<compile_context>
chip_gen: v6e
topology: v6e:2x2x1
jax: 0.10.0
libtpu: 0.0.40
codegen_flags: <defaults>
</compile_context>

<pallas_src>
import functools

import jax
import jax.numpy as jnp
from jax.experimental import pallas as pl
from jax.experimental.pallas import tpu as pltpu


# ----------------------------------------------------------------------------
# Kernels
# ----------------------------------------------------------------------------
def _bigru_fc_kernel(x_ref, wih_ref, whh_ref, bih_ref, bhh_ref,
                     wl_ref, bl_ref, o_ref):
    """Bidirectional GRU over T steps + fused Linear on the concat output.

    x_ref   : (T*W, Cin)  f32    -- time-major, rows t*W + w
    wih_ref : (Cin, 6H)   bf16   -- [fwd(3H) | bwd(3H)] input projections
    whh_ref : (2, H, 3H)  bf16   -- [fwd, bwd] hidden projections
    bih_ref : (1, 6H)     f32
    bhh_ref : (2, 1, 3H)  f32
    wl_ref  : (2H, Hout)  bf16   -- Linear on concat([h_fwd, h_bwd])
    bl_ref  : (1, Hout)   f32
    o_ref   : (T, W, Hout) f32
    """
    T, W, _ = o_ref.shape
    H = whh_ref.shape[1]
    G = 3 * H

    # Hoisted input projection for BOTH directions: one (T*W, Cin)@(Cin, 6H).
    x = x_ref[...].astype(jnp.bfloat16)
    gi = jnp.dot(x, wih_ref[...],
                 preferred_element_type=jnp.float32) + bih_ref[...]

    def step(gi_t, h_prev, whh, bhh):
        gh = jnp.dot(h_prev.astype(jnp.bfloat16), whh,
                     preferred_element_type=jnp.float32) + bhh
        r = jax.nn.sigmoid(gi_t[:, 0:H] + gh[:, 0:H])
        z = jax.nn.sigmoid(gi_t[:, H:2 * H] + gh[:, H:2 * H])
        n = jnp.tanh(gi_t[:, 2 * H:3 * H] + r * gh[:, 2 * H:3 * H])
        return (1.0 - z) * n + z * h_prev

    # -- forward direction; write fc contribution of the fwd half (+ bias) --
    whh_f = whh_ref[0]
    bhh_f = bhh_ref[0]
    wl_f = wl_ref[0:H, :]
    bl = bl_ref[...]
    h = jnp.zeros((W, H), jnp.float32)
    for t in range(T):                       # static T -> fully unrolled
        h = step(gi[t * W:(t + 1) * W, 0:G], h, whh_f, bhh_f)
        o_ref[t] = jnp.dot(h.astype(jnp.bfloat16), wl_f,
                           preferred_element_type=jnp.float32) + bl

    # -- backward direction: reversed in-kernel indexing (no flips) --
    whh_b = whh_ref[1]
    bhh_b = bhh_ref[1]
    wl_b = wl_ref[H:2 * H, :]
    h = jnp.zeros((W, H), jnp.float32)
    for t in range(T - 1, -1, -1):
        h = step(gi[t * W:(t + 1) * W, G:2 * G], h, whh_b, bhh_b)
        o_ref[t] = o_ref[t] + jnp.dot(h.astype(jnp.bfloat16), wl_b,
                                      preferred_element_type=jnp.float32)


def _linear_kernel(x_ref, w_ref, b_ref, o_ref):
    """o = x @ w + b (bf16 operands, f32 accumulate)."""
    o_ref[...] = (
        jnp.dot(x_ref[...].astype(jnp.bfloat16), w_ref[...],
                preferred_element_type=jnp.float32)
        + b_ref[...]
    )


# ----------------------------------------------------------------------------
# pallas_call wrappers
# ----------------------------------------------------------------------------
_VMEM = pl.BlockSpec(memory_space=pltpu.MemorySpace.VMEM)


def layer1_fused(x_d, wih, whh, bih, bhh, w1, b1, *, T, W):
    """All D descriptors x 2 directions + fc1 in ONE gridded pallas_call.

    x_d : (D, T*W, C); output: (T, W, D*H2) written per-descriptor slice.
    """
    D, TW, C = x_d.shape
    H1 = whh.shape[2]
    G = 3 * H1
    H2 = w1.shape[2]
    return pl.pallas_call(
        _bigru_fc_kernel,
        out_shape=jax.ShapeDtypeStruct((T, W, D * H2), jnp.float32),
        grid=(D,),
        in_specs=[
            pl.BlockSpec((None, TW, C), lambda d: (d, 0, 0)),
            pl.BlockSpec((None, C, 2 * G), lambda d: (d, 0, 0)),
            pl.BlockSpec((None, 2, H1, G), lambda d: (d, 0, 0, 0)),
            pl.BlockSpec((None, 1, 2 * G), lambda d: (d, 0, 0)),
            pl.BlockSpec((None, 2, 1, G), lambda d: (d, 0, 0, 0)),
            pl.BlockSpec((None, 2 * H1, H2), lambda d: (d, 0, 0)),
            pl.BlockSpec((None, 1, H2), lambda d: (d, 0, 0)),
        ],
        out_specs=pl.BlockSpec((T, W, H2), lambda d: (0, 0, d)),
        compiler_params=pltpu.CompilerParams(
            dimension_semantics=("parallel",)),
    )(x_d, wih, whh, bih, bhh, w1, b1)


def layer2_fc2_fused(x2, wih, whh, bih, bhh, w2, b2, *, T, W):
    """Layer-2 bidirectional GRU + fc2, fully resident in VMEM."""
    H4 = w2.shape[1]
    return pl.pallas_call(
        _bigru_fc_kernel,
        out_shape=jax.ShapeDtypeStruct((T, W, H4), jnp.float32),
        in_specs=[_VMEM] * 7,
        out_specs=_VMEM,
    )(x2, wih, whh, bih, bhh, w2, b2)


def fc3_linear(x2d, w, b):
    return pl.pallas_call(
        _linear_kernel,
        out_shape=jax.ShapeDtypeStruct((x2d.shape[0], w.shape[1]),
                                       jnp.float32),
        in_specs=[_VMEM] * 3,
        out_specs=_VMEM,
    )(x2d, w, b)


# ----------------------------------------------------------------------------
# Parameter construction (deterministic, synthetic, pre-packed layout)
# ----------------------------------------------------------------------------
def init_params(key, C, W, NC, D, H1, H2, H3, H4, nc_pad):
    def u(k, shape, scale):
        return jax.random.uniform(k, shape, jnp.float32, -scale, scale)

    keys = jax.random.split(key, 14)
    s1 = 1.0 / float(H1) ** 0.5
    s2 = 1.0 / float(2 * H1) ** 0.5
    s3 = 1.0 / float(H3) ** 0.5
    s4 = 1.0 / float(2 * H3) ** 0.5
    s5 = 1.0 / float(H4 * W) ** 0.5

    params = {
        # layer1: per-descriptor, directions packed / stacked.
        "wih1": u(keys[0], (D, C, 6 * H1), s1).astype(jnp.bfloat16),
        "whh1": u(keys[1], (D, 2, H1, 3 * H1), s1).astype(jnp.bfloat16),
        "bih1": u(keys[2], (D, 1, 6 * H1), s1),
        "bhh1": u(keys[3], (D, 2, 1, 3 * H1), s1),
        "w1":   u(keys[4], (D, 2 * H1, H2), s2).astype(jnp.bfloat16),
        "b1":   u(keys[5], (D, 1, H2), s2),
        # layer2 + fc2.
        "wih2": u(keys[6], (D * H2, 6 * H3), s3).astype(jnp.bfloat16),
        "whh2": u(keys[7], (2, H3, 3 * H3), s3).astype(jnp.bfloat16),
        "bih2": u(keys[8], (1, 6 * H3), s3),
        "bhh2": u(keys[9], (2, 1, 3 * H3), s3),
        "w2":   u(keys[10], (2 * H3, H4), s4).astype(jnp.bfloat16),
        "b2":   u(keys[11], (1, H4), s4),
    }
    # fc3, class dim padded to a lane-dense 128.
    w3 = u(keys[12], (W * H4, NC), s5)
    b3 = u(keys[13], (1, NC), s5)
    params["w3"] = jnp.pad(w3, ((0, 0), (0, nc_pad - NC))).astype(jnp.bfloat16)
    params["b3"] = jnp.pad(b3, ((0, 0), (0, nc_pad - NC)))
    return params


# ----------------------------------------------------------------------------
# Forward pass (mirrors TwoLevelGRU_.forward, eval mode)
# ----------------------------------------------------------------------------
def forward(x, params, *, num_classes):
    T, W, D, C = x.shape
    H2 = params["w1"].shape[2]
    H4 = params["w2"].shape[1]

    # Layer 1 (+ fc1): all descriptors & both directions in one gridded call.
    x_d = jnp.transpose(x, (2, 0, 1, 3)).reshape(D, T * W, C)
    concat = layer1_fused(x_d, params["wih1"], params["whh1"],
                          params["bih1"], params["bhh1"],
                          params["w1"], params["b1"], T=T, W=W)  # (T,W,D*H2)

    # Layer 2 (+ fc2) fused.
    x2 = concat.reshape(T * W, D * H2)
    fc2_out = layer2_fc2_fused(x2, params["wih2"], params["whh2"],
                               params["bih2"], params["bhh2"],
                               params["w2"], params["b2"], T=T, W=W)  # (T,W,H4)

    # nn.Dropout: eval-mode identity.
    # TODO(synk): training-mode Bernoulli dropout mask not implemented.
    flat = fc2_out.reshape(T, W * H4)                     # Flatten(1, 2)
    out = fc3_linear(flat, params["w3"], params["b3"])    # (T, nc_pad)
    return out[:, :num_classes]


# ----------------------------------------------------------------------------
# Main
# ----------------------------------------------------------------------------
if __name__ == "__main__":
    NUM_COLUMNS = 16
    NUM_WINDOWS = 8
    NUM_CLASSES = 10
    NUM_DESCRIPTORS = 5
    H1, H2, H3, H4 = 128, 128, 128, 128   # small, lane-aligned hidden sizes
    T = 4                                 # leading (recurrence) dim
    NC_PAD = 128                          # lane-dense fc3 output, sliced after

    key = jax.random.PRNGKey(0)
    kx, kp = jax.random.split(key)
    x = jax.random.normal(
        kx, (T, NUM_WINDOWS, NUM_DESCRIPTORS, NUM_COLUMNS), jnp.float32)
    params = init_params(kp, NUM_COLUMNS, NUM_WINDOWS, NUM_CLASSES,
                         NUM_DESCRIPTORS, H1, H2, H3, H4, NC_PAD)

    fwd = jax.jit(functools.partial(forward, num_classes=NUM_CLASSES))
    out = jax.block_until_ready(fwd(x, params))
    assert out.shape == (T, NUM_CLASSES), out.shape
    assert bool(jnp.all(jnp.isfinite(out)))
    print("KERNEL_OK")
</pallas_src>

<mosaic_0001>
module attributes {stable_mosaic.version = 11 : i64} {
  func.func @_bigru_fc_kernel(%arg0: memref<32x640xf32, #tpu.memory_space<vmem>>, %arg1: memref<640x768xbf16, #tpu.memory_space<vmem>>, %arg2: memref<2x128x384xbf16, #tpu.memory_space<vmem>>, %arg3: memref<1x768xf32, #tpu.memory_space<vmem>>, %arg4: memref<2x1x384xf32, #tpu.memory_space<vmem>>, %arg5: memref<256x128xbf16, #tpu.memory_space<vmem>>, %arg6: memref<1x128xf32, #tpu.memory_space<vmem>>, %arg7: memref<4x8x128xf32, #tpu.memory_space<vmem>>) attributes {dimension_semantics = [], scalar_prefetch = 0 : i64, scratch_operands = 0 : i64, tpu.core_type = #tpu.core_type<tc>} {
    %c0 = arith.constant 0 : index
    %c0_0 = arith.constant 0 : index
    %0 = vector.load %arg0[%c0, %c0_0] : memref<32x640xf32, #tpu.memory_space<vmem>>, vector<32x640xf32>
    %1 = arith.truncf %0 : vector<32x640xf32> to vector<32x640xbf16>
    %c0_1 = arith.constant 0 : index
    %c0_2 = arith.constant 0 : index
    %2 = vector.load %arg1[%c0_1, %c0_2] : memref<640x768xbf16, #tpu.memory_space<vmem>>, vector<640x768xbf16>
    %cst = arith.constant dense<0.000000e+00> : vector<32x768xf32>
    %3 = tpu.matmul %1, %2, %cst {dimension_numbers = #tpu.dot_dimension_numbers<[1], [0], [0], [1], [0, 0, 1, 1], [], []>} : vector<32x640xbf16>, vector<640x768xbf16>, vector<32x768xf32> -> vector<32x768xf32>
    %c0_3 = arith.constant 0 : index
    %c0_4 = arith.constant 0 : index
    %4 = vector.load %arg3[%c0_3, %c0_4] : memref<1x768xf32, #tpu.memory_space<vmem>>, vector<1x768xf32>
    %5 = vector.broadcast %4 : vector<1x768xf32> to vector<32x768xf32>
    %6 = arith.addf %3, %5 : vector<32x768xf32>
    %c0_5 = arith.constant 0 : index
    %c0_6 = arith.constant 0 : index
    %c0_7 = arith.constant 0 : index
    %7 = vector.load %arg2[%c0_5, %c0_6, %c0_7] : memref<2x128x384xbf16, #tpu.memory_space<vmem>>, vector<1x128x384xbf16>
    %8 = vector.shape_cast %7 : vector<1x128x384xbf16> to vector<128x384xbf16>
    %c0_8 = arith.constant 0 : index
    %c0_9 = arith.constant 0 : index
    %c0_10 = arith.constant 0 : index
    %9 = vector.load %arg4[%c0_8, %c0_9, %c0_10] : memref<2x1x384xf32, #tpu.memory_space<vmem>>, vector<1x1x384xf32>
    %10 = vector.shape_cast %9 : vector<1x1x384xf32> to vector<1x384xf32>
    %c0_11 = arith.constant 0 : index
    %c0_12 = arith.constant 0 : index
    %11 = vector.load %arg5[%c0_11, %c0_12] : memref<256x128xbf16, #tpu.memory_space<vmem>>, vector<128x128xbf16>
    %c0_13 = arith.constant 0 : index
    %c0_14 = arith.constant 0 : index
    %12 = vector.load %arg6[%c0_13, %c0_14] : memref<1x128xf32, #tpu.memory_space<vmem>>, vector<1x128xf32>
    %cst_15 = arith.constant 0.000000e+00 : f32
    %13 = vector.broadcast %cst_15 : f32 to vector<8x128xf32>
    %14 = vector.extract_strided_slice %6 {offsets = [0, 0], sizes = [8, 384], strides = [1, 1]} : vector<32x768xf32> to vector<8x384xf32>
    %15 = arith.truncf %13 : vector<8x128xf32> to vector<8x128xbf16>
    %cst_16 = arith.constant dense<0.000000e+00> : vector<8x384xf32>
    %16 = tpu.matmul %15, %8, %cst_16 {dimension_numbers = #tpu.dot_dimension_numbers<[1], [0], [0], [1], [0, 0, 1, 1], [], []>} : vector<8x128xbf16>, vector<128x384xbf16>, vector<8x384xf32> -> vector<8x384xf32>
    %17 = vector.broadcast %10 : vector<1x384xf32> to vector<8x384xf32>
    %18 = arith.addf %16, %17 : vector<8x384xf32>
    %19 = vector.extract_strided_slice %14 {offsets = [0, 0], sizes = [8, 128], strides = [1, 1]} : vector<8x384xf32> to vector<8x128xf32>
    %20 = vector.extract_strided_slice %18 {offsets = [0, 0], sizes = [8, 128], strides = [1, 1]} : vector<8x384xf32> to vector<8x128xf32>
    %21 = arith.addf %19, %20 : vector<8x128xf32>
    %22 = arith.negf %21 : vector<8x128xf32>
    %23 = math.exp %22 : vector<8x128xf32>
    %cst_17 = arith.constant 1.000000e+00 : f32
    %24 = vector.broadcast %cst_17 : f32 to vector<8x128xf32>
    %25 = arith.addf %24, %23 : vector<8x128xf32>
    %26 = arith.divf %24, %25 : vector<8x128xf32>
    %27 = vector.extract_strided_slice %14 {offsets = [0, 128], sizes = [8, 128], strides = [1, 1]} : vector<8x384xf32> to vector<8x128xf32>
    %28 = vector.extract_strided_slice %18 {offsets = [0, 128], sizes = [8, 128], strides = [1, 1]} : vector<8x384xf32> to vector<8x128xf32>
    %29 = arith.addf %27, %28 : vector<8x128xf32>
    %30 = arith.negf %29 : vector<8x128xf32>
    %31 = math.exp %30 : vector<8x128xf32>
    %cst_18 = arith.constant 1.000000e+00 : f32
    %32 = vector.broadcast %cst_18 : f32 to vector<8x128xf32>
    %33 = arith.addf %32, %31 : vector<8x128xf32>
    %34 = arith.divf %32, %33 : vector<8x128xf32>
    %35 = vector.extract_strided_slice %14 {offsets = [0, 256], sizes = [8, 128], strides = [1, 1]} : vector<8x384xf32> to vector<8x128xf32>
    %36 = vector.extract_strided_slice %18 {offsets = [0, 256], sizes = [8, 128], strides = [1, 1]} : vector<8x384xf32> to vector<8x128xf32>
    %37 = arith.mulf %26, %36 : vector<8x128xf32>
    %38 = arith.addf %35, %37 : vector<8x128xf32>
    %39 = math.tanh %38 : vector<8x128xf32>
    %cst_19 = arith.constant 1.000000e+00 : f32
    %40 = vector.broadcast %cst_19 : f32 to vector<8x128xf32>
    %41 = arith.subf %40, %34 : vector<8x128xf32>
    %42 = arith.mulf %41, %39 : vector<8x128xf32>
    %43 = arith.mulf %34, %13 : vector<8x128xf32>
    %44 = arith.addf %42, %43 : vector<8x128xf32>
    %45 = arith.truncf %44 : vector<8x128xf32> to vector<8x128xbf16>
    %cst_20 = arith.constant dense<0.000000e+00> : vector<8x128xf32>
    %46 = tpu.matmul %45, %11, %cst_20 {dimension_numbers = #tpu.dot_dimension_numbers<[1], [0], [0], [1], [0, 0, 1, 1], [], []>} : vector<8x128xbf16>, vector<128x128xbf16>, vector<8x128xf32> -> vector<8x128xf32>
    %47 = vector.broadcast %12 : vector<1x128xf32> to vector<8x128xf32>
    %48 = arith.addf %46, %47 : vector<8x128xf32>
    %c0_21 = arith.constant 0 : index
    %c0_22 = arith.constant 0 : index
    %c0_23 = arith.constant 0 : index
    %49 = vector.load %arg7[%c0_21, %c0_22, %c0_23] : memref<4x8x128xf32, #tpu.memory_space<vmem>>, vector<1x8x128xf32>
    %50 = vector.shape_cast %49 : vector<1x8x128xf32> to vector<8x128xf32>
    %51 = vector.shape_cast %48 : vector<8x128xf32> to vector<1x8x128xf32>
    tpu.vector_store %arg7[%c0_21, %c0_22, %c0_23], %51 {strides = array<i32>} : memref<4x8x128xf32, #tpu.memory_space<vmem>>, vector<1x8x128xf32>,
    %52 = vector.extract_strided_slice %6 {offsets = [8, 0], sizes = [8, 384], strides = [1, 1]} : vector<32x768xf32> to vector<8x384xf32>
    %53 = arith.truncf %44 : vector<8x128xf32> to vector<8x128xbf16>
    %cst_24 = arith.constant dense<0.000000e+00> : vector<8x384xf32>
    %54 = tpu.matmul %53, %8, %cst_24 {dimension_numbers = #tpu.dot_dimension_numbers<[1], [0], [0], [1], [0, 0, 1, 1], [], []>} : vector<8x128xbf16>, vector<128x384xbf16>, vector<8x384xf32> -> vector<8x384xf32>
    %55 = vector.broadcast %10 : vector<1x384xf32> to vector<8x384xf32>
    %56 = arith.addf %54, %55 : vector<8x384xf32>
    %57 = vector.extract_strided_slice %52 {offsets = [0, 0], sizes = [8, 128], strides = [1, 1]} : vector<8x384xf32> to vector<8x128xf32>
    %58 = vector.extract_strided_slice %56 {offsets = [0, 0], sizes = [8, 128], strides = [1, 1]} : vector<8x384xf32> to vector<8x128xf32>
    %59 = arith.addf %57, %58 : vector<8x128xf32>
    %60 = arith.negf %59 : vector<8x128xf32>
    %61 = math.exp %60 : vector<8x128xf32>
    %cst_25 = arith.constant 1.000000e+00 : f32
    %62 = vector.broadcast %cst_25 : f32 to vector<8x128xf32>
    %63 = arith.addf %62, %61 : vector<8x128xf32>
    %64 = arith.divf %62, %63 : vector<8x128xf32>
    %65 = vector.extract_strided_slice %52 {offsets = [0, 128], sizes = [8, 128], strides = [1, 1]} : vector<8x384xf32> to vector<8x128xf32>
    %66 = vector.extract_strided_slice %56 {offsets = [0, 128], sizes = [8, 128], strides = [1, 1]} : vector<8x384xf32> to vector<8x128xf32>
    %67 = arith.addf %65, %66 : vector<8x128xf32>
    %68 = arith.negf %67 : vector<8x128xf32>
    %69 = math.exp %68 : vector<8x128xf32>
    %cst_26 = arith.constant 1.000000e+00 : f32
    %70 = vector.broadcast %cst_26 : f32 to vector<8x128xf32>
    %71 = arith.addf %70, %69 : vector<8x128xf32>
    %72 = arith.divf %70, %71 : vector<8x128xf32>
    %73 = vector.extract_strided_slice %52 {offsets = [0, 256], sizes = [8, 128], strides = [1, 1]} : vector<8x384xf32> to vector<8x128xf32>
    %74 = vector.extract_strided_slice %56 {offsets = [0, 256], sizes = [8, 128], strides = [1, 1]} : vector<8x384xf32> to vector<8x128xf32>
    %75 = arith.mulf %64, %74 : vector<8x128xf32>
    %76 = arith.addf %73, %75 : vector<8x128xf32>
    %77 = math.tanh %76 : vector<8x128xf32>
    %cst_27 = arith.constant 1.000000e+00 : f32
    %78 = vector.broadcast %cst_27 : f32 to vector<8x128xf32>
    %79 = arith.subf %78, %72 : vector<8x128xf32>
    %80 = arith.mulf %79, %77 : vector<8x128xf32>
    %81 = arith.mulf %72, %44 : vector<8x128xf32>
    %82 = arith.addf %80, %81 : vector<8x128xf32>
    %83 = arith.truncf %82 : vector<8x128xf32> to vector<8x128xbf16>
    %cst_28 = arith.constant dense<0.000000e+00> : vector<8x128xf32>
    %84 = tpu.matmul %83, %11, %cst_28 {dimension_numbers = #tpu.dot_dimension_numbers<[1], [0], [0], [1], [0, 0, 1, 1], [], []>} : vector<8x128xbf16>, vector<128x128xbf16>, vector<8x128xf32> -> vector<8x128xf32>
    %85 = vector.broadcast %12 : vector<1x128xf32> to vector<8x128xf32>
    %86 = arith.addf %84, %85 : vector<8x128xf32>
    %c1 = arith.constant 1 : index
    %c0_29 = arith.constant 0 : index
    %c0_30 = arith.constant 0 : index
    %87 = vector.load %arg7[%c1, %c0_29, %c0_30] : memref<4x8x128xf32, #tpu.memory_space<vmem>>, vector<1x8x128xf32>
    %88 = vector.shape_cast %87 : vector<1x8x128xf32> to vector<8x128xf32>
    %89 = vector.shape_cast %86 : vector<8x128xf32> to vector<1x8x128xf32>
    tpu.vector_store %arg7[%c1, %c0_29, %c0_30], %89 {strides = array<i32>} : memref<4x8x128xf32, #tpu.memory_space<vmem>>, vector<1x8x128xf32>,
    %90 = vector.extract_strided_slice %6 {offsets = [16, 0], sizes = [8, 384], strides = [1, 1]} : vector<32x768xf32> to vector<8x384xf32>
    %91 = arith.truncf %82 : vector<8x128xf32> to vector<8x128xbf16>
    %cst_31 = arith.constant dense<0.000000e+00> : vector<8x384xf32>
    %92 = tpu.matmul %91, %8, %cst_31 {dimension_numbers = #tpu.dot_dimension_numbers<[1], [0], [0], [1], [0, 0, 1, 1], [], []>} : vector<8x128xbf16>, vector<128x384xbf16>, vector<8x384xf32> -> vector<8x384xf32>
    %93 = vector.broadcast %10 : vector<1x384xf32> to vector<8x384xf32>
    %94 = arith.addf %92, %93 : vector<8x384xf32>
    %95 = vector.extract_strided_slice %90 {offsets = [0, 0], sizes = [8, 128], strides = [1, 1]} : vector<8x384xf32> to vector<8x128xf32>
    %96 = vector.extract_strided_slice %94 {offsets = [0, 0], sizes = [8, 128], strides = [1, 1]} : vector<8x384xf32> to vector<8x128xf32>
    %97 = arith.addf %95, %96 : vector<8x128xf32>
    %98 = arith.negf %97 : vector<8x128xf32>
    %99 = math.exp %98 : vector<8x128xf32>
    %cst_32 = arith.constant 1.000000e+00 : f32
    %100 = vector.broadcast %cst_32 : f32 to vector<8x128xf32>
    %101 = arith.addf %100, %99 : vector<8x128xf32>
    %102 = arith.divf %100, %101 : vector<8x128xf32>
    %103 = vector.extract_strided_slice %90 {offsets = [0, 128], sizes = [8, 128], strides = [1, 1]} : vector<8x384xf32> to vector<8x128xf32>
    %104 = vector.extract_strided_slice %94 {offsets = [0, 128], sizes = [8, 128], strides = [1, 1]} : vector<8x384xf32> to vector<8x128xf32>
    %105 = arith.addf %103, %104 : vector<8x128xf32>
    %106 = arith.negf %105 : vector<8x128xf32>
    %107 = math.exp %106 : vector<8x128xf32>
    %cst_33 = arith.constant 1.000000e+00 : f32
    %108 = vector.broadcast %cst_33 : f32 to vector<8x128xf32>
    %109 = arith.addf %108, %107 : vector<8x128xf32>
    %110 = arith.divf %108, %109 : vector<8x128xf32>
    %111 = vector.extract_strided_slice %90 {offsets = [0, 256], sizes = [8, 128], strides = [1, 1]} : vector<8x384xf32> to vector<8x128xf32>
    %112 = vector.extract_strided_slice %94 {offsets = [0, 256], sizes = [8, 128], strides = [1, 1]} : vector<8x384xf32> to vector<8x128xf32>
    %113 = arith.mulf %102, %112 : vector<8x128xf32>
    %114 = arith.addf %111, %113 : vector<8x128xf32>
    %115 = math.tanh %114 : vector<8x128xf32>
    %cst_34 = arith.constant 1.000000e+00 : f32
    %116 = vector.broadcast %cst_34 : f32 to vector<8x128xf32>
    %117 = arith.subf %116, %110 : vector<8x128xf32>
    %118 = arith.mulf %117, %115 : vector<8x128xf32>
    %119 = arith.mulf %110, %82 : vector<8x128xf32>
    %120 = arith.addf %118, %119 : vector<8x128xf32>
    %121 = arith.truncf %120 : vector<8x128xf32> to vector<8x128xbf16>
    %cst_35 = arith.constant dense<0.000000e+00> : vector<8x128xf32>
    %122 = tpu.matmul %121, %11, %cst_35 {dimension_numbers = #tpu.dot_dimension_numbers<[1], [0], [0], [1], [0, 0, 1, 1], [], []>} : vector<8x128xbf16>, vector<128x128xbf16>, vector<8x128xf32> -> vector<8x128xf32>
    %123 = vector.broadcast %12 : vector<1x128xf32> to vector<8x128xf32>
    %124 = arith.addf %122, %123 : vector<8x128xf32>
    %c2 = arith.constant 2 : index
    %c0_36 = arith.constant 0 : index
    %c0_37 = arith.constant 0 : index
    %125 = vector.load %arg7[%c2, %c0_36, %c0_37] : memref<4x8x128xf32, #tpu.memory_space<vmem>>, vector<1x8x128xf32>
    %126 = vector.shape_cast %125 : vector<1x8x128xf32> to vector<8x128xf32>
    %127 = vector.shape_cast %124 : vector<8x128xf32> to vector<1x8x128xf32>
    tpu.vector_store %arg7[%c2, %c0_36, %c0_37], %127 {strides = array<i32>} : memref<4x8x128xf32, #tpu.memory_space<vmem>>, vector<1x8x128xf32>,
    %128 = vector.extract_strided_slice %6 {offsets = [24, 0], sizes = [8, 384], strides = [1, 1]} : vector<32x768xf32> to vector<8x384xf32>
    %129 = arith.truncf %120 : vector<8x128xf32> to vector<8x128xbf16>
    %cst_38 = arith.constant dense<0.000000e+00> : vector<8x384xf32>
    %130 = tpu.matmul %129, %8, %cst_38 {dimension_numbers = #tpu.dot_dimension_numbers<[1], [0], [0], [1], [0, 0, 1, 1], [], []>} : vector<8x128xbf16>, vector<128x384xbf16>, vector<8x384xf32> -> vector<8x384xf32>
    %131 = vector.broadcast %10 : vector<1x384xf32> to vector<8x384xf32>
    %132 = arith.addf %130, %131 : vector<8x384xf32>
    %133 = vector.extract_strided_slice %128 {offsets = [0, 0], sizes = [8, 128], strides = [1, 1]} : vector<8x384xf32> to vector<8x128xf32>
    %134 = vector.extract_strided_slice %132 {offsets = [0, 0], sizes = [8, 128], strides = [1, 1]} : vector<8x384xf32> to vector<8x128xf32>
    %135 = arith.addf %133, %134 : vector<8x128xf32>
    %136 = arith.negf %135 : vector<8x128xf32>
    %137 = math.exp %136 : vector<8x128xf32>
    %cst_39 = arith.constant 1.000000e+00 : f32
    %138 = vector.broadcast %cst_39 : f32 to vector<8x128xf32>
    %139 = arith.addf %138, %137 : vector<8x128xf32>
    %140 = arith.divf %138, %139 : vector<8x128xf32>
    %141 = vector.extract_strided_slice %128 {offsets = [0, 128], sizes = [8, 128], strides = [1, 1]} : vector<8x384xf32> to vector<8x128xf32>
    %142 = vector.extract_strided_slice %132 {offsets = [0, 128], sizes = [8, 128], strides = [1, 1]} : vector<8x384xf32> to vector<8x128xf32>
    %143 = arith.addf %141, %142 : vector<8x128xf32>
    %144 = arith.negf %143 : vector<8x128xf32>
    %145 = math.exp %144 : vector<8x128xf32>
    %cst_40 = arith.constant 1.000000e+00 : f32
    %146 = vector.broadcast %cst_40 : f32 to vector<8x128xf32>
    %147 = arith.addf %146, %145 : vector<8x128xf32>
    %148 = arith.divf %146, %147 : vector<8x128xf32>
    %149 = vector.extract_strided_slice %128 {offsets = [0, 256], sizes = [8, 128], strides = [1, 1]} : vector<8x384xf32> to vector<8x128xf32>
    %150 = vector.extract_strided_slice %132 {offsets = [0, 256], sizes = [8, 128], strides = [1, 1]} : vector<8x384xf32> to vector<8x128xf32>
    %151 = arith.mulf %140, %150 : vector<8x128xf32>
    %152 = arith.addf %149, %151 : vector<8x128xf32>
    %153 = math.tanh %152 : vector<8x128xf32>
    %cst_41 = arith.constant 1.000000e+00 : f32
    %154 = vector.broadcast %cst_41 : f32 to vector<8x128xf32>
    %155 = arith.subf %154, %148 : vector<8x128xf32>
    %156 = arith.mulf %155, %153 : vector<8x128xf32>
    %157 = arith.mulf %148, %120 : vector<8x128xf32>
    %158 = arith.addf %156, %157 : vector<8x128xf32>
    %159 = arith.truncf %158 : vector<8x128xf32> to vector<8x128xbf16>
    %cst_42 = arith.constant dense<0.000000e+00> : vector<8x128xf32>
    %160 = tpu.matmul %159, %11, %cst_42 {dimension_numbers = #tpu.dot_dimension_numbers<[1], [0], [0], [1], [0, 0, 1, 1], [], []>} : vector<8x128xbf16>, vector<128x128xbf16>, vector<8x128xf32> -> vector<8x128xf32>
    %161 = vector.broadcast %12 : vector<1x128xf32> to vector<8x128xf32>
    %162 = arith.addf %160, %161 : vector<8x128xf32>
    %c3 = arith.constant 3 : index
    %c0_43 = arith.constant 0 : index
    %c0_44 = arith.constant 0 : index
    %163 = vector.load %arg7[%c3, %c0_43, %c0_44] : memref<4x8x128xf32, #tpu.memory_space<vmem>>, vector<1x8x128xf32>
    %164 = vector.shape_cast %163 : vector<1x8x128xf32> to vector<8x128xf32>
    %165 = vector.shape_cast %162 : vector<8x128xf32> to vector<1x8x128xf32>
    tpu.vector_store %arg7[%c3, %c0_43, %c0_44], %165 {strides = array<i32>} : memref<4x8x128xf32, #tpu.memory_space<vmem>>, vector<1x8x128xf32>,
    %c1_45 = arith.constant 1 : index
    %c0_46 = arith.constant 0 : index
    %c0_47 = arith.constant 0 : index
    %166 = vector.load %arg2[%c1_45, %c0_46, %c0_47] : memref<2x128x384xbf16, #tpu.memory_space<vmem>>, vector<1x128x384xbf16>
    %167 = vector.shape_cast %166 : vector<1x128x384xbf16> to vector<128x384xbf16>
    %c1_48 = arith.constant 1 : index
    %c0_49 = arith.constant 0 : index
    %c0_50 = arith.constant 0 : index
    %168 = vector.load %arg4[%c1_48, %c0_49, %c0_50] : memref<2x1x384xf32, #tpu.memory_space<vmem>>, vector<1x1x384xf32>
    %169 = vector.shape_cast %168 : vector<1x1x384xf32> to vector<1x384xf32>
    %c128 = arith.constant 128 : index
    %c0_51 = arith.constant 0 : index
    %170 = vector.load %arg5[%c128, %c0_51] : memref<256x128xbf16, #tpu.memory_space<vmem>>, vector<128x128xbf16>
    %cst_52 = arith.constant 0.000000e+00 : f32
    %171 = vector.broadcast %cst_52 : f32 to vector<8x128xf32>
    %172 = vector.extract_strided_slice %6 {offsets = [24, 384], sizes = [8, 384], strides = [1, 1]} : vector<32x768xf32> to vector<8x384xf32>
    %173 = arith.truncf %171 : vector<8x128xf32> to vector<8x128xbf16>
    %cst_53 = arith.constant dense<0.000000e+00> : vector<8x384xf32>
    %174 = tpu.matmul %173, %167, %cst_53 {dimension_numbers = #tpu.dot_dimension_numbers<[1], [0], [0], [1], [0, 0, 1, 1], [], []>} : vector<8x128xbf16>, vector<128x384xbf16>, vector<8x384xf32> -> vector<8x384xf32>
    %175 = vector.broadcast %169 : vector<1x384xf32> to vector<8x384xf32>
    %176 = arith.addf %174, %175 : vector<8x384xf32>
    %177 = vector.extract_strided_slice %172 {offsets = [0, 0], sizes = [8, 128], strides = [1, 1]} : vector<8x384xf32> to vector<8x128xf32>
    %178 = vector.extract_strided_slice %176 {offsets = [0, 0], sizes = [8, 128], strides = [1, 1]} : vector<8x384xf32> to vector<8x128xf32>
    %179 = arith.addf %177, %178 : vector<8x128xf32>
    %180 = arith.negf %179 : vector<8x128xf32>
    %181 = math.exp %180 : vector<8x128xf32>
    %cst_54 = arith.constant 1.000000e+00 : f32
    %182 = vector.broadcast %cst_54 : f32 to vector<8x128xf32>
    %183 = arith.addf %182, %181 : vector<8x128xf32>
    %184 = arith.divf %182, %183 : vector<8x128xf32>
    %185 = vector.extract_strided_slice %172 {offsets = [0, 128], sizes = [8, 128], strides = [1, 1]} : vector<8x384xf32> to vector<8x128xf32>
    %186 = vector.extract_strided_slice %176 {offsets = [0, 128], sizes = [8, 128], strides = [1, 1]} : vector<8x384xf32> to vector<8x128xf32>
    %187 = arith.addf %185, %186 : vector<8x128xf32>
    %188 = arith.negf %187 : vector<8x128xf32>
    %189 = math.exp %188 : vector<8x128xf32>
    %cst_55 = arith.constant 1.000000e+00 : f32
    %190 = vector.broadcast %cst_55 : f32 to vector<8x128xf32>
    %191 = arith.addf %190, %189 : vector<8x128xf32>
    %192 = arith.divf %190, %191 : vector<8x128xf32>
    %193 = vector.extract_strided_slice %172 {offsets = [0, 256], sizes = [8, 128], strides = [1, 1]} : vector<8x384xf32> to vector<8x128xf32>
    %194 = vector.extract_strided_slice %176 {offsets = [0, 256], sizes = [8, 128], strides = [1, 1]} : vector<8x384xf32> to vector<8x128xf32>
    %195 = arith.mulf %184, %194 : vector<8x128xf32>
    %196 = arith.addf %193, %195 : vector<8x128xf32>
    %197 = math.tanh %196 : vector<8x128xf32>
    %cst_56 = arith.constant 1.000000e+00 : f32
    %198 = vector.broadcast %cst_56 : f32 to vector<8x128xf32>
    %199 = arith.subf %198, %192 : vector<8x128xf32>
    %200 = arith.mulf %199, %197 : vector<8x128xf32>
    %201 = arith.mulf %192, %171 : vector<8x128xf32>
    %202 = arith.addf %200, %201 : vector<8x128xf32>
    %c3_57 = arith.constant 3 : index
    %c0_58 = arith.constant 0 : index
    %c0_59 = arith.constant 0 : index
    %203 = vector.load %arg7[%c3_57, %c0_58, %c0_59] : memref<4x8x128xf32, #tpu.memory_space<vmem>>, vector<1x8x128xf32>
    %204 = vector.shape_cast %203 : vector<1x8x128xf32> to vector<8x128xf32>
    %205 = arith.truncf %202 : vector<8x128xf32> to vector<8x128xbf16>
    %cst_60 = arith.constant dense<0.000000e+00> : vector<8x128xf32>
    %206 = tpu.matmul %205, %170, %cst_60 {dimension_numbers = #tpu.dot_dimension_numbers<[1], [0], [0], [1], [0, 0, 1, 1], [], []>} : vector<8x128xbf16>, vector<128x128xbf16>, vector<8x128xf32> -> vector<8x128xf32>
    %207 = arith.addf %204, %206 : vector<8x128xf32>
    %c3_61 = arith.constant 3 : index
    %c0_62 = arith.constant 0 : index
    %c0_63 = arith.constant 0 : index
    %208 = vector.load %arg7[%c3_61, %c0_62, %c0_63] : memref<4x8x128xf32, #tpu.memory_space<vmem>>, vector<1x8x128xf32>
    %209 = vector.shape_cast %208 : vector<1x8x128xf32> to vector<8x128xf32>
    %210 = vector.shape_cast %207 : vector<8x128xf32> to vector<1x8x128xf32>
    tpu.vector_store %arg7[%c3_61, %c0_62, %c0_63], %210 {strides = array<i32>} : memref<4x8x128xf32, #tpu.memory_space<vmem>>, vector<1x8x128xf32>,
    %211 = vector.extract_strided_slice %6 {offsets = [16, 384], sizes = [8, 384], strides = [1, 1]} : vector<32x768xf32> to vector<8x384xf32>
    %212 = arith.truncf %202 : vector<8x128xf32> to vector<8x128xbf16>
    %cst_64 = arith.constant dense<0.000000e+00> : vector<8x384xf32>
    %213 = tpu.matmul %212, %167, %cst_64 {dimension_numbers = #tpu.dot_dimension_numbers<[1], [0], [0], [1], [0, 0, 1, 1], [], []>} : vector<8x128xbf16>, vector<128x384xbf16>, vector<8x384xf32> -> vector<8x384xf32>
    %214 = vector.broadcast %169 : vector<1x384xf32> to vector<8x384xf32>
    %215 = arith.addf %213, %214 : vector<8x384xf32>
    %216 = vector.extract_strided_slice %211 {offsets = [0, 0], sizes = [8, 128], strides = [1, 1]} : vector<8x384xf32> to vector<8x128xf32>
    %217 = vector.extract_strided_slice %215 {offsets = [0, 0], sizes = [8, 128], strides = [1, 1]} : vector<8x384xf32> to vector<8x128xf32>
    %218 = arith.addf %216, %217 : vector<8x128xf32>
    %219 = arith.negf %218 : vector<8x128xf32>
    %220 = math.exp %219 : vector<8x128xf32>
    %cst_65 = arith.constant 1.000000e+00 : f32
    %221 = vector.broadcast %cst_65 : f32 to vector<8x128xf32>
    %222 = arith.addf %221, %220 : vector<8x128xf32>
    %223 = arith.divf %221, %222 : vector<8x128xf32>
    %224 = vector.extract_strided_slice %211 {offsets = [0, 128], sizes = [8, 128], strides = [1, 1]} : vector<8x384xf32> to vector<8x128xf32>
    %225 = vector.extract_strided_slice %215 {offsets = [0, 128], sizes = [8, 128], strides = [1, 1]} : vector<8x384xf32> to vector<8x128xf32>
    %226 = arith.addf %224, %225 : vector<8x128xf32>
    %227 = arith.negf %226 : vector<8x128xf32>
    %228 = math.exp %227 : vector<8x128xf32>
    %cst_66 = arith.constant 1.000000e+00 : f32
    %229 = vector.broadcast %cst_66 : f32 to vector<8x128xf32>
    %230 = arith.addf %229, %228 : vector<8x128xf32>
    %231 = arith.divf %229, %230 : vector<8x128xf32>
    %232 = vector.extract_strided_slice %211 {offsets = [0, 256], sizes = [8, 128], strides = [1, 1]} : vector<8x384xf32> to vector<8x128xf32>
    %233 = vector.extract_strided_slice %215 {offsets = [0, 256], sizes = [8, 128], strides = [1, 1]} : vector<8x384xf32> to vector<8x128xf32>
    %234 = arith.mulf %223, %233 : vector<8x128xf32>
    %235 = arith.addf %232, %234 : vector<8x128xf32>
    %236 = math.tanh %235 : vector<8x128xf32>
    %cst_67 = arith.constant 1.000000e+00 : f32
    %237 = vector.broadcast %cst_67 : f32 to vector<8x128xf32>
    %238 = arith.subf %237, %231 : vector<8x128xf32>
    %239 = arith.mulf %238, %236 : vector<8x128xf32>
    %240 = arith.mulf %231, %202 : vector<8x128xf32>
    %241 = arith.addf %239, %240 : vector<8x128xf32>
    %c2_68 = arith.constant 2 : index
    %c0_69 = arith.constant 0 : index
    %c0_70 = arith.constant 0 : index
    %242 = vector.load %arg7[%c2_68, %c0_69, %c0_70] : memref<4x8x128xf32, #tpu.memory_space<vmem>>, vector<1x8x128xf32>
    %243 = vector.shape_cast %242 : vector<1x8x128xf32> to vector<8x128xf32>
    %244 = arith.truncf %241 : vector<8x128xf32> to vector<8x128xbf16>
    %cst_71 = arith.constant dense<0.000000e+00> : vector<8x128xf32>
    %245 = tpu.matmul %244, %170, %cst_71 {dimension_numbers = #tpu.dot_dimension_numbers<[1], [0], [0], [1], [0, 0, 1, 1], [], []>} : vector<8x128xbf16>, vector<128x128xbf16>, vector<8x128xf32> -> vector<8x128xf32>
    %246 = arith.addf %243, %245 : vector<8x128xf32>
    %c2_72 = arith.constant 2 : index
    %c0_73 = arith.constant 0 : index
    %c0_74 = arith.constant 0 : index
    %247 = vector.load %arg7[%c2_72, %c0_73, %c0_74] : memref<4x8x128xf32, #tpu.memory_space<vmem>>, vector<1x8x128xf32>
    %248 = vector.shape_cast %247 : vector<1x8x128xf32> to vector<8x128xf32>
    %249 = vector.shape_cast %246 : vector<8x128xf32> to vector<1x8x128xf32>
    tpu.vector_store %arg7[%c2_72, %c0_73, %c0_74], %249 {strides = array<i32>} : memref<4x8x128xf32, #tpu.memory_space<vmem>>, vector<1x8x128xf32>,
    %250 = vector.extract_strided_slice %6 {offsets = [8, 384], sizes = [8, 384], strides = [1, 1]} : vector<32x768xf32> to vector<8x384xf32>
    %251 = arith.truncf %241 : vector<8x128xf32> to vector<8x128xbf16>
    %cst_75 = arith.constant dense<0.000000e+00> : vector<8x384xf32>
    %252 = tpu.matmul %251, %167, %cst_75 {dimension_numbers = #tpu.dot_dimension_numbers<[1], [0], [0], [1], [0, 0, 1, 1], [], []>} : vector<8x128xbf16>, vector<128x384xbf16>, vector<8x384xf32> -> vector<8x384xf32>
    %253 = vector.broadcast %169 : vector<1x384xf32> to vector<8x384xf32>
    %254 = arith.addf %252, %253 : vector<8x384xf32>
    %255 = vector.extract_strided_slice %250 {offsets = [0, 0], sizes = [8, 128], strides = [1, 1]} : vector<8x384xf32> to vector<8x128xf32>
    %256 = vector.extract_strided_slice %254 {offsets = [0, 0], sizes = [8, 128], strides = [1, 1]} : vector<8x384xf32> to vector<8x128xf32>
    %257 = arith.addf %255, %256 : vector<8x128xf32>
    %258 = arith.negf %257 : vector<8x128xf32>
    %259 = math.exp %258 : vector<8x128xf32>
    %cst_76 = arith.constant 1.000000e+00 : f32
    %260 = vector.broadcast %cst_76 : f32 to vector<8x128xf32>
    %261 = arith.addf %260, %259 : vector<8x128xf32>
    %262 = arith.divf %260, %261 : vector<8x128xf32>
    %263 = vector.extract_strided_slice %250 {offsets = [0, 128], sizes = [8, 128], strides = [1, 1]} : vector<8x384xf32> to vector<8x128xf32>
    %264 = vector.extract_strided_slice %254 {offsets = [0, 128], sizes = [8, 128], strides = [1, 1]} : vector<8x384xf32> to vector<8x128xf32>
    %265 = arith.addf %263, %264 : vector<8x128xf32>
    %266 = arith.negf %265 : vector<8x128xf32>
    %267 = math.exp %266 : vector<8x128xf32>
    %cst_77 = arith.constant 1.000000e+00 : f32
    %268 = vector.broadcast %cst_77 : f32 to vector<8x128xf32>
    %269 = arith.addf %268, %267 : vector<8x128xf32>
    %270 = arith.divf %268, %269 : vector<8x128xf32>
    %271 = vector.extract_strided_slice %250 {offsets = [0, 256], sizes = [8, 128], strides = [1, 1]} : vector<8x384xf32> to vector<8x128xf32>
    %272 = vector.extract_strided_slice %254 {offsets = [0, 256], sizes = [8, 128], strides = [1, 1]} : vector<8x384xf32> to vector<8x128xf32>
    %273 = arith.mulf %262, %272 : vector<8x128xf32>
    %274 = arith.addf %271, %273 : vector<8x128xf32>
    %275 = math.tanh %274 : vector<8x128xf32>
    %cst_78 = arith.constant 1.000000e+00 : f32
    %276 = vector.broadcast %cst_78 : f32 to vector<8x128xf32>
    %277 = arith.subf %276, %270 : vector<8x128xf32>
    %278 = arith.mulf %277, %275 : vector<8x128xf32>
    %279 = arith.mulf %270, %241 : vector<8x128xf32>
    %280 = arith.addf %278, %279 : vector<8x128xf32>
    %c1_79 = arith.constant 1 : index
    %c0_80 = arith.constant 0 : index
    %c0_81 = arith.constant 0 : index
    %281 = vector.load %arg7[%c1_79, %c0_80, %c0_81] : memref<4x8x128xf32, #tpu.memory_space<vmem>>, vector<1x8x128xf32>
    %282 = vector.shape_cast %281 : vector<1x8x128xf32> to vector<8x128xf32>
    %283 = arith.truncf %280 : vector<8x128xf32> to vector<8x128xbf16>
    %cst_82 = arith.constant dense<0.000000e+00> : vector<8x128xf32>
    %284 = tpu.matmul %283, %170, %cst_82 {dimension_numbers = #tpu.dot_dimension_numbers<[1], [0], [0], [1], [0, 0, 1, 1], [], []>} : vector<8x128xbf16>, vector<128x128xbf16>, vector<8x128xf32> -> vector<8x128xf32>
    %285 = arith.addf %282, %284 : vector<8x128xf32>
    %c1_83 = arith.constant 1 : index
    %c0_84 = arith.constant 0 : index
    %c0_85 = arith.constant 0 : index
    %286 = vector.load %arg7[%c1_83, %c0_84, %c0_85] : memref<4x8x128xf32, #tpu.memory_space<vmem>>, vector<1x8x128xf32>
    %287 = vector.shape_cast %286 : vector<1x8x128xf32> to vector<8x128xf32>
    %288 = vector.shape_cast %285 : vector<8x128xf32> to vector<1x8x128xf32>
    tpu.vector_store %arg7[%c1_83, %c0_84, %c0_85], %288 {strides = array<i32>} : memref<4x8x128xf32, #tpu.memory_space<vmem>>, vector<1x8x128xf32>,
    %289 = vector.extract_strided_slice %6 {offsets = [0, 384], sizes = [8, 384], strides = [1, 1]} : vector<32x768xf32> to vector<8x384xf32>
    %290 = arith.truncf %280 : vector<8x128xf32> to vector<8x128xbf16>
    %cst_86 = arith.constant dense<0.000000e+00> : vector<8x384xf32>
    %291 = tpu.matmul %290, %167, %cst_86 {dimension_numbers = #tpu.dot_dimension_numbers<[1], [0], [0], [1], [0, 0, 1, 1], [], []>} : vector<8x128xbf16>, vector<128x384xbf16>, vector<8x384xf32> -> vector<8x384xf32>
    %292 = vector.broadcast %169 : vector<1x384xf32> to vector<8x384xf32>
    %293 = arith.addf %291, %292 : vector<8x384xf32>
    %294 = vector.extract_strided_slice %289 {offsets = [0, 0], sizes = [8, 128], strides = [1, 1]} : vector<8x384xf32> to vector<8x128xf32>
    %295 = vector.extract_strided_slice %293 {offsets = [0, 0], sizes = [8, 128], strides = [1, 1]} : vector<8x384xf32> to vector<8x128xf32>
    %296 = arith.addf %294, %295 : vector<8x128xf32>
    %297 = arith.negf %296 : vector<8x128xf32>
    %298 = math.exp %297 : vector<8x128xf32>
    %cst_87 = arith.constant 1.000000e+00 : f32
    %299 = vector.broadcast %cst_87 : f32 to vector<8x128xf32>
    %300 = arith.addf %299, %298 : vector<8x128xf32>
    %301 = arith.divf %299, %300 : vector<8x128xf32>
    %302 = vector.extract_strided_slice %289 {offsets = [0, 128], sizes = [8, 128], strides = [1, 1]} : vector<8x384xf32> to vector<8x128xf32>
    %303 = vector.extract_strided_slice %293 {offsets = [0, 128], sizes = [8, 128], strides = [1, 1]} : vector<8x384xf32> to vector<8x128xf32>
    %304 = arith.addf %302, %303 : vector<8x128xf32>
    %305 = arith.negf %304 : vector<8x128xf32>
    %306 = math.exp %305 : vector<8x128xf32>
    %cst_88 = arith.constant 1.000000e+00 : f32
    %307 = vector.broadcast %cst_88 : f32 to vector<8x128xf32>
    %308 = arith.addf %307, %306 : vector<8x128xf32>
    %309 = arith.divf %307, %308 : vector<8x128xf32>
    %310 = vector.extract_strided_slice %289 {offsets = [0, 256], sizes = [8, 128], strides = [1, 1]} : vector<8x384xf32> to vector<8x128xf32>
    %311 = vector.extract_strided_slice %293 {offsets = [0, 256], sizes = [8, 128], strides = [1, 1]} : vector<8x384xf32> to vector<8x128xf32>
    %312 = arith.mulf %301, %311 : vector<8x128xf32>
    %313 = arith.addf %310, %312 : vector<8x128xf32>
    %314 = math.tanh %313 : vector<8x128xf32>
    %cst_89 = arith.constant 1.000000e+00 : f32
    %315 = vector.broadcast %cst_89 : f32 to vector<8x128xf32>
    %316 = arith.subf %315, %309 : vector<8x128xf32>
    %317 = arith.mulf %316, %314 : vector<8x128xf32>
    %318 = arith.mulf %309, %280 : vector<8x128xf32>
    %319 = arith.addf %317, %318 : vector<8x128xf32>
    %c0_90 = arith.constant 0 : index
    %c0_91 = arith.constant 0 : index
    %c0_92 = arith.constant 0 : index
    %320 = vector.load %arg7[%c0_90, %c0_91, %c0_92] : memref<4x8x128xf32, #tpu.memory_space<vmem>>, vector<1x8x128xf32>
    %321 = vector.shape_cast %320 : vector<1x8x128xf32> to vector<8x128xf32>
    %322 = arith.truncf %319 : vector<8x128xf32> to vector<8x128xbf16>
    %cst_93 = arith.constant dense<0.000000e+00> : vector<8x128xf32>
    %323 = tpu.matmul %322, %170, %cst_93 {dimension_numbers = #tpu.dot_dimension_numbers<[1], [0], [0], [1], [0, 0, 1, 1], [], []>} : vector<8x128xbf16>, vector<128x128xbf16>, vector<8x128xf32> -> vector<8x128xf32>
    %324 = arith.addf %321, %323 : vector<8x128xf32>
    %c0_94 = arith.constant 0 : index
    %c0_95 = arith.constant 0 : index
    %c0_96 = arith.constant 0 : index
    %325 = vector.load %arg7[%c0_94, %c0_95, %c0_96] : memref<4x8x128xf32, #tpu.memory_space<vmem>>, vector<1x8x128xf32>
    %326 = vector.shape_cast %325 : vector<1x8x128xf32> to vector<8x128xf32>
    %327 = vector.shape_cast %324 : vector<8x128xf32> to vector<1x8x128xf32>
    tpu.vector_store %arg7[%c0_94, %c0_95, %c0_96], %327 {strides = array<i32>} : memref<4x8x128xf32, #tpu.memory_space<vmem>>, vector<1x8x128xf32>,
    return
  }
}

module attributes {stable_mosaic.version = 11 : i64} {
  func.func @_bigru_fc_kernel(%arg0: i32, %arg1: memref<1x32x16xf32, #tpu.memory_space<vmem>>, %arg2: memref<1x16x768xbf16, #tpu.memory_space<vmem>>, %arg3: memref<1x2x128x384xbf16, #tpu.memory_space<vmem>>, %arg4: memref<1x1x768xf32, #tpu.memory_space<vmem>>, %arg5: memref<1x2x1x384xf32, #tpu.memory_space<vmem>>, %arg6: memref<1x256x128xbf16, #tpu.memory_space<vmem>>, %arg7: memref<1x1x128xf32, #tpu.memory_space<vmem>>, %arg8: memref<4x8x128xf32, #tpu.memory_space<vmem>>) attributes {dimension_semantics = [#tpu.dimension_semantics<parallel>], iteration_bounds = array<i64: 5>, scalar_prefetch = 0 : i64, scratch_operands = 0 : i64, tpu.core_type = #tpu.core_type<tc>, window_params = [{transform_indices = @transform_0, window_bounds = array<i64: 1, 32, 16>}, {transform_indices = @transform_1, window_bounds = array<i64: 1, 16, 768>}, {transform_indices = @transform_2, window_bounds = array<i64: 1, 2, 128, 384>}, {transform_indices = @transform_3, window_bounds = array<i64: 1, 1, 768>}, {transform_indices = @transform_4, window_bounds = array<i64: 1, 2, 1, 384>}, {transform_indices = @transform_5, window_bounds = array<i64: 1, 256, 128>}, {transform_indices = @transform_6, window_bounds = array<i64: 1, 1, 128>}, {transform_indices = @transform_7, window_bounds = array<i64: 4, 8, 128>}]} {
    %c0 = arith.constant 0 : index
    %c0_0 = arith.constant 0 : index
    %c0_1 = arith.constant 0 : index
    %0 = vector.load %arg1[%c0, %c0_0, %c0_1] : memref<1x32x16xf32, #tpu.memory_space<vmem>>, vector<1x32x16xf32>
    %1 = vector.shape_cast %0 : vector<1x32x16xf32> to vector<32x16xf32>
    %2 = arith.truncf %1 : vector<32x16xf32> to vector<32x16xbf16>
    %c0_2 = arith.constant 0 : index
    %c0_3 = arith.constant 0 : index
    %c0_4 = arith.constant 0 : index
    %3 = vector.load %arg2[%c0_2, %c0_3, %c0_4] : memref<1x16x768xbf16, #tpu.memory_space<vmem>>, vector<1x16x768xbf16>
    %4 = vector.shape_cast %3 : vector<1x16x768xbf16> to vector<16x768xbf16>
    %cst = arith.constant dense<0.000000e+00> : vector<32x768xf32>
    %5 = tpu.matmul %2, %4, %cst {dimension_numbers = #tpu.dot_dimension_numbers<[1], [0], [0], [1], [0, 0, 1, 1], [], []>} : vector<32x16xbf16>, vector<16x768xbf16>, vector<32x768xf32> -> vector<32x768xf32>
    %c0_5 = arith.constant 0 : index
    %c0_6 = arith.constant 0 : index
    %c0_7 = arith.constant 0 : index
    %6 = vector.load %arg4[%c0_5, %c0_6, %c0_7] : memref<1x1x768xf32, #tpu.memory_space<vmem>>, vector<1x1x768xf32>
    %7 = vector.shape_cast %6 : vector<1x1x768xf32> to vector<1x768xf32>
    %8 = vector.broadcast %7 : vector<1x768xf32> to vector<32x768xf32>
    %9 = arith.addf %5, %8 : vector<32x768xf32>
    %c0_8 = arith.constant 0 : index
    %c0_9 = arith.constant 0 : index
    %c0_10 = arith.constant 0 : index
    %c0_11 = arith.constant 0 : index
    %10 = vector.load %arg3[%c0_8, %c0_9, %c0_10, %c0_11] : memref<1x2x128x384xbf16, #tpu.memory_space<vmem>>, vector<1x1x128x384xbf16>
    %11 = vector.shape_cast %10 : vector<1x1x128x384xbf16> to vector<128x384xbf16>
    %c0_12 = arith.constant 0 : index
    %c0_13 = arith.constant 0 : index
    %c0_14 = arith.constant 0 : index
    %c0_15 = arith.constant 0 : index
    %12 = vector.load %arg5[%c0_12, %c0_13, %c0_14, %c0_15] : memref<1x2x1x384xf32, #tpu.memory_space<vmem>>, vector<1x1x1x384xf32>
    %13 = vector.shape_cast %12 : vector<1x1x1x384xf32> to vector<1x384xf32>
    %c0_16 = arith.constant 0 : index
    %c0_17 = arith.constant 0 : index
    %c0_18 = arith.constant 0 : index
    %14 = vector.load %arg6[%c0_16, %c0_17, %c0_18] : memref<1x256x128xbf16, #tpu.memory_space<vmem>>, vector<1x128x128xbf16>
    %15 = vector.shape_cast %14 : vector<1x128x128xbf16> to vector<128x128xbf16>
    %c0_19 = arith.constant 0 : index
    %c0_20 = arith.constant 0 : index
    %c0_21 = arith.constant 0 : index
    %16 = vector.load %arg7[%c0_19, %c0_20, %c0_21] : memref<1x1x128xf32, #tpu.memory_space<vmem>>, vector<1x1x128xf32>
    %17 = vector.shape_cast %16 : vector<1x1x128xf32> to vector<1x128xf32>
    %cst_22 = arith.constant 0.000000e+00 : f32
    %18 = vector.broadcast %cst_22 : f32 to vector<8x128xf32>
    %19 = vector.extract_strided_slice %9 {offsets = [0, 0], sizes = [8, 384], strides = [1, 1]} : vector<32x768xf32> to vector<8x384xf32>
    %20 = arith.truncf %18 : vector<8x128xf32> to vector<8x128xbf16>
    %cst_23 = arith.constant dense<0.000000e+00> : vector<8x384xf32>
    %21 = tpu.matmul %20, %11, %cst_23 {dimension_numbers = #tpu.dot_dimension_numbers<[1], [0], [0], [1], [0, 0, 1, 1], [], []>} : vector<8x128xbf16>, vector<128x384xbf16>, vector<8x384xf32> -> vector<8x384xf32>
    %22 = vector.broadcast %13 : vector<1x384xf32> to vector<8x384xf32>
    %23 = arith.addf %21, %22 : vector<8x384xf32>
    %24 = vector.extract_strided_slice %19 {offsets = [0, 0], sizes = [8, 128], strides = [1, 1]} : vector<8x384xf32> to vector<8x128xf32>
    %25 = vector.extract_strided_slice %23 {offsets = [0, 0], sizes = [8, 128], strides = [1, 1]} : vector<8x384xf32> to vector<8x128xf32>
    %26 = arith.addf %24, %25 : vector<8x128xf32>
    %27 = arith.negf %26 : vector<8x128xf32>
    %28 = math.exp %27 : vector<8x128xf32>
    %cst_24 = arith.constant 1.000000e+00 : f32
    %29 = vector.broadcast %cst_24 : f32 to vector<8x128xf32>
    %30 = arith.addf %29, %28 : vector<8x128xf32>
    %31 = arith.divf %29, %30 : vector<8x128xf32>
    %32 = vector.extract_strided_slice %19 {offsets = [0, 128], sizes = [8, 128], strides = [1, 1]} : vector<8x384xf32> to vector<8x128xf32>
    %33 = vector.extract_strided_slice %23 {offsets = [0, 128], sizes = [8, 128], strides = [1, 1]} : vector<8x384xf32> to vector<8x128xf32>
    %34 = arith.addf %32, %33 : vector<8x128xf32>
    %35 = arith.negf %34 : vector<8x128xf32>
    %36 = math.exp %35 : vector<8x128xf32>
    %cst_25 = arith.constant 1.000000e+00 : f32
    %37 = vector.broadcast %cst_25 : f32 to vector<8x128xf32>
    %38 = arith.addf %37, %36 : vector<8x128xf32>
    %39 = arith.divf %37, %38 : vector<8x128xf32>
    %40 = vector.extract_strided_slice %19 {offsets = [0, 256], sizes = [8, 128], strides = [1, 1]} : vector<8x384xf32> to vector<8x128xf32>
    %41 = vector.extract_strided_slice %23 {offsets = [0, 256], sizes = [8, 128], strides = [1, 1]} : vector<8x384xf32> to vector<8x128xf32>
    %42 = arith.mulf %31, %41 : vector<8x128xf32>
    %43 = arith.addf %40, %42 : vector<8x128xf32>
    %44 = math.tanh %43 : vector<8x128xf32>
    %cst_26 = arith.constant 1.000000e+00 : f32
    %45 = vector.broadcast %cst_26 : f32 to vector<8x128xf32>
    %46 = arith.subf %45, %39 : vector<8x128xf32>
    %47 = arith.mulf %46, %44 : vector<8x128xf32>
    %48 = arith.mulf %39, %18 : vector<8x128xf32>
    %49 = arith.addf %47, %48 : vector<8x128xf32>
    %50 = arith.truncf %49 : vector<8x128xf32> to vector<8x128xbf16>
    %cst_27 = arith.constant dense<0.000000e+00> : vector<8x128xf32>
    %51 = tpu.matmul %50, %15, %cst_27 {dimension_numbers = #tpu.dot_dimension_numbers<[1], [0], [0], [1], [0, 0, 1, 1], [], []>} : vector<8x128xbf16>, vector<128x128xbf16>, vector<8x128xf32> -> vector<8x128xf32>
    %52 = vector.broadcast %17 : vector<1x128xf32> to vector<8x128xf32>
    %53 = arith.addf %51, %52 : vector<8x128xf32>
    %c0_28 = arith.constant 0 : index
    %c0_29 = arith.constant 0 : index
    %c0_30 = arith.constant 0 : index
    %54 = vector.load %arg8[%c0_28, %c0_29, %c0_30] : memref<4x8x128xf32, #tpu.memory_space<vmem>>, vector<1x8x128xf32>
    %55 = vector.shape_cast %54 : vector<1x8x128xf32> to vector<8x128xf32>
    %56 = vector.shape_cast %53 : vector<8x128xf32> to vector<1x8x128xf32>
    tpu.vector_store %arg8[%c0_28, %c0_29, %c0_30], %56 {strides = array<i32>} : memref<4x8x128xf32, #tpu.memory_space<vmem>>, vector<1x8x128xf32>,
    %57 = vector.extract_strided_slice %9 {offsets = [8, 0], sizes = [8, 384], strides = [1, 1]} : vector<32x768xf32> to vector<8x384xf32>
    %58 = arith.truncf %49 : vector<8x128xf32> to vector<8x128xbf16>
    %cst_31 = arith.constant dense<0.000000e+00> : vector<8x384xf32>
    %59 = tpu.matmul %58, %11, %cst_31 {dimension_numbers = #tpu.dot_dimension_numbers<[1], [0], [0], [1], [0, 0, 1, 1], [], []>} : vector<8x128xbf16>, vector<128x384xbf16>, vector<8x384xf32> -> vector<8x384xf32>
    %60 = vector.broadcast %13 : vector<1x384xf32> to vector<8x384xf32>
    %61 = arith.addf %59, %60 : vector<8x384xf32>
    %62 = vector.extract_strided_slice %57 {offsets = [0, 0], sizes = [8, 128], strides = [1, 1]} : vector<8x384xf32> to vector<8x128xf32>
    %63 = vector.extract_strided_slice %61 {offsets = [0, 0], sizes = [8, 128], strides = [1, 1]} : vector<8x384xf32> to vector<8x128xf32>
    %64 = arith.addf %62, %63 : vector<8x128xf32>
    %65 = arith.negf %64 : vector<8x128xf32>
    %66 = math.exp %65 : vector<8x128xf32>
    %cst_32 = arith.constant 1.000000e+00 : f32
    %67 = vector.broadcast %cst_32 : f32 to vector<8x128xf32>
    %68 = arith.addf %67, %66 : vector<8x128xf32>
    %69 = arith.divf %67, %68 : vector<8x128xf32>
    %70 = vector.extract_strided_slice %57 {offsets = [0, 128], sizes = [8, 128], strides = [1, 1]} : vector<8x384xf32> to vector<8x128xf32>
    %71 = vector.extract_strided_slice %61 {offsets = [0, 128], sizes = [8, 128], strides = [1, 1]} : vector<8x384xf32> to vector<8x128xf32>
    %72 = arith.addf %70, %71 : vector<8x128xf32>
    %73 = arith.negf %72 : vector<8x128xf32>
    %74 = math.exp %73 : vector<8x128xf32>
    %cst_33 = arith.constant 1.000000e+00 : f32
    %75 = vector.broadcast %cst_33 : f32 to vector<8x128xf32>
    %76 = arith.addf %75, %74 : vector<8x128xf32>
    %77 = arith.divf %75, %76 : vector<8x128xf32>
    %78 = vector.extract_strided_slice %57 {offsets = [0, 256], sizes = [8, 128], strides = [1, 1]} : vector<8x384xf32> to vector<8x128xf32>
    %79 = vector.extract_strided_slice %61 {offsets = [0, 256], sizes = [8, 128], strides = [1, 1]} : vector<8x384xf32> to vector<8x128xf32>
    %80 = arith.mulf %69, %79 : vector<8x128xf32>
    %81 = arith.addf %78, %80 : vector<8x128xf32>
    %82 = math.tanh %81 : vector<8x128xf32>
    %cst_34 = arith.constant 1.000000e+00 : f32
    %83 = vector.broadcast %cst_34 : f32 to vector<8x128xf32>
    %84 = arith.subf %83, %77 : vector<8x128xf32>
    %85 = arith.mulf %84, %82 : vector<8x128xf32>
    %86 = arith.mulf %77, %49 : vector<8x128xf32>
    %87 = arith.addf %85, %86 : vector<8x128xf32>
    %88 = arith.truncf %87 : vector<8x128xf32> to vector<8x128xbf16>
    %cst_35 = arith.constant dense<0.000000e+00> : vector<8x128xf32>
    %89 = tpu.matmul %88, %15, %cst_35 {dimension_numbers = #tpu.dot_dimension_numbers<[1], [0], [0], [1], [0, 0, 1, 1], [], []>} : vector<8x128xbf16>, vector<128x128xbf16>, vector<8x128xf32> -> vector<8x128xf32>
    %90 = vector.broadcast %17 : vector<1x128xf32> to vector<8x128xf32>
    %91 = arith.addf %89, %90 : vector<8x128xf32>
    %c1 = arith.constant 1 : index
    %c0_36 = arith.constant 0 : index
    %c0_37 = arith.constant 0 : index
    %92 = vector.load %arg8[%c1, %c0_36, %c0_37] : memref<4x8x128xf32, #tpu.memory_space<vmem>>, vector<1x8x128xf32>
    %93 = vector.shape_cast %92 : vector<1x8x128xf32> to vector<8x128xf32>
    %94 = vector.shape_cast %91 : vector<8x128xf32> to vector<1x8x128xf32>
    tpu.vector_store %arg8[%c1, %c0_36, %c0_37], %94 {strides = array<i32>} : memref<4x8x128xf32, #tpu.memory_space<vmem>>, vector<1x8x128xf32>,
    %95 = vector.extract_strided_slice %9 {offsets = [16, 0], sizes = [8, 384], strides = [1, 1]} : vector<32x768xf32> to vector<8x384xf32>
    %96 = arith.truncf %87 : vector<8x128xf32> to vector<8x128xbf16>
    %cst_38 = arith.constant dense<0.000000e+00> : vector<8x384xf32>
    %97 = tpu.matmul %96, %11, %cst_38 {dimension_numbers = #tpu.dot_dimension_numbers<[1], [0], [0], [1], [0, 0, 1, 1], [], []>} : vector<8x128xbf16>, vector<128x384xbf16>, vector<8x384xf32> -> vector<8x384xf32>
    %98 = vector.broadcast %13 : vector<1x384xf32> to vector<8x384xf32>
    %99 = arith.addf %97, %98 : vector<8x384xf32>
    %100 = vector.extract_strided_slice %95 {offsets = [0, 0], sizes = [8, 128], strides = [1, 1]} : vector<8x384xf32> to vector<8x128xf32>
    %101 = vector.extract_strided_slice %99 {offsets = [0, 0], sizes = [8, 128], strides = [1, 1]} : vector<8x384xf32> to vector<8x128xf32>
    %102 = arith.addf %100, %101 : vector<8x128xf32>
    %103 = arith.negf %102 : vector<8x128xf32>
    %104 = math.exp %103 : vector<8x128xf32>
    %cst_39 = arith.constant 1.000000e+00 : f32
    %105 = vector.broadcast %cst_39 : f32 to vector<8x128xf32>
    %106 = arith.addf %105, %104 : vector<8x128xf32>
    %107 = arith.divf %105, %106 : vector<8x128xf32>
    %108 = vector.extract_strided_slice %95 {offsets = [0, 128], sizes = [8, 128], strides = [1, 1]} : vector<8x384xf32> to vector<8x128xf32>
    %109 = vector.extract_strided_slice %99 {offsets = [0, 128], sizes = [8, 128], strides = [1, 1]} : vector<8x384xf32> to vector<8x128xf32>
    %110 = arith.addf %108, %109 : vector<8x128xf32>
    %111 = arith.negf %110 : vector<8x128xf32>
    %112 = math.exp %111 : vector<8x128xf32>
    %cst_40 = arith.constant 1.000000e+00 : f32
    %113 = vector.broadcast %cst_40 : f32 to vector<8x128xf32>
    %114 = arith.addf %113, %112 : vector<8x128xf32>
    %115 = arith.divf %113, %114 : vector<8x128xf32>
    %116 = vector.extract_strided_slice %95 {offsets = [0, 256], sizes = [8, 128], strides = [1, 1]} : vector<8x384xf32> to vector<8x128xf32>
    %117 = vector.extract_strided_slice %99 {offsets = [0, 256], sizes = [8, 128], strides = [1, 1]} : vector<8x384xf32> to vector<8x128xf32>
    %118 = arith.mulf %107, %117 : vector<8x128xf32>
    %119 = arith.addf %116, %118 : vector<8x128xf32>
    %120 = math.tanh %119 : vector<8x128xf32>
    %cst_41 = arith.constant 1.000000e+00 : f32
    %121 = vector.broadcast %cst_41 : f32 to vector<8x128xf32>
    %122 = arith.subf %121, %115 : vector<8x128xf32>
    %123 = arith.mulf %122, %120 : vector<8x128xf32>
    %124 = arith.mulf %115, %87 : vector<8x128xf32>
    %125 = arith.addf %123, %124 : vector<8x128xf32>
    %126 = arith.truncf %125 : vector<8x128xf32> to vector<8x128xbf16>
    %cst_42 = arith.constant dense<0.000000e+00> : vector<8x128xf32>
    %127 = tpu.matmul %126, %15, %cst_42 {dimension_numbers = #tpu.dot_dimension_numbers<[1], [0], [0], [1], [0, 0, 1, 1], [], []>} : vector<8x128xbf16>, vector<128x128xbf16>, vector<8x128xf32> -> vector<8x128xf32>
    %128 = vector.broadcast %17 : vector<1x128xf32> to vector<8x128xf32>
    %129 = arith.addf %127, %128 : vector<8x128xf32>
    %c2 = arith.constant 2 : index
    %c0_43 = arith.constant 0 : index
    %c0_44 = arith.constant 0 : index
    %130 = vector.load %arg8[%c2, %c0_43, %c0_44] : memref<4x8x128xf32, #tpu.memory_space<vmem>>, vector<1x8x128xf32>
    %131 = vector.shape_cast %130 : vector<1x8x128xf32> to vector<8x128xf32>
    %132 = vector.shape_cast %129 : vector<8x128xf32> to vector<1x8x128xf32>
    tpu.vector_store %arg8[%c2, %c0_43, %c0_44], %132 {strides = array<i32>} : memref<4x8x128xf32, #tpu.memory_space<vmem>>, vector<1x8x128xf32>,
    %133 = vector.extract_strided_slice %9 {offsets = [24, 0], sizes = [8, 384], strides = [1, 1]} : vector<32x768xf32> to vector<8x384xf32>
    %134 = arith.truncf %125 : vector<8x128xf32> to vector<8x128xbf16>
    %cst_45 = arith.constant dense<0.000000e+00> : vector<8x384xf32>
    %135 = tpu.matmul %134, %11, %cst_45 {dimension_numbers = #tpu.dot_dimension_numbers<[1], [0], [0], [1], [0, 0, 1, 1], [], []>} : vector<8x128xbf16>, vector<128x384xbf16>, vector<8x384xf32> -> vector<8x384xf32>
    %136 = vector.broadcast %13 : vector<1x384xf32> to vector<8x384xf32>
    %137 = arith.addf %135, %136 : vector<8x384xf32>
    %138 = vector.extract_strided_slice %133 {offsets = [0, 0], sizes = [8, 128], strides = [1, 1]} : vector<8x384xf32> to vector<8x128xf32>
    %139 = vector.extract_strided_slice %137 {offsets = [0, 0], sizes = [8, 128], strides = [1, 1]} : vector<8x384xf32> to vector<8x128xf32>
    %140 = arith.addf %138, %139 : vector<8x128xf32>
    %141 = arith.negf %140 : vector<8x128xf32>
    %142 = math.exp %141 : vector<8x128xf32>
    %cst_46 = arith.constant 1.000000e+00 : f32
    %143 = vector.broadcast %cst_46 : f32 to vector<8x128xf32>
    %144 = arith.addf %143, %142 : vector<8x128xf32>
    %145 = arith.divf %143, %144 : vector<8x128xf32>
    %146 = vector.extract_strided_slice %133 {offsets = [0, 128], sizes = [8, 128], strides = [1, 1]} : vector<8x384xf32> to vector<8x128xf32>
    %147 = vector.extract_strided_slice %137 {offsets = [0, 128], sizes = [8, 128], strides = [1, 1]} : vector<8x384xf32> to vector<8x128xf32>
    %148 = arith.addf %146, %147 : vector<8x128xf32>
    %149 = arith.negf %148 : vector<8x128xf32>
    %150 = math.exp %149 : vector<8x128xf32>
    %cst_47 = arith.constant 1.000000e+00 : f32
    %151 = vector.broadcast %cst_47 : f32 to vector<8x128xf32>
    %152 = arith.addf %151, %150 : vector<8x128xf32>
    %153 = arith.divf %151, %152 : vector<8x128xf32>
    %154 = vector.extract_strided_slice %133 {offsets = [0, 256], sizes = [8, 128], strides = [1, 1]} : vector<8x384xf32> to vector<8x128xf32>
    %155 = vector.extract_strided_slice %137 {offsets = [0, 256], sizes = [8, 128], strides = [1, 1]} : vector<8x384xf32> to vector<8x128xf32>
    %156 = arith.mulf %145, %155 : vector<8x128xf32>
    %157 = arith.addf %154, %156 : vector<8x128xf32>
    %158 = math.tanh %157 : vector<8x128xf32>
    %cst_48 = arith.constant 1.000000e+00 : f32
    %159 = vector.broadcast %cst_48 : f32 to vector<8x128xf32>
    %160 = arith.subf %159, %153 : vector<8x128xf32>
    %161 = arith.mulf %160, %158 : vector<8x128xf32>
    %162 = arith.mulf %153, %125 : vector<8x128xf32>
    %163 = arith.addf %161, %162 : vector<8x128xf32>
    %164 = arith.truncf %163 : vector<8x128xf32> to vector<8x128xbf16>
    %cst_49 = arith.constant dense<0.000000e+00> : vector<8x128xf32>
    %165 = tpu.matmul %164, %15, %cst_49 {dimension_numbers = #tpu.dot_dimension_numbers<[1], [0], [0], [1], [0, 0, 1, 1], [], []>} : vector<8x128xbf16>, vector<128x128xbf16>, vector<8x128xf32> -> vector<8x128xf32>
    %166 = vector.broadcast %17 : vector<1x128xf32> to vector<8x128xf32>
    %167 = arith.addf %165, %166 : vector<8x128xf32>
    %c3 = arith.constant 3 : index
    %c0_50 = arith.constant 0 : index
    %c0_51 = arith.constant 0 : index
    %168 = vector.load %arg8[%c3, %c0_50, %c0_51] : memref<4x8x128xf32, #tpu.memory_space<vmem>>, vector<1x8x128xf32>
    %169 = vector.shape_cast %168 : vector<1x8x128xf32> to vector<8x128xf32>
    %170 = vector.shape_cast %167 : vector<8x128xf32> to vector<1x8x128xf32>
    tpu.vector_store %arg8[%c3, %c0_50, %c0_51], %170 {strides = array<i32>} : memref<4x8x128xf32, #tpu.memory_space<vmem>>, vector<1x8x128xf32>,
    %c0_52 = arith.constant 0 : index
    %c1_53 = arith.constant 1 : index
    %c0_54 = arith.constant 0 : index
    %c0_55 = arith.constant 0 : index
    %171 = vector.load %arg3[%c0_52, %c1_53, %c0_54, %c0_55] : memref<1x2x128x384xbf16, #tpu.memory_space<vmem>>, vector<1x1x128x384xbf16>
    %172 = vector.shape_cast %171 : vector<1x1x128x384xbf16> to vector<128x384xbf16>
    %c0_56 = arith.constant 0 : index
    %c1_57 = arith.constant 1 : index
    %c0_58 = arith.constant 0 : index
    %c0_59 = arith.constant 0 : index
    %173 = vector.load %arg5[%c0_56, %c1_57, %c0_58, %c0_59] : memref<1x2x1x384xf32, #tpu.memory_space<vmem>>, vector<1x1x1x384xf32>
    %174 = vector.shape_cast %173 : vector<1x1x1x384xf32> to vector<1x384xf32>
    %c0_60 = arith.constant 0 : index
    %c128 = arith.constant 128 : index
    %c0_61 = arith.constant 0 : index
    %175 = vector.load %arg6[%c0_60, %c128, %c0_61] : memref<1x256x128xbf16, #tpu.memory_space<vmem>>, vector<1x128x128xbf16>
    %176 = vector.shape_cast %175 : vector<1x128x128xbf16> to vector<128x128xbf16>
    %cst_62 = arith.constant 0.000000e+00 : f32
    %177 = vector.broadcast %cst_62 : f32 to vector<8x128xf32>
    %178 = vector.extract_strided_slice %9 {offsets = [24, 384], sizes = [8, 384], strides = [1, 1]} : vector<32x768xf32> to vector<8x384xf32>
    %179 = arith.truncf %177 : vector<8x128xf32> to vector<8x128xbf16>
    %cst_63 = arith.constant dense<0.000000e+00> : vector<8x384xf32>
    %180 = tpu.matmul %179, %172, %cst_63 {dimension_numbers = #tpu.dot_dimension_numbers<[1], [0], [0], [1], [0, 0, 1, 1], [], []>} : vector<8x128xbf16>, vector<128x384xbf16>, vector<8x384xf32> -> vector<8x384xf32>
    %181 = vector.broadcast %174 : vector<1x384xf32> to vector<8x384xf32>
    %182 = arith.addf %180, %181 : vector<8x384xf32>
    %183 = vector.extract_strided_slice %178 {offsets = [0, 0], sizes = [8, 128], strides = [1, 1]} : vector<8x384xf32> to vector<8x128xf32>
    %184 = vector.extract_strided_slice %182 {offsets = [0, 0], sizes = [8, 128], strides = [1, 1]} : vector<8x384xf32> to vector<8x128xf32>
    %185 = arith.addf %183, %184 : vector<8x128xf32>
    %186 = arith.negf %185 : vector<8x128xf32>
    %187 = math.exp %186 : vector<8x128xf32>
    %cst_64 = arith.constant 1.000000e+00 : f32
    %188 = vector.broadcast %cst_64 : f32 to vector<8x128xf32>
    %189 = arith.addf %188, %187 : vector<8x128xf32>
    %190 = arith.divf %188, %189 : vector<8x128xf32>
    %191 = vector.extract_strided_slice %178 {offsets = [0, 128], sizes = [8, 128], strides = [1, 1]} : vector<8x384xf32> to vector<8x128xf32>
    %192 = vector.extract_strided_slice %182 {offsets = [0, 128], sizes = [8, 128], strides = [1, 1]} : vector<8x384xf32> to vector<8x128xf32>
    %193 = arith.addf %191, %192 : vector<8x128xf32>
    %194 = arith.negf %193 : vector<8x128xf32>
    %195 = math.exp %194 : vector<8x128xf32>
    %cst_65 = arith.constant 1.000000e+00 : f32
    %196 = vector.broadcast %cst_65 : f32 to vector<8x128xf32>
    %197 = arith.addf %196, %195 : vector<8x128xf32>
    %198 = arith.divf %196, %197 : vector<8x128xf32>
    %199 = vector.extract_strided_slice %178 {offsets = [0, 256], sizes = [8, 128], strides = [1, 1]} : vector<8x384xf32> to vector<8x128xf32>
    %200 = vector.extract_strided_slice %182 {offsets = [0, 256], sizes = [8, 128], strides = [1, 1]} : vector<8x384xf32> to vector<8x128xf32>
    %201 = arith.mulf %190, %200 : vector<8x128xf32>
    %202 = arith.addf %199, %201 : vector<8x128xf32>
    %203 = math.tanh %202 : vector<8x128xf32>
    %cst_66 = arith.constant 1.000000e+00 : f32
    %204 = vector.broadcast %cst_66 : f32 to vector<8x128xf32>
    %205 = arith.subf %204, %198 : vector<8x128xf32>
    %206 = arith.mulf %205, %203 : vector<8x128xf32>
    %207 = arith.mulf %198, %177 : vector<8x128xf32>
    %208 = arith.addf %206, %207 : vector<8x128xf32>
    %c3_67 = arith.constant 3 : index
    %c0_68 = arith.constant 0 : index
    %c0_69 = arith.constant 0 : index
    %209 = vector.load %arg8[%c3_67, %c0_68, %c0_69] : memref<4x8x128xf32, #tpu.memory_space<vmem>>, vector<1x8x128xf32>
    %210 = vector.shape_cast %209 : vector<1x8x128xf32> to vector<8x128xf32>
    %211 = arith.truncf %208 : vector<8x128xf32> to vector<8x128xbf16>
    %cst_70 = arith.constant dense<0.000000e+00> : vector<8x128xf32>
    %212 = tpu.matmul %211, %176, %cst_70 {dimension_numbers = #tpu.dot_dimension_numbers<[1], [0], [0], [1], [0, 0, 1, 1], [], []>} : vector<8x128xbf16>, vector<128x128xbf16>, vector<8x128xf32> -> vector<8x128xf32>
    %213 = arith.addf %210, %212 : vector<8x128xf32>
    %c3_71 = arith.constant 3 : index
    %c0_72 = arith.constant 0 : index
    %c0_73 = arith.constant 0 : index
    %214 = vector.load %arg8[%c3_71, %c0_72, %c0_73] : memref<4x8x128xf32, #tpu.memory_space<vmem>>, vector<1x8x128xf32>
    %215 = vector.shape_cast %214 : vector<1x8x128xf32> to vector<8x128xf32>
    %216 = vector.shape_cast %213 : vector<8x128xf32> to vector<1x8x128xf32>
    tpu.vector_store %arg8[%c3_71, %c0_72, %c0_73], %216 {strides = array<i32>} : memref<4x8x128xf32, #tpu.memory_space<vmem>>, vector<1x8x128xf32>,
    %217 = vector.extract_strided_slice %9 {offsets = [16, 384], sizes = [8, 384], strides = [1, 1]} : vector<32x768xf32> to vector<8x384xf32>
    %218 = arith.truncf %208 : vector<8x128xf32> to vector<8x128xbf16>
    %cst_74 = arith.constant dense<0.000000e+00> : vector<8x384xf32>
    %219 = tpu.matmul %218, %172, %cst_74 {dimension_numbers = #tpu.dot_dimension_numbers<[1], [0], [0], [1], [0, 0, 1, 1], [], []>} : vector<8x128xbf16>, vector<128x384xbf16>, vector<8x384xf32> -> vector<8x384xf32>
    %220 = vector.broadcast %174 : vector<1x384xf32> to vector<8x384xf32>
    %221 = arith.addf %219, %220 : vector<8x384xf32>
    %222 = vector.extract_strided_slice %217 {offsets = [0, 0], sizes = [8, 128], strides = [1, 1]} : vector<8x384xf32> to vector<8x128xf32>
    %223 = vector.extract_strided_slice %221 {offsets = [0, 0], sizes = [8, 128], strides = [1, 1]} : vector<8x384xf32> to vector<8x128xf32>
    %224 = arith.addf %222, %223 : vector<8x128xf32>
    %225 = arith.negf %224 : vector<8x128xf32>
    %226 = math.exp %225 : vector<8x128xf32>
    %cst_75 = arith.constant 1.000000e+00 : f32
    %227 = vector.broadcast %cst_75 : f32 to vector<8x128xf32>
    %228 = arith.addf %227, %226 : vector<8x128xf32>
    %229 = arith.divf %227, %228 : vector<8x128xf32>
    %230 = vector.extract_strided_slice %217 {offsets = [0, 128], sizes = [8, 128], strides = [1, 1]} : vector<8x384xf32> to vector<8x128xf32>
    %231 = vector.extract_strided_slice %221 {offsets = [0, 128], sizes = [8, 128], strides = [1, 1]} : vector<8x384xf32> to vector<8x128xf32>
    %232 = arith.addf %230, %231 : vector<8x128xf32>
    %233 = arith.negf %232 : vector<8x128xf32>
    %234 = math.exp %233 : vector<8x128xf32>
    %cst_76 = arith.constant 1.000000e+00 : f32
    %235 = vector.broadcast %cst_76 : f32 to vector<8x128xf32>
    %236 = arith.addf %235, %234 : vector<8x128xf32>
    %237 = arith.divf %235, %236 : vector<8x128xf32>
    %238 = vector.extract_strided_slice %217 {offsets = [0, 256], sizes = [8, 128], strides = [1, 1]} : vector<8x384xf32> to vector<8x128xf32>
    %239 = vector.extract_strided_slice %221 {offsets = [0, 256], sizes = [8, 128], strides = [1, 1]} : vector<8x384xf32> to vector<8x128xf32>
    %240 = arith.mulf %229, %239 : vector<8x128xf32>
    %241 = arith.addf %238, %240 : vector<8x128xf32>
    %242 = math.tanh %241 : vector<8x128xf32>
    %cst_77 = arith.constant 1.000000e+00 : f32
    %243 = vector.broadcast %cst_77 : f32 to vector<8x128xf32>
    %244 = arith.subf %243, %237 : vector<8x128xf32>
    %245 = arith.mulf %244, %242 : vector<8x128xf32>
    %246 = arith.mulf %237, %208 : vector<8x128xf32>
    %247 = arith.addf %245, %246 : vector<8x128xf32>
    %c2_78 = arith.constant 2 : index
    %c0_79 = arith.constant 0 : index
    %c0_80 = arith.constant 0 : index
    %248 = vector.load %arg8[%c2_78, %c0_79, %c0_80] : memref<4x8x128xf32, #tpu.memory_space<vmem>>, vector<1x8x128xf32>
    %249 = vector.shape_cast %248 : vector<1x8x128xf32> to vector<8x128xf32>
    %250 = arith.truncf %247 : vector<8x128xf32> to vector<8x128xbf16>
    %cst_81 = arith.constant dense<0.000000e+00> : vector<8x128xf32>
    %251 = tpu.matmul %250, %176, %cst_81 {dimension_numbers = #tpu.dot_dimension_numbers<[1], [0], [0], [1], [0, 0, 1, 1], [], []>} : vector<8x128xbf16>, vector<128x128xbf16>, vector<8x128xf32> -> vector<8x128xf32>
    %252 = arith.addf %249, %251 : vector<8x128xf32>
    %c2_82 = arith.constant 2 : index
    %c0_83 = arith.constant 0 : index
    %c0_84 = arith.constant 0 : index
    %253 = vector.load %arg8[%c2_82, %c0_83, %c0_84] : memref<4x8x128xf32, #tpu.memory_space<vmem>>, vector<1x8x128xf32>
    %254 = vector.shape_cast %253 : vector<1x8x128xf32> to vector<8x128xf32>
    %255 = vector.shape_cast %252 : vector<8x128xf32> to vector<1x8x128xf32>
    tpu.vector_store %arg8[%c2_82, %c0_83, %c0_84], %255 {strides = array<i32>} : memref<4x8x128xf32, #tpu.memory_space<vmem>>, vector<1x8x128xf32>,
    %256 = vector.extract_strided_slice %9 {offsets = [8, 384], sizes = [8, 384], strides = [1, 1]} : vector<32x768xf32> to vector<8x384xf32>
    %257 = arith.truncf %247 : vector<8x128xf32> to vector<8x128xbf16>
    %cst_85 = arith.constant dense<0.000000e+00> : vector<8x384xf32>
    %258 = tpu.matmul %257, %172, %cst_85 {dimension_numbers = #tpu.dot_dimension_numbers<[1], [0], [0], [1], [0, 0, 1, 1], [], []>} : vector<8x128xbf16>, vector<128x384xbf16>, vector<8x384xf32> -> vector<8x384xf32>
    %259 = vector.broadcast %174 : vector<1x384xf32> to vector<8x384xf32>
    %260 = arith.addf %258, %259 : vector<8x384xf32>
    %261 = vector.extract_strided_slice %256 {offsets = [0, 0], sizes = [8, 128], strides = [1, 1]} : vector<8x384xf32> to vector<8x128xf32>
    %262 = vector.extract_strided_slice %260 {offsets = [0, 0], sizes = [8, 128], strides = [1, 1]} : vector<8x384xf32> to vector<8x128xf32>
    %263 = arith.addf %261, %262 : vector<8x128xf32>
    %264 = arith.negf %263 : vector<8x128xf32>
    %265 = math.exp %264 : vector<8x128xf32>
    %cst_86 = arith.constant 1.000000e+00 : f32
    %266 = vector.broadcast %cst_86 : f32 to vector<8x128xf32>
    %267 = arith.addf %266, %265 : vector<8x128xf32>
    %268 = arith.divf %266, %267 : vector<8x128xf32>
    %269 = vector.extract_strided_slice %256 {offsets = [0, 128], sizes = [8, 128], strides = [1, 1]} : vector<8x384xf32> to vector<8x128xf32>
    %270 = vector.extract_strided_slice %260 {offsets = [0, 128], sizes = [8, 128], strides = [1, 1]} : vector<8x384xf32> to vector<8x128xf32>
    %271 = arith.addf %269, %270 : vector<8x128xf32>
    %272 = arith.negf %271 : vector<8x128xf32>
    %273 = math.exp %272 : vector<8x128xf32>
    %cst_87 = arith.constant 1.000000e+00 : f32
    %274 = vector.broadcast %cst_87 : f32 to vector<8x128xf32>
    %275 = arith.addf %274, %273 : vector<8x128xf32>
    %276 = arith.divf %274, %275 : vector<8x128xf32>
    %277 = vector.extract_strided_slice %256 {offsets = [0, 256], sizes = [8, 128], strides = [1, 1]} : vector<8x384xf32> to vector<8x128xf32>
    %278 = vector.extract_strided_slice %260 {offsets = [0, 256], sizes = [8, 128], strides = [1, 1]} : vector<8x384xf32> to vector<8x128xf32>
    %279 = arith.mulf %268, %278 : vector<8x128xf32>
    %280 = arith.addf %277, %279 : vector<8x128xf32>
    %281 = math.tanh %280 : vector<8x128xf32>
    %cst_88 = arith.constant 1.000000e+00 : f32
    %282 = vector.broadcast %cst_88 : f32 to vector<8x128xf32>
    %283 = arith.subf %282, %276 : vector<8x128xf32>
    %284 = arith.mulf %283, %281 : vector<8x128xf32>
    %285 = arith.mulf %276, %247 : vector<8x128xf32>
    %286 = arith.addf %284, %285 : vector<8x128xf32>
    %c1_89 = arith.constant 1 : index
    %c0_90 = arith.constant 0 : index
    %c0_91 = arith.constant 0 : index
    %287 = vector.load %arg8[%c1_89, %c0_90, %c0_91] : memref<4x8x128xf32, #tpu.memory_space<vmem>>, vector<1x8x128xf32>
    %288 = vector.shape_cast %287 : vector<1x8x128xf32> to vector<8x128xf32>
    %289 = arith.truncf %286 : vector<8x128xf32> to vector<8x128xbf16>
    %cst_92 = arith.constant dense<0.000000e+00> : vector<8x128xf32>
    %290 = tpu.matmul %289, %176, %cst_92 {dimension_numbers = #tpu.dot_dimension_numbers<[1], [0], [0], [1], [0, 0, 1, 1], [], []>} : vector<8x128xbf16>, vector<128x128xbf16>, vector<8x128xf32> -> vector<8x128xf32>
    %291 = arith.addf %288, %290 : vector<8x128xf32>
    %c1_93 = arith.constant 1 : index
    %c0_94 = arith.constant 0 : index
    %c0_95 = arith.constant 0 : index
    %292 = vector.load %arg8[%c1_93, %c0_94, %c0_95] : memref<4x8x128xf32, #tpu.memory_space<vmem>>, vector<1x8x128xf32>
    %293 = vector.shape_cast %292 : vector<1x8x128xf32> to vector<8x128xf32>
    %294 = vector.shape_cast %291 : vector<8x128xf32> to vector<1x8x128xf32>
    tpu.vector_store %arg8[%c1_93, %c0_94, %c0_95], %294 {strides = array<i32>} : memref<4x8x128xf32, #tpu.memory_space<vmem>>, vector<1x8x128xf32>,
    %295 = vector.extract_strided_slice %9 {offsets = [0, 384], sizes = [8, 384], strides = [1, 1]} : vector<32x768xf32> to vector<8x384xf32>
    %296 = arith.truncf %286 : vector<8x128xf32> to vector<8x128xbf16>
    %cst_96 = arith.constant dense<0.000000e+00> : vector<8x384xf32>
    %297 = tpu.matmul %296, %172, %cst_96 {dimension_numbers = #tpu.dot_dimension_numbers<[1], [0], [0], [1], [0, 0, 1, 1], [], []>} : vector<8x128xbf16>, vector<128x384xbf16>, vector<8x384xf32> -> vector<8x384xf32>
    %298 = vector.broadcast %174 : vector<1x384xf32> to vector<8x384xf32>
    %299 = arith.addf %297, %298 : vector<8x384xf32>
    %300 = vector.extract_strided_slice %295 {offsets = [0, 0], sizes = [8, 128], strides = [1, 1]} : vector<8x384xf32> to vector<8x128xf32>
    %301 = vector.extract_strided_slice %299 {offsets = [0, 0], sizes = [8, 128], strides = [1, 1]} : vector<8x384xf32> to vector<8x128xf32>
    %302 = arith.addf %300, %301 : vector<8x128xf32>
    %303 = arith.negf %302 : vector<8x128xf32>
    %304 = math.exp %303 : vector<8x128xf32>
    %cst_97 = arith.constant 1.000000e+00 : f32
    %305 = vector.broadcast %cst_97 : f32 to vector<8x128xf32>
    %306 = arith.addf %305, %304 : vector<8x128xf32>
    %307 = arith.divf %305, %306 : vector<8x128xf32>
    %308 = vector.extract_strided_slice %295 {offsets = [0, 128], sizes = [8, 128], strides = [1, 1]} : vector<8x384xf32> to vector<8x128xf32>
    %309 = vector.extract_strided_slice %299 {offsets = [0, 128], sizes = [8, 128], strides = [1, 1]} : vector<8x384xf32> to vector<8x128xf32>
    %310 = arith.addf %308, %309 : vector<8x128xf32>
    %311 = arith.negf %310 : vector<8x128xf32>
    %312 = math.exp %311 : vector<8x128xf32>
    %cst_98 = arith.constant 1.000000e+00 : f32
    %313 = vector.broadcast %cst_98 : f32 to vector<8x128xf32>
    %314 = arith.addf %313, %312 : vector<8x128xf32>
    %315 = arith.divf %313, %314 : vector<8x128xf32>
    %316 = vector.extract_strided_slice %295 {offsets = [0, 256], sizes = [8, 128], strides = [1, 1]} : vector<8x384xf32> to vector<8x128xf32>
    %317 = vector.extract_strided_slice %299 {offsets = [0, 256], sizes = [8, 128], strides = [1, 1]} : vector<8x384xf32> to vector<8x128xf32>
    %318 = arith.mulf %307, %317 : vector<8x128xf32>
    %319 = arith.addf %316, %318 : vector<8x128xf32>
    %320 = math.tanh %319 : vector<8x128xf32>
    %cst_99 = arith.constant 1.000000e+00 : f32
    %321 = vector.broadcast %cst_99 : f32 to vector<8x128xf32>
    %322 = arith.subf %321, %315 : vector<8x128xf32>
    %323 = arith.mulf %322, %320 : vector<8x128xf32>
    %324 = arith.mulf %315, %286 : vector<8x128xf32>
    %325 = arith.addf %323, %324 : vector<8x128xf32>
    %c0_100 = arith.constant 0 : index
    %c0_101 = arith.constant 0 : index
    %c0_102 = arith.constant 0 : index
    %326 = vector.load %arg8[%c0_100, %c0_101, %c0_102] : memref<4x8x128xf32, #tpu.memory_space<vmem>>, vector<1x8x128xf32>
    %327 = vector.shape_cast %326 : vector<1x8x128xf32> to vector<8x128xf32>
    %328 = arith.truncf %325 : vector<8x128xf32> to vector<8x128xbf16>
    %cst_103 = arith.constant dense<0.000000e+00> : vector<8x128xf32>
    %329 = tpu.matmul %328, %176, %cst_103 {dimension_numbers = #tpu.dot_dimension_numbers<[1], [0], [0], [1], [0, 0, 1, 1], [], []>} : vector<8x128xbf16>, vector<128x128xbf16>, vector<8x128xf32> -> vector<8x128xf32>
    %330 = arith.addf %327, %329 : vector<8x128xf32>
    %c0_104 = arith.constant 0 : index
    %c0_105 = arith.constant 0 : index
    %c0_106 = arith.constant 0 : index
    %331 = vector.load %arg8[%c0_104, %c0_105, %c0_106] : memref<4x8x128xf32, #tpu.memory_space<vmem>>, vector<1x8x128xf32>
    %332 = vector.shape_cast %331 : vector<1x8x128xf32> to vector<8x128xf32>
    %333 = vector.shape_cast %330 : vector<8x128xf32> to vector<1x8x128xf32>
    tpu.vector_store %arg8[%c0_104, %c0_105, %c0_106], %333 {strides = array<i32>} : memref<4x8x128xf32, #tpu.memory_space<vmem>>, vector<1x8x128xf32>,
    return
  }
  func.func @transform_0(%arg0: i32) -> (i32, i32, i32) {
    %c0_i32 = arith.constant 0 : i32
    %c0_i32_0 = arith.constant 0 : i32
    %c0_i32_1 = arith.constant 0 : i32
    return %arg0, %c0_i32, %c0_i32_0 : i32, i32, i32
  }
  func.func @transform_1(%arg0: i32) -> (i32, i32, i32) {
    %c0_i32 = arith.constant 0 : i32
    %c0_i32_0 = arith.constant 0 : i32
    %c0_i32_1 = arith.constant 0 : i32
    return %arg0, %c0_i32, %c0_i32_0 : i32, i32, i32
  }
  func.func @transform_2(%arg0: i32) -> (i32, i32, i32, i32) {
    %c0_i32 = arith.constant 0 : i32
    %c0_i32_0 = arith.constant 0 : i32
    %c0_i32_1 = arith.constant 0 : i32
    %c0_i32_2 = arith.constant 0 : i32
    return %arg0, %c0_i32, %c0_i32_0, %c0_i32_1 : i32, i32, i32, i32
  }
  func.func @transform_3(%arg0: i32) -> (i32, i32, i32) {
    %c0_i32 = arith.constant 0 : i32
    %c0_i32_0 = arith.constant 0 : i32
    %c0_i32_1 = arith.constant 0 : i32
    return %arg0, %c0_i32, %c0_i32_0 : i32, i32, i32
  }
  func.func @transform_4(%arg0: i32) -> (i32, i32, i32, i32) {
    %c0_i32 = arith.constant 0 : i32
    %c0_i32_0 = arith.constant 0 : i32
    %c0_i32_1 = arith.constant 0 : i32
    %c0_i32_2 = arith.constant 0 : i32
    return %arg0, %c0_i32, %c0_i32_0, %c0_i32_1 : i32, i32, i32, i32
  }
  func.func @transform_5(%arg0: i32) -> (i32, i32, i32) {
    %c0_i32 = arith.constant 0 : i32
    %c0_i32_0 = arith.constant 0 : i32
    %c0_i32_1 = arith.constant 0 : i32
    return %arg0, %c0_i32, %c0_i32_0 : i32, i32, i32
  }
  func.func @transform_6(%arg0: i32) -> (i32, i32, i32) {
    %c0_i32 = arith.constant 0 : i32
    %c0_i32_0 = arith.constant 0 : i32
    %c0_i32_1 = arith.constant 0 : i32
    return %arg0, %c0_i32, %c0_i32_0 : i32, i32, i32
  }
  func.func @transform_7(%arg0: i32) -> (i32, i32, i32) {
    %c0_i32 = arith.constant 0 : i32
    %c0_i32_0 = arith.constant 0 : i32
    %c0_i32_1 = arith.constant 0 : i32
    return %c0_i32, %c0_i32_0, %arg0 : i32, i32, i32
  }
}

module attributes {stable_mosaic.version = 11 : i64} {
  func.func @_linear_kernel(%arg0: memref<4x1024xf32, #tpu.memory_space<vmem>>, %arg1: memref<1024x128xbf16, #tpu.memory_space<vmem>>, %arg2: memref<1x128xf32, #tpu.memory_space<vmem>>, %arg3: memref<4x128xf32, #tpu.memory_space<vmem>>) attributes {dimension_semantics = [], scalar_prefetch = 0 : i64, scratch_operands = 0 : i64, tpu.core_type = #tpu.core_type<tc>} {
    %c0 = arith.constant 0 : index
    %c0_0 = arith.constant 0 : index
    %0 = vector.load %arg0[%c0, %c0_0] : memref<4x1024xf32, #tpu.memory_space<vmem>>, vector<4x1024xf32>
    %1 = arith.truncf %0 : vector<4x1024xf32> to vector<4x1024xbf16>
    %c0_1 = arith.constant 0 : index
    %c0_2 = arith.constant 0 : index
    %2 = vector.load %arg1[%c0_1, %c0_2] : memref<1024x128xbf16, #tpu.memory_space<vmem>>, vector<1024x128xbf16>
    %cst = arith.constant dense<0.000000e+00> : vector<4x128xf32>
    %3 = tpu.matmul %1, %2, %cst {dimension_numbers = #tpu.dot_dimension_numbers<[1], [0], [0], [1], [0, 0, 1, 1], [], []>} : vector<4x1024xbf16>, vector<1024x128xbf16>, vector<4x128xf32> -> vector<4x128xf32>
    %c0_3 = arith.constant 0 : index
    %c0_4 = arith.constant 0 : index
    %4 = vector.load %arg2[%c0_3, %c0_4] : memref<1x128xf32, #tpu.memory_space<vmem>>, vector<1x128xf32>
    %5 = vector.broadcast %4 : vector<1x128xf32> to vector<4x128xf32>
    %6 = arith.addf %3, %5 : vector<4x128xf32>
    %c0_5 = arith.constant 0 : index
    %c0_6 = arith.constant 0 : index
    %7 = vector.load %arg3[%c0_5, %c0_6] : memref<4x128xf32, #tpu.memory_space<vmem>>, vector<4x128xf32>
    tpu.vector_store %arg3[%c0_5, %c0_6], %6 {strides = array<i32>} : memref<4x128xf32, #tpu.memory_space<vmem>>, vector<4x128xf32>,
    return
  }
}

</mosaic_0001>

<llo_original>
// kernel: forward.5
$region0: #{forward.5}
  #allocation0 [shape = 'u32[]', space=smem, size = 0x4, offset = 0x4, fixed_abs, tag = 'smem constant byte address 0x4 - core index']
  #allocation1 [shape = 'u32[144,128]{1,0:T(1,128)}', space=vmem, size = 0x12000, scoped, tag = 'internal scratch']
  %s0 = inlined_call_operand.vmem [shape: f32[4,1024], index: 0, kind: input, shape index: {}]
  %s1 = inlined_call_operand.vmem [shape: bf16[1024,128], index: 1, kind: input, shape index: {}]
  %s2 = inlined_call_operand.vmem [shape: f32[1,128], index: 2, kind: input, shape index: {}]
  %s3 = inlined_call_operand.hbm [shape: f32[4,128], index: 3, kind: output, shape index: {}]
  %s4 = sld [smem:[#allocation0]]
  $region22: #{forward.5} parent=0
    _
  %s6 = ssub.s32 1, %s4
  %s7 = scalar_select 0, %s6, %s4
  $region1: #{forward.5} parent=0
    #allocation2 [shape = 'u8[2048]{0}', space=vmem, size = 0x800, scoped, tag = 'output window, operand 0, single buffered']
    #allocation3 [shape = 's32[1]{0}', space=sflag, size = 0x4, scoped, tag = 'scoped memory for forward.5']
    %8 = vsyncpa [#allocation3], 0
    // Predicated region
    $region2: #{forward.5} parent=1 // pred_check
      _
    $region3: #{forward.5} parent=1 // pred_check_branch
      %10 = sbr.rel (0) target = $region5
    $region4: #{forward.5} parent=1 // pred_region
      _
    $region5: #{forward.5} parent=1 // pred_fallthru
      _
    // Predicated region
    $region6: #{forward.5} parent=1 // pred_check
      _
    $region7: #{forward.5} parent=1 // pred_check_branch
      %12 = sbr.rel (0) target = $region9
    $region8: #{forward.5} parent=1 // pred_region
      _
    $region9: #{forward.5} parent=1 // pred_fallthru
      _
    // Predicated region
    $region10: #{forward.5} parent=1 // pred_check
      _
    $region11: #{forward.5} parent=1 // pred_check_branch
      %14 = sbr.rel (0) target = $region13
    $region12: #{forward.5} parent=1 // pred_region
      _
    $region13: #{forward.5} parent=1 // pred_fallthru
      _
    %v16 = vld [vmem:[%s0] sm:$0xff]
    %v17 = vld [vmem:[%s0 + $0x8] sm:$0xff]
    %v18 = vld [vmem:[%s0 + $0x10] sm:$0xff]
    %v19 = vld [vmem:[%s0 + $0x18] sm:$0xff]
    %v24 = vcombine.high %v16, %v16
    %v25 = vcombine.high %v17, %v17
    %v26 = vcombine.high %v18, %v18
    %v27 = vcombine.high %v19, %v19
    %v32 = vpack.c.bf16 %v16, %v16
    %v33 = vpack.c.bf16 %v24, %v24
    %v34 = vpack.c.bf16 %v17, %v17
    %v35 = vpack.c.bf16 %v25, %v25
    %v36 = vpack.c.bf16 %v18, %v18
    %v37 = vpack.c.bf16 %v26, %v26
    %v38 = vpack.c.bf16 %v19, %v19
    %v39 = vpack.c.bf16 %v27, %v27
    %v40 = vld [vmem:[%s1] sm:$0xf]
    %v41 = vld [vmem:[%s1 + $0x4] sm:$0xf]
    %v42 = vld [vmem:[%s1 + $0x8] sm:$0xf]
    %v43 = vld [vmem:[%s1 + $0xc] sm:$0xf]
    %v44 = vld [vmem:[%s1 + $0x10] sm:$0xf]
    %v45 = vld [vmem:[%s1 + $0x14] sm:$0xf]
    %v46 = vld [vmem:[%s1 + $0x18] sm:$0xf]
    %v47 = vld [vmem:[%s1 + $0x1c] sm:$0xf]
    %v48 = vld [vmem:[%s1 + $0x20] sm:$0xf]
    %v49 = vld [vmem:[%s1 + $0x24] sm:$0xf]
    %v50 = vld [vmem:[%s1 + $0x28] sm:$0xf]
    %v51 = vld [vmem:[%s1 + $0x2c] sm:$0xf]
    %v52 = vld [vmem:[%s1 + $0x30] sm:$0xf]
    %v53 = vld [vmem:[%s1 + $0x34] sm:$0xf]
    %v54 = vld [vmem:[%s1 + $0x38] sm:$0xf]
    %v55 = vld [vmem:[%s1 + $0x3c] sm:$0xf]
    %v56 = vld [vmem:[%s1 + $0x40] sm:$0xf]
    %v57 = vld [vmem:[%s1 + $0x44] sm:$0xf]
    %v58 = vld [vmem:[%s1 + $0x48] sm:$0xf]
    %v59 = vld [vmem:[%s1 + $0x4c] sm:$0xf]
    %v60 = vld [vmem:[%s1 + $0x50] sm:$0xf]
    %v61 = vld [vmem:[%s1 + $0x54] sm:$0xf]
    %v62 = vld [vmem:[%s1 + $0x58] sm:$0xf]
    %v63 = vld [vmem:[%s1 + $0x5c] sm:$0xf]
    %v64 = vld [vmem:[%s1 + $0x60] sm:$0xf]
    %v65 = vld [vmem:[%s1 + $0x64] sm:$0xf]
    %v66 = vld [vmem:[%s1 + $0x68] sm:$0xf]
    %v67 = vld [vmem:[%s1 + $0x6c] sm:$0xf]
    %v68 = vld [vmem:[%s1 + $0x70] sm:$0xf]
    %v69 = vld [vmem:[%s1 + $0x74] sm:$0xf]
    %v70 = vld [vmem:[%s1 + $0x78] sm:$0xf]
    %v71 = vld [vmem:[%s1 + $0x7c] sm:$0xf]
    %v72 = vld [vmem:[%s1 + $0x80] sm:$0xf]
    %v73 = vld [vmem:[%s1 + $0x84] sm:$0xf]
    %v74 = vld [vmem:[%s1 + $0x88] sm:$0xf]
    %v75 = vld [vmem:[%s1 + $0x8c] sm:$0xf]
    %v76 = vld [vmem:[%s1 + $0x90] sm:$0xf]
    %v77 = vld [vmem:[%s1 + $0x94] sm:$0xf]
    %v78 = vld [vmem:[%s1 + $0x98] sm:$0xf]
    %v79 = vld [vmem:[%s1 + $0x9c] sm:$0xf]
    %v80 = vld [vmem:[%s1 + $0xa0] sm:$0xf]
    %v81 = vld [vmem:[%s1 + $0xa4] sm:$0xf]
    %v82 = vld [vmem:[%s1 + $0xa8] sm:$0xf]
    %v83 = vld [vmem:[%s1 + $0xac] sm:$0xf]
    %v84 = vld [vmem:[%s1 + $0xb0] sm:$0xf]
    %v85 = vld [vmem:[%s1 + $0xb4] sm:$0xf]
    %v86 = vld [vmem:[%s1 + $0xb8] sm:$0xf]
    %v87 = vld [vmem:[%s1 + $0xbc] sm:$0xf]
    %v88 = vld [vmem:[%s1 + $0xc0] sm:$0xf]
    %v89 = vld [vmem:[%s1 + $0xc4] sm:$0xf]
    %v90 = vld [vmem:[%s1 + $0xc8] sm:$0xf]
    %v91 = vld [vmem:[%s1 + $0xcc] sm:$0xf]
    %v92 = vld [vmem:[%s1 + $0xd0] sm:$0xf]
    %v93 = vld [vmem:[%s1 + $0xd4] sm:$0xf]
    %v94 = vld [vmem:[%s1 + $0xd8] sm:$0xf]
    %v95 = vld [vmem:[%s1 + $0xdc] sm:$0xf]
    %v96 = vld [vmem:[%s1 + $0xe0] sm:$0xf]
    %v97 = vld [vmem:[%s1 + $0xe4] sm:$0xf]
    %v98 = vld [vmem:[%s1 + $0xe8] sm:$0xf]
    %v99 = vld [vmem:[%s1 + $0xec] sm:$0xf]
    %v100 = vld [vmem:[%s1 + $0xf0] sm:$0xf]
    %v101 = vld [vmem:[%s1 + $0xf4] sm:$0xf]
    %v102 = vld [vmem:[%s1 + $0xf8] sm:$0xf]
    %v103 = vld [vmem:[%s1 + $0xfc] sm:$0xf]
    %v104 = vld [vmem:[%s1 + $0x100] sm:$0xf]
    %v105 = vld [vmem:[%s1 + $0x104] sm:$0xf]
    %v106 = vld [vmem:[%s1 + $0x108] sm:$0xf]
    %v107 = vld [vmem:[%s1 + $0x10c] sm:$0xf]
    %v108 = vld [vmem:[%s1 + $0x110] sm:$0xf]
    %v109 = vld [vmem:[%s1 + $0x114] sm:$0xf]
    %v110 = vld [vmem:[%s1 + $0x118] sm:$0xf]
    %v111 = vld [vmem:[%s1 + $0x11c] sm:$0xf]
    %v112 = vld [vmem:[%s1 + $0x120] sm:$0xf]
    %v113 = vld [vmem:[%s1 + $0x124] sm:$0xf]
    %v114 = vld [vmem:[%s1 + $0x128] sm:$0xf]
    %v115 = vld [vmem:[%s1 + $0x12c] sm:$0xf]
    %v116 = vld [vmem:[%s1 + $0x130] sm:$0xf]
    %v117 = vld [vmem:[%s1 + $0x134] sm:$0xf]
    %v118 = vld [vmem:[%s1 + $0x138] sm:$0xf]
    %v119 = vld [vmem:[%s1 + $0x13c] sm:$0xf]
    %v120 = vld [vmem:[%s1 + $0x140] sm:$0xf]
    %v121 = vld [vmem:[%s1 + $0x144] sm:$0xf]
    %v122 = vld [vmem:[%s1 + $0x148] sm:$0xf]
    %v123 = vld [vmem:[%s1 + $0x14c] sm:$0xf]
    %v124 = vld [vmem:[%s1 + $0x150] sm:$0xf]
    %v125 = vld [vmem:[%s1 + $0x154] sm:$0xf]
    %v126 = vld [vmem:[%s1 + $0x158] sm:$0xf]
    %v127 = vld [vmem:[%s1 + $0x15c] sm:$0xf]
    %v128 = vld [vmem:[%s1 + $0x160] sm:$0xf]
    %v129 = vld [vmem:[%s1 + $0x164] sm:$0xf]
    %v130 = vld [vmem:[%s1 + $0x168] sm:$0xf]
    %v131 = vld [vmem:[%s1 + $0x16c] sm:$0xf]
    %v132 = vld [vmem:[%s1 + $0x170] sm:$0xf]
    %v133 = vld [vmem:[%s1 + $0x174] sm:$0xf]
    %v134 = vld [vmem:[%s1 + $0x178] sm:$0xf]
    %v135 = vld [vmem:[%s1 + $0x17c] sm:$0xf]
    %v136 = vld [vmem:[%s1 + $0x180] sm:$0xf]
    %v137 = vld [vmem:[%s1 + $0x184] sm:$0xf]
    %v138 = vld [vmem:[%s1 + $0x188] sm:$0xf]
    %v139 = vld [vmem:[%s1 + $0x18c] sm:$0xf]
    %v140 = vld [vmem:[%s1 + $0x190] sm:$0xf]
    %v141 = vld [vmem:[%s1 + $0x194] sm:$0xf]
    %v142 = vld [vmem:[%s1 + $0x198] sm:$0xf]
    %v143 = vld [vmem:[%s1 + $0x19c] sm:$0xf]
    %v144 = vld [vmem:[%s1 + $0x1a0] sm:$0xf]
    %v145 = vld [vmem:[%s1 + $0x1a4] sm:$0xf]
    %v146 = vld [vmem:[%s1 + $0x1a8] sm:$0xf]
    %v147 = vld [vmem:[%s1 + $0x1ac] sm:$0xf]
    %v148 = vld [vmem:[%s1 + $0x1b0] sm:$0xf]
    %v149 = vld [vmem:[%s1 + $0x1b4] sm:$0xf]
    %v150 = vld [vmem:[%s1 + $0x1b8] sm:$0xf]
    %v151 = vld [vmem:[%s1 + $0x1bc] sm:$0xf]
    %v152 = vld [vmem:[%s1 + $0x1c0] sm:$0xf]
    %v153 = vld [vmem:[%s1 + $0x1c4] sm:$0xf]
    %v154 = vld [vmem:[%s1 + $0x1c8] sm:$0xf]
    %v155 = vld [vmem:[%s1 + $0x1cc] sm:$0xf]
    %v156 = vld [vmem:[%s1 + $0x1d0] sm:$0xf]
    %v157 = vld [vmem:[%s1 + $0x1d4] sm:$0xf]
    %v158 = vld [vmem:[%s1 + $0x1d8] sm:$0xf]
    %v159 = vld [vmem:[%s1 + $0x1dc] sm:$0xf]
    %v160 = vld [vmem:[%s1 + $0x1e0] sm:$0xf]
    %v161 = vld [vmem:[%s1 + $0x1e4] sm:$0xf]
    %v162 = vld [vmem:[%s1 + $0x1e8] sm:$0xf]
    %v163 = vld [vmem:[%s1 + $0x1ec] sm:$0xf]
    %v164 = vld [vmem:[%s1 + $0x1f0] sm:$0xf]
    %v165 = vld [vmem:[%s1 + $0x1f4] sm:$0xf]
    %v166 = vld [vmem:[%s1 + $0x1f8] sm:$0xf]
    %v167 = vld [vmem:[%s1 + $0x1fc] sm:$0xf]
    %v168 = vld [vmem:[%s2] sm:$0x1]
    %v170 = vlaneseq
    %v171 = vshrl.u32 %v170, 7
    %v172 = vsub.s32 0, %v171
    %v173 = vrot.slane %v168, %v172
    %v303 = vunpack.c.l.b16 %v40
    %v304 = vunpack.c.l.b16 %v41
    %v305 = vunpack.c.l.b16 %v42
    %v306 = vunpack.c.l.b16 %v43
    %v307 = vunpack.c.l.b16 %v44
    %v308 = vunpack.c.l.b16 %v45
    %v309 = vunpack.c.l.b16 %v46
    %v310 = vunpack.c.l.b16 %v47
    %v311 = vunpack.c.l.b16 %v48
    %v312 = vunpack.c.l.b16 %v49
    %v313 = vunpack.c.l.b16 %v50
    %v314 = vunpack.c.l.b16 %v51
    %v315 = vunpack.c.l.b16 %v52
    %v316 = vunpack.c.l.b16 %v53
    %v317 = vunpack.c.l.b16 %v54
    %v318 = vunpack.c.l.b16 %v55
    %v319 = vunpack.c.l.b16 %v56
    %v320 = vunpack.c.l.b16 %v57
    %v321 = vunpack.c.l.b16 %v58
    %v322 = vunpack.c.l.b16 %v59
    %v323 = vunpack.c.l.b16 %v60
    %v324 = vunpack.c.l.b16 %v61
    %v325 = vunpack.c.l.b16 %v62
    %v326 = vunpack.c.l.b16 %v63
    %v327 = vunpack.c.l.b16 %v64
    %v328 = vunpack.c.l.b16 %v65
    %v329 = vunpack.c.l.b16 %v66
    %v330 = vunpack.c.l.b16 %v67
    %v331 = vunpack.c.l.b16 %v68
    %v332 = vunpack.c.l.b16 %v69
    %v333 = vunpack.c.l.b16 %v70
    %v334 = vunpack.c.l.b16 %v71
    %v335 = vunpack.c.l.b16 %v72
    %v336 = vunpack.c.l.b16 %v73
    %v337 = vunpack.c.l.b16 %v74
    %v338 = vunpack.c.l.b16 %v75
    %v339 = vunpack.c.l.b16 %v76
    %v340 = vunpack.c.l.b16 %v77
    %v341 = vunpack.c.l.b16 %v78
    %v342 = vunpack.c.l.b16 %v79
    %v343 = vunpack.c.l.b16 %v80
    %v344 = vunpack.c.l.b16 %v81
    %v345 = vunpack.c.l.b16 %v82
    %v346 = vunpack.c.l.b16 %v83
    %v347 = vunpack.c.l.b16 %v84
    %v348 = vunpack.c.l.b16 %v85
    %v349 = vunpack.c.l.b16 %v86
    %v350 = vunpack.c.l.b16 %v87
    %v351 = vunpack.c.l.b16 %v88
    %v352 = vunpack.c.l.b16 %v89
    %v353 = vunpack.c.l.b16 %v90
    %v354 = vunpack.c.l.b16 %v91
    %v355 = vunpack.c.l.b16 %v92
    %v356 = vunpack.c.l.b16 %v93
    %v357 = vunpack.c.l.b16 %v94
    %v358 = vunpack.c.l.b16 %v95
    %v359 = vunpack.c.l.b16 %v96
    %v360 = vunpack.c.l.b16 %v97
    %v361 = vunpack.c.l.b16 %v98
    %v362 = vunpack.c.l.b16 %v99
    %v363 = vunpack.c.l.b16 %v100
    %v364 = vunpack.c.l.b16 %v101
    %v365 = vunpack.c.l.b16 %v102
    %v366 = vunpack.c.l.b16 %v103
    %v367 = vunpack.c.l.b16 %v104
    %v368 = vunpack.c.l.b16 %v105
    %v369 = vunpack.c.l.b16 %v106
    %v370 = vunpack.c.l.b16 %v107
    %v371 = vunpack.c.l.b16 %v108
    %v372 = vunpack.c.l.b16 %v109
    %v373 = vunpack.c.l.b16 %v110
    %v374 = vunpack.c.l.b16 %v111
    %v375 = vunpack.c.l.b16 %v112
    %v376 = vunpack.c.l.b16 %v113
    %v377 = vunpack.c.l.b16 %v114
    %v378 = vunpack.c.l.b16 %v115
    %v379 = vunpack.c.l.b16 %v116
    %v380 = vunpack.c.l.b16 %v117
    %v381 = vunpack.c.l.b16 %v118
    %v382 = vunpack.c.l.b16 %v119
    %v383 = vunpack.c.l.b16 %v120
    %v384 = vunpack.c.l.b16 %v121
    %v385 = vunpack.c.l.b16 %v122
    %v386 = vunpack.c.l.b16 %v123
    %v387 = vunpack.c.l.b16 %v124
    %v388 = vunpack.c.l.b16 %v125
    %v389 = vunpack.c.l.b16 %v126
    %v390 = vunpack.c.l.b16 %v127
    %v391 = vunpack.c.l.b16 %v128
    %v392 = vunpack.c.l.b16 %v129
    %v393 = vunpack.c.l.b16 %v130
    %v394 = vunpack.c.l.b16 %v131
    %v395 = vunpack.c.l.b16 %v132
    %v396 = vunpack.c.l.b16 %v133
    %v397 = vunpack.c.l.b16 %v134
    %v398 = vunpack.c.l.b16 %v135
    %v399 = vunpack.c.l.b16 %v136
    %v400 = vunpack.c.l.b16 %v137
    %v401 = vunpack.c.l.b16 %v138
    %v402 = vunpack.c.l.b16 %v139
    %v403 = vunpack.c.l.b16 %v140
    %v404 = vunpack.c.l.b16 %v141
    %v405 = vunpack.c.l.b16 %v142
    %v406 = vunpack.c.l.b16 %v143
    %v407 = vunpack.c.l.b16 %v144
    %v408 = vunpack.c.l.b16 %v145
    %v409 = vunpack.c.l.b16 %v146
    %v410 = vunpack.c.l.b16 %v147
    %v411 = vunpack.c.l.b16 %v148
    %v412 = vunpack.c.l.b16 %v149
    %v413 = vunpack.c.l.b16 %v150
    %v414 = vunpack.c.l.b16 %v151
    %v415 = vunpack.c.l.b16 %v152
    %v416 = vunpack.c.l.b16 %v153
    %v417 = vunpack.c.l.b16 %v154
    %v418 = vunpack.c.l.b16 %v155
    %v419 = vunpack.c.l.b16 %v156
    %v420 = vunpack.c.l.b16 %v157
    %v421 = vunpack.c.l.b16 %v158
    %v422 = vunpack.c.l.b16 %v159
    %v423 = vunpack.c.l.b16 %v160
    %v424 = vunpack.c.l.b16 %v161
    %v425 = vunpack.c.l.b16 %v162
    %v426 = vunpack.c.l.b16 %v163
    %v427 = vunpack.c.l.b16 %v164
    %v428 = vunpack.c.l.b16 %v165
    %v429 = vunpack.c.l.b16 %v166
    %v430 = vunpack.c.l.b16 %v167
    %v431 = vpack.c.b16 %v304, %v303
    %v432 = vpack.c.b16 %v306, %v305
    %v433 = vpack.c.b16 %v308, %v307
    %v434 = vpack.c.b16 %v310, %v309
    %v435 = vpack.c.b16 %v312, %v311
    %v436 = vpack.c.b16 %v314, %v313
    %v437 = vpack.c.b16 %v316, %v315
    %v438 = vpack.c.b16 %v318, %v317
    %v439 = vpack.c.b16 %v320, %v319
    %v440 = vpack.c.b16 %v322, %v321
    %v441 = vpack.c.b16 %v324, %v323
    %v442 = vpack.c.b16 %v326, %v325
    %v443 = vpack.c.b16 %v328, %v327
    %v444 = vpack.c.b16 %v330, %v329
    %v445 = vpack.c.b16 %v332, %v331
    %v446 = vpack.c.b16 %v334, %v333
    %v447 = vpack.c.b16 %v336, %v335
    %v448 = vpack.c.b16 %v338, %v337
    %v449 = vpack.c.b16 %v340, %v339
    %v450 = vpack.c.b16 %v342, %v341
    %v451 = vpack.c.b16 %v344, %v343
    %v452 = vpack.c.b16 %v346, %v345
    %v453 = vpack.c.b16 %v348, %v347
    %v454 = vpack.c.b16 %v350, %v349
    %v455 = vpack.c.b16 %v352, %v351
    %v456 = vpack.c.b16 %v354, %v353
    %v457 = vpack.c.b16 %v356, %v355
    %v458 = vpack.c.b16 %v358, %v357
    %v459 = vpack.c.b16 %v360, %v359
    %v460 = vpack.c.b16 %v362, %v361
    %v461 = vpack.c.b16 %v364, %v363
    %v462 = vpack.c.b16 %v366, %v365
    %v463 = vpack.c.b16 %v368, %v367
    %v464 = vpack.c.b16 %v370, %v369
    %v465 = vpack.c.b16 %v372, %v371
    %v466 = vpack.c.b16 %v374, %v373
    %v467 = vpack.c.b16 %v376, %v375
    %v468 = vpack.c.b16 %v378, %v377
    %v469 = vpack.c.b16 %v380, %v379
    %v470 = vpack.c.b16 %v382, %v381
    %v471 = vpack.c.b16 %v384, %v383
    %v472 = vpack.c.b16 %v386, %v385
    %v473 = vpack.c.b16 %v388, %v387
    %v474 = vpack.c.b16 %v390, %v389
    %v475 = vpack.c.b16 %v392, %v391
    %v476 = vpack.c.b16 %v394, %v393
    %v477 = vpack.c.b16 %v396, %v395
    %v478 = vpack.c.b16 %v398, %v397
    %v479 = vpack.c.b16 %v400, %v399
    %v480 = vpack.c.b16 %v402, %v401
    %v481 = vpack.c.b16 %v404, %v403
    %v482 = vpack.c.b16 %v406, %v405
    %v483 = vpack.c.b16 %v408, %v407
    %v484 = vpack.c.b16 %v410, %v409
    %v485 = vpack.c.b16 %v412, %v411
    %v486 = vpack.c.b16 %v414, %v413
    %v487 = vpack.c.b16 %v416, %v415
    %v488 = vpack.c.b16 %v418, %v417
    %v489 = vpack.c.b16 %v420, %v419
    %v490 = vpack.c.b16 %v422, %v421
    %v491 = vpack.c.b16 %v424, %v423
    %v492 = vpack.c.b16 %v426, %v425
    %v493 = vpack.c.b16 %v428, %v427
    %v494 = vpack.c.b16 %v430, %v429
    %559 = vmatprep.subr.bf16.mxu0 0
    %560 = vmatpush1.bf16.msra.mxu0 %v438
    %561 = vmatprep.subr.bf16.mxu0 0
    %562 = vmatpush1.bf16.msra.mxu0 %v437
    %563 = vmatprep.subr.bf16.mxu0 0
    %564 = vmatpush1.bf16.msra.mxu0 %v436
    %565 = vmatprep.subr.bf16.mxu0 0
    %566 = vmatpush1.bf16.msra.mxu0 %v435
    %567 = vmatprep.subr.bf16.mxu0 0
    %568 = vmatpush1.bf16.msra.mxu0 %v434
    %569 = vmatprep.subr.bf16.mxu0 0
    %570 = vmatpush1.bf16.msra.mxu0 %v433
    %571 = vmatprep.subr.bf16.mxu0 0
    %572 = vmatpush1.bf16.msra.mxu0 %v432
    %573 = vmatprep.subr.bf16.mxu0 0
    %574 = vmatpush1.bf16.msra.mxu0 %v431
    %575 = vmatprep.subr.bf16.mxu0 0
    %576 = vmatpush2.bf16.msra.mxu0 %v446
    %577 = vmatprep.subr.bf16.mxu0 0
    %578 = vmatpush2.bf16.msra.mxu0 %v445
    %579 = vmatprep.subr.bf16.mxu0 0
    %580 = vmatpush2.bf16.msra.mxu0 %v444
    %581 = vmatprep.subr.bf16.mxu0 0
    %582 = vmatpush2.bf16.msra.mxu0 %v443
    %583 = vmatprep.subr.bf16.mxu0 0
    %584 = vmatpush2.bf16.msra.mxu0 %v442
    %585 = vmatprep.subr.bf16.mxu0 0
    %586 = vmatpush2.bf16.msra.mxu0 %v441
    %587 = vmatprep.subr.bf16.mxu0 0
    %588 = vmatpush2.bf16.msra.mxu0 %v440
    %589 = vmatprep.subr.bf16.mxu0 0
    %590 = vmatpush2.bf16.msra.mxu0 %v439
    %591 = vmatprep.mubr.bf16.mxu0 %v33
    %592 = vmatmul.mubr.bf16.gmra.mxu0 %v32
    %v593 = vpop.f32.mrf.mxu0
    %v594 = vadd.f32 %v173, %v593
    %v595 = vpop.f32.mrf.mxu0
    %v596 = vpop.f32.mrf.mxu0
    %v597 = vpop.f32.mrf.mxu0
    %598 = vdwg.mxu0
    %599 = vmatprep.subr.bf16.mxu0 0
    %600 = vmatpush1.bf16.msra.mxu0 %v454
    %601 = vmatprep.subr.bf16.mxu0 0
    %602 = vmatpush1.bf16.msra.mxu0 %v453
    %603 = vmatprep.subr.bf16.mxu0 0
    %604 = vmatpush1.bf16.msra.mxu0 %v452
    %605 = vmatprep.subr.bf16.mxu0 0
    %606 = vmatpush1.bf16.msra.mxu0 %v451
    %607 = vmatprep.subr.bf16.mxu0 0
    %608 = vmatpush1.bf16.msra.mxu0 %v450
    %609 = vmatprep.subr.bf16.mxu0 0
    %610 = vmatpush1.bf16.msra.mxu0 %v449
    %611 = vmatprep.subr.bf16.mxu0 0
    %612 = vmatpush1.bf16.msra.mxu0 %v448
    %613 = vmatprep.subr.bf16.mxu0 0
    %614 = vmatpush1.bf16.msra.mxu0 %v447
    %615 = vmatprep.subr.bf16.mxu0 0
    %616 = vmatpush2.bf16.msra.mxu0 %v462
    %617 = vmatprep.subr.bf16.mxu0 0
    %618 = vmatpush2.bf16.msra.mxu0 %v461
    %619 = vmatprep.subr.bf16.mxu0 0
    %620 = vmatpush2.bf16.msra.mxu0 %v460
    %621 = vmatprep.subr.bf16.mxu0 0
    %622 = vmatpush2.bf16.msra.mxu0 %v459
    %623 = vmatprep.subr.bf16.mxu0 0
    %624 = vmatpush2.bf16.msra.mxu0 %v458
    %625 = vmatprep.subr.bf16.mxu0 0
    %626 = vmatpush2.bf16.msra.mxu0 %v457
    %627 = vmatprep.subr.bf16.mxu0 0
    %628 = vmatpush2.bf16.msra.mxu0 %v456
    %629 = vmatprep.subr.bf16.mxu0 0
    %630 = vmatpush2.bf16.msra.mxu0 %v455
    %631 = vmatprep.mubr.bf16.mxu0 %v35
    %632 = vmatmul.mubr.bf16.gmra.mxu0 %v34
    %v633 = vpop.f32.mrf.mxu0
    %v634 = vadd.f32 %v594, %v633
    %v635 = vpop.f32.mrf.mxu0
    %v636 = vpop.f32.mrf.mxu0
    %v637 = vpop.f32.mrf.mxu0
    %638 = vdwg.mxu0
    %639 = vmatprep.subr.bf16.mxu0 0
    %640 = vmatpush1.bf16.msra.mxu0 %v470
    %641 = vmatprep.subr.bf16.mxu0 0
    %642 = vmatpush1.bf16.msra.mxu0 %v469
    %643 = vmatprep.subr.bf16.mxu0 0
    %644 = vmatpush1.bf16.msra.mxu0 %v468
    %645 = vmatprep.subr.bf16.mxu0 0
    %646 = vmatpush1.bf16.msra.mxu0 %v467
    %647 = vmatprep.subr.bf16.mxu0 0
    %648 = vmatpush1.bf16.msra.mxu0 %v466
    %649 = vmatprep.subr.bf16.mxu0 0
    %650 = vmatpush1.bf16.msra.mxu0 %v465
    %651 = vmatprep.subr.bf16.mxu0 0
    %652 = vmatpush1.bf16.msra.mxu0 %v464
    %653 = vmatprep.subr.bf16.mxu0 0
    %654 = vmatpush1.bf16.msra.mxu0 %v463
    %655 = vmatprep.subr.bf16.mxu0 0
    %656 = vmatpush2.bf16.msra.mxu0 %v478
    %657 = vmatprep.subr.bf16.mxu0 0
    %658 = vmatpush2.bf16.msra.mxu0 %v477
    %659 = vmatprep.subr.bf16.mxu0 0
    %660 = vmatpush2.bf16.msra.mxu0 %v476
    %661 = vmatprep.subr.bf16.mxu0 0
    %662 = vmatpush2.bf16.msra.mxu0 %v475
    %663 = vmatprep.subr.bf16.mxu0 0
    %664 = vmatpush2.bf16.msra.mxu0 %v474
    %665 = vmatprep.subr.bf16.mxu0 0
    %666 = vmatpush2.bf16.msra.mxu0 %v473
    %667 = vmatprep.subr.bf16.mxu0 0
    %668 = vmatpush2.bf16.msra.mxu0 %v472
    %669 = vmatprep.subr.bf16.mxu0 0
    %670 = vmatpush2.bf16.msra.mxu0 %v471
    %671 = vmatprep.mubr.bf16.mxu0 %v37
    %672 = vmatmul.mubr.bf16.gmra.mxu0 %v36
    %v673 = vpop.f32.mrf.mxu0
    %v674 = vadd.f32 %v634, %v673
    %v675 = vpop.f32.mrf.mxu0
    %v676 = vpop.f32.mrf.mxu0
    %v677 = vpop.f32.mrf.mxu0
    %678 = vdwg.mxu0
    %679 = vmatprep.subr.bf16.mxu0 0
    %680 = vmatpush1.bf16.msra.mxu0 %v486
    %681 = vmatprep.subr.bf16.mxu0 0
    %682 = vmatpush1.bf16.msra.mxu0 %v485
    %683 = vmatprep.subr.bf16.mxu0 0
    %684 = vmatpush1.bf16.msra.mxu0 %v484
    %685 = vmatprep.subr.bf16.mxu0 0
    %686 = vmatpush1.bf16.msra.mxu0 %v483
    %687 = vmatprep.subr.bf16.mxu0 0
    %688 = vmatpush1.bf16.msra.mxu0 %v482
    %689 = vmatprep.subr.bf16.mxu0 0
    %690 = vmatpush1.bf16.msra.mxu0 %v481
    %691 = vmatprep.subr.bf16.mxu0 0
    %692 = vmatpush1.bf16.msra.mxu0 %v480
    %693 = vmatprep.subr.bf16.mxu0 0
    %694 = vmatpush1.bf16.msra.mxu0 %v479
    %695 = vmatprep.subr.bf16.mxu0 0
    %696 = vmatpush2.bf16.msra.mxu0 %v494
    %697 = vmatprep.subr.bf16.mxu0 0
    %698 = vmatpush2.bf16.msra.mxu0 %v493
    %699 = vmatprep.subr.bf16.mxu0 0
    %700 = vmatpush2.bf16.msra.mxu0 %v492
    %701 = vmatprep.subr.bf16.mxu0 0
    %702 = vmatpush2.bf16.msra.mxu0 %v491
    %703 = vmatprep.subr.bf16.mxu0 0
    %704 = vmatpush2.bf16.msra.mxu0 %v490
    %705 = vmatprep.subr.bf16.mxu0 0
    %706 = vmatpush2.bf16.msra.mxu0 %v489
    %707 = vmatprep.subr.bf16.mxu0 0
    %708 = vmatpush2.bf16.msra.mxu0 %v488
    %709 = vmatprep.subr.bf16.mxu0 0
    %710 = vmatpush2.bf16.msra.mxu0 %v487
    %711 = vmatprep.mubr.bf16.mxu0 %v39
    %712 = vmatmul.mubr.bf16.gmra.mxu0 %v38
    %v713 = vpop.f32.mrf.mxu0
    %v714 = vadd.f32 %v674, %v713
    %v715 = vpop.f32.mrf.mxu0
    %v716 = vpop.f32.mrf.mxu0
    %v717 = vpop.f32.mrf.mxu0
    %718 = vdwg.mxu0
    %719 = vst [vmem:[#allocation2] sm:$0xf] %v714
    // Predicated region
    $region14: #{forward.5} parent=1 // pred_check
      _
    $region15: #{forward.5} parent=1 // pred_check_branch
      %721 = sbr.rel (0) target = $region17
    $region16: #{forward.5} parent=1 // pred_region
      %s723 = ssub.s32 64, 64
      %724 = vsyncadd [#allocation3], %s723
      %s726 = sshll.u32 [#allocation2], 4
      %s727 = int_to_ptr.vmem [resolvable:$true] %s726
      %729 = dma.vmem_to_hbm [thread:$0]  %s727, 64, %s3, [#allocation3]
    $region17: #{forward.5} parent=1 // pred_fallthru
      _
    // Predicated region
    $region18: #{forward.5} parent=1 // pred_check
      _
    $region19: #{forward.5} parent=1 // pred_check_branch
      %731 = sbr.rel (0) target = $region21
    $region20: #{forward.5} parent=1 // pred_region
      %732 = dma.done [#allocation3], 64
    $region21: #{forward.5} parent=1 // pred_fallthru
      _
    %733 = vsyncpa [#allocation3], 1

// kernel: forward.3
$region0: #{forward.3}
  #allocation0 [shape = 'u32[]', space=smem, size = 0x4, offset = 0x4, fixed_abs, tag = 'smem constant byte address 0x4 - core index']
  #allocation1 [shape = 'u32[144,128]{1,0:T(1,128)}', space=vmem, size = 0x12000, scoped, tag = 'internal scratch']
  %s0 = inlined_call_operand.vmem [shape: f32[5,32,16], index: 0, kind: input, shape index: {}]
  %s1 = inlined_call_operand.hbm [shape: bf16[5,16,768], index: 1, kind: input, shape index: {}]
  %s2 = inlined_call_operand.hbm [shape: bf16[5,2,128,384], index: 2, kind: input, shape index: {}]
  %s3 = inlined_call_operand.hbm [shape: f32[5,1,768], index: 3, kind: input, shape index: {}]
  %s4 = inlined_call_operand.hbm [shape: f32[5,2,1,384], index: 4, kind: input, shape index: {}]
  %s5 = inlined_call_operand.hbm [shape: bf16[5,256,128], index: 5, kind: input, shape index: {}]
  %s6 = inlined_call_operand.hbm [shape: f32[5,1,128], index: 6, kind: input, shape index: {}]
  %s7 = inlined_call_operand.vmem [shape: f32[4,8,640], index: 7, kind: output, shape index: {}]
  %s8 = sld [smem:[#allocation0]]
  $region119: #{forward.3} parent=0
    _
  %s10 = ssub.s32 1, %s8
  %s11 = scalar_select 0, %s10, %s8
  $region1: #{forward.3} parent=0
    #allocation2 [shape = 'u8[49152]{0}', space=vmem, size = 0xc000, scoped, tag = 'input window, operand 1']
    #allocation3 [shape = 's32[2]{0}', space=sflag, size = 0x8, scoped, tag = 'scoped memory for forward.3']
    #allocation4 [shape = 'u8[393216]{0}', space=vmem, size = 0x60000, scoped, tag = 'input window, operand 2']
    #allocation5 [shape = 's32[2]{0}', space=sflag, size = 0x8, scoped, tag = 'scoped memory for forward.3']
    #allocation6 [shape = 'u8[6144]{0}', space=vmem, size = 0x1800, scoped, tag = 'input window, operand 3']
    #allocation7 [shape = 'u8[6144]{0}', space=vmem, size = 0x1800, scoped, tag = 'input window, operand 4']
    #allocation8 [shape = 's32[2]{0}', space=sflag, size = 0x8, scoped, tag = 'scoped memory for forward.3']
    #allocation9 [shape = 'u8[131072]{0}', space=vmem, size = 0x20000, scoped, tag = 'input window, operand 5']
    #allocation10 [shape = 'u8[1024]{0}', space=vmem, size = 0x400, scoped, tag = 'input window, operand 6']
    #allocation11 [shape = 's32[2]{0}', space=sflag, size = 0x8, scoped, tag = 'scoped memory for forward.3']
    #allocation12 [shape = 'u8[32768]{0}', space=vmem, size = 0x8000, scoped, tag = 'output window, operand 0']
    %12 = vsyncpa [#allocation3], 0
    %s13 = scalar_lea.sflag [#allocation3], 1
    %14 = vsyncpa %s13, 0
    %15 = vsyncpa [#allocation5], 0
    %s16 = scalar_lea.sflag [#allocation5], 1
    %17 = vsyncpa %s16, 0
    %18 = vsyncpa [#allocation8], 0
    %s19 = scalar_lea.sflag [#allocation8], 1
    %20 = vsyncpa %s19, 0
    %21 = vsyncpa [#allocation11], 0
    %s22 = scalar_lea.sflag [#allocation11], 1
    %23 = vsyncpa %s22, 0
    loop: start=0, step=1, limit=7
    $region2: #{forward.3} parent=1 // loop_pre_header
      _
    $region3: #{forward.3} parent=1 // loop_header
      %s25 = sphi 0, %s29
      %p26 = scmp.ge.s32.totalorder %s25, 7
      %s35 = sphi 0, %s37
      %s38 = sphi 0, %s35
      %s39 = sphi 0, %s38
      %s55 = sphi 0, %s39
      %s61 = sphi 0, %s63
      %s64 = sphi 0, %s61
      %s65 = sphi 0, %s64
      %s81 = sphi 0, %s65
      %s87 = sphi 0, %s89
      %s90 = sphi 0, %s87
      %s91 = sphi 0, %s90
      %s107 = sphi 0, %s91
      %s113 = sphi 0, %s115
      %s116 = sphi 0, %s113
      %s117 = sphi 0, %s116
      %s133 = sphi 0, %s117
      %s139 = sphi 0, %s141
      %s142 = sphi 0, %s139
      %s143 = sphi 0, %s142
      %s159 = sphi 0, %s143
      %s165 = sphi 0, %s167
      %s168 = sphi 0, %s165
      %s169 = sphi 0, %s168
      %s185 = sphi 0, %s169
      %s191 = sphi 0, %s193
      %s194 = sphi 0, %s191
      %s195 = sphi 0, %s194
      %s211 = sphi 0, %s195
      %s217 = sphi 0, %s219
      %s220 = sphi 0, %s217
      %s221 = sphi 0, %s220
      %s237 = sphi 0, %s221
    $region4: #{forward.3} parent=1 // loop_header_branch
      %28 = sbr.rel (%p26) target = $region8
    $region5: #{forward.3} parent=1 // loop_body
      %s30 = ssub.s32 %s25, 1
      %s31 = ssub.s32 %s25, 2
      %s32 = sadd.s32 %s25, 1
      %s33 = ssub.s32 %s25, %s32
      %p34 = scmp.eq.s32.totalorder %s33, 0
      %s36 = sadd.s32 %s35, 1
      %s37 = scalar_select %p34, %s35, %s36
      %p40 = pneg %p34
      %p41 = scmp.eq.s32.totalorder %s25, 4
      %p42 = por %p40, %p41
      %p43 = scmp.ne.s32.totalorder %s35, %s38
      %p44 = scmp.eq.s32.totalorder %s25, 0
      %p45 = por %p43, %p44
      %p46 = scmp.ne.s32.totalorder %s35, %s38
      %p47 = scmp.eq.s32.totalorder %s30, 4
      %p48 = por %p46, %p47
      %p49 = scmp.ne.s32.totalorder %s38, %s39
      %p50 = scmp.eq.s32.totalorder %s30, 0
      %p51 = por %p49, %p50
      %p52 = scmp.ne.s32.totalorder %s38, %s39
      %p53 = scmp.eq.s32.totalorder %s31, 4
      %p54 = por %p52, %p53
      %p56 = scmp.ne.s32.totalorder %s39, %s55
      %p57 = scmp.eq.s32.totalorder %s31, 0
      %p58 = por %p56, %p57
      %s59 = ssub.s32 %s25, %s32
      %p60 = scmp.eq.s32.totalorder %s59, 0
      %s62 = sadd.s32 %s61, 1
      %s63 = scalar_select %p60, %s61, %s62
      %p66 = pneg %p60
      %p67 = scmp.eq.s32.totalorder %s25, 4
      %p68 = por %p66, %p67
      %p69 = scmp.ne.s32.totalorder %s61, %s64
      %p70 = scmp.eq.s32.totalorder %s25, 0
      %p71 = por %p69, %p70
      %p72 = scmp.ne.s32.totalorder %s61, %s64
      %p73 = scmp.eq.s32.totalorder %s30, 4
      %p74 = por %p72, %p73
      %p75 = scmp.ne.s32.totalorder %s64, %s65
      %p76 = scmp.eq.s32.totalorder %s30, 0
      %p77 = por %p75, %p76
      %p78 = scmp.ne.s32.totalorder %s64, %s65
      %p79 = scmp.eq.s32.totalorder %s31, 4
      %p80 = por %p78, %p79
      %p82 = scmp.ne.s32.totalorder %s65, %s81
      %p83 = scmp.eq.s32.totalorder %s31, 0
      %p84 = por %p82, %p83
      %s85 = ssub.s32 %s25, %s32
      %p86 = scmp.eq.s32.totalorder %s85, 0
      %s88 = sadd.s32 %s87, 1
      %s89 = scalar_select %p86, %s87, %s88
      %p92 = pneg %p86
      %p93 = scmp.eq.s32.totalorder %s25, 4
      %p94 = por %p92, %p93
      %p95 = scmp.ne.s32.totalorder %s87, %s90
      %p96 = scmp.eq.s32.totalorder %s25, 0
      %p97 = por %p95, %p96
      %p98 = scmp.ne.s32.totalorder %s87, %s90
      %p99 = scmp.eq.s32.totalorder %s30, 4
      %p100 = por %p98, %p99
      %p101 = scmp.ne.s32.totalorder %s90, %s91
      %p102 = scmp.eq.s32.totalorder %s30, 0
      %p103 = por %p101, %p102
      %p104 = scmp.ne.s32.totalorder %s90, %s91
      %p105 = scmp.eq.s32.totalorder %s31, 4
      %p106 = por %p104, %p105
      %p108 = scmp.ne.s32.totalorder %s91, %s107
      %p109 = scmp.eq.s32.totalorder %s31, 0
      %p110 = por %p108, %p109
      %s111 = ssub.s32 %s25, %s32
      %p112 = scmp.eq.s32.totalorder %s111, 0
      %s114 = sadd.s32 %s113, 1
      %s115 = scalar_select %p112, %s113, %s114
      %p118 = pneg %p112
      %p119 = scmp.eq.s32.totalorder %s25, 4
      %p120 = por %p118, %p119
      %p121 = scmp.ne.s32.totalorder %s113, %s116
      %p122 = scmp.eq.s32.totalorder %s25, 0
      %p123 = por %p121, %p122
      %p124 = scmp.ne.s32.totalorder %s113, %s116
      %p125 = scmp.eq.s32.totalorder %s30, 4
      %p126 = por %p124, %p125
      %p127 = scmp.ne.s32.totalorder %s116, %s117
      %p128 = scmp.eq.s32.totalorder %s30, 0
      %p129 = por %p127, %p128
      %p130 = scmp.ne.s32.totalorder %s116, %s117
      %p131 = scmp.eq.s32.totalorder %s31, 4
      %p132 = por %p130, %p131
      %p134 = scmp.ne.s32.totalorder %s117, %s133
      %p135 = scmp.eq.s32.totalorder %s31, 0
      %p136 = por %p134, %p135
      %s137 = ssub.s32 %s25, %s32
      %p138 = scmp.eq.s32.totalorder %s137, 0
      %s140 = sadd.s32 %s139, 1
      %s141 = scalar_select %p138, %s139, %s140
      %p144 = pneg %p138
      %p145 = scmp.eq.s32.totalorder %s25, 4
      %p146 = por %p144, %p145
      %p147 = scmp.ne.s32.totalorder %s139, %s142
      %p148 = scmp.eq.s32.totalorder %s25, 0
      %p149 = por %p147, %p148
      %p150 = scmp.ne.s32.totalorder %s139, %s142
      %p151 = scmp.eq.s32.totalorder %s30, 4
      %p152 = por %p150, %p151
      %p153 = scmp.ne.s32.totalorder %s142, %s143
      %p154 = scmp.eq.s32.totalorder %s30, 0
      %p155 = por %p153, %p154
      %p156 = scmp.ne.s32.totalorder %s142, %s143
      %p157 = scmp.eq.s32.totalorder %s31, 4
      %p158 = por %p156, %p157
      %p160 = scmp.ne.s32.totalorder %s143, %s159
      %p161 = scmp.eq.s32.totalorder %s31, 0
      %p162 = por %p160, %p161
      %s163 = ssub.s32 %s25, %s32
      %p164 = scmp.eq.s32.totalorder %s163, 0
      %s166 = sadd.s32 %s165, 1
      %s167 = scalar_select %p164, %s165, %s166
      %p170 = pneg %p164
      %p171 = scmp.eq.s32.totalorder %s25, 4
      %p172 = por %p170, %p171
      %p173 = scmp.ne.s32.totalorder %s165, %s168
      %p174 = scmp.eq.s32.totalorder %s25, 0
      %p175 = por %p173, %p174
      %p176 = scmp.ne.s32.totalorder %s165, %s168
      %p177 = scmp.eq.s32.totalorder %s30, 4
      %p178 = por %p176, %p177
      %p179 = scmp.ne.s32.totalorder %s168, %s169
      %p180 = scmp.eq.s32.totalorder %s30, 0
      %p181 = por %p179, %p180
      %p182 = scmp.ne.s32.totalorder %s168, %s169
      %p183 = scmp.eq.s32.totalorder %s31, 4
      %p184 = por %p182, %p183
      %p186 = scmp.ne.s32.totalorder %s169, %s185
      %p187 = scmp.eq.s32.totalorder %s31, 0
      %p188 = por %p186, %p187
      %s189 = ssub.s32 %s25, %s32
      %p190 = scmp.eq.s32.totalorder %s189, 0
      %s192 = sadd.s32 %s191, 1
      %s193 = scalar_select %p190, %s191, %s192
      %p196 = pneg %p190
      %p197 = scmp.eq.s32.totalorder %s25, 4
      %p198 = por %p196, %p197
      %p199 = scmp.ne.s32.totalorder %s191, %s194
      %p200 = scmp.eq.s32.totalorder %s25, 0
      %p201 = por %p199, %p200
      %p202 = scmp.ne.s32.totalorder %s191, %s194
      %p203 = scmp.eq.s32.totalorder %s30, 4
      %p204 = por %p202, %p203
      %p205 = scmp.ne.s32.totalorder %s194, %s195
      %p206 = scmp.eq.s32.totalorder %s30, 0
      %p207 = por %p205, %p206
      %p208 = scmp.ne.s32.totalorder %s194, %s195
      %p209 = scmp.eq.s32.totalorder %s31, 4
      %p210 = por %p208, %p209
      %p212 = scmp.ne.s32.totalorder %s195, %s211
      %p213 = scmp.eq.s32.totalorder %s31, 0
      %p214 = por %p212, %p213
      %s215 = ssub.s32 %s25, %s32
      %p216 = scmp.eq.s32.totalorder %s215, 0
      %s218 = sadd.s32 %s217, 1
      %s219 = scalar_select %p216, %s217, %s218
      %p222 = pneg %p216
      %p223 = scmp.eq.s32.totalorder %s25, 4
      %p224 = por %p222, %p223
      %p225 = scmp.ne.s32.totalorder %s217, %s220
      %p226 = scmp.eq.s32.totalorder %s25, 0
      %p227 = por %p225, %p226
      %p228 = scmp.ne.s32.totalorder %s217, %s220
      %p229 = scmp.eq.s32.totalorder %s30, 4
      %p230 = por %p228, %p229
      %p231 = scmp.ne.s32.totalorder %s220, %s221
      %p232 = scmp.eq.s32.totalorder %s30, 0
      %p233 = por %p231, %p232
      %p234 = scmp.ne.s32.totalorder %s220, %s221
      %p235 = scmp.eq.s32.totalorder %s31, 4
      %p236 = por %p234, %p235
      %p238 = scmp.ne.s32.totalorder %s221, %s237
      %p239 = scmp.eq.s32.totalorder %s31, 0
      %p240 = por %p238, %p239
      %p241 = scmp.le.s32.totalorder 1, %s25
      %p242 = scmp.lt.s32.totalorder %s25, 6
      %p243 = pnand %p241, %p242
      %p244 = pneg %p243
      // Predicated region
      $region9: #{forward.3} parent=5 // pred_check
        _
      $region10: #{forward.3} parent=5 // pred_check_branch
        %246 = sbr.rel (%p243) target = $region12
      $region11: #{forward.3} parent=5 // pred_region
        %s247 = ssub.s32 %s25, 1
      $region12: #{forward.3} parent=5 // pred_fallthru
        _
      %p248 = scmp.lt.s32.totalorder %s25, 5
      // Predicated region
      $region13: #{forward.3} parent=5 // pred_check
        %p249 = pneg %p248
      $region14: #{forward.3} parent=5 // pred_check_branch
        %251 = sbr.rel (%p249) target = $region16
      $region15: #{forward.3} parent=5 // pred_region
        // Predicated region
        $region17: #{forward.3} parent=15 // pred_check
          %p252 = pneg %p45
        $region18: #{forward.3} parent=15 // pred_check_branch
          %254 = sbr.rel (%p252) target = $region20
        $region19: #{forward.3} parent=15 // pred_region
          %p255 = scmp.lt.s32.totalorder %s25, 4
          %s256 = scalar_select %p255, %s25, 4
          %s257 = smul.addr %s256, 4
          %s258 = smul.addr %s257, 8
          %s259 = scalar_lea.vmem %s0, %s258
        $region20: #{forward.3} parent=15 // pred_fallthru
          _
        // Predicated region
        $region21: #{forward.3} parent=15 // pred_check
          %p260 = pneg %p71
        $region22: #{forward.3} parent=15 // pred_check_branch
          %262 = sbr.rel (%p260) target = $region24
        $region23: #{forward.3} parent=15 // pred_region
          %s263 = sand.u32 %s61, 1
          %s264 = scalar_lea.sflag [#allocation3], %s263
          %s265 = sand.u32 %s61, 1
          %s266 = smul.addr %s265, 48
          %s267 = scalar_lea.vmem [#allocation2], %s266
          %s269 = ssub.s32 768, 768
          %270 = vsyncadd %s264, %s269
          %s271 = smul.addr %s25, 12
          %s272 = smul.addr %s271, 64
          %s273 = scalar_lea.hbm %s1, %s272
          %s274 = sshll.u32 %s267, 4
          %s275 = int_to_ptr.vmem [resolvable:$true] %s274
          %280 = dma.hbm_to_vmem [thread:$0]  %s273, 768, %s275, %s264, 384, 384, 24
        $region24: #{forward.3} parent=15 // pred_fallthru
          _
        // Predicated region
        $region25: #{forward.3} parent=15 // pred_check
          %p281 = pneg %p97
        $region26: #{forward.3} parent=15 // pred_check_branch
          %283 = sbr.rel (%p281) target = $region28
        $region27: #{forward.3} parent=15 // pred_region
          %s284 = sand.u32 %s25, 1
          %s285 = scalar_lea.sflag [#allocation5], %s284
          %s286 = sand.u32 %s87, 1
          %s287 = smul.addr %s286, 384
          %s288 = scalar_lea.vmem [#allocation4], %s287
          %s290 = ssub.s32 6144, 6144
          %291 = vsyncadd %s285, %s290
          %s292 = smul.addr %s25, 96
          %s293 = smul.addr %s292, 64
          %s294 = scalar_lea.hbm %s2, %s293
          %s295 = sshll.u32 %s288, 4
          %s296 = int_to_ptr.vmem [resolvable:$true] %s295
          %301 = dma.hbm_to_vmem [thread:$0]  %s294, 6144, %s296, %s285, 192, 192, 12
        $region28: #{forward.3} parent=15 // pred_fallthru
          _
        // Predicated region
        $region29: #{forward.3} parent=15 // pred_check
          %p302 = pneg %p123
        $region30: #{forward.3} parent=15 // pred_check_branch
          %304 = sbr.rel (%p302) target = $region32
        $region31: #{forward.3} parent=15 // pred_region
          %s305 = sand.u32 %s25, 1
          %s306 = scalar_lea.sflag [#allocation5], %s305
          %s307 = sand.u32 %s113, 1
          %s308 = smul.addr %s307, 6
          %s309 = scalar_lea.vmem [#allocation6], %s308
          %s311 = ssub.s32 96, 96
          %312 = vsyncadd %s306, %s311
          %s313 = smul.addr %s25, 6
          %s314 = smul.addr %s313, 16
          %s315 = scalar_lea.hbm %s3, %s314
          %s317 = sshll.u32 %s309, 4
          %s318 = int_to_ptr.vmem [resolvable:$true] %s317
          %320 = dma.hbm_to_vmem [thread:$0]  %s315, 96, %s318, %s306
        $region32: #{forward.3} parent=15 // pred_fallthru
          _
        // Predicated region
        $region33: #{forward.3} parent=15 // pred_check
          %p321 = pneg %p149
        $region34: #{forward.3} parent=15 // pred_check_branch
          %323 = sbr.rel (%p321) target = $region36
        $region35: #{forward.3} parent=15 // pred_region
          %s324 = sand.u32 %s25, 1
          %s325 = scalar_lea.sflag [#allocation8], %s324
          %s326 = sand.u32 %s139, 1
          %s327 = smul.addr %s326, 6
          %s328 = scalar_lea.vmem [#allocation7], %s327
          %s330 = ssub.s32 96, 96
          %331 = vsyncadd %s325, %s330
          %s332 = smul.addr %s25, 6
          %s333 = smul.addr %s332, 16
          %s334 = scalar_lea.hbm %s4, %s333
          %s335 = sshll.u32 %s328, 4
          %s336 = int_to_ptr.vmem [resolvable:$true] %s335
          %341 = dma.hbm_to_vmem [thread:$0]  %s334, 96, %s336, %s325, 48, 48, 3
        $region36: #{forward.3} parent=15 // pred_fallthru
          _
        // Predicated region
        $region37: #{forward.3} parent=15 // pred_check
          %p342 = pneg %p175
        $region38: #{forward.3} parent=15 // pred_check_branch
          %344 = sbr.rel (%p342) target = $region40
        $region39: #{forward.3} parent=15 // pred_region
          %s345 = sand.u32 %s25, 1
          %s346 = scalar_lea.sflag [#allocation8], %s345
          %s347 = sand.u32 %s165, 1
          %s348 = smul.addr %s347, 128
          %s349 = scalar_lea.vmem [#allocation9], %s348
          %s351 = ssub.s32 2048, 2048
          %352 = vsyncadd %s346, %s351
          %s353 = smul.addr %s25, 32
          %s354 = smul.addr %s353, 64
          %s355 = scalar_lea.hbm %s5, %s354
          %s356 = sshll.u32 %s349, 4
          %s357 = int_to_ptr.vmem [resolvable:$true] %s356
          %362 = dma.hbm_to_vmem [thread:$0]  %s355, 2048, %s357, %s346, 64, 64, 4
        $region40: #{forward.3} parent=15 // pred_fallthru
          _
        // Predicated region
        $region41: #{forward.3} parent=15 // pred_check
          %p363 = pneg %p201
        $region42: #{forward.3} parent=15 // pred_check_branch
          %365 = sbr.rel (%p363) target = $region44
        $region43: #{forward.3} parent=15 // pred_region
          %s366 = sand.u32 %s191, 1
          %s367 = scalar_lea.sflag [#allocation11], %s366
          %s368 = sand.u32 %s191, 1
          %s369 = scalar_lea.vmem [#allocation10], %s368
          %s371 = ssub.s32 16, 16
          %372 = vsyncadd %s367, %s371
          %s373 = smul.addr %s25, 16
          %s374 = scalar_lea.hbm %s6, %s373
          %s376 = sshll.u32 %s369, 4
          %s377 = int_to_ptr.vmem [resolvable:$true] %s376
          %379 = dma.hbm_to_vmem [thread:$0]  %s374, 16, %s377, %s367
        $region44: #{forward.3} parent=15 // pred_fallthru
          _
      $region16: #{forward.3} parent=5 // pred_fallthru
        _
      %p380 = scmp.le.s32.totalorder 1, %s25
      %p381 = scmp.lt.s32.totalorder %s25, 6
      %p382 = pnand %p380, %p381
      %p383 = pneg %p382
      // Predicated region
      $region45: #{forward.3} parent=5 // pred_check
        _
      $region46: #{forward.3} parent=5 // pred_check_branch
        %385 = sbr.rel (%p382) target = $region48
      $region47: #{forward.3} parent=5 // pred_region
        %s386 = ssub.s32 %s25, 1
        %s387 = sand.u32 %s64, 1
        %s388 = scalar_lea.sflag [#allocation3], %s387
        %s389 = sand.u32 %s64, 1
        %s390 = smul.addr %s389, 48
        %s391 = scalar_lea.vmem [#allocation2], %s390
        // Predicated region
        $region49: #{forward.3} parent=47 // pred_check
          %p392 = pneg %p77
        $region50: #{forward.3} parent=47 // pred_check_branch
          %394 = sbr.rel (%p392) target = $region52
        $region51: #{forward.3} parent=47 // pred_region
          %395 = dma.done %s388, 768
        $region52: #{forward.3} parent=47 // pred_fallthru
          _
        %s396 = sand.u32 %s30, 1
        %s397 = scalar_lea.sflag [#allocation5], %s396
        %s398 = sand.u32 %s90, 1
        %s399 = smul.addr %s398, 384
        %s400 = scalar_lea.vmem [#allocation4], %s399
        // Predicated region
        $region53: #{forward.3} parent=47 // pred_check
          %p401 = pneg %p103
        $region54: #{forward.3} parent=47 // pred_check_branch
          %403 = sbr.rel (%p401) target = $region56
        $region55: #{forward.3} parent=47 // pred_region
          %404 = dma.done %s397, 6144
        $region56: #{forward.3} parent=47 // pred_fallthru
          _
        %s405 = sand.u32 %s30, 1
        %s406 = scalar_lea.sflag [#allocation5], %s405
        %s407 = sand.u32 %s116, 1
        %s408 = smul.addr %s407, 6
        %s409 = scalar_lea.vmem [#allocation6], %s408
        // Predicated region
        $region57: #{forward.3} parent=47 // pred_check
          %p410 = pneg %p129
        $region58: #{forward.3} parent=47 // pred_check_branch
          %412 = sbr.rel (%p410) target = $region60
        $region59: #{forward.3} parent=47 // pred_region
          %413 = dma.done %s406, 96
        $region60: #{forward.3} parent=47 // pred_fallthru
          _
        %s414 = sand.u32 %s30, 1
        %s415 = scalar_lea.sflag [#allocation8], %s414
        %s416 = sand.u32 %s142, 1
        %s417 = smul.addr %s416, 6
        %s418 = scalar_lea.vmem [#allocation7], %s417
        // Predicated region
        $region61: #{forward.3} parent=47 // pred_check
          %p419 = pneg %p155
        $region62: #{forward.3} parent=47 // pred_check_branch
          %421 = sbr.rel (%p419) target = $region64
        $region63: #{forward.3} parent=47 // pred_region
          %422 = dma.done %s415, 96
        $region64: #{forward.3} parent=47 // pred_fallthru
          _
        %s423 = sand.u32 %s30, 1
        %s424 = scalar_lea.sflag [#allocation8], %s423
        %s425 = sand.u32 %s168, 1
        %s426 = smul.addr %s425, 128
        %s427 = scalar_lea.vmem [#allocation9], %s426
        // Predicated region
        $region65: #{forward.3} parent=47 // pred_check
          %p428 = pneg %p181
        $region66: #{forward.3} parent=47 // pred_check_branch
          %430 = sbr.rel (%p428) target = $region68
        $region67: #{forward.3} parent=47 // pred_region
          %431 = dma.done %s424, 2048
        $region68: #{forward.3} parent=47 // pred_fallthru
          _
        %s432 = sand.u32 %s194, 1
        %s433 = scalar_lea.sflag [#allocation11], %s432
        %s434 = sand.u32 %s194, 1
        %s435 = scalar_lea.vmem [#allocation10], %s434
        // Predicated region
        $region69: #{forward.3} parent=47 // pred_check
          %p436 = pneg %p207
        $region70: #{forward.3} parent=47 // pred_check_branch
          %438 = sbr.rel (%p436) target = $region72
        $region71: #{forward.3} parent=47 // pred_region
          %439 = dma.done %s433, 16
        $region72: #{forward.3} parent=47 // pred_fallthru
          _
        %p440 = scmp.lt.s32.totalorder %s30, 4
        %s441 = scalar_select %p440, %s30, 4
        %s442 = smul.addr %s441, 4
        %s443 = smul.addr %s442, 8
        %s444 = scalar_lea.vmem %s0, %s443
        %p445 = pneg %p51
        %p446 = pneg %p48
        %s447 = sand.u32 %s64, 1
        %s448 = scalar_lea.sflag [#allocation3], %s447
        %s449 = sand.u32 %s64, 1
        %s450 = smul.addr %s449, 48
        %s451 = scalar_lea.vmem [#allocation2], %s450
        %p452 = pneg %p77
        %p453 = pneg %p74
        %s454 = sand.u32 %s30, 1
        %s455 = scalar_lea.sflag [#allocation5], %s454
        %s456 = sand.u32 %s90, 1
        %s457 = smul.addr %s456, 384
        %s458 = scalar_lea.vmem [#allocation4], %s457
        %p459 = pneg %p103
        %p460 = pneg %p100
        %s461 = sand.u32 %s30, 1
        %s462 = scalar_lea.sflag [#allocation5], %s461
        %s463 = sand.u32 %s116, 1
        %s464 = smul.addr %s463, 6
        %s465 = scalar_lea.vmem [#allocation6], %s464
        %p466 = pneg %p129
        %p467 = pneg %p126
        %s468 = sand.u32 %s30, 1
        %s469 = scalar_lea.sflag [#allocation8], %s468
        %s470 = sand.u32 %s142, 1
        %s471 = smul.addr %s470, 6
        %s472 = scalar_lea.vmem [#allocation7], %s471
        %p473 = pneg %p155
        %p474 = pneg %p152
        %s475 = sand.u32 %s30, 1
        %s476 = scalar_lea.sflag [#allocation8], %s475
        %s477 = sand.u32 %s168, 1
        %s478 = smul.addr %s477, 128
        %s479 = scalar_lea.vmem [#allocation9], %s478
        %p480 = pneg %p181
        %p481 = pneg %p178
        %s482 = sand.u32 %s194, 1
        %s483 = scalar_lea.sflag [#allocation11], %s482
        %s484 = sand.u32 %s194, 1
        %s485 = scalar_lea.vmem [#allocation10], %s484
        %p486 = pneg %p207
        %p487 = pneg %p204
        %p488 = pneg %p233
        %p489 = pneg %p230
        %s490 = sand.u32 %s220, 1
        %s491 = sand.u32 %s220, 1
        %s492 = smul.addr %s491, 32
        %s493 = scalar_lea.vmem [#allocation12], %s492
        %p494 = scmp.lt.s32.totalorder %s30, 4
        %s495 = scalar_select %p494, %s30, 4
        %s496 = smul.addr %s495, 4
        %s497 = smul.addr %s496, 8
        %s498 = scalar_lea.vmem %s0, %s497
        %v500 = vld [vmem:[%s498] sm:$0xff]
        %v501 = vld [vmem:[%s498 + $0x8] sm:$0xff]
        %v502 = vld [vmem:[%s498 + $0x10] sm:$0xff]
        %v503 = vld [vmem:[%s498 + $0x18] sm:$0xff]
        %v504 = vpack.c.bf16 %v501, %v500
        %v505 = vpack.c.bf16 %v503, %v502
        %v506 = vld [vmem:[%s391] sm:$0xff]
        %v507 = vld [vmem:[%s391 + $0x8] sm:$0xff]
        %v508 = vld [vmem:[%s391 + $0x10] sm:$0xff]
        %v509 = vld [vmem:[%s391 + $0x18] sm:$0xff]
        %v510 = vld [vmem:[%s391 + $0x20] sm:$0xff]
        %v511 = vld [vmem:[%s391 + $0x28] sm:$0xff]
        %v512 = vld [vmem:[%s409] sm:$0x3f]
        %v514 = vlaneseq
        %v515 = vshrl.u32 %v514, 7
        %v516 = vsub.s32 0, %v515
        %v517 = vrot.slane %v512, %v516
        %v518 = vlaneseq
        %v519 = vshrl.u32 %v518, 7
        %v520 = vsub.s32 1, %v519
        %v521 = vrot.slane %v512, %v520
        %v522 = vlaneseq
        %v523 = vshrl.u32 %v522, 7
        %v524 = vsub.s32 2, %v523
        %v525 = vrot.slane %v512, %v524
        %v526 = vlaneseq
        %v527 = vshrl.u32 %v526, 7
        %v528 = vsub.s32 3, %v527
        %v529 = vrot.slane %v512, %v528
        %v530 = vlaneseq
        %v531 = vshrl.u32 %v530, 7
        %v532 = vsub.s32 4, %v531
        %v533 = vrot.slane %v512, %v532
        %v534 = vlaneseq
        %v535 = vshrl.u32 %v534, 7
        %v536 = vsub.s32 5, %v535
        %v537 = vrot.slane %v512, %v536
        %v550 = vunpack.c.l.b16 %v506
        %v551 = vunpack.c.h.b16 %v506
        %v552 = vunpack.c.l.b16 %v507
        %v553 = vunpack.c.h.b16 %v507
        %v554 = vunpack.c.l.b16 %v508
        %v555 = vunpack.c.h.b16 %v508
        %v556 = vunpack.c.l.b16 %v509
        %v557 = vunpack.c.h.b16 %v509
        %v558 = vunpack.c.l.b16 %v510
        %v559 = vunpack.c.h.b16 %v510
        %v560 = vunpack.c.l.b16 %v511
        %v561 = vunpack.c.h.b16 %v511
        %v562 = vpack.c.b16 %v556, %v550
        %v563 = vpack.c.b16 %v557, %v551
        %v564 = vpack.c.b16 %v558, %v552
        %v565 = vpack.c.b16 %v559, %v553
        %v566 = vpack.c.b16 %v560, %v554
        %v567 = vpack.c.b16 %v561, %v555
        %vm574 = vcmask 130048
        %v576 = vsel %vm574, %v504, 0
        %v579 = vsel %vm574, %v505, 0
        %581 = vmatprep.subr.bf16.mxu0 0
        %582 = vmatpush1.bf16.msra.mxu0 0
        %583 = vmatprep.subr.bf16.mxu0 0
        %584 = vmatpush1.bf16.msra.mxu0 0
        %585 = vmatprep.subr.bf16.mxu0 0
        %586 = vmatpush1.bf16.msra.mxu0 0
        %587 = vmatprep.subr.bf16.mxu0 0
        %588 = vmatpush1.bf16.msra.mxu0 0
        %589 = vmatprep.subr.bf16.mxu0 0
        %590 = vmatpush1.bf16.msra.mxu0 0
        %591 = vmatprep.subr.bf16.mxu0 0
        %592 = vmatpush1.bf16.msra.mxu0 0
        %593 = vmatprep.subr.bf16.mxu0 0
        %594 = vmatpush1.bf16.msra.mxu0 0
        %595 = vmatprep.subr.bf16.mxu0 %v563
        %596 = vmatpush1.bf16.msra.mxu0 %v562
        %597 = vmatprep.subr.bf16.mxu0 0
        %598 = vmatpush2.bf16.msra.mxu0 0
        %599 = vmatprep.subr.bf16.mxu0 0
        %600 = vmatpush2.bf16.msra.mxu0 0
        %601 = vmatprep.subr.bf16.mxu0 0
        %602 = vmatpush2.bf16.msra.mxu0 0
        %603 = vmatprep.subr.bf16.mxu0 0
        %604 = vmatpush2.bf16.msra.mxu0 0
        %605 = vmatprep.subr.bf16.mxu0 0
        %606 = vmatpush2.bf16.msra.mxu0 0
        %607 = vmatprep.subr.bf16.mxu0 0
        %608 = vmatpush2.bf16.msra.mxu0 0
        %609 = vmatprep.subr.bf16.mxu0 0
        %610 = vmatpush2.bf16.msra.mxu0 0
        %611 = vmatprep.subr.bf16.mxu0 0
        %612 = vmatpush2.bf16.msra.mxu0 0
        %613 = vmatprep.mubr.bf16.mxu0 0
        %614 = vmatmul.mubr.bf16.gmra.mxu0 %v576
        %v615 = vpop.f32.mrf.mxu0
        %v616 = vadd.f32 %v517, %v615
        %v617 = vpop.f32.mrf.mxu0
        %v618 = vadd.f32 %v521, %v617
        %v619 = vpop.f32.mrf.mxu0
        %v620 = vadd.f32 %v517, %v619
        %v621 = vpop.f32.mrf.mxu0
        %v622 = vadd.f32 %v521, %v621
        %623 = vmatprep.mubr.bf16.mxu0 0
        %624 = vmatmul.mubr.bf16.gmra.mxu0 %v579
        %v625 = vpop.f32.mrf.mxu0
        %v626 = vadd.f32 %v517, %v625
        %v627 = vpop.f32.mrf.mxu0
        %v628 = vadd.f32 %v521, %v627
        %v629 = vpop.f32.mrf.mxu0
        %v630 = vadd.f32 %v517, %v629
        %v631 = vpop.f32.mrf.mxu0
        %v632 = vadd.f32 %v521, %v631
        %633 = vdwg.mxu0
        %634 = vmatprep.subr.bf16.mxu0 0
        %635 = vmatpush1.bf16.msra.mxu0 0
        %636 = vmatprep.subr.bf16.mxu0 0
        %637 = vmatpush1.bf16.msra.mxu0 0
        %638 = vmatprep.subr.bf16.mxu0 0
        %639 = vmatpush1.bf16.msra.mxu0 0
        %640 = vmatprep.subr.bf16.mxu0 0
        %641 = vmatpush1.bf16.msra.mxu0 0
        %642 = vmatprep.subr.bf16.mxu0 0
        %643 = vmatpush1.bf16.msra.mxu0 0
        %644 = vmatprep.subr.bf16.mxu0 0
        %645 = vmatpush1.bf16.msra.mxu0 0
        %646 = vmatprep.subr.bf16.mxu0 0
        %647 = vmatpush1.bf16.msra.mxu0 0
        %648 = vmatprep.subr.bf16.mxu0 %v565
        %649 = vmatpush1.bf16.msra.mxu0 %v564
        %650 = vmatprep.subr.bf16.mxu0 0
        %651 = vmatpush2.bf16.msra.mxu0 0
        %652 = vmatprep.subr.bf16.mxu0 0
        %653 = vmatpush2.bf16.msra.mxu0 0
        %654 = vmatprep.subr.bf16.mxu0 0
        %655 = vmatpush2.bf16.msra.mxu0 0
        %656 = vmatprep.subr.bf16.mxu0 0
        %657 = vmatpush2.bf16.msra.mxu0 0
        %658 = vmatprep.subr.bf16.mxu0 0
        %659 = vmatpush2.bf16.msra.mxu0 0
        %660 = vmatprep.subr.bf16.mxu0 0
        %661 = vmatpush2.bf16.msra.mxu0 0
        %662 = vmatprep.subr.bf16.mxu0 0
        %663 = vmatpush2.bf16.msra.mxu0 0
        %664 = vmatprep.subr.bf16.mxu0 0
        %665 = vmatpush2.bf16.msra.mxu0 0
        %666 = vmatprep.mubr.bf16.mxu0 0
        %667 = vmatmul.mubr.bf16.gmra.mxu0 %v576
        %v668 = vpop.f32.mrf.mxu0
        %v669 = vadd.f32 %v525, %v668
        %v670 = vpop.f32.mrf.mxu0
        %v671 = vadd.f32 %v529, %v670
        %v672 = vpop.f32.mrf.mxu0
        %v673 = vadd.f32 %v525, %v672
        %v674 = vpop.f32.mrf.mxu0
        %v675 = vadd.f32 %v529, %v674
        %676 = vmatprep.mubr.bf16.mxu0 0
        %677 = vmatmul.mubr.bf16.gmra.mxu0 %v579
        %v678 = vpop.f32.mrf.mxu0
        %v679 = vadd.f32 %v525, %v678
        %v680 = vpop.f32.mrf.mxu0
        %v681 = vadd.f32 %v529, %v680
        %v682 = vpop.f32.mrf.mxu0
        %v683 = vadd.f32 %v525, %v682
        %v684 = vpop.f32.mrf.mxu0
        %v685 = vadd.f32 %v529, %v684
        %686 = vdwg.mxu0
        %687 = vmatprep.subr.bf16.mxu0 0
        %688 = vmatpush1.bf16.msra.mxu0 0
        %689 = vmatprep.subr.bf16.mxu0 0
        %690 = vmatpush1.bf16.msra.mxu0 0
        %691 = vmatprep.subr.bf16.mxu0 0
        %692 = vmatpush1.bf16.msra.mxu0 0
        %693 = vmatprep.subr.bf16.mxu0 0
        %694 = vmatpush1.bf16.msra.mxu0 0
        %695 = vmatprep.subr.bf16.mxu0 0
        %696 = vmatpush1.bf16.msra.mxu0 0
        %697 = vmatprep.subr.bf16.mxu0 0
        %698 = vmatpush1.bf16.msra.mxu0 0
        %699 = vmatprep.subr.bf16.mxu0 0
        %700 = vmatpush1.bf16.msra.mxu0 0
        %701 = vmatprep.subr.bf16.mxu0 %v567
        %702 = vmatpush1.bf16.msra.mxu0 %v566
        %703 = vmatprep.subr.bf16.mxu0 0
        %704 = vmatpush2.bf16.msra.mxu0 0
        %705 = vmatprep.subr.bf16.mxu0 0
        %706 = vmatpush2.bf16.msra.mxu0 0
        %707 = vmatprep.subr.bf16.mxu0 0
        %708 = vmatpush2.bf16.msra.mxu0 0
        %709 = vmatprep.subr.bf16.mxu0 0
        %710 = vmatpush2.bf16.msra.mxu0 0
        %711 = vmatprep.subr.bf16.mxu0 0
        %712 = vmatpush2.bf16.msra.mxu0 0
        %713 = vmatprep.subr.bf16.mxu0 0
        %714 = vmatpush2.bf16.msra.mxu0 0
        %715 = vmatprep.subr.bf16.mxu0 0
        %716 = vmatpush2.bf16.msra.mxu0 0
        %717 = vmatprep.subr.bf16.mxu0 0
        %718 = vmatpush2.bf16.msra.mxu0 0
        %719 = vmatprep.mubr.bf16.mxu0 0
        %720 = vmatmul.mubr.bf16.gmra.mxu0 %v576
        %v721 = vpop.f32.mrf.mxu0
        %v722 = vadd.f32 %v533, %v721
        %v723 = vpop.f32.mrf.mxu0
        %v724 = vadd.f32 %v537, %v723
        %v725 = vpop.f32.mrf.mxu0
        %v726 = vadd.f32 %v533, %v725
        %v727 = vpop.f32.mrf.mxu0
        %v728 = vadd.f32 %v537, %v727
        %729 = vmatprep.mubr.bf16.mxu0 0
        %730 = vmatmul.mubr.bf16.gmra.mxu0 %v579
        %v731 = vpop.f32.mrf.mxu0
        %v732 = vadd.f32 %v533, %v731
        %v733 = vpop.f32.mrf.mxu0
        %v734 = vadd.f32 %v537, %v733
        %v735 = vpop.f32.mrf.mxu0
        %v736 = vadd.f32 %v533, %v735
        %v737 = vpop.f32.mrf.mxu0
        %v738 = vadd.f32 %v537, %v737
        %739 = vdwg.mxu0
        %v740 = vld [vmem:[%s400] sm:$0xff]
        %v741 = vld [vmem:[%s400 + $0x8] sm:$0xf]
        %v742 = vld [vmem:[%s400 + $0xc] sm:$0xff]
        %v743 = vld [vmem:[%s400 + $0x14] sm:$0xf]
        %v744 = vld [vmem:[%s400 + $0x18] sm:$0xff]
        %v745 = vld [vmem:[%s400 + $0x20] sm:$0xf]
        %v746 = vld [vmem:[%s400 + $0x24] sm:$0xff]
        %v747 = vld [vmem:[%s400 + $0x2c] sm:$0xf]
        %v748 = vld [vmem:[%s400 + $0x30] sm:$0xff]
        %v749 = vld [vmem:[%s400 + $0x38] sm:$0xf]
        %v750 = vld [vmem:[%s400 + $0x3c] sm:$0xff]
        %v751 = vld [vmem:[%s400 + $0x44] sm:$0xf]
        %v752 = vld [vmem:[%s400 + $0x48] sm:$0xff]
        %v753 = vld [vmem:[%s400 + $0x50] sm:$0xf]
        %v754 = vld [vmem:[%s400 + $0x54] sm:$0xff]
        %v755 = vld [vmem:[%s400 + $0x5c] sm:$0xf]
        %v756 = vld [vmem:[%s400 + $0x60] sm:$0xff]
        %v757 = vld [vmem:[%s400 + $0x68] sm:$0xf]
        %v758 = vld [vmem:[%s400 + $0x6c] sm:$0xff]
        %v759 = vld [vmem:[%s400 + $0x74] sm:$0xf]
        %v760 = vld [vmem:[%s400 + $0x78] sm:$0xff]
        %v761 = vld [vmem:[%s400 + $0x80] sm:$0xf]
        %v762 = vld [vmem:[%s400 + $0x84] sm:$0xff]
        %v763 = vld [vmem:[%s400 + $0x8c] sm:$0xf]
        %v764 = vld [vmem:[%s400 + $0x90] sm:$0xff]
        %v765 = vld [vmem:[%s400 + $0x98] sm:$0xf]
        %v766 = vld [vmem:[%s400 + $0x9c] sm:$0xff]
        %v767 = vld [vmem:[%s400 + $0xa4] sm:$0xf]
        %v768 = vld [vmem:[%s400 + $0xa8] sm:$0xff]
        %v769 = vld [vmem:[%s400 + $0xb0] sm:$0xf]
        %v770 = vld [vmem:[%s400 + $0xb4] sm:$0xff]
        %v771 = vld [vmem:[%s400 + $0xbc] sm:$0xf]
        %v772 = vld [vmem:[%s418] sm:$0x7]
        %v773 = vld [vmem:[%s427] sm:$0xf]
        %v774 = vld [vmem:[%s427 + $0x4] sm:$0xf]
        %v775 = vld [vmem:[%s427 + $0x8] sm:$0xf]
        %v776 = vld [vmem:[%s427 + $0xc] sm:$0xf]
        %v777 = vld [vmem:[%s427 + $0x10] sm:$0xf]
        %v778 = vld [vmem:[%s427 + $0x14] sm:$0xf]
        %v779 = vld [vmem:[%s427 + $0x18] sm:$0xf]
        %v780 = vld [vmem:[%s427 + $0x1c] sm:$0xf]
        %v781 = vld [vmem:[%s427 + $0x20] sm:$0xf]
        %v782 = vld [vmem:[%s427 + $0x24] sm:$0xf]
        %v783 = vld [vmem:[%s427 + $0x28] sm:$0xf]
        %v784 = vld [vmem:[%s427 + $0x2c] sm:$0xf]
        %v785 = vld [vmem:[%s427 + $0x30] sm:$0xf]
        %v786 = vld [vmem:[%s427 + $0x34] sm:$0xf]
        %v787 = vld [vmem:[%s427 + $0x38] sm:$0xf]
        %v788 = vld [vmem:[%s427 + $0x3c] sm:$0xf]
        %v789 = vld [vmem:[%s435] sm:$0x1]
        %v791 = vlaneseq
        %v792 = vshrl.u32 %v791, 7
        %v793 = vsub.s32 0, %v792
        %v794 = vrot.slane %v772, %v793
        %v795 = vlaneseq
        %v796 = vshrl.u32 %v795, 7
        %v797 = vsub.s32 1, %v796
        %v798 = vrot.slane %v772, %v797
        %v799 = vlaneseq
        %v800 = vshrl.u32 %v799, 7
        %v801 = vsub.s32 2, %v800
        %v802 = vrot.slane %v772, %v801
        %v838 = vunpack.c.l.b16 %v740
        %v839 = vunpack.c.h.b16 %v740
        %v840 = vunpack.c.l.b16 %v741
        %v841 = vunpack.c.l.b16 %v742
        %v842 = vunpack.c.h.b16 %v742
        %v843 = vunpack.c.l.b16 %v743
        %v844 = vunpack.c.l.b16 %v744
        %v845 = vunpack.c.h.b16 %v744
        %v846 = vunpack.c.l.b16 %v745
        %v847 = vunpack.c.l.b16 %v746
        %v848 = vunpack.c.h.b16 %v746
        %v849 = vunpack.c.l.b16 %v747
        %v850 = vunpack.c.l.b16 %v748
        %v851 = vunpack.c.h.b16 %v748
        %v852 = vunpack.c.l.b16 %v749
        %v853 = vunpack.c.l.b16 %v750
        %v854 = vunpack.c.h.b16 %v750
        %v855 = vunpack.c.l.b16 %v751
        %v856 = vunpack.c.l.b16 %v752
        %v857 = vunpack.c.h.b16 %v752
        %v858 = vunpack.c.l.b16 %v753
        %v859 = vunpack.c.l.b16 %v754
        %v860 = vunpack.c.h.b16 %v754
        %v861 = vunpack.c.l.b16 %v755
        %v862 = vunpack.c.l.b16 %v756
        %v863 = vunpack.c.h.b16 %v756
        %v864 = vunpack.c.l.b16 %v757
        %v865 = vunpack.c.l.b16 %v758
        %v866 = vunpack.c.h.b16 %v758
        %v867 = vunpack.c.l.b16 %v759
        %v868 = vunpack.c.l.b16 %v760
        %v869 = vunpack.c.h.b16 %v760
        %v870 = vunpack.c.l.b16 %v761
        %v871 = vunpack.c.l.b16 %v762
        %v872 = vunpack.c.h.b16 %v762
        %v873 = vunpack.c.l.b16 %v763
        %v874 = vunpack.c.l.b16 %v764
        %v875 = vunpack.c.h.b16 %v764
        %v876 = vunpack.c.l.b16 %v765
        %v877 = vunpack.c.l.b16 %v766
        %v878 = vunpack.c.h.b16 %v766
        %v879 = vunpack.c.l.b16 %v767
        %v880 = vunpack.c.l.b16 %v768
        %v881 = vunpack.c.h.b16 %v768
        %v882 = vunpack.c.l.b16 %v769
        %v883 = vunpack.c.l.b16 %v770
        %v884 = vunpack.c.h.b16 %v770
        %v885 = vunpack.c.l.b16 %v771
        %v886 = vpack.c.b16 %v841, %v838
        %v887 = vpack.c.b16 %v842, %v839
        %v888 = vpack.c.b16 %v843, %v840
        %v889 = vpack.c.b16 %v847, %v844
        %v890 = vpack.c.b16 %v848, %v845
        %v891 = vpack.c.b16 %v849, %v846
        %v892 = vpack.c.b16 %v853, %v850
        %v893 = vpack.c.b16 %v854, %v851
        %v894 = vpack.c.b16 %v855, %v852
        %v895 = vpack.c.b16 %v859, %v856
        %v896 = vpack.c.b16 %v860, %v857
        %v897 = vpack.c.b16 %v861, %v858
        %v898 = vpack.c.b16 %v865, %v862
        %v899 = vpack.c.b16 %v866, %v863
        %v900 = vpack.c.b16 %v867, %v864
        %v901 = vpack.c.b16 %v871, %v868
        %v902 = vpack.c.b16 %v872, %v869
        %v903 = vpack.c.b16 %v873, %v870
        %v904 = vpack.c.b16 %v877, %v874
        %v905 = vpack.c.b16 %v878, %v875
        %v906 = vpack.c.b16 %v879, %v876
        %v907 = vpack.c.b16 %v883, %v880
        %v908 = vpack.c.b16 %v884, %v881
        %v909 = vpack.c.b16 %v885, %v882
        %934 = vmatprep.subr.bf16.mxu0 %v908
        %935 = vmatpush1.bf16.msra.mxu0 %v907
        %936 = vmatprep.subr.bf16.mxu0 %v905
        %937 = vmatpush1.bf16.msra.mxu0 %v904
        %938 = vmatprep.subr.bf16.mxu0 %v902
        %939 = vmatpush1.bf16.msra.mxu0 %v901
        %940 = vmatprep.subr.bf16.mxu0 %v899
        %941 = vmatpush1.bf16.msra.mxu0 %v898
        %942 = vmatprep.subr.bf16.mxu0 %v896
        %943 = vmatpush1.bf16.msra.mxu0 %v895
        %944 = vmatprep.subr.bf16.mxu0 %v893
        %945 = vmatpush1.bf16.msra.mxu0 %v892
        %946 = vmatprep.subr.bf16.mxu0 %v890
        %947 = vmatpush1.bf16.msra.mxu0 %v889
        %948 = vmatprep.subr.bf16.mxu0 %v887
        %949 = vmatpush1.bf16.msra.mxu0 %v886
        %950 = vmatprep.subr.bf16.mxu0 0
        %951 = vmatpush2.bf16.msra.mxu0 0
        %952 = vmatprep.subr.bf16.mxu0 0
        %953 = vmatpush2.bf16.msra.mxu0 0
        %954 = vmatprep.subr.bf16.mxu0 0
        %955 = vmatpush2.bf16.msra.mxu0 0
        %956 = vmatprep.subr.bf16.mxu0 0
        %957 = vmatpush2.bf16.msra.mxu0 0
        %958 = vmatprep.subr.bf16.mxu0 0
        %959 = vmatpush2.bf16.msra.mxu0 0
        %960 = vmatprep.subr.bf16.mxu0 0
        %961 = vmatpush2.bf16.msra.mxu0 0
        %962 = vmatprep.subr.bf16.mxu0 0
        %963 = vmatpush2.bf16.msra.mxu0 0
        %964 = vmatprep.subr.bf16.mxu0 0
        %965 = vmatpush2.bf16.msra.mxu0 0
        %966 = vmatprep.mubr.bf16.mxu0 0
        %967 = vmatmul.mubr.bf16.gmra.mxu0 0
        %v968 = vpop.f32.mrf.mxu0
        %v969 = vadd.f32 %v794, %v968
        %v970 = vpop.f32.mrf.mxu0
        %v971 = vadd.f32 %v798, %v970
        %v972 = vpop.f32.mrf.mxu0
        %v973 = vpop.f32.mrf.mxu0
        %974 = vdwg.mxu0
        %975 = vmatprep.subr.bf16.mxu0 0
        %976 = vmatpush1.bf16.msra.mxu0 %v909
        %977 = vmatprep.subr.bf16.mxu0 0
        %978 = vmatpush1.bf16.msra.mxu0 %v906
        %979 = vmatprep.subr.bf16.mxu0 0
        %980 = vmatpush1.bf16.msra.mxu0 %v903
        %981 = vmatprep.subr.bf16.mxu0 0
        %982 = vmatpush1.bf16.msra.mxu0 %v900
        %983 = vmatprep.subr.bf16.mxu0 0
        %984 = vmatpush1.bf16.msra.mxu0 %v897
        %985 = vmatprep.subr.bf16.mxu0 0
        %986 = vmatpush1.bf16.msra.mxu0 %v894
        %987 = vmatprep.subr.bf16.mxu0 0
        %988 = vmatpush1.bf16.msra.mxu0 %v891
        %989 = vmatprep.subr.bf16.mxu0 0
        %990 = vmatpush1.bf16.msra.mxu0 %v888
        %991 = vmatprep.subr.bf16.mxu0 0
        %992 = vmatpush2.bf16.msra.mxu0 0
        %993 = vmatprep.subr.bf16.mxu0 0
        %994 = vmatpush2.bf16.msra.mxu0 0
        %995 = vmatprep.subr.bf16.mxu0 0
        %996 = vmatpush2.bf16.msra.mxu0 0
        %997 = vmatprep.subr.bf16.mxu0 0
        %998 = vmatpush2.bf16.msra.mxu0 0
        %999 = vmatprep.subr.bf16.mxu0 0
        %1000 = vmatpush2.bf16.msra.mxu0 0
        %1001 = vmatprep.subr.bf16.mxu0 0
        %1002 = vmatpush2.bf16.msra.mxu0 0
        %1003 = vmatprep.subr.bf16.mxu0 0
        %1004 = vmatpush2.bf16.msra.mxu0 0
        %1005 = vmatprep.subr.bf16.mxu0 0
        %1006 = vmatpush2.bf16.msra.mxu0 0
        %1007 = vmatprep.mubr.bf16.mxu0 0
        %1008 = vmatmul.mubr.bf16.gmra.mxu0 0
        %v1009 = vpop.f32.mrf.mxu0
        %v1010 = vadd.f32 %v802, %v1009
        %v1011 = vpop.f32.mrf.mxu0
        %v1012 = vpop.f32.mrf.mxu0
        %v1013 = vpop.f32.mrf.mxu0
        %1014 = vdwg.mxu0
        %v1015 = vadd.f32 %v616, %v969
        %v1016 = vxor.u32 %v1015, 2147483648
        %v1017 = vmul.f32 %v1016, 1.442695
        %v1018 = vpow.pop %v1017
        %v1019 = vadd.f32 %v1018, 1.0
        %v1020 = vrcp.pop %v1019
        %v1021 = vmul.f32 1.0, %v1020
        %v1022 = vadd.f32 %v618, %v971
        %v1023 = vxor.u32 %v1022, 2147483648
        %v1024 = vmul.f32 %v1023, 1.442695
        %v1025 = vpow.pop %v1024
        %v1026 = vadd.f32 %v1025, 1.0
        %v1027 = vrcp.pop %v1026
        %v1028 = vmul.f32 1.0, %v1027
        %v1029 = vmul.f32 %v1021, %v1010
        %v1030 = vadd.f32 %v669, %v1029
        %v1031 = vtanh.pop %v1030
        %v1032 = vsub.f32 1.0, %v1028
        %v1033 = vmul.f32 %v1032, %v1031
        %v1034 = vmul.f32 %v1028, 0.0
        %v1035 = vadd.f32 %v1033, %v1034
        %v1036 = vpack.c.bf16 %v1035, %v1035
        %v1038 = vlaneseq
        %v1039 = vshrl.u32 %v1038, 7
        %v1040 = vsub.s32 0, %v1039
        %v1041 = vrot.slane %v789, %v1040
        %v1059 = vunpack.c.l.b16 %v773
        %v1060 = vunpack.c.l.b16 %v774
        %v1061 = vunpack.c.l.b16 %v775
        %v1062 = vunpack.c.l.b16 %v776
        %v1063 = vunpack.c.l.b16 %v777
        %v1064 = vunpack.c.l.b16 %v778
        %v1065 = vunpack.c.l.b16 %v779
        %v1066 = vunpack.c.l.b16 %v780
        %v1067 = vunpack.c.l.b16 %v781
        %v1068 = vunpack.c.l.b16 %v782
        %v1069 = vunpack.c.l.b16 %v783
        %v1070 = vunpack.c.l.b16 %v784
        %v1071 = vunpack.c.l.b16 %v785
        %v1072 = vunpack.c.l.b16 %v786
        %v1073 = vunpack.c.l.b16 %v787
        %v1074 = vunpack.c.l.b16 %v788
        %v1075 = vpack.c.b16 %v1060, %v1059
        %v1076 = vpack.c.b16 %v1062, %v1061
        %v1077 = vpack.c.b16 %v1064, %v1063
        %v1078 = vpack.c.b16 %v1066, %v1065
        %v1079 = vpack.c.b16 %v1068, %v1067
        %v1080 = vpack.c.b16 %v1070, %v1069
        %v1081 = vpack.c.b16 %v1072, %v1071
        %v1082 = vpack.c.b16 %v1074, %v1073
        %1091 = vmatprep.subr.bf16.mxu0 0
        %1092 = vmatpush1.bf16.msra.mxu0 %v1082
        %1093 = vmatprep.subr.bf16.mxu0 0
        %1094 = vmatpush1.bf16.msra.mxu0 %v1081
        %1095 = vmatprep.subr.bf16.mxu0 0
        %1096 = vmatpush1.bf16.msra.mxu0 %v1080
        %1097 = vmatprep.subr.bf16.mxu0 0
        %1098 = vmatpush1.bf16.msra.mxu0 %v1079
        %1099 = vmatprep.subr.bf16.mxu0 0
        %1100 = vmatpush1.bf16.msra.mxu0 %v1078
        %1101 = vmatprep.subr.bf16.mxu0 0
        %1102 = vmatpush1.bf16.msra.mxu0 %v1077
        %1103 = vmatprep.subr.bf16.mxu0 0
        %1104 = vmatpush1.bf16.msra.mxu0 %v1076
        %1105 = vmatprep.subr.bf16.mxu0 0
        %1106 = vmatpush1.bf16.msra.mxu0 %v1075
        %1107 = vmatprep.subr.bf16.mxu0 0
        %1108 = vmatpush2.bf16.msra.mxu0 0
        %1109 = vmatprep.subr.bf16.mxu0 0
        %1110 = vmatpush2.bf16.msra.mxu0 0
        %1111 = vmatprep.subr.bf16.mxu0 0
        %1112 = vmatpush2.bf16.msra.mxu0 0
        %1113 = vmatprep.subr.bf16.mxu0 0
        %1114 = vmatpush2.bf16.msra.mxu0 0
        %1115 = vmatprep.subr.bf16.mxu0 0
        %1116 = vmatpush2.bf16.msra.mxu0 0
        %1117 = vmatprep.subr.bf16.mxu0 0
        %1118 = vmatpush2.bf16.msra.mxu0 0
        %1119 = vmatprep.subr.bf16.mxu0 0
        %1120 = vmatpush2.bf16.msra.mxu0 0
        %1121 = vmatprep.subr.bf16.mxu0 0
        %1122 = vmatpush2.bf16.msra.mxu0 0
        %1123 = vmatprep.mubr.bf16.mxu0 0
        %1124 = vmatmul.mubr.bf16.gmra.mxu0 %v1036
        %v1125 = vpop.f32.mrf.mxu0
        %v1126 = vadd.f32 %v1041, %v1125
        %v1127 = vpop.f32.mrf.mxu0
        %v1128 = vpop.f32.mrf.mxu0
        %v1129 = vpop.f32.mrf.mxu0
        %1130 = vdwg.mxu0
        %1131 = vst [vmem:[%s493] sm:$0xff] %v1126
        %1132 = vmatprep.subr.bf16.mxu0 %v908
        %1133 = vmatpush1.bf16.msra.mxu0 %v907
        %1134 = vmatprep.subr.bf16.mxu0 %v905
        %1135 = vmatpush1.bf16.msra.mxu0 %v904
        %1136 = vmatprep.subr.bf16.mxu0 %v902
        %1137 = vmatpush1.bf16.msra.mxu0 %v901
        %1138 = vmatprep.subr.bf16.mxu0 %v899
        %1139 = vmatpush1.bf16.msra.mxu0 %v898
        %1140 = vmatprep.subr.bf16.mxu0 %v896
        %1141 = vmatpush1.bf16.msra.mxu0 %v895
        %1142 = vmatprep.subr.bf16.mxu0 %v893
        %1143 = vmatpush1.bf16.msra.mxu0 %v892
        %1144 = vmatprep.subr.bf16.mxu0 %v890
        %1145 = vmatpush1.bf16.msra.mxu0 %v889
        %1146 = vmatprep.subr.bf16.mxu0 %v887
        %1147 = vmatpush1.bf16.msra.mxu0 %v886
        %1148 = vmatprep.subr.bf16.mxu0 0
        %1149 = vmatpush2.bf16.msra.mxu0 0
        %1150 = vmatprep.subr.bf16.mxu0 0
        %1151 = vmatpush2.bf16.msra.mxu0 0
        %1152 = vmatprep.subr.bf16.mxu0 0
        %1153 = vmatpush2.bf16.msra.mxu0 0
        %1154 = vmatprep.subr.bf16.mxu0 0
        %1155 = vmatpush2.bf16.msra.mxu0 0
        %1156 = vmatprep.subr.bf16.mxu0 0
        %1157 = vmatpush2.bf16.msra.mxu0 0
        %1158 = vmatprep.subr.bf16.mxu0 0
        %1159 = vmatpush2.bf16.msra.mxu0 0
        %1160 = vmatprep.subr.bf16.mxu0 0
        %1161 = vmatpush2.bf16.msra.mxu0 0
        %1162 = vmatprep.subr.bf16.mxu0 0
        %1163 = vmatpush2.bf16.msra.mxu0 0
        %1164 = vmatprep.mubr.bf16.mxu0 0
        %1165 = vmatmul.mubr.bf16.gmra.mxu0 %v1036
        %v1166 = vpop.f32.mrf.mxu0
        %v1167 = vadd.f32 %v794, %v1166
        %v1168 = vpop.f32.mrf.mxu0
        %v1169 = vadd.f32 %v798, %v1168
        %v1170 = vpop.f32.mrf.mxu0
        %v1171 = vpop.f32.mrf.mxu0
        %1172 = vdwg.mxu0
        %1173 = vmatprep.subr.bf16.mxu0 0
        %1174 = vmatpush1.bf16.msra.mxu0 %v909
        %1175 = vmatprep.subr.bf16.mxu0 0
        %1176 = vmatpush1.bf16.msra.mxu0 %v906
        %1177 = vmatprep.subr.bf16.mxu0 0
        %1178 = vmatpush1.bf16.msra.mxu0 %v903
        %1179 = vmatprep.subr.bf16.mxu0 0
        %1180 = vmatpush1.bf16.msra.mxu0 %v900
        %1181 = vmatprep.subr.bf16.mxu0 0
        %1182 = vmatpush1.bf16.msra.mxu0 %v897
        %1183 = vmatprep.subr.bf16.mxu0 0
        %1184 = vmatpush1.bf16.msra.mxu0 %v894
        %1185 = vmatprep.subr.bf16.mxu0 0
        %1186 = vmatpush1.bf16.msra.mxu0 %v891
        %1187 = vmatprep.subr.bf16.mxu0 0
        %1188 = vmatpush1.bf16.msra.mxu0 %v888
        %1189 = vmatprep.subr.bf16.mxu0 0
        %1190 = vmatpush2.bf16.msra.mxu0 0
        %1191 = vmatprep.subr.bf16.mxu0 0
        %1192 = vmatpush2.bf16.msra.mxu0 0
        %1193 = vmatprep.subr.bf16.mxu0 0
        %1194 = vmatpush2.bf16.msra.mxu0 0
        %1195 = vmatprep.subr.bf16.mxu0 0
        %1196 = vmatpush2.bf16.msra.mxu0 0
        %1197 = vmatprep.subr.bf16.mxu0 0
        %1198 = vmatpush2.bf16.msra.mxu0 0
        %1199 = vmatprep.subr.bf16.mxu0 0
        %1200 = vmatpush2.bf16.msra.mxu0 0
        %1201 = vmatprep.subr.bf16.mxu0 0
        %1202 = vmatpush2.bf16.msra.mxu0 0
        %1203 = vmatprep.subr.bf16.mxu0 0
        %1204 = vmatpush2.bf16.msra.mxu0 0
        %1205 = vmatprep.mubr.bf16.mxu0 0
        %1206 = vmatmul.mubr.bf16.gmra.mxu0 %v1036
        %v1207 = vpop.f32.mrf.mxu0
        %v1208 = vadd.f32 %v802, %v1207
        %v1209 = vpop.f32.mrf.mxu0
        %v1210 = vpop.f32.mrf.mxu0
        %v1211 = vpop.f32.mrf.mxu0
        %1212 = vdwg.mxu0
        %v1213 = vadd.f32 %v620, %v1167
        %v1214 = vxor.u32 %v1213, 2147483648
        %v1215 = vmul.f32 %v1214, 1.442695
        %v1216 = vpow.pop %v1215
        %v1217 = vadd.f32 %v1216, 1.0
        %v1218 = vrcp.pop %v1217
        %v1219 = vmul.f32 1.0, %v1218
        %v1220 = vadd.f32 %v622, %v1169
        %v1221 = vxor.u32 %v1220, 2147483648
        %v1222 = vmul.f32 %v1221, 1.442695
        %v1223 = vpow.pop %v1222
        %v1224 = vadd.f32 %v1223, 1.0
        %v1225 = vrcp.pop %v1224
        %v1226 = vmul.f32 1.0, %v1225
        %v1227 = vmul.f32 %v1219, %v1208
        %v1228 = vadd.f32 %v673, %v1227
        %v1229 = vtanh.pop %v1228
        %v1230 = vsub.f32 1.0, %v1226
        %v1231 = vmul.f32 %v1230, %v1229
        %v1232 = vmul.f32 %v1226, %v1035
        %v1233 = vadd.f32 %v1231, %v1232
        %v1234 = vpack.c.bf16 %v1233, %v1233
        %1235 = vmatprep.subr.bf16.mxu0 0
        %1236 = vmatpush1.bf16.msra.mxu0 %v1082
        %1237 = vmatprep.subr.bf16.mxu0 0
        %1238 = vmatpush1.bf16.msra.mxu0 %v1081
        %1239 = vmatprep.subr.bf16.mxu0 0
        %1240 = vmatpush1.bf16.msra.mxu0 %v1080
        %1241 = vmatprep.subr.bf16.mxu0 0
        %1242 = vmatpush1.bf16.msra.mxu0 %v1079
        %1243 = vmatprep.subr.bf16.mxu0 0
        %1244 = vmatpush1.bf16.msra.mxu0 %v1078
        %1245 = vmatprep.subr.bf16.mxu0 0
        %1246 = vmatpush1.bf16.msra.mxu0 %v1077
        %1247 = vmatprep.subr.bf16.mxu0 0
        %1248 = vmatpush1.bf16.msra.mxu0 %v1076
        %1249 = vmatprep.subr.bf16.mxu0 0
        %1250 = vmatpush1.bf16.msra.mxu0 %v1075
        %1251 = vmatprep.subr.bf16.mxu0 0
        %1252 = vmatpush2.bf16.msra.mxu0 0
        %1253 = vmatprep.subr.bf16.mxu0 0
        %1254 = vmatpush2.bf16.msra.mxu0 0
        %1255 = vmatprep.subr.bf16.mxu0 0
        %1256 = vmatpush2.bf16.msra.mxu0 0
        %1257 = vmatprep.subr.bf16.mxu0 0
        %1258 = vmatpush2.bf16.msra.mxu0 0
        %1259 = vmatprep.subr.bf16.mxu0 0
        %1260 = vmatpush2.bf16.msra.mxu0 0
        %1261 = vmatprep.subr.bf16.mxu0 0
        %1262 = vmatpush2.bf16.msra.mxu0 0
        %1263 = vmatprep.subr.bf16.mxu0 0
        %1264 = vmatpush2.bf16.msra.mxu0 0
        %1265 = vmatprep.subr.bf16.mxu0 0
        %1266 = vmatpush2.bf16.msra.mxu0 0
        %1267 = vmatprep.mubr.bf16.mxu0 0
        %1268 = vmatmul.mubr.bf16.gmra.mxu0 %v1234
        %v1269 = vpop.f32.mrf.mxu0
        %v1270 = vadd.f32 %v1041, %v1269
        %v1271 = vpop.f32.mrf.mxu0
        %v1272 = vpop.f32.mrf.mxu0
        %v1273 = vpop.f32.mrf.mxu0
        %1274 = vdwg.mxu0
        %s1275 = scalar_lea.vmem %s493, 8 [#allocation12]
        %1276 = vst [vmem:[%s1275] sm:$0xff] %v1270
        %1277 = vmatprep.subr.bf16.mxu0 %v908
        %1278 = vmatpush1.bf16.msra.mxu0 %v907
        %1279 = vmatprep.subr.bf16.mxu0 %v905
        %1280 = vmatpush1.bf16.msra.mxu0 %v904
        %1281 = vmatprep.subr.bf16.mxu0 %v902
        %1282 = vmatpush1.bf16.msra.mxu0 %v901
        %1283 = vmatprep.subr.bf16.mxu0 %v899
        %1284 = vmatpush1.bf16.msra.mxu0 %v898
        %1285 = vmatprep.subr.bf16.mxu0 %v896
        %1286 = vmatpush1.bf16.msra.mxu0 %v895
        %1287 = vmatprep.subr.bf16.mxu0 %v893
        %1288 = vmatpush1.bf16.msra.mxu0 %v892
        %1289 = vmatprep.subr.bf16.mxu0 %v890
        %1290 = vmatpush1.bf16.msra.mxu0 %v889
        %1291 = vmatprep.subr.bf16.mxu0 %v887
        %1292 = vmatpush1.bf16.msra.mxu0 %v886
        %1293 = vmatprep.subr.bf16.mxu0 0
        %1294 = vmatpush2.bf16.msra.mxu0 0
        %1295 = vmatprep.subr.bf16.mxu0 0
        %1296 = vmatpush2.bf16.msra.mxu0 0
        %1297 = vmatprep.subr.bf16.mxu0 0
        %1298 = vmatpush2.bf16.msra.mxu0 0
        %1299 = vmatprep.subr.bf16.mxu0 0
        %1300 = vmatpush2.bf16.msra.mxu0 0
        %1301 = vmatprep.subr.bf16.mxu0 0
        %1302 = vmatpush2.bf16.msra.mxu0 0
        %1303 = vmatprep.subr.bf16.mxu0 0
        %1304 = vmatpush2.bf16.msra.mxu0 0
        %1305 = vmatprep.subr.bf16.mxu0 0
        %1306 = vmatpush2.bf16.msra.mxu0 0
        %1307 = vmatprep.subr.bf16.mxu0 0
        %1308 = vmatpush2.bf16.msra.mxu0 0
        %1309 = vmatprep.mubr.bf16.mxu0 0
        %1310 = vmatmul.mubr.bf16.gmra.mxu0 %v1234
        %v1311 = vpop.f32.mrf.mxu0
        %v1312 = vadd.f32 %v794, %v1311
        %v1313 = vpop.f32.mrf.mxu0
        %v1314 = vadd.f32 %v798, %v1313
        %v1315 = vpop.f32.mrf.mxu0
        %v1316 = vpop.f32.mrf.mxu0
        %1317 = vdwg.mxu0
        %1318 = vmatprep.subr.bf16.mxu0 0
        %1319 = vmatpush1.bf16.msra.mxu0 %v909
        %1320 = vmatprep.subr.bf16.mxu0 0
        %1321 = vmatpush1.bf16.msra.mxu0 %v906
        %1322 = vmatprep.subr.bf16.mxu0 0
        %1323 = vmatpush1.bf16.msra.mxu0 %v903
        %1324 = vmatprep.subr.bf16.mxu0 0
        %1325 = vmatpush1.bf16.msra.mxu0 %v900
        %1326 = vmatprep.subr.bf16.mxu0 0
        %1327 = vmatpush1.bf16.msra.mxu0 %v897
        %1328 = vmatprep.subr.bf16.mxu0 0
        %1329 = vmatpush1.bf16.msra.mxu0 %v894
        %1330 = vmatprep.subr.bf16.mxu0 0
        %1331 = vmatpush1.bf16.msra.mxu0 %v891
        %1332 = vmatprep.subr.bf16.mxu0 0
        %1333 = vmatpush1.bf16.msra.mxu0 %v888
        %1334 = vmatprep.subr.bf16.mxu0 0
        %1335 = vmatpush2.bf16.msra.mxu0 0
        %1336 = vmatprep.subr.bf16.mxu0 0
        %1337 = vmatpush2.bf16.msra.mxu0 0
        %1338 = vmatprep.subr.bf16.mxu0 0
        %1339 = vmatpush2.bf16.msra.mxu0 0
        %1340 = vmatprep.subr.bf16.mxu0 0
        %1341 = vmatpush2.bf16.msra.mxu0 0
        %1342 = vmatprep.subr.bf16.mxu0 0
        %1343 = vmatpush2.bf16.msra.mxu0 0
        %1344 = vmatprep.subr.bf16.mxu0 0
        %1345 = vmatpush2.bf16.msra.mxu0 0
        %1346 = vmatprep.subr.bf16.mxu0 0
        %1347 = vmatpush2.bf16.msra.mxu0 0
        %1348 = vmatprep.subr.bf16.mxu0 0
        %1349 = vmatpush2.bf16.msra.mxu0 0
        %1350 = vmatprep.mubr.bf16.mxu0 0
        %1351 = vmatmul.mubr.bf16.gmra.mxu0 %v1234
        %v1352 = vpop.f32.mrf.mxu0
        %v1353 = vadd.f32 %v802, %v1352
        %v1354 = vpop.f32.mrf.mxu0
        %v1355 = vpop.f32.mrf.mxu0
        %v1356 = vpop.f32.mrf.mxu0
        %1357 = vdwg.mxu0
        %v1358 = vadd.f32 %v626, %v1312
        %v1359 = vxor.u32 %v1358, 2147483648
        %v1360 = vmul.f32 %v1359, 1.442695
        %v1361 = vpow.pop %v1360
        %v1362 = vadd.f32 %v1361, 1.0
        %v1363 = vrcp.pop %v1362
        %v1364 = vmul.f32 1.0, %v1363
        %v1365 = vadd.f32 %v628, %v1314
        %v1366 = vxor.u32 %v1365, 2147483648
        %v1367 = vmul.f32 %v1366, 1.442695
        %v1368 = vpow.pop %v1367
        %v1369 = vadd.f32 %v1368, 1.0
        %v1370 = vrcp.pop %v1369
        %v1371 = vmul.f32 1.0, %v1370
        %v1372 = vmul.f32 %v1364, %v1353
        %v1373 = vadd.f32 %v679, %v1372
        %v1374 = vtanh.pop %v1373
        %v1375 = vsub.f32 1.0, %v1371
        %v1376 = vmul.f32 %v1375, %v1374
        %v1377 = vmul.f32 %v1371, %v1233
        %v1378 = vadd.f32 %v1376, %v1377
        %v1379 = vpack.c.bf16 %v1378, %v1378
        %1380 = vmatprep.subr.bf16.mxu0 0
        %1381 = vmatpush1.bf16.msra.mxu0 %v1082
        %1382 = vmatprep.subr.bf16.mxu0 0
        %1383 = vmatpush1.bf16.msra.mxu0 %v1081
        %1384 = vmatprep.subr.bf16.mxu0 0
        %1385 = vmatpush1.bf16.msra.mxu0 %v1080
        %1386 = vmatprep.subr.bf16.mxu0 0
        %1387 = vmatpush1.bf16.msra.mxu0 %v1079
        %1388 = vmatprep.subr.bf16.mxu0 0
        %1389 = vmatpush1.bf16.msra.mxu0 %v1078
        %1390 = vmatprep.subr.bf16.mxu0 0
        %1391 = vmatpush1.bf16.msra.mxu0 %v1077
        %1392 = vmatprep.subr.bf16.mxu0 0
        %1393 = vmatpush1.bf16.msra.mxu0 %v1076
        %1394 = vmatprep.subr.bf16.mxu0 0
        %1395 = vmatpush1.bf16.msra.mxu0 %v1075
        %1396 = vmatprep.subr.bf16.mxu0 0
        %1397 = vmatpush2.bf16.msra.mxu0 0
        %1398 = vmatprep.subr.bf16.mxu0 0
        %1399 = vmatpush2.bf16.msra.mxu0 0
        %1400 = vmatprep.subr.bf16.mxu0 0
        %1401 = vmatpush2.bf16.msra.mxu0 0
        %1402 = vmatprep.subr.bf16.mxu0 0
        %1403 = vmatpush2.bf16.msra.mxu0 0
        %1404 = vmatprep.subr.bf16.mxu0 0
        %1405 = vmatpush2.bf16.msra.mxu0 0
        %1406 = vmatprep.subr.bf16.mxu0 0
        %1407 = vmatpush2.bf16.msra.mxu0 0
        %1408 = vmatprep.subr.bf16.mxu0 0
        %1409 = vmatpush2.bf16.msra.mxu0 0
        %1410 = vmatprep.subr.bf16.mxu0 0
        %1411 = vmatpush2.bf16.msra.mxu0 0
        %1412 = vmatprep.mubr.bf16.mxu0 0
        %1413 = vmatmul.mubr.bf16.gmra.mxu0 %v1379
        %v1414 = vpop.f32.mrf.mxu0
        %v1415 = vadd.f32 %v1041, %v1414
        %v1416 = vpop.f32.mrf.mxu0
        %v1417 = vpop.f32.mrf.mxu0
        %v1418 = vpop.f32.mrf.mxu0
        %1419 = vdwg.mxu0
        %s1420 = scalar_lea.vmem %s493, 16 [#allocation12]
        %1421 = vst [vmem:[%s1420] sm:$0xff] %v1415
        %1422 = vmatprep.subr.bf16.mxu0 %v908
        %1423 = vmatpush1.bf16.msra.mxu0 %v907
        %1424 = vmatprep.subr.bf16.mxu0 %v905
        %1425 = vmatpush1.bf16.msra.mxu0 %v904
        %1426 = vmatprep.subr.bf16.mxu0 %v902
        %1427 = vmatpush1.bf16.msra.mxu0 %v901
        %1428 = vmatprep.subr.bf16.mxu0 %v899
        %1429 = vmatpush1.bf16.msra.mxu0 %v898
        %1430 = vmatprep.subr.bf16.mxu0 %v896
        %1431 = vmatpush1.bf16.msra.mxu0 %v895
        %1432 = vmatprep.subr.bf16.mxu0 %v893
        %1433 = vmatpush1.bf16.msra.mxu0 %v892
        %1434 = vmatprep.subr.bf16.mxu0 %v890
        %1435 = vmatpush1.bf16.msra.mxu0 %v889
        %1436 = vmatprep.subr.bf16.mxu0 %v887
        %1437 = vmatpush1.bf16.msra.mxu0 %v886
        %1438 = vmatprep.subr.bf16.mxu0 0
        %1439 = vmatpush2.bf16.msra.mxu0 0
        %1440 = vmatprep.subr.bf16.mxu0 0
        %1441 = vmatpush2.bf16.msra.mxu0 0
        %1442 = vmatprep.subr.bf16.mxu0 0
        %1443 = vmatpush2.bf16.msra.mxu0 0
        %1444 = vmatprep.subr.bf16.mxu0 0
        %1445 = vmatpush2.bf16.msra.mxu0 0
        %1446 = vmatprep.subr.bf16.mxu0 0
        %1447 = vmatpush2.bf16.msra.mxu0 0
        %1448 = vmatprep.subr.bf16.mxu0 0
        %1449 = vmatpush2.bf16.msra.mxu0 0
        %1450 = vmatprep.subr.bf16.mxu0 0
        %1451 = vmatpush2.bf16.msra.mxu0 0
        %1452 = vmatprep.subr.bf16.mxu0 0
        %1453 = vmatpush2.bf16.msra.mxu0 0
        %1454 = vmatprep.mubr.bf16.mxu0 0
        %1455 = vmatmul.mubr.bf16.gmra.mxu0 %v1379
        %v1456 = vpop.f32.mrf.mxu0
        %v1457 = vadd.f32 %v794, %v1456
        %v1458 = vpop.f32.mrf.mxu0
        %v1459 = vadd.f32 %v798, %v1458
        %v1460 = vpop.f32.mrf.mxu0
        %v1461 = vpop.f32.mrf.mxu0
        %1462 = vdwg.mxu0
        %1463 = vmatprep.subr.bf16.mxu0 0
        %1464 = vmatpush1.bf16.msra.mxu0 %v909
        %1465 = vmatprep.subr.bf16.mxu0 0
        %1466 = vmatpush1.bf16.msra.mxu0 %v906
        %1467 = vmatprep.subr.bf16.mxu0 0
        %1468 = vmatpush1.bf16.msra.mxu0 %v903
        %1469 = vmatprep.subr.bf16.mxu0 0
        %1470 = vmatpush1.bf16.msra.mxu0 %v900
        %1471 = vmatprep.subr.bf16.mxu0 0
        %1472 = vmatpush1.bf16.msra.mxu0 %v897
        %1473 = vmatprep.subr.bf16.mxu0 0
        %1474 = vmatpush1.bf16.msra.mxu0 %v894
        %1475 = vmatprep.subr.bf16.mxu0 0
        %1476 = vmatpush1.bf16.msra.mxu0 %v891
        %1477 = vmatprep.subr.bf16.mxu0 0
        %1478 = vmatpush1.bf16.msra.mxu0 %v888
        %1479 = vmatprep.subr.bf16.mxu0 0
        %1480 = vmatpush2.bf16.msra.mxu0 0
        %1481 = vmatprep.subr.bf16.mxu0 0
        %1482 = vmatpush2.bf16.msra.mxu0 0
        %1483 = vmatprep.subr.bf16.mxu0 0
        %1484 = vmatpush2.bf16.msra.mxu0 0
        %1485 = vmatprep.subr.bf16.mxu0 0
        %1486 = vmatpush2.bf16.msra.mxu0 0
        %1487 = vmatprep.subr.bf16.mxu0 0
        %1488 = vmatpush2.bf16.msra.mxu0 0
        %1489 = vmatprep.subr.bf16.mxu0 0
        %1490 = vmatpush2.bf16.msra.mxu0 0
        %1491 = vmatprep.subr.bf16.mxu0 0
        %1492 = vmatpush2.bf16.msra.mxu0 0
        %1493 = vmatprep.subr.bf16.mxu0 0
        %1494 = vmatpush2.bf16.msra.mxu0 0
        %1495 = vmatprep.mubr.bf16.mxu0 0
        %1496 = vmatmul.mubr.bf16.gmra.mxu0 %v1379
        %v1497 = vpop.f32.mrf.mxu0
        %v1498 = vadd.f32 %v802, %v1497
        %v1499 = vpop.f32.mrf.mxu0
        %v1500 = vpop.f32.mrf.mxu0
        %v1501 = vpop.f32.mrf.mxu0
        %1502 = vdwg.mxu0
        %v1503 = vadd.f32 %v630, %v1457
        %v1504 = vxor.u32 %v1503, 2147483648
        %v1505 = vmul.f32 %v1504, 1.442695
        %v1506 = vpow.pop %v1505
        %v1507 = vadd.f32 %v1506, 1.0
        %v1508 = vrcp.pop %v1507
        %v1509 = vmul.f32 1.0, %v1508
        %v1510 = vadd.f32 %v632, %v1459
        %v1511 = vxor.u32 %v1510, 2147483648
        %v1512 = vmul.f32 %v1511, 1.442695
        %v1513 = vpow.pop %v1512
        %v1514 = vadd.f32 %v1513, 1.0
        %v1515 = vrcp.pop %v1514
        %v1516 = vmul.f32 1.0, %v1515
        %v1517 = vmul.f32 %v1509, %v1498
        %v1518 = vadd.f32 %v683, %v1517
        %v1519 = vtanh.pop %v1518
        %v1520 = vsub.f32 1.0, %v1516
        %v1521 = vmul.f32 %v1520, %v1519
        %v1522 = vmul.f32 %v1516, %v1378
        %v1523 = vadd.f32 %v1521, %v1522
        %v1524 = vpack.c.bf16 %v1523, %v1523
        %1525 = vmatprep.subr.bf16.mxu0 0
        %1526 = vmatpush1.bf16.msra.mxu0 %v1082
        %1527 = vmatprep.subr.bf16.mxu0 0
        %1528 = vmatpush1.bf16.msra.mxu0 %v1081
        %1529 = vmatprep.subr.bf16.mxu0 0
        %1530 = vmatpush1.bf16.msra.mxu0 %v1080
        %1531 = vmatprep.subr.bf16.mxu0 0
        %1532 = vmatpush1.bf16.msra.mxu0 %v1079
        %1533 = vmatprep.subr.bf16.mxu0 0
        %1534 = vmatpush1.bf16.msra.mxu0 %v1078
        %1535 = vmatprep.subr.bf16.mxu0 0
        %1536 = vmatpush1.bf16.msra.mxu0 %v1077
        %1537 = vmatprep.subr.bf16.mxu0 0
        %1538 = vmatpush1.bf16.msra.mxu0 %v1076
        %1539 = vmatprep.subr.bf16.mxu0 0
        %1540 = vmatpush1.bf16.msra.mxu0 %v1075
        %1541 = vmatprep.subr.bf16.mxu0 0
        %1542 = vmatpush2.bf16.msra.mxu0 0
        %1543 = vmatprep.subr.bf16.mxu0 0
        %1544 = vmatpush2.bf16.msra.mxu0 0
        %1545 = vmatprep.subr.bf16.mxu0 0
        %1546 = vmatpush2.bf16.msra.mxu0 0
        %1547 = vmatprep.subr.bf16.mxu0 0
        %1548 = vmatpush2.bf16.msra.mxu0 0
        %1549 = vmatprep.subr.bf16.mxu0 0
        %1550 = vmatpush2.bf16.msra.mxu0 0
        %1551 = vmatprep.subr.bf16.mxu0 0
        %1552 = vmatpush2.bf16.msra.mxu0 0
        %1553 = vmatprep.subr.bf16.mxu0 0
        %1554 = vmatpush2.bf16.msra.mxu0 0
        %1555 = vmatprep.subr.bf16.mxu0 0
        %1556 = vmatpush2.bf16.msra.mxu0 0
        %1557 = vmatprep.mubr.bf16.mxu0 0
        %1558 = vmatmul.mubr.bf16.gmra.mxu0 %v1524
        %v1559 = vpop.f32.mrf.mxu0
        %v1560 = vadd.f32 %v1041, %v1559
        %v1561 = vpop.f32.mrf.mxu0
        %v1562 = vpop.f32.mrf.mxu0
        %v1563 = vpop.f32.mrf.mxu0
        %1564 = vdwg.mxu0
        %s1565 = scalar_lea.vmem %s493, 24 [#allocation12]
        %1566 = vst [vmem:[%s1565] sm:$0xff] %v1560
        %s1567 = scalar_lea.vmem %s400, 192 [#allocation4]
        %v1568 = vld [vmem:[%s1567] sm:$0xff]
        %v1569 = vld [vmem:[%s1567 + $0x8] sm:$0xf]
        %v1570 = vld [vmem:[%s1567 + $0xc] sm:$0xff]
        %v1571 = vld [vmem:[%s1567 + $0x14] sm:$0xf]
        %v1572 = vld [vmem:[%s1567 + $0x18] sm:$0xff]
        %v1573 = vld [vmem:[%s1567 + $0x20] sm:$0xf]
        %v1574 = vld [vmem:[%s1567 + $0x24] sm:$0xff]
        %v1575 = vld [vmem:[%s1567 + $0x2c] sm:$0xf]
        %v1576 = vld [vmem:[%s1567 + $0x30] sm:$0xff]
        %v1577 = vld [vmem:[%s1567 + $0x38] sm:$0xf]
        %v1578 = vld [vmem:[%s1567 + $0x3c] sm:$0xff]
        %v1579 = vld [vmem:[%s1567 + $0x44] sm:$0xf]
        %v1580 = vld [vmem:[%s1567 + $0x48] sm:$0xff]
        %v1581 = vld [vmem:[%s1567 + $0x50] sm:$0xf]
        %v1582 = vld [vmem:[%s1567 + $0x54] sm:$0xff]
        %v1583 = vld [vmem:[%s1567 + $0x5c] sm:$0xf]
        %v1584 = vld [vmem:[%s1567 + $0x60] sm:$0xff]
        %v1585 = vld [vmem:[%s1567 + $0x68] sm:$0xf]
        %v1586 = vld [vmem:[%s1567 + $0x6c] sm:$0xff]
        %v1587 = vld [vmem:[%s1567 + $0x74] sm:$0xf]
        %v1588 = vld [vmem:[%s1567 + $0x78] sm:$0xff]
        %v1589 = vld [vmem:[%s1567 + $0x80] sm:$0xf]
        %v1590 = vld [vmem:[%s1567 + $0x84] sm:$0xff]
        %v1591 = vld [vmem:[%s1567 + $0x8c] sm:$0xf]
        %v1592 = vld [vmem:[%s1567 + $0x90] sm:$0xff]
        %v1593 = vld [vmem:[%s1567 + $0x98] sm:$0xf]
        %v1594 = vld [vmem:[%s1567 + $0x9c] sm:$0xff]
        %v1595 = vld [vmem:[%s1567 + $0xa4] sm:$0xf]
        %v1596 = vld [vmem:[%s1567 + $0xa8] sm:$0xff]
        %v1597 = vld [vmem:[%s1567 + $0xb0] sm:$0xf]
        %v1598 = vld [vmem:[%s1567 + $0xb4] sm:$0xff]
        %v1599 = vld [vmem:[%s1567 + $0xbc] sm:$0xf]
        %s1600 = scalar_lea.vmem %s418, 3 [#allocation7]
        %v1601 = vld [vmem:[%s1600] sm:$0x7]
        %v1602 = vld [vmem:[%s427 + $0x40] sm:$0xf]
        %v1603 = vld [vmem:[%s427 + $0x44] sm:$0xf]
        %v1604 = vld [vmem:[%s427 + $0x48] sm:$0xf]
        %v1605 = vld [vmem:[%s427 + $0x4c] sm:$0xf]
        %v1606 = vld [vmem:[%s427 + $0x50] sm:$0xf]
        %v1607 = vld [vmem:[%s427 + $0x54] sm:$0xf]
        %v1608 = vld [vmem:[%s427 + $0x58] sm:$0xf]
        %v1609 = vld [vmem:[%s427 + $0x5c] sm:$0xf]
        %v1610 = vld [vmem:[%s427 + $0x60] sm:$0xf]
        %v1611 = vld [vmem:[%s427 + $0x64] sm:$0xf]
        %v1612 = vld [vmem:[%s427 + $0x68] sm:$0xf]
        %v1613 = vld [vmem:[%s427 + $0x6c] sm:$0xf]
        %v1614 = vld [vmem:[%s427 + $0x70] sm:$0xf]
        %v1615 = vld [vmem:[%s427 + $0x74] sm:$0xf]
        %v1616 = vld [vmem:[%s427 + $0x78] sm:$0xf]
        %v1617 = vld [vmem:[%s427 + $0x7c] sm:$0xf]
        %v1619 = vlaneseq
        %v1620 = vshrl.u32 %v1619, 7
        %v1621 = vsub.s32 0, %v1620
        %v1622 = vrot.slane %v1601, %v1621
        %v1623 = vlaneseq
        %v1624 = vshrl.u32 %v1623, 7
        %v1625 = vsub.s32 1, %v1624
        %v1626 = vrot.slane %v1601, %v1625
        %v1627 = vlaneseq
        %v1628 = vshrl.u32 %v1627, 7
        %v1629 = vsub.s32 2, %v1628
        %v1630 = vrot.slane %v1601, %v1629
        %v1666 = vunpack.c.l.b16 %v1568
        %v1667 = vunpack.c.h.b16 %v1568
        %v1668 = vunpack.c.l.b16 %v1569
        %v1669 = vunpack.c.l.b16 %v1570
        %v1670 = vunpack.c.h.b16 %v1570
        %v1671 = vunpack.c.l.b16 %v1571
        %v1672 = vunpack.c.l.b16 %v1572
        %v1673 = vunpack.c.h.b16 %v1572
        %v1674 = vunpack.c.l.b16 %v1573
        %v1675 = vunpack.c.l.b16 %v1574
        %v1676 = vunpack.c.h.b16 %v1574
        %v1677 = vunpack.c.l.b16 %v1575
        %v1678 = vunpack.c.l.b16 %v1576
        %v1679 = vunpack.c.h.b16 %v1576
        %v1680 = vunpack.c.l.b16 %v1577
        %v1681 = vunpack.c.l.b16 %v1578
        %v1682 = vunpack.c.h.b16 %v1578
        %v1683 = vunpack.c.l.b16 %v1579
        %v1684 = vunpack.c.l.b16 %v1580
        %v1685 = vunpack.c.h.b16 %v1580
        %v1686 = vunpack.c.l.b16 %v1581
        %v1687 = vunpack.c.l.b16 %v1582
        %v1688 = vunpack.c.h.b16 %v1582
        %v1689 = vunpack.c.l.b16 %v1583
        %v1690 = vunpack.c.l.b16 %v1584
        %v1691 = vunpack.c.h.b16 %v1584
        %v1692 = vunpack.c.l.b16 %v1585
        %v1693 = vunpack.c.l.b16 %v1586
        %v1694 = vunpack.c.h.b16 %v1586
        %v1695 = vunpack.c.l.b16 %v1587
        %v1696 = vunpack.c.l.b16 %v1588
        %v1697 = vunpack.c.h.b16 %v1588
        %v1698 = vunpack.c.l.b16 %v1589
        %v1699 = vunpack.c.l.b16 %v1590
        %v1700 = vunpack.c.h.b16 %v1590
        %v1701 = vunpack.c.l.b16 %v1591
        %v1702 = vunpack.c.l.b16 %v1592
        %v1703 = vunpack.c.h.b16 %v1592
        %v1704 = vunpack.c.l.b16 %v1593
        %v1705 = vunpack.c.l.b16 %v1594
        %v1706 = vunpack.c.h.b16 %v1594
        %v1707 = vunpack.c.l.b16 %v1595
        %v1708 = vunpack.c.l.b16 %v1596
        %v1709 = vunpack.c.h.b16 %v1596
        %v1710 = vunpack.c.l.b16 %v1597
        %v1711 = vunpack.c.l.b16 %v1598
        %v1712 = vunpack.c.h.b16 %v1598
        %v1713 = vunpack.c.l.b16 %v1599
        %v1714 = vpack.c.b16 %v1669, %v1666
        %v1715 = vpack.c.b16 %v1670, %v1667
        %v1716 = vpack.c.b16 %v1671, %v1668
        %v1717 = vpack.c.b16 %v1675, %v1672
        %v1718 = vpack.c.b16 %v1676, %v1673
        %v1719 = vpack.c.b16 %v1677, %v1674
        %v1720 = vpack.c.b16 %v1681, %v1678
        %v1721 = vpack.c.b16 %v1682, %v1679
        %v1722 = vpack.c.b16 %v1683, %v1680
        %v1723 = vpack.c.b16 %v1687, %v1684
        %v1724 = vpack.c.b16 %v1688, %v1685
        %v1725 = vpack.c.b16 %v1689, %v1686
        %v1726 = vpack.c.b16 %v1693, %v1690
        %v1727 = vpack.c.b16 %v1694, %v1691
        %v1728 = vpack.c.b16 %v1695, %v1692
        %v1729 = vpack.c.b16 %v1699, %v1696
        %v1730 = vpack.c.b16 %v1700, %v1697
        %v1731 = vpack.c.b16 %v1701, %v1698
        %v1732 = vpack.c.b16 %v1705, %v1702
        %v1733 = vpack.c.b16 %v1706, %v1703
        %v1734 = vpack.c.b16 %v1707, %v1704
        %v1735 = vpack.c.b16 %v1711, %v1708
        %v1736 = vpack.c.b16 %v1712, %v1709
        %v1737 = vpack.c.b16 %v1713, %v1710
        %1762 = vmatprep.subr.bf16.mxu0 %v1736
        %1763 = vmatpush1.bf16.msra.mxu0 %v1735
        %1764 = vmatprep.subr.bf16.mxu0 %v1733
        %1765 = vmatpush1.bf16.msra.mxu0 %v1732
        %1766 = vmatprep.subr.bf16.mxu0 %v1730
        %1767 = vmatpush1.bf16.msra.mxu0 %v1729
        %1768 = vmatprep.subr.bf16.mxu0 %v1727
        %1769 = vmatpush1.bf16.msra.mxu0 %v1726
        %1770 = vmatprep.subr.bf16.mxu0 %v1724
        %1771 = vmatpush1.bf16.msra.mxu0 %v1723
        %1772 = vmatprep.subr.bf16.mxu0 %v1721
        %1773 = vmatpush1.bf16.msra.mxu0 %v1720
        %1774 = vmatprep.subr.bf16.mxu0 %v1718
        %1775 = vmatpush1.bf16.msra.mxu0 %v1717
        %1776 = vmatprep.subr.bf16.mxu0 %v1715
        %1777 = vmatpush1.bf16.msra.mxu0 %v1714
        %1778 = vmatprep.subr.bf16.mxu0 0
        %1779 = vmatpush2.bf16.msra.mxu0 0
        %1780 = vmatprep.subr.bf16.mxu0 0
        %1781 = vmatpush2.bf16.msra.mxu0 0
        %1782 = vmatprep.subr.bf16.mxu0 0
        %1783 = vmatpush2.bf16.msra.mxu0 0
        %1784 = vmatprep.subr.bf16.mxu0 0
        %1785 = vmatpush2.bf16.msra.mxu0 0
        %1786 = vmatprep.subr.bf16.mxu0 0
        %1787 = vmatpush2.bf16.msra.mxu0 0
        %1788 = vmatprep.subr.bf16.mxu0 0
        %1789 = vmatpush2.bf16.msra.mxu0 0
        %1790 = vmatprep.subr.bf16.mxu0 0
        %1791 = vmatpush2.bf16.msra.mxu0 0
        %1792 = vmatprep.subr.bf16.mxu0 0
        %1793 = vmatpush2.bf16.msra.mxu0 0
        %1794 = vmatprep.mubr.bf16.mxu0 0
        %1795 = vmatmul.mubr.bf16.gmra.mxu0 0
        %v1796 = vpop.f32.mrf.mxu0
        %v1797 = vadd.f32 %v1622, %v1796
        %v1798 = vpop.f32.mrf.mxu0
        %v1799 = vadd.f32 %v1626, %v1798
        %v1800 = vpop.f32.mrf.mxu0
        %v1801 = vpop.f32.mrf.mxu0
        %1802 = vdwg.mxu0
        %1803 = vmatprep.subr.bf16.mxu0 0
        %1804 = vmatpush1.bf16.msra.mxu0 %v1737
        %1805 = vmatprep.subr.bf16.mxu0 0
        %1806 = vmatpush1.bf16.msra.mxu0 %v1734
        %1807 = vmatprep.subr.bf16.mxu0 0
        %1808 = vmatpush1.bf16.msra.mxu0 %v1731
        %1809 = vmatprep.subr.bf16.mxu0 0
        %1810 = vmatpush1.bf16.msra.mxu0 %v1728
        %1811 = vmatprep.subr.bf16.mxu0 0
        %1812 = vmatpush1.bf16.msra.mxu0 %v1725
        %1813 = vmatprep.subr.bf16.mxu0 0
        %1814 = vmatpush1.bf16.msra.mxu0 %v1722
        %1815 = vmatprep.subr.bf16.mxu0 0
        %1816 = vmatpush1.bf16.msra.mxu0 %v1719
        %1817 = vmatprep.subr.bf16.mxu0 0
        %1818 = vmatpush1.bf16.msra.mxu0 %v1716
        %1819 = vmatprep.subr.bf16.mxu0 0
        %1820 = vmatpush2.bf16.msra.mxu0 0
        %1821 = vmatprep.subr.bf16.mxu0 0
        %1822 = vmatpush2.bf16.msra.mxu0 0
        %1823 = vmatprep.subr.bf16.mxu0 0
        %1824 = vmatpush2.bf16.msra.mxu0 0
        %1825 = vmatprep.subr.bf16.mxu0 0
        %1826 = vmatpush2.bf16.msra.mxu0 0
        %1827 = vmatprep.subr.bf16.mxu0 0
        %1828 = vmatpush2.bf16.msra.mxu0 0
        %1829 = vmatprep.subr.bf16.mxu0 0
        %1830 = vmatpush2.bf16.msra.mxu0 0
        %1831 = vmatprep.subr.bf16.mxu0 0
        %1832 = vmatpush2.bf16.msra.mxu0 0
        %1833 = vmatprep.subr.bf16.mxu0 0
        %1834 = vmatpush2.bf16.msra.mxu0 0
        %1835 = vmatprep.mubr.bf16.mxu0 0
        %1836 = vmatmul.mubr.bf16.gmra.mxu0 0
        %v1837 = vpop.f32.mrf.mxu0
        %v1838 = vadd.f32 %v1630, %v1837
        %v1839 = vpop.f32.mrf.mxu0
        %v1840 = vpop.f32.mrf.mxu0
        %v1841 = vpop.f32.mrf.mxu0
        %1842 = vdwg.mxu0
        %v1843 = vadd.f32 %v685, %v1797
        %v1844 = vxor.u32 %v1843, 2147483648
        %v1845 = vmul.f32 %v1844, 1.442695
        %v1846 = vpow.pop %v1845
        %v1847 = vadd.f32 %v1846, 1.0
        %v1848 = vrcp.pop %v1847
        %v1849 = vmul.f32 1.0, %v1848
        %v1850 = vadd.f32 %v736, %v1799
        %v1851 = vxor.u32 %v1850, 2147483648
        %v1852 = vmul.f32 %v1851, 1.442695
        %v1853 = vpow.pop %v1852
        %v1854 = vadd.f32 %v1853, 1.0
        %v1855 = vrcp.pop %v1854
        %v1856 = vmul.f32 1.0, %v1855
        %v1857 = vmul.f32 %v1849, %v1838
        %v1858 = vadd.f32 %v738, %v1857
        %v1859 = vtanh.pop %v1858
        %v1860 = vsub.f32 1.0, %v1856
        %v1861 = vmul.f32 %v1860, %v1859
        %v1862 = vmul.f32 %v1856, 0.0
        %v1863 = vadd.f32 %v1861, %v1862
        %v1864 = vld [vmem:[%s1565] sm:$0xff]
        %v1865 = vpack.c.bf16 %v1863, %v1863
        %v1882 = vunpack.c.l.b16 %v1602
        %v1883 = vunpack.c.l.b16 %v1603
        %v1884 = vunpack.c.l.b16 %v1604
        %v1885 = vunpack.c.l.b16 %v1605
        %v1886 = vunpack.c.l.b16 %v1606
        %v1887 = vunpack.c.l.b16 %v1607
        %v1888 = vunpack.c.l.b16 %v1608
        %v1889 = vunpack.c.l.b16 %v1609
        %v1890 = vunpack.c.l.b16 %v1610
        %v1891 = vunpack.c.l.b16 %v1611
        %v1892 = vunpack.c.l.b16 %v1612
        %v1893 = vunpack.c.l.b16 %v1613
        %v1894 = vunpack.c.l.b16 %v1614
        %v1895 = vunpack.c.l.b16 %v1615
        %v1896 = vunpack.c.l.b16 %v1616
        %v1897 = vunpack.c.l.b16 %v1617
        %v1898 = vpack.c.b16 %v1883, %v1882
        %v1899 = vpack.c.b16 %v1885, %v1884
        %v1900 = vpack.c.b16 %v1887, %v1886
        %v1901 = vpack.c.b16 %v1889, %v1888
        %v1902 = vpack.c.b16 %v1891, %v1890
        %v1903 = vpack.c.b16 %v1893, %v1892
        %v1904 = vpack.c.b16 %v1895, %v1894
        %v1905 = vpack.c.b16 %v1897, %v1896
        %1914 = vmatprep.subr.bf16.mxu0 0
        %1915 = vmatpush1.bf16.msra.mxu0 %v1905
        %1916 = vmatprep.subr.bf16.mxu0 0
        %1917 = vmatpush1.bf16.msra.mxu0 %v1904
        %1918 = vmatprep.subr.bf16.mxu0 0
        %1919 = vmatpush1.bf16.msra.mxu0 %v1903
        %1920 = vmatprep.subr.bf16.mxu0 0
        %1921 = vmatpush1.bf16.msra.mxu0 %v1902
        %1922 = vmatprep.subr.bf16.mxu0 0
        %1923 = vmatpush1.bf16.msra.mxu0 %v1901
        %1924 = vmatprep.subr.bf16.mxu0 0
        %1925 = vmatpush1.bf16.msra.mxu0 %v1900
        %1926 = vmatprep.subr.bf16.mxu0 0
        %1927 = vmatpush1.bf16.msra.mxu0 %v1899
        %1928 = vmatprep.subr.bf16.mxu0 0
        %1929 = vmatpush1.bf16.msra.mxu0 %v1898
        %1930 = vmatprep.subr.bf16.mxu0 0
        %1931 = vmatpush2.bf16.msra.mxu0 0
        %1932 = vmatprep.subr.bf16.mxu0 0
        %1933 = vmatpush2.bf16.msra.mxu0 0
        %1934 = vmatprep.subr.bf16.mxu0 0
        %1935 = vmatpush2.bf16.msra.mxu0 0
        %1936 = vmatprep.subr.bf16.mxu0 0
        %1937 = vmatpush2.bf16.msra.mxu0 0
        %1938 = vmatprep.subr.bf16.mxu0 0
        %1939 = vmatpush2.bf16.msra.mxu0 0
        %1940 = vmatprep.subr.bf16.mxu0 0
        %1941 = vmatpush2.bf16.msra.mxu0 0
        %1942 = vmatprep.subr.bf16.mxu0 0
        %1943 = vmatpush2.bf16.msra.mxu0 0
        %1944 = vmatprep.subr.bf16.mxu0 0
        %1945 = vmatpush2.bf16.msra.mxu0 0
        %1946 = vmatprep.mubr.bf16.mxu0 0
        %1947 = vmatmul.mubr.bf16.gmra.mxu0 %v1865
        %v1948 = vpop.f32.mrf.mxu0
        %v1949 = vadd.f32 0.0, %v1948
        %v1950 = vpop.f32.mrf.mxu0
        %v1951 = vpop.f32.mrf.mxu0
        %v1952 = vpop.f32.mrf.mxu0
        %1953 = vdwg.mxu0
        %v1954 = vadd.f32 %v1864, %v1949
        %1955 = vst [vmem:[%s1565] sm:$0xff] %v1954
        %1956 = vmatprep.subr.bf16.mxu0 %v1736
        %1957 = vmatpush1.bf16.msra.mxu0 %v1735
        %1958 = vmatprep.subr.bf16.mxu0 %v1733
        %1959 = vmatpush1.bf16.msra.mxu0 %v1732
        %1960 = vmatprep.subr.bf16.mxu0 %v1730
        %1961 = vmatpush1.bf16.msra.mxu0 %v1729
        %1962 = vmatprep.subr.bf16.mxu0 %v1727
        %1963 = vmatpush1.bf16.msra.mxu0 %v1726
        %1964 = vmatprep.subr.bf16.mxu0 %v1724
        %1965 = vmatpush1.bf16.msra.mxu0 %v1723
        %1966 = vmatprep.subr.bf16.mxu0 %v1721
        %1967 = vmatpush1.bf16.msra.mxu0 %v1720
        %1968 = vmatprep.subr.bf16.mxu0 %v1718
        %1969 = vmatpush1.bf16.msra.mxu0 %v1717
        %1970 = vmatprep.subr.bf16.mxu0 %v1715
        %1971 = vmatpush1.bf16.msra.mxu0 %v1714
        %1972 = vmatprep.subr.bf16.mxu0 0
        %1973 = vmatpush2.bf16.msra.mxu0 0
        %1974 = vmatprep.subr.bf16.mxu0 0
        %1975 = vmatpush2.bf16.msra.mxu0 0
        %1976 = vmatprep.subr.bf16.mxu0 0
        %1977 = vmatpush2.bf16.msra.mxu0 0
        %1978 = vmatprep.subr.bf16.mxu0 0
        %1979 = vmatpush2.bf16.msra.mxu0 0
        %1980 = vmatprep.subr.bf16.mxu0 0
        %1981 = vmatpush2.bf16.msra.mxu0 0
        %1982 = vmatprep.subr.bf16.mxu0 0
        %1983 = vmatpush2.bf16.msra.mxu0 0
        %1984 = vmatprep.subr.bf16.mxu0 0
        %1985 = vmatpush2.bf16.msra.mxu0 0
        %1986 = vmatprep.subr.bf16.mxu0 0
        %1987 = vmatpush2.bf16.msra.mxu0 0
        %1988 = vmatprep.mubr.bf16.mxu0 0
        %1989 = vmatmul.mubr.bf16.gmra.mxu0 %v1865
        %v1990 = vpop.f32.mrf.mxu0
        %v1991 = vadd.f32 %v1622, %v1990
        %v1992 = vpop.f32.mrf.mxu0
        %v1993 = vadd.f32 %v1626, %v1992
        %v1994 = vpop.f32.mrf.mxu0
        %v1995 = vpop.f32.mrf.mxu0
        %1996 = vdwg.mxu0
        %1997 = vmatprep.subr.bf16.mxu0 0
        %1998 = vmatpush1.bf16.msra.mxu0 %v1737
        %1999 = vmatprep.subr.bf16.mxu0 0
        %2000 = vmatpush1.bf16.msra.mxu0 %v1734
        %2001 = vmatprep.subr.bf16.mxu0 0
        %2002 = vmatpush1.bf16.msra.mxu0 %v1731
        %2003 = vmatprep.subr.bf16.mxu0 0
        %2004 = vmatpush1.bf16.msra.mxu0 %v1728
        %2005 = vmatprep.subr.bf16.mxu0 0
        %2006 = vmatpush1.bf16.msra.mxu0 %v1725
        %2007 = vmatprep.subr.bf16.mxu0 0
        %2008 = vmatpush1.bf16.msra.mxu0 %v1722
        %2009 = vmatprep.subr.bf16.mxu0 0
        %2010 = vmatpush1.bf16.msra.mxu0 %v1719
        %2011 = vmatprep.subr.bf16.mxu0 0
        %2012 = vmatpush1.bf16.msra.mxu0 %v1716
        %2013 = vmatprep.subr.bf16.mxu0 0
        %2014 = vmatpush2.bf16.msra.mxu0 0
        %2015 = vmatprep.subr.bf16.mxu0 0
        %2016 = vmatpush2.bf16.msra.mxu0 0
        %2017 = vmatprep.subr.bf16.mxu0 0
        %2018 = vmatpush2.bf16.msra.mxu0 0
        %2019 = vmatprep.subr.bf16.mxu0 0
        %2020 = vmatpush2.bf16.msra.mxu0 0
        %2021 = vmatprep.subr.bf16.mxu0 0
        %2022 = vmatpush2.bf16.msra.mxu0 0
        %2023 = vmatprep.subr.bf16.mxu0 0
        %2024 = vmatpush2.bf16.msra.mxu0 0
        %2025 = vmatprep.subr.bf16.mxu0 0
        %2026 = vmatpush2.bf16.msra.mxu0 0
        %2027 = vmatprep.subr.bf16.mxu0 0
        %2028 = vmatpush2.bf16.msra.mxu0 0
        %2029 = vmatprep.mubr.bf16.mxu0 0
        %2030 = vmatmul.mubr.bf16.gmra.mxu0 %v1865
        %v2031 = vpop.f32.mrf.mxu0
        %v2032 = vadd.f32 %v1630, %v2031
        %v2033 = vpop.f32.mrf.mxu0
        %v2034 = vpop.f32.mrf.mxu0
        %v2035 = vpop.f32.mrf.mxu0
        %2036 = vdwg.mxu0
        %v2037 = vadd.f32 %v681, %v1991
        %v2038 = vxor.u32 %v2037, 2147483648
        %v2039 = vmul.f32 %v2038, 1.442695
        %v2040 = vpow.pop %v2039
        %v2041 = vadd.f32 %v2040, 1.0
        %v2042 = vrcp.pop %v2041
        %v2043 = vmul.f32 1.0, %v2042
        %v2044 = vadd.f32 %v732, %v1993
        %v2045 = vxor.u32 %v2044, 2147483648
        %v2046 = vmul.f32 %v2045, 1.442695
        %v2047 = vpow.pop %v2046
        %v2048 = vadd.f32 %v2047, 1.0
        %v2049 = vrcp.pop %v2048
        %v2050 = vmul.f32 1.0, %v2049
        %v2051 = vmul.f32 %v2043, %v2032
        %v2052 = vadd.f32 %v734, %v2051
        %v2053 = vtanh.pop %v2052
        %v2054 = vsub.f32 1.0, %v2050
        %v2055 = vmul.f32 %v2054, %v2053
        %v2056 = vmul.f32 %v2050, %v1863
        %v2057 = vadd.f32 %v2055, %v2056
        %v2058 = vld [vmem:[%s1420] sm:$0xff]
        %v2059 = vpack.c.bf16 %v2057, %v2057
        %2060 = vmatprep.subr.bf16.mxu0 0
        %2061 = vmatpush1.bf16.msra.mxu0 %v1905
        %2062 = vmatprep.subr.bf16.mxu0 0
        %2063 = vmatpush1.bf16.msra.mxu0 %v1904
        %2064 = vmatprep.subr.bf16.mxu0 0
        %2065 = vmatpush1.bf16.msra.mxu0 %v1903
        %2066 = vmatprep.subr.bf16.mxu0 0
        %2067 = vmatpush1.bf16.msra.mxu0 %v1902
        %2068 = vmatprep.subr.bf16.mxu0 0
        %2069 = vmatpush1.bf16.msra.mxu0 %v1901
        %2070 = vmatprep.subr.bf16.mxu0 0
        %2071 = vmatpush1.bf16.msra.mxu0 %v1900
        %2072 = vmatprep.subr.bf16.mxu0 0
        %2073 = vmatpush1.bf16.msra.mxu0 %v1899
        %2074 = vmatprep.subr.bf16.mxu0 0
        %2075 = vmatpush1.bf16.msra.mxu0 %v1898
        %2076 = vmatprep.subr.bf16.mxu0 0
        %2077 = vmatpush2.bf16.msra.mxu0 0
        %2078 = vmatprep.subr.bf16.mxu0 0
        %2079 = vmatpush2.bf16.msra.mxu0 0
        %2080 = vmatprep.subr.bf16.mxu0 0
        %2081 = vmatpush2.bf16.msra.mxu0 0
        %2082 = vmatprep.subr.bf16.mxu0 0
        %2083 = vmatpush2.bf16.msra.mxu0 0
        %2084 = vmatprep.subr.bf16.mxu0 0
        %2085 = vmatpush2.bf16.msra.mxu0 0
        %2086 = vmatprep.subr.bf16.mxu0 0
        %2087 = vmatpush2.bf16.msra.mxu0 0
        %2088 = vmatprep.subr.bf16.mxu0 0
        %2089 = vmatpush2.bf16.msra.mxu0 0
        %2090 = vmatprep.subr.bf16.mxu0 0
        %2091 = vmatpush2.bf16.msra.mxu0 0
        %2092 = vmatprep.mubr.bf16.mxu0 0
        %2093 = vmatmul.mubr.bf16.gmra.mxu0 %v2059
        %v2094 = vpop.f32.mrf.mxu0
        %v2095 = vadd.f32 0.0, %v2094
        %v2096 = vpop.f32.mrf.mxu0
        %v2097 = vpop.f32.mrf.mxu0
        %v2098 = vpop.f32.mrf.mxu0
        %2099 = vdwg.mxu0
        %v2100 = vadd.f32 %v2058, %v2095
        %2101 = vst [vmem:[%s1420] sm:$0xff] %v2100
        %2102 = vmatprep.subr.bf16.mxu0 %v1736
        %2103 = vmatpush1.bf16.msra.mxu0 %v1735
        %2104 = vmatprep.subr.bf16.mxu0 %v1733
        %2105 = vmatpush1.bf16.msra.mxu0 %v1732
        %2106 = vmatprep.subr.bf16.mxu0 %v1730
        %2107 = vmatpush1.bf16.msra.mxu0 %v1729
        %2108 = vmatprep.subr.bf16.mxu0 %v1727
        %2109 = vmatpush1.bf16.msra.mxu0 %v1726
        %2110 = vmatprep.subr.bf16.mxu0 %v1724
        %2111 = vmatpush1.bf16.msra.mxu0 %v1723
        %2112 = vmatprep.subr.bf16.mxu0 %v1721
        %2113 = vmatpush1.bf16.msra.mxu0 %v1720
        %2114 = vmatprep.subr.bf16.mxu0 %v1718
        %2115 = vmatpush1.bf16.msra.mxu0 %v1717
        %2116 = vmatprep.subr.bf16.mxu0 %v1715
        %2117 = vmatpush1.bf16.msra.mxu0 %v1714
        %2118 = vmatprep.subr.bf16.mxu0 0
        %2119 = vmatpush2.bf16.msra.mxu0 0
        %2120 = vmatprep.subr.bf16.mxu0 0
        %2121 = vmatpush2.bf16.msra.mxu0 0
        %2122 = vmatprep.subr.bf16.mxu0 0
        %2123 = vmatpush2.bf16.msra.mxu0 0
        %2124 = vmatprep.subr.bf16.mxu0 0
        %2125 = vmatpush2.bf16.msra.mxu0 0
        %2126 = vmatprep.subr.bf16.mxu0 0
        %2127 = vmatpush2.bf16.msra.mxu0 0
        %2128 = vmatprep.subr.bf16.mxu0 0
        %2129 = vmatpush2.bf16.msra.mxu0 0
        %2130 = vmatprep.subr.bf16.mxu0 0
        %2131 = vmatpush2.bf16.msra.mxu0 0
        %2132 = vmatprep.subr.bf16.mxu0 0
        %2133 = vmatpush2.bf16.msra.mxu0 0
        %2134 = vmatprep.mubr.bf16.mxu0 0
        %2135 = vmatmul.mubr.bf16.gmra.mxu0 %v2059
        %v2136 = vpop.f32.mrf.mxu0
        %v2137 = vadd.f32 %v1622, %v2136
        %v2138 = vpop.f32.mrf.mxu0
        %v2139 = vadd.f32 %v1626, %v2138
        %v2140 = vpop.f32.mrf.mxu0
        %v2141 = vpop.f32.mrf.mxu0
        %2142 = vdwg.mxu0
        %2143 = vmatprep.subr.bf16.mxu0 0
        %2144 = vmatpush1.bf16.msra.mxu0 %v1737
        %2145 = vmatprep.subr.bf16.mxu0 0
        %2146 = vmatpush1.bf16.msra.mxu0 %v1734
        %2147 = vmatprep.subr.bf16.mxu0 0
        %2148 = vmatpush1.bf16.msra.mxu0 %v1731
        %2149 = vmatprep.subr.bf16.mxu0 0
        %2150 = vmatpush1.bf16.msra.mxu0 %v1728
        %2151 = vmatprep.subr.bf16.mxu0 0
        %2152 = vmatpush1.bf16.msra.mxu0 %v1725
        %2153 = vmatprep.subr.bf16.mxu0 0
        %2154 = vmatpush1.bf16.msra.mxu0 %v1722
        %2155 = vmatprep.subr.bf16.mxu0 0
        %2156 = vmatpush1.bf16.msra.mxu0 %v1719
        %2157 = vmatprep.subr.bf16.mxu0 0
        %2158 = vmatpush1.bf16.msra.mxu0 %v1716
        %2159 = vmatprep.subr.bf16.mxu0 0
        %2160 = vmatpush2.bf16.msra.mxu0 0
        %2161 = vmatprep.subr.bf16.mxu0 0
        %2162 = vmatpush2.bf16.msra.mxu0 0
        %2163 = vmatprep.subr.bf16.mxu0 0
        %2164 = vmatpush2.bf16.msra.mxu0 0
        %2165 = vmatprep.subr.bf16.mxu0 0
        %2166 = vmatpush2.bf16.msra.mxu0 0
        %2167 = vmatprep.subr.bf16.mxu0 0
        %2168 = vmatpush2.bf16.msra.mxu0 0
        %2169 = vmatprep.subr.bf16.mxu0 0
        %2170 = vmatpush2.bf16.msra.mxu0 0
        %2171 = vmatprep.subr.bf16.mxu0 0
        %2172 = vmatpush2.bf16.msra.mxu0 0
        %2173 = vmatprep.subr.bf16.mxu0 0
        %2174 = vmatpush2.bf16.msra.mxu0 0
        %2175 = vmatprep.mubr.bf16.mxu0 0
        %2176 = vmatmul.mubr.bf16.gmra.mxu0 %v2059
        %v2177 = vpop.f32.mrf.mxu0
        %v2178 = vadd.f32 %v1630, %v2177
        %v2179 = vpop.f32.mrf.mxu0
        %v2180 = vpop.f32.mrf.mxu0
        %v2181 = vpop.f32.mrf.mxu0
        %2182 = vdwg.mxu0
        %v2183 = vadd.f32 %v675, %v2137
        %v2184 = vxor.u32 %v2183, 2147483648
        %v2185 = vmul.f32 %v2184, 1.442695
        %v2186 = vpow.pop %v2185
        %v2187 = vadd.f32 %v2186, 1.0
        %v2188 = vrcp.pop %v2187
        %v2189 = vmul.f32 1.0, %v2188
        %v2190 = vadd.f32 %v726, %v2139
        %v2191 = vxor.u32 %v2190, 2147483648
        %v2192 = vmul.f32 %v2191, 1.442695
        %v2193 = vpow.pop %v2192
        %v2194 = vadd.f32 %v2193, 1.0
        %v2195 = vrcp.pop %v2194
        %v2196 = vmul.f32 1.0, %v2195
        %v2197 = vmul.f32 %v2189, %v2178
        %v2198 = vadd.f32 %v728, %v2197
        %v2199 = vtanh.pop %v2198
        %v2200 = vsub.f32 1.0, %v2196
        %v2201 = vmul.f32 %v2200, %v2199
        %v2202 = vmul.f32 %v2196, %v2057
        %v2203 = vadd.f32 %v2201, %v2202
        %v2204 = vld [vmem:[%s1275] sm:$0xff]
        %v2205 = vpack.c.bf16 %v2203, %v2203
        %2206 = vmatprep.subr.bf16.mxu0 0
        %2207 = vmatpush1.bf16.msra.mxu0 %v1905
        %2208 = vmatprep.subr.bf16.mxu0 0
        %2209 = vmatpush1.bf16.msra.mxu0 %v1904
        %2210 = vmatprep.subr.bf16.mxu0 0
        %2211 = vmatpush1.bf16.msra.mxu0 %v1903
        %2212 = vmatprep.subr.bf16.mxu0 0
        %2213 = vmatpush1.bf16.msra.mxu0 %v1902
        %2214 = vmatprep.subr.bf16.mxu0 0
        %2215 = vmatpush1.bf16.msra.mxu0 %v1901
        %2216 = vmatprep.subr.bf16.mxu0 0
        %2217 = vmatpush1.bf16.msra.mxu0 %v1900
        %2218 = vmatprep.subr.bf16.mxu0 0
        %2219 = vmatpush1.bf16.msra.mxu0 %v1899
        %2220 = vmatprep.subr.bf16.mxu0 0
        %2221 = vmatpush1.bf16.msra.mxu0 %v1898
        %2222 = vmatprep.subr.bf16.mxu0 0
        %2223 = vmatpush2.bf16.msra.mxu0 0
        %2224 = vmatprep.subr.bf16.mxu0 0
        %2225 = vmatpush2.bf16.msra.mxu0 0
        %2226 = vmatprep.subr.bf16.mxu0 0
        %2227 = vmatpush2.bf16.msra.mxu0 0
        %2228 = vmatprep.subr.bf16.mxu0 0
        %2229 = vmatpush2.bf16.msra.mxu0 0
        %2230 = vmatprep.subr.bf16.mxu0 0
        %2231 = vmatpush2.bf16.msra.mxu0 0
        %2232 = vmatprep.subr.bf16.mxu0 0
        %2233 = vmatpush2.bf16.msra.mxu0 0
        %2234 = vmatprep.subr.bf16.mxu0 0
        %2235 = vmatpush2.bf16.msra.mxu0 0
        %2236 = vmatprep.subr.bf16.mxu0 0
        %2237 = vmatpush2.bf16.msra.mxu0 0
        %2238 = vmatprep.mubr.bf16.mxu0 0
        %2239 = vmatmul.mubr.bf16.gmra.mxu0 %v2205
        %v2240 = vpop.f32.mrf.mxu0
        %v2241 = vadd.f32 0.0, %v2240
        %v2242 = vpop.f32.mrf.mxu0
        %v2243 = vpop.f32.mrf.mxu0
        %v2244 = vpop.f32.mrf.mxu0
        %2245 = vdwg.mxu0
        %v2246 = vadd.f32 %v2204, %v2241
        %2247 = vst [vmem:[%s1275] sm:$0xff] %v2246
        %2248 = vmatprep.subr.bf16.mxu0 %v1736
        %2249 = vmatpush1.bf16.msra.mxu0 %v1735
        %2250 = vmatprep.subr.bf16.mxu0 %v1733
        %2251 = vmatpush1.bf16.msra.mxu0 %v1732
        %2252 = vmatprep.subr.bf16.mxu0 %v1730
        %2253 = vmatpush1.bf16.msra.mxu0 %v1729
        %2254 = vmatprep.subr.bf16.mxu0 %v1727
        %2255 = vmatpush1.bf16.msra.mxu0 %v1726
        %2256 = vmatprep.subr.bf16.mxu0 %v1724
        %2257 = vmatpush1.bf16.msra.mxu0 %v1723
        %2258 = vmatprep.subr.bf16.mxu0 %v1721
        %2259 = vmatpush1.bf16.msra.mxu0 %v1720
        %2260 = vmatprep.subr.bf16.mxu0 %v1718
        %2261 = vmatpush1.bf16.msra.mxu0 %v1717
        %2262 = vmatprep.subr.bf16.mxu0 %v1715
        %2263 = vmatpush1.bf16.msra.mxu0 %v1714
        %2264 = vmatprep.subr.bf16.mxu0 0
        %2265 = vmatpush2.bf16.msra.mxu0 0
        %2266 = vmatprep.subr.bf16.mxu0 0
        %2267 = vmatpush2.bf16.msra.mxu0 0
        %2268 = vmatprep.subr.bf16.mxu0 0
        %2269 = vmatpush2.bf16.msra.mxu0 0
        %2270 = vmatprep.subr.bf16.mxu0 0
        %2271 = vmatpush2.bf16.msra.mxu0 0
        %2272 = vmatprep.subr.bf16.mxu0 0
        %2273 = vmatpush2.bf16.msra.mxu0 0
        %2274 = vmatprep.subr.bf16.mxu0 0
        %2275 = vmatpush2.bf16.msra.mxu0 0
        %2276 = vmatprep.subr.bf16.mxu0 0
        %2277 = vmatpush2.bf16.msra.mxu0 0
        %2278 = vmatprep.subr.bf16.mxu0 0
        %2279 = vmatpush2.bf16.msra.mxu0 0
        %2280 = vmatprep.mubr.bf16.mxu0 0
        %2281 = vmatmul.mubr.bf16.gmra.mxu0 %v2205
        %v2282 = vpop.f32.mrf.mxu0
        %v2283 = vadd.f32 %v1622, %v2282
        %v2284 = vpop.f32.mrf.mxu0
        %v2285 = vadd.f32 %v1626, %v2284
        %v2286 = vpop.f32.mrf.mxu0
        %v2287 = vpop.f32.mrf.mxu0
        %2288 = vdwg.mxu0
        %2289 = vmatprep.subr.bf16.mxu0 0
        %2290 = vmatpush1.bf16.msra.mxu0 %v1737
        %2291 = vmatprep.subr.bf16.mxu0 0
        %2292 = vmatpush1.bf16.msra.mxu0 %v1734
        %2293 = vmatprep.subr.bf16.mxu0 0
        %2294 = vmatpush1.bf16.msra.mxu0 %v1731
        %2295 = vmatprep.subr.bf16.mxu0 0
        %2296 = vmatpush1.bf16.msra.mxu0 %v1728
        %2297 = vmatprep.subr.bf16.mxu0 0
        %2298 = vmatpush1.bf16.msra.mxu0 %v1725
        %2299 = vmatprep.subr.bf16.mxu0 0
        %2300 = vmatpush1.bf16.msra.mxu0 %v1722
        %2301 = vmatprep.subr.bf16.mxu0 0
        %2302 = vmatpush1.bf16.msra.mxu0 %v1719
        %2303 = vmatprep.subr.bf16.mxu0 0
        %2304 = vmatpush1.bf16.msra.mxu0 %v1716
        %2305 = vmatprep.subr.bf16.mxu0 0
        %2306 = vmatpush2.bf16.msra.mxu0 0
        %2307 = vmatprep.subr.bf16.mxu0 0
        %2308 = vmatpush2.bf16.msra.mxu0 0
        %2309 = vmatprep.subr.bf16.mxu0 0
        %2310 = vmatpush2.bf16.msra.mxu0 0
        %2311 = vmatprep.subr.bf16.mxu0 0
        %2312 = vmatpush2.bf16.msra.mxu0 0
        %2313 = vmatprep.subr.bf16.mxu0 0
        %2314 = vmatpush2.bf16.msra.mxu0 0
        %2315 = vmatprep.subr.bf16.mxu0 0
        %2316 = vmatpush2.bf16.msra.mxu0 0
        %2317 = vmatprep.subr.bf16.mxu0 0
        %2318 = vmatpush2.bf16.msra.mxu0 0
        %2319 = vmatprep.subr.bf16.mxu0 0
        %2320 = vmatpush2.bf16.msra.mxu0 0
        %2321 = vmatprep.mubr.bf16.mxu0 0
        %2322 = vmatmul.mubr.bf16.gmra.mxu0 %v2205
        %v2323 = vpop.f32.mrf.mxu0
        %v2324 = vadd.f32 %v1630, %v2323
        %v2325 = vpop.f32.mrf.mxu0
        %v2326 = vpop.f32.mrf.mxu0
        %v2327 = vpop.f32.mrf.mxu0
        %2328 = vdwg.mxu0
        %v2329 = vadd.f32 %v671, %v2283
        %v2330 = vxor.u32 %v2329, 2147483648
        %v2331 = vmul.f32 %v2330, 1.442695
        %v2332 = vpow.pop %v2331
        %v2333 = vadd.f32 %v2332, 1.0
        %v2334 = vrcp.pop %v2333
        %v2335 = vmul.f32 1.0, %v2334
        %v2336 = vadd.f32 %v722, %v2285
        %v2337 = vxor.u32 %v2336, 2147483648
        %v2338 = vmul.f32 %v2337, 1.442695
        %v2339 = vpow.pop %v2338
        %v2340 = vadd.f32 %v2339, 1.0
        %v2341 = vrcp.pop %v2340
        %v2342 = vmul.f32 1.0, %v2341
        %v2343 = vmul.f32 %v2335, %v2324
        %v2344 = vadd.f32 %v724, %v2343
        %v2345 = vtanh.pop %v2344
        %v2346 = vsub.f32 1.0, %v2342
        %v2347 = vmul.f32 %v2346, %v2345
        %v2348 = vmul.f32 %v2342, %v2203
        %v2349 = vadd.f32 %v2347, %v2348
        %v2350 = vld [vmem:[%s493] sm:$0xff]
        %v2351 = vpack.c.bf16 %v2349, %v2349
        %2352 = vmatprep.subr.bf16.mxu0 0
        %2353 = vmatpush1.bf16.msra.mxu0 %v1905
        %2354 = vmatprep.subr.bf16.mxu0 0
        %2355 = vmatpush1.bf16.msra.mxu0 %v1904
        %2356 = vmatprep.subr.bf16.mxu0 0
        %2357 = vmatpush1.bf16.msra.mxu0 %v1903
        %2358 = vmatprep.subr.bf16.mxu0 0
        %2359 = vmatpush1.bf16.msra.mxu0 %v1902
        %2360 = vmatprep.subr.bf16.mxu0 0
        %2361 = vmatpush1.bf16.msra.mxu0 %v1901
        %2362 = vmatprep.subr.bf16.mxu0 0
        %2363 = vmatpush1.bf16.msra.mxu0 %v1900
        %2364 = vmatprep.subr.bf16.mxu0 0
        %2365 = vmatpush1.bf16.msra.mxu0 %v1899
        %2366 = vmatprep.subr.bf16.mxu0 0
        %2367 = vmatpush1.bf16.msra.mxu0 %v1898
        %2368 = vmatprep.subr.bf16.mxu0 0
        %2369 = vmatpush2.bf16.msra.mxu0 0
        %2370 = vmatprep.subr.bf16.mxu0 0
        %2371 = vmatpush2.bf16.msra.mxu0 0
        %2372 = vmatprep.subr.bf16.mxu0 0
        %2373 = vmatpush2.bf16.msra.mxu0 0
        %2374 = vmatprep.subr.bf16.mxu0 0
        %2375 = vmatpush2.bf16.msra.mxu0 0
        %2376 = vmatprep.subr.bf16.mxu0 0
        %2377 = vmatpush2.bf16.msra.mxu0 0
        %2378 = vmatprep.subr.bf16.mxu0 0
        %2379 = vmatpush2.bf16.msra.mxu0 0
        %2380 = vmatprep.subr.bf16.mxu0 0
        %2381 = vmatpush2.bf16.msra.mxu0 0
        %2382 = vmatprep.subr.bf16.mxu0 0
        %2383 = vmatpush2.bf16.msra.mxu0 0
        %2384 = vmatprep.mubr.bf16.mxu0 0
        %2385 = vmatmul.mubr.bf16.gmra.mxu0 %v2351
        %v2386 = vpop.f32.mrf.mxu0
        %v2387 = vadd.f32 0.0, %v2386
        %v2388 = vpop.f32.mrf.mxu0
        %v2389 = vpop.f32.mrf.mxu0
        %v2390 = vpop.f32.mrf.mxu0
        %2391 = vdwg.mxu0
        %v2392 = vadd.f32 %v2350, %v2387
        %2393 = vst [vmem:[%s493] sm:$0xff] %v2392
        %s2394 = sand.u32 %s220, 1
        %s2395 = sand.u32 %s220, 1
        %s2396 = smul.addr %s2395, 32
        %s2397 = scalar_lea.vmem [#allocation12], %s2396
        // Predicated region
        $region73: #{forward.3} parent=47 // pred_check
          %p2398 = pneg %p230
        $region74: #{forward.3} parent=47 // pred_check_branch
          %2400 = sbr.rel (%p2398) target = $region76
        $region75: #{forward.3} parent=47 // pred_region
          %s2401 = smul.addr %s30, 8
          %s2402 = scalar_lea.vmem %s7, %s2401
          // Predicated region
          $region77: #{forward.3} parent=75 // pred_check
            _
          $region78: #{forward.3} parent=75 // pred_check_branch
            %2404 = sbr.rel (0) target = $region80
          $region79: #{forward.3} parent=75 // pred_region
            // Predicated region
            $region81: #{forward.3} parent=79 // pred_check
              _
            $region82: #{forward.3} parent=79 // pred_check_branch
              %2406 = sbr.rel (0) target = $region84
            $region83: #{forward.3} parent=79 // pred_region
              // Predicated region
              $region96: #{forward.3} parent=83 // pred_check
                _
              $region97: #{forward.3} parent=83 // pred_check_branch
                %2428 = sbr.rel (0) target = $region99
              $region98: #{forward.3} parent=83 // pred_region
                loop: start=0, step=1, limit=1
                $region100: #{forward.3} parent=98 // loop_pre_header
                  _
                $region101: #{forward.3} parent=98 // loop_header
                  %s2430 = sphi 0, %s2434
                  %p2431 = scmp.ge.s32.totalorder %s2430, 1
                  %s2435 = sphi %s2397, %s2397
                  %s2436 = sphi %s2402, %s2402
                $region102: #{forward.3} parent=98 // loop_header_branch
                  %2433 = sbr.rel (%p2431) target = $region106
                $region103: #{forward.3} parent=98 // loop_body
                  %v2437 = vld [vmem:[%s2435] sm:$0xff]
                  %2438 = vst [vmem:[%s2436] sm:$0xff] %v2437
                  %v2439 = vld [vmem:[%s2435 + $0x8] sm:$0xff]
                  %2440 = vst [vmem:[%s2436 + $0x28] sm:$0xff] %v2439
                  %v2441 = vld [vmem:[%s2435 + $0x10] sm:$0xff]
                  %2442 = vst [vmem:[%s2436 + $0x50] sm:$0xff] %v2441
                  %v2443 = vld [vmem:[%s2435 + $0x18] sm:$0xff]
                  %2444 = vst [vmem:[%s2436 + $0x78] sm:$0xff] %v2443
                $region104: #{forward.3} parent=98 // loop_footer
                  %s2434 = sadd.s32 1, %s2430
                $region105: #{forward.3} parent=98 // loop_footer_branch
                  %2429 = sbr.rel target = $region101
                $region106: #{forward.3} parent=98 // loop_exit
                  _
              $region99: #{forward.3} parent=83 // pred_fallthru
                _
              // Predicated region
              $region107: #{forward.3} parent=83 // pred_check
                _
              $region108: #{forward.3} parent=83 // pred_check_branch
                %2446 = sbr.rel target = $region110
              $region109: #{forward.3} parent=83 // pred_region
                _
              $region110: #{forward.3} parent=83 // pred_fallthru
                _
            $region84: #{forward.3} parent=79 // pred_fallthru
              _
            // Predicated region
            $region85: #{forward.3} parent=79 // pred_check
              _
            $region86: #{forward.3} parent=79 // pred_check_branch
              %2408 = sbr.rel target = $region88
            $region87: #{forward.3} parent=79 // pred_region
              %s2410 = ssub.s32 256, 1
              loop: start=0, step=1, limit=1
              $region89: #{forward.3} parent=87 // loop_pre_header
                _
              $region90: #{forward.3} parent=87 // loop_header
                %s2412 = sphi 0, %s2416
                %p2413 = scmp.ge.s32.totalorder %s2412, 1
                %s2417 = sphi %s2397, %s2397
                %s2418 = sphi %s2402, %s2402
              $region91: #{forward.3} parent=87 // loop_header_branch
                %2415 = sbr.rel (%p2413) target = $region95
              $region92: #{forward.3} parent=87 // loop_body
                %v2419 = vld [vmem:[%s2417] sm:%s2410]
                %2420 = vst [vmem:[%s2418] sm:%s2410] %v2419
                %v2421 = vld [vmem:[%s2417 + $0x8] sm:%s2410]
                %2422 = vst [vmem:[%s2418 + $0x28] sm:%s2410] %v2421
                %v2423 = vld [vmem:[%s2417 + $0x10] sm:%s2410]
                %2424 = vst [vmem:[%s2418 + $0x50] sm:%s2410] %v2423
                %v2425 = vld [vmem:[%s2417 + $0x18] sm:%s2410]
                %2426 = vst [vmem:[%s2418 + $0x78] sm:%s2410] %v2425
              $region93: #{forward.3} parent=87 // loop_footer
                %s2416 = sadd.s32 1, %s2412
              $region94: #{forward.3} parent=87 // loop_footer_branch
                %2411 = sbr.rel target = $region90
              $region95: #{forward.3} parent=87 // loop_exit
                _
            $region88: #{forward.3} parent=79 // pred_fallthru
              _
          $region80: #{forward.3} parent=75 // pred_fallthru
            _
          %2447 = vnop
        $region76: #{forward.3} parent=47 // pred_fallthru
          _
      $region48: #{forward.3} parent=5 // pred_fallthru
        _
      %p2448 = scmp.le.s32.totalorder 2, %s25
      // Predicated region
      $region111: #{forward.3} parent=5 // pred_check
        %p2449 = pneg %p2448
      $region112: #{forward.3} parent=5 // pred_check_branch
        %2451 = sbr.rel (%p2449) target = $region114
      $region113: #{forward.3} parent=5 // pred_region
        %s2452 = ssub.s32 %s25, 2
        // Predicated region
        $region115: #{forward.3} parent=113 // pred_check
          %p2453 = pneg %p236
        $region116: #{forward.3} parent=113 // pred_check_branch
          %2455 = sbr.rel (%p2453) target = $region118
        $region117: #{forward.3} parent=113 // pred_region
          %s2456 = sand.u32 %s221, 1
          %s2457 = sand.u32 %s221, 1
          %s2458 = smul.addr %s2457, 32
          %s2459 = scalar_lea.vmem [#allocation12], %s2458
        $region118: #{forward.3} parent=113 // pred_fallthru
          _
      $region114: #{forward.3} parent=5 // pred_fallthru
        _
    $region6: #{forward.3} parent=1 // loop_footer
      %s29 = sadd.s32 1, %s25
    $region7: #{forward.3} parent=1 // loop_footer_branch
      %24 = sbr.rel target = $region3
    $region8: #{forward.3} parent=1 // loop_exit
      _
    %2460 = vsyncpa [#allocation3], 1
    %s2461 = scalar_lea.sflag [#allocation3], 1
    %2462 = vsyncpa %s2461, 1
    %2463 = vsyncpa [#allocation5], 1
    %s2464 = scalar_lea.sflag [#allocation5], 1
    %2465 = vsyncpa %s2464, 1
    %2466 = vsyncpa [#allocation8], 1
    %s2467 = scalar_lea.sflag [#allocation8], 1
    %2468 = vsyncpa %s2467, 1
    %2469 = vsyncpa [#allocation11], 1
    %s2470 = scalar_lea.sflag [#allocation11], 1
    %2471 = vsyncpa %s2470, 1

// kernel: forward.4
$region0: #{forward.4}
  #allocation0 [shape = 'u32[]', space=smem, size = 0x4, offset = 0x4, fixed_abs, tag = 'smem constant byte address 0x4 - core index']
  #allocation1 [shape = 'u32[144,128]{1,0:T(1,128)}', space=vmem, size = 0x12000, scoped, tag = 'internal scratch']
  %s0 = inlined_call_operand.vmem [shape: f32[32,640], index: 0, kind: input, shape index: {}]
  %s1 = inlined_call_operand.vmem [shape: bf16[640,768], index: 1, kind: input, shape index: {}]
  %s2 = inlined_call_operand.vmem [shape: bf16[2,128,384], index: 2, kind: input, shape index: {}]
  %s3 = inlined_call_operand.vmem [shape: f32[1,768], index: 3, kind: input, shape index: {}]
  %s4 = inlined_call_operand.vmem [shape: f32[2,1,384], index: 4, kind: input, shape index: {}]
  %s5 = inlined_call_operand.vmem [shape: bf16[256,128], index: 5, kind: input, shape index: {}]
  %s6 = inlined_call_operand.vmem [shape: f32[1,128], index: 6, kind: input, shape index: {}]
  %s7 = inlined_call_operand.vmem [shape: f32[4,8,128], index: 7, kind: output, shape index: {}]
  %s8 = sld [smem:[#allocation0]]
  $region38: #{forward.4} parent=0
    _
  %s10 = ssub.s32 1, %s8
  %s11 = scalar_select 0, %s10, %s8
  // Predicated region
  $region2: #{forward.4} parent=0 // pred_check
    _
  $region3: #{forward.4} parent=0 // pred_check_branch
    %13 = sbr.rel (0) target = $region5
  $region4: #{forward.4} parent=0 // pred_region
    _
  $region5: #{forward.4} parent=0 // pred_fallthru
    _
  // Predicated region
  $region6: #{forward.4} parent=0 // pred_check
    _
  $region7: #{forward.4} parent=0 // pred_check_branch
    %15 = sbr.rel (0) target = $region9
  $region8: #{forward.4} parent=0 // pred_region
    _
  $region9: #{forward.4} parent=0 // pred_fallthru
    _
  // Predicated region
  $region10: #{forward.4} parent=0 // pred_check
    _
  $region11: #{forward.4} parent=0 // pred_check_branch
    %17 = sbr.rel (0) target = $region13
  $region12: #{forward.4} parent=0 // pred_region
    _
  $region13: #{forward.4} parent=0 // pred_fallthru
    _
  // Predicated region
  $region14: #{forward.4} parent=0 // pred_check
    _
  $region15: #{forward.4} parent=0 // pred_check_branch
    %19 = sbr.rel (0) target = $region17
  $region16: #{forward.4} parent=0 // pred_region
    _
  $region17: #{forward.4} parent=0 // pred_fallthru
    _
  // Predicated region
  $region18: #{forward.4} parent=0 // pred_check
    _
  $region19: #{forward.4} parent=0 // pred_check_branch
    %21 = sbr.rel (0) target = $region21
  $region20: #{forward.4} parent=0 // pred_region
    _
  $region21: #{forward.4} parent=0 // pred_fallthru
    _
  // Predicated region
  $region22: #{forward.4} parent=0 // pred_check
    _
  $region23: #{forward.4} parent=0 // pred_check_branch
    %23 = sbr.rel (0) target = $region25
  $region24: #{forward.4} parent=0 // pred_region
    _
  $region25: #{forward.4} parent=0 // pred_fallthru
    _
  // Predicated region
  $region26: #{forward.4} parent=0 // pred_check
    _
  $region27: #{forward.4} parent=0 // pred_check_branch
    %25 = sbr.rel (0) target = $region29
  $region28: #{forward.4} parent=0 // pred_region
    _
  $region29: #{forward.4} parent=0 // pred_fallthru
    _
  %v27 = vld [vmem:[%s0] sm:$0xff]
  %v28 = vld [vmem:[%s0 + $0x8] sm:$0xff]
  %v29 = vld [vmem:[%s0 + $0x10] sm:$0xff]
  %v30 = vld [vmem:[%s0 + $0x18] sm:$0xff]
  %v31 = vld [vmem:[%s0 + $0x20] sm:$0xff]
  %v32 = vld [vmem:[%s0 + $0x28] sm:$0xff]
  %v33 = vld [vmem:[%s0 + $0x30] sm:$0xff]
  %v34 = vld [vmem:[%s0 + $0x38] sm:$0xff]
  %v35 = vld [vmem:[%s0 + $0x40] sm:$0xff]
  %v36 = vld [vmem:[%s0 + $0x48] sm:$0xff]
  %v37 = vld [vmem:[%s0 + $0x50] sm:$0xff]
  %v38 = vld [vmem:[%s0 + $0x58] sm:$0xff]
  %v39 = vld [vmem:[%s0 + $0x60] sm:$0xff]
  %v40 = vld [vmem:[%s0 + $0x68] sm:$0xff]
  %v41 = vld [vmem:[%s0 + $0x70] sm:$0xff]
  %v42 = vld [vmem:[%s0 + $0x78] sm:$0xff]
  %v43 = vld [vmem:[%s0 + $0x80] sm:$0xff]
  %v44 = vld [vmem:[%s0 + $0x88] sm:$0xff]
  %v45 = vld [vmem:[%s0 + $0x90] sm:$0xff]
  %v46 = vld [vmem:[%s0 + $0x98] sm:$0xff]
  %v47 = vpack.c.bf16 %v32, %v27
  %v48 = vpack.c.bf16 %v33, %v28
  %v49 = vpack.c.bf16 %v34, %v29
  %v50 = vpack.c.bf16 %v35, %v30
  %v51 = vpack.c.bf16 %v36, %v31
  %v52 = vpack.c.bf16 %v42, %v37
  %v53 = vpack.c.bf16 %v43, %v38
  %v54 = vpack.c.bf16 %v44, %v39
  %v55 = vpack.c.bf16 %v45, %v40
  %v56 = vpack.c.bf16 %v46, %v41
  %v57 = vld [vmem:[%s1] sm:$0xff]
  %v58 = vld [vmem:[%s1 + $0x8] sm:$0xff]
  %v59 = vld [vmem:[%s1 + $0x10] sm:$0xff]
  %v60 = vld [vmem:[%s1 + $0x18] sm:$0xff]
  %v61 = vld [vmem:[%s1 + $0x20] sm:$0xff]
  %v62 = vld [vmem:[%s1 + $0x28] sm:$0xff]
  %v63 = vld [vmem:[%s1 + $0x30] sm:$0xff]
  %v64 = vld [vmem:[%s1 + $0x38] sm:$0xff]
  %v65 = vld [vmem:[%s1 + $0x40] sm:$0xff]
  %v66 = vld [vmem:[%s1 + $0x48] sm:$0xff]
  %v67 = vld [vmem:[%s1 + $0x50] sm:$0xff]
  %v68 = vld [vmem:[%s1 + $0x58] sm:$0xff]
  %v69 = vld [vmem:[%s1 + $0x60] sm:$0xff]
  %v70 = vld [vmem:[%s1 + $0x68] sm:$0xff]
  %v71 = vld [vmem:[%s1 + $0x70] sm:$0xff]
  %v72 = vld [vmem:[%s1 + $0x78] sm:$0xff]
  %v73 = vld [vmem:[%s1 + $0x80] sm:$0xff]
  %v74 = vld [vmem:[%s1 + $0x88] sm:$0xff]
  %v75 = vld [vmem:[%s1 + $0x90] sm:$0xff]
  %v76 = vld [vmem:[%s1 + $0x98] sm:$0xff]
  %v77 = vld [vmem:[%s1 + $0xa0] sm:$0xff]
  %v78 = vld [vmem:[%s1 + $0xa8] sm:$0xff]
  %v79 = vld [vmem:[%s1 + $0xb0] sm:$0xff]
  %v80 = vld [vmem:[%s1 + $0xb8] sm:$0xff]
  %v81 = vld [vmem:[%s1 + $0xc0] sm:$0xff]
  %v82 = vld [vmem:[%s1 + $0xc8] sm:$0xff]
  %v83 = vld [vmem:[%s1 + $0xd0] sm:$0xff]
  %v84 = vld [vmem:[%s1 + $0xd8] sm:$0xff]
  %v85 = vld [vmem:[%s1 + $0xe0] sm:$0xff]
  %v86 = vld [vmem:[%s1 + $0xe8] sm:$0xff]
  %v87 = vld [vmem:[%s1 + $0xf0] sm:$0xff]
  %v88 = vld [vmem:[%s1 + $0xf8] sm:$0xff]
  %v89 = vld [vmem:[%s1 + $0x100] sm:$0xff]
  %v90 = vld [vmem:[%s1 + $0x108] sm:$0xff]
  %v91 = vld [vmem:[%s1 + $0x110] sm:$0xff]
  %v92 = vld [vmem:[%s1 + $0x118] sm:$0xff]
  %v93 = vld [vmem:[%s1 + $0x120] sm:$0xff]
  %v94 = vld [vmem:[%s1 + $0x128] sm:$0xff]
  %v95 = vld [vmem:[%s1 + $0x130] sm:$0xff]
  %v96 = vld [vmem:[%s1 + $0x138] sm:$0xff]
  %v97 = vld [vmem:[%s1 + $0x140] sm:$0xff]
  %v98 = vld [vmem:[%s1 + $0x148] sm:$0xff]
  %v99 = vld [vmem:[%s1 + $0x150] sm:$0xff]
  %v100 = vld [vmem:[%s1 + $0x158] sm:$0xff]
  %v101 = vld [vmem:[%s1 + $0x160] sm:$0xff]
  %v102 = vld [vmem:[%s1 + $0x168] sm:$0xff]
  %v103 = vld [vmem:[%s1 + $0x170] sm:$0xff]
  %v104 = vld [vmem:[%s1 + $0x178] sm:$0xff]
  %v105 = vld [vmem:[%s1 + $0x180] sm:$0xff]
  %v106 = vld [vmem:[%s1 + $0x188] sm:$0xff]
  %v107 = vld [vmem:[%s1 + $0x190] sm:$0xff]
  %v108 = vld [vmem:[%s1 + $0x198] sm:$0xff]
  %v109 = vld [vmem:[%s1 + $0x1a0] sm:$0xff]
  %v110 = vld [vmem:[%s1 + $0x1a8] sm:$0xff]
  %v111 = vld [vmem:[%s1 + $0x1b0] sm:$0xff]
  %v112 = vld [vmem:[%s1 + $0x1b8] sm:$0xff]
  %v113 = vld [vmem:[%s1 + $0x1c0] sm:$0xff]
  %v114 = vld [vmem:[%s1 + $0x1c8] sm:$0xff]
  %v115 = vld [vmem:[%s1 + $0x1d0] sm:$0xff]
  %v116 = vld [vmem:[%s1 + $0x1d8] sm:$0xff]
  %v117 = vld [vmem:[%s1 + $0x1e0] sm:$0xff]
  %v118 = vld [vmem:[%s1 + $0x1e8] sm:$0xff]
  %v119 = vld [vmem:[%s1 + $0x1f0] sm:$0xff]
  %v120 = vld [vmem:[%s1 + $0x1f8] sm:$0xff]
  %v121 = vld [vmem:[%s1 + $0x200] sm:$0xff]
  %v122 = vld [vmem:[%s1 + $0x208] sm:$0xff]
  %v123 = vld [vmem:[%s1 + $0x210] sm:$0xff]
  %v124 = vld [vmem:[%s1 + $0x218] sm:$0xff]
  %v125 = vld [vmem:[%s1 + $0x220] sm:$0xff]
  %v126 = vld [vmem:[%s1 + $0x228] sm:$0xff]
  %v127 = vld [vmem:[%s1 + $0x230] sm:$0xff]
  %v128 = vld [vmem:[%s1 + $0x238] sm:$0xff]
  %v129 = vld [vmem:[%s1 + $0x240] sm:$0xff]
  %v130 = vld [vmem:[%s1 + $0x248] sm:$0xff]
  %v131 = vld [vmem:[%s1 + $0x250] sm:$0xff]
  %v132 = vld [vmem:[%s1 + $0x258] sm:$0xff]
  %v133 = vld [vmem:[%s1 + $0x260] sm:$0xff]
  %v134 = vld [vmem:[%s1 + $0x268] sm:$0xff]
  %v135 = vld [vmem:[%s1 + $0x270] sm:$0xff]
  %v136 = vld [vmem:[%s1 + $0x278] sm:$0xff]
  %v137 = vld [vmem:[%s1 + $0x280] sm:$0xff]
  %v138 = vld [vmem:[%s1 + $0x288] sm:$0xff]
  %v139 = vld [vmem:[%s1 + $0x290] sm:$0xff]
  %v140 = vld [vmem:[%s1 + $0x298] sm:$0xff]
  %v141 = vld [vmem:[%s1 + $0x2a0] sm:$0xff]
  %v142 = vld [vmem:[%s1 + $0x2a8] sm:$0xff]
  %v143 = vld [vmem:[%s1 + $0x2b0] sm:$0xff]
  %v144 = vld [vmem:[%s1 + $0x2b8] sm:$0xff]
  %v145 = vld [vmem:[%s1 + $0x2c0] sm:$0xff]
  %v146 = vld [vmem:[%s1 + $0x2c8] sm:$0xff]
  %v147 = vld [vmem:[%s1 + $0x2d0] sm:$0xff]
  %v148 = vld [vmem:[%s1 + $0x2d8] sm:$0xff]
  %v149 = vld [vmem:[%s1 + $0x2e0] sm:$0xff]
  %v150 = vld [vmem:[%s1 + $0x2e8] sm:$0xff]
  %v151 = vld [vmem:[%s1 + $0x2f0] sm:$0xff]
  %v152 = vld [vmem:[%s1 + $0x2f8] sm:$0xff]
  %v153 = vld [vmem:[%s1 + $0x300] sm:$0xff]
  %v154 = vld [vmem:[%s1 + $0x308] sm:$0xff]
  %v155 = vld [vmem:[%s1 + $0x310] sm:$0xff]
  %v156 = vld [vmem:[%s1 + $0x318] sm:$0xff]
  %v157 = vld [vmem:[%s1 + $0x320] sm:$0xff]
  %v158 = vld [vmem:[%s1 + $0x328] sm:$0xff]
  %v159 = vld [vmem:[%s1 + $0x330] sm:$0xff]
  %v160 = vld [vmem:[%s1 + $0x338] sm:$0xff]
  %v161 = vld [vmem:[%s1 + $0x340] sm:$0xff]
  %v162 = vld [vmem:[%s1 + $0x348] sm:$0xff]
  %v163 = vld [vmem:[%s1 + $0x350] sm:$0xff]
  %v164 = vld [vmem:[%s1 + $0x358] sm:$0xff]
  %v165 = vld [vmem:[%s1 + $0x360] sm:$0xff]
  %v166 = vld [vmem:[%s1 + $0x368] sm:$0xff]
  %v167 = vld [vmem:[%s1 + $0x370] sm:$0xff]
  %v168 = vld [vmem:[%s1 + $0x378] sm:$0xff]
  %v169 = vld [vmem:[%s1 + $0x380] sm:$0xff]
  %v170 = vld [vmem:[%s1 + $0x388] sm:$0xff]
  %v171 = vld [vmem:[%s1 + $0x390] sm:$0xff]
  %v172 = vld [vmem:[%s1 + $0x398] sm:$0xff]
  %v173 = vld [vmem:[%s1 + $0x3a0] sm:$0xff]
  %v174 = vld [vmem:[%s1 + $0x3a8] sm:$0xff]
  %v175 = vld [vmem:[%s1 + $0x3b0] sm:$0xff]
  %v176 = vld [vmem:[%s1 + $0x3b8] sm:$0xff]
  %v177 = vld [vmem:[%s1 + $0x3c0] sm:$0xff]
  %v178 = vld [vmem:[%s1 + $0x3c8] sm:$0xff]
  %v179 = vld [vmem:[%s1 + $0x3d0] sm:$0xff]
  %v180 = vld [vmem:[%s1 + $0x3d8] sm:$0xff]
  %v181 = vld [vmem:[%s1 + $0x3e0] sm:$0xff]
  %v182 = vld [vmem:[%s1 + $0x3e8] sm:$0xff]
  %v183 = vld [vmem:[%s1 + $0x3f0] sm:$0xff]
  %v184 = vld [vmem:[%s1 + $0x3f8] sm:$0xff]
  %v185 = vld [vmem:[%s1 + $0x400] sm:$0xff]
  %v186 = vld [vmem:[%s1 + $0x408] sm:$0xff]
  %v187 = vld [vmem:[%s1 + $0x410] sm:$0xff]
  %v188 = vld [vmem:[%s1 + $0x418] sm:$0xff]
  %v189 = vld [vmem:[%s1 + $0x420] sm:$0xff]
  %v190 = vld [vmem:[%s1 + $0x428] sm:$0xff]
  %v191 = vld [vmem:[%s1 + $0x430] sm:$0xff]
  %v192 = vld [vmem:[%s1 + $0x438] sm:$0xff]
  %v193 = vld [vmem:[%s1 + $0x440] sm:$0xff]
  %v194 = vld [vmem:[%s1 + $0x448] sm:$0xff]
  %v195 = vld [vmem:[%s1 + $0x450] sm:$0xff]
  %v196 = vld [vmem:[%s1 + $0x458] sm:$0xff]
  %v197 = vld [vmem:[%s1 + $0x460] sm:$0xff]
  %v198 = vld [vmem:[%s1 + $0x468] sm:$0xff]
  %v199 = vld [vmem:[%s1 + $0x470] sm:$0xff]
  %v200 = vld [vmem:[%s1 + $0x478] sm:$0xff]
  %v201 = vld [vmem:[%s1 + $0x480] sm:$0xff]
  %v202 = vld [vmem:[%s1 + $0x488] sm:$0xff]
  %v203 = vld [vmem:[%s1 + $0x490] sm:$0xff]
  %v204 = vld [vmem:[%s1 + $0x498] sm:$0xff]
  %v205 = vld [vmem:[%s1 + $0x4a0] sm:$0xff]
  %v206 = vld [vmem:[%s1 + $0x4a8] sm:$0xff]
  %v207 = vld [vmem:[%s1 + $0x4b0] sm:$0xff]
  %v208 = vld [vmem:[%s1 + $0x4b8] sm:$0xff]
  %v209 = vld [vmem:[%s1 + $0x4c0] sm:$0xff]
  %v210 = vld [vmem:[%s1 + $0x4c8] sm:$0xff]
  %v211 = vld [vmem:[%s1 + $0x4d0] sm:$0xff]
  %v212 = vld [vmem:[%s1 + $0x4d8] sm:$0xff]
  %v213 = vld [vmem:[%s1 + $0x4e0] sm:$0xff]
  %v214 = vld [vmem:[%s1 + $0x4e8] sm:$0xff]
  %v215 = vld [vmem:[%s1 + $0x4f0] sm:$0xff]
  %v216 = vld [vmem:[%s1 + $0x4f8] sm:$0xff]
  %v217 = vld [vmem:[%s1 + $0x500] sm:$0xff]
  %v218 = vld [vmem:[%s1 + $0x508] sm:$0xff]
  %v219 = vld [vmem:[%s1 + $0x510] sm:$0xff]
  %v220 = vld [vmem:[%s1 + $0x518] sm:$0xff]
  %v221 = vld [vmem:[%s1 + $0x520] sm:$0xff]
  %v222 = vld [vmem:[%s1 + $0x528] sm:$0xff]
  %v223 = vld [vmem:[%s1 + $0x530] sm:$0xff]
  %v224 = vld [vmem:[%s1 + $0x538] sm:$0xff]
  %v225 = vld [vmem:[%s1 + $0x540] sm:$0xff]
  %v226 = vld [vmem:[%s1 + $0x548] sm:$0xff]
  %v227 = vld [vmem:[%s1 + $0x550] sm:$0xff]
  %v228 = vld [vmem:[%s1 + $0x558] sm:$0xff]
  %v229 = vld [vmem:[%s1 + $0x560] sm:$0xff]
  %v230 = vld [vmem:[%s1 + $0x568] sm:$0xff]
  %v231 = vld [vmem:[%s1 + $0x570] sm:$0xff]
  %v232 = vld [vmem:[%s1 + $0x578] sm:$0xff]
  %v233 = vld [vmem:[%s1 + $0x580] sm:$0xff]
  %v234 = vld [vmem:[%s1 + $0x588] sm:$0xff]
  %v235 = vld [vmem:[%s1 + $0x590] sm:$0xff]
  %v236 = vld [vmem:[%s1 + $0x598] sm:$0xff]
  %v237 = vld [vmem:[%s1 + $0x5a0] sm:$0xff]
  %v238 = vld [vmem:[%s1 + $0x5a8] sm:$0xff]
  %v239 = vld [vmem:[%s1 + $0x5b0] sm:$0xff]
  %v240 = vld [vmem:[%s1 + $0x5b8] sm:$0xff]
  %v241 = vld [vmem:[%s1 + $0x5c0] sm:$0xff]
  %v242 = vld [vmem:[%s1 + $0x5c8] sm:$0xff]
  %v243 = vld [vmem:[%s1 + $0x5d0] sm:$0xff]
  %v244 = vld [vmem:[%s1 + $0x5d8] sm:$0xff]
  %v245 = vld [vmem:[%s1 + $0x5e0] sm:$0xff]
  %v246 = vld [vmem:[%s1 + $0x5e8] sm:$0xff]
  %v247 = vld [vmem:[%s1 + $0x5f0] sm:$0xff]
  %v248 = vld [vmem:[%s1 + $0x5f8] sm:$0xff]
  %v249 = vld [vmem:[%s1 + $0x600] sm:$0xff]
  %v250 = vld [vmem:[%s1 + $0x608] sm:$0xff]
  %v251 = vld [vmem:[%s1 + $0x610] sm:$0xff]
  %v252 = vld [vmem:[%s1 + $0x618] sm:$0xff]
  %v253 = vld [vmem:[%s1 + $0x620] sm:$0xff]
  %v254 = vld [vmem:[%s1 + $0x628] sm:$0xff]
  %v255 = vld [vmem:[%s1 + $0x630] sm:$0xff]
  %v256 = vld [vmem:[%s1 + $0x638] sm:$0xff]
  %v257 = vld [vmem:[%s1 + $0x640] sm:$0xff]
  %v258 = vld [vmem:[%s1 + $0x648] sm:$0xff]
  %v259 = vld [vmem:[%s1 + $0x650] sm:$0xff]
  %v260 = vld [vmem:[%s1 + $0x658] sm:$0xff]
  %v261 = vld [vmem:[%s1 + $0x660] sm:$0xff]
  %v262 = vld [vmem:[%s1 + $0x668] sm:$0xff]
  %v263 = vld [vmem:[%s1 + $0x670] sm:$0xff]
  %v264 = vld [vmem:[%s1 + $0x678] sm:$0xff]
  %v265 = vld [vmem:[%s1 + $0x680] sm:$0xff]
  %v266 = vld [vmem:[%s1 + $0x688] sm:$0xff]
  %v267 = vld [vmem:[%s1 + $0x690] sm:$0xff]
  %v268 = vld [vmem:[%s1 + $0x698] sm:$0xff]
  %v269 = vld [vmem:[%s1 + $0x6a0] sm:$0xff]
  %v270 = vld [vmem:[%s1 + $0x6a8] sm:$0xff]
  %v271 = vld [vmem:[%s1 + $0x6b0] sm:$0xff]
  %v272 = vld [vmem:[%s1 + $0x6b8] sm:$0xff]
  %v273 = vld [vmem:[%s1 + $0x6c0] sm:$0xff]
  %v274 = vld [vmem:[%s1 + $0x6c8] sm:$0xff]
  %v275 = vld [vmem:[%s1 + $0x6d0] sm:$0xff]
  %v276 = vld [vmem:[%s1 + $0x6d8] sm:$0xff]
  %v277 = vld [vmem:[%s1 + $0x6e0] sm:$0xff]
  %v278 = vld [vmem:[%s1 + $0x6e8] sm:$0xff]
  %v279 = vld [vmem:[%s1 + $0x6f0] sm:$0xff]
  %v280 = vld [vmem:[%s1 + $0x6f8] sm:$0xff]
  %v281 = vld [vmem:[%s1 + $0x700] sm:$0xff]
  %v282 = vld [vmem:[%s1 + $0x708] sm:$0xff]
  %v283 = vld [vmem:[%s1 + $0x710] sm:$0xff]
  %v284 = vld [vmem:[%s1 + $0x718] sm:$0xff]
  %v285 = vld [vmem:[%s1 + $0x720] sm:$0xff]
  %v286 = vld [vmem:[%s1 + $0x728] sm:$0xff]
  %v287 = vld [vmem:[%s1 + $0x730] sm:$0xff]
  %v288 = vld [vmem:[%s1 + $0x738] sm:$0xff]
  %v289 = vld [vmem:[%s1 + $0x740] sm:$0xff]
  %v290 = vld [vmem:[%s1 + $0x748] sm:$0xff]
  %v291 = vld [vmem:[%s1 + $0x750] sm:$0xff]
  %v292 = vld [vmem:[%s1 + $0x758] sm:$0xff]
  %v293 = vld [vmem:[%s1 + $0x760] sm:$0xff]
  %v294 = vld [vmem:[%s1 + $0x768] sm:$0xff]
  %v295 = vld [vmem:[%s1 + $0x770] sm:$0xff]
  %v296 = vld [vmem:[%s1 + $0x778] sm:$0xff]
  %v297 = vld [vmem:[%s3] sm:$0x3f]
  %v299 = vlaneseq
  %v300 = vshrl.u32 %v299, 7
  %v301 = vsub.s32 0, %v300
  %v302 = vrot.slane %v297, %v301
  %v303 = vlaneseq
  %v304 = vshrl.u32 %v303, 7
  %v305 = vsub.s32 1, %v304
  %v306 = vrot.slane %v297, %v305
  %v307 = vlaneseq
  %v308 = vshrl.u32 %v307, 7
  %v309 = vsub.s32 2, %v308
  %v310 = vrot.slane %v297, %v309
  %v311 = vlaneseq
  %v312 = vshrl.u32 %v311, 7
  %v313 = vsub.s32 3, %v312
  %v314 = vrot.slane %v297, %v313
  %v315 = vlaneseq
  %v316 = vshrl.u32 %v315, 7
  %v317 = vsub.s32 4, %v316
  %v318 = vrot.slane %v297, %v317
  %v319 = vlaneseq
  %v320 = vshrl.u32 %v319, 7
  %v321 = vsub.s32 5, %v320
  %v322 = vrot.slane %v297, %v321
  %v569 = vunpack.c.l.b16 %v57
  %v570 = vunpack.c.h.b16 %v57
  %v571 = vunpack.c.l.b16 %v58
  %v572 = vunpack.c.h.b16 %v58
  %v573 = vunpack.c.l.b16 %v59
  %v574 = vunpack.c.h.b16 %v59
  %v575 = vunpack.c.l.b16 %v60
  %v576 = vunpack.c.h.b16 %v60
  %v577 = vunpack.c.l.b16 %v61
  %v578 = vunpack.c.h.b16 %v61
  %v579 = vunpack.c.l.b16 %v62
  %v580 = vunpack.c.h.b16 %v62
  %v581 = vunpack.c.l.b16 %v63
  %v582 = vunpack.c.h.b16 %v63
  %v583 = vunpack.c.l.b16 %v64
  %v584 = vunpack.c.h.b16 %v64
  %v585 = vunpack.c.l.b16 %v65
  %v586 = vunpack.c.h.b16 %v65
  %v587 = vunpack.c.l.b16 %v66
  %v588 = vunpack.c.h.b16 %v66
  %v589 = vunpack.c.l.b16 %v67
  %v590 = vunpack.c.h.b16 %v67
  %v591 = vunpack.c.l.b16 %v68
  %v592 = vunpack.c.h.b16 %v68
  %v593 = vunpack.c.l.b16 %v69
  %v594 = vunpack.c.h.b16 %v69
  %v595 = vunpack.c.l.b16 %v70
  %v596 = vunpack.c.h.b16 %v70
  %v597 = vunpack.c.l.b16 %v71
  %v598 = vunpack.c.h.b16 %v71
  %v599 = vunpack.c.l.b16 %v72
  %v600 = vunpack.c.h.b16 %v72
  %v601 = vunpack.c.l.b16 %v73
  %v602 = vunpack.c.h.b16 %v73
  %v603 = vunpack.c.l.b16 %v74
  %v604 = vunpack.c.h.b16 %v74
  %v605 = vunpack.c.l.b16 %v75
  %v606 = vunpack.c.h.b16 %v75
  %v607 = vunpack.c.l.b16 %v76
  %v608 = vunpack.c.h.b16 %v76
  %v609 = vunpack.c.l.b16 %v77
  %v610 = vunpack.c.h.b16 %v77
  %v611 = vunpack.c.l.b16 %v78
  %v612 = vunpack.c.h.b16 %v78
  %v613 = vunpack.c.l.b16 %v79
  %v614 = vunpack.c.h.b16 %v79
  %v615 = vunpack.c.l.b16 %v80
  %v616 = vunpack.c.h.b16 %v80
  %v617 = vunpack.c.l.b16 %v81
  %v618 = vunpack.c.h.b16 %v81
  %v619 = vunpack.c.l.b16 %v82
  %v620 = vunpack.c.h.b16 %v82
  %v621 = vunpack.c.l.b16 %v83
  %v622 = vunpack.c.h.b16 %v83
  %v623 = vunpack.c.l.b16 %v84
  %v624 = vunpack.c.h.b16 %v84
  %v625 = vunpack.c.l.b16 %v85
  %v626 = vunpack.c.h.b16 %v85
  %v627 = vunpack.c.l.b16 %v86
  %v628 = vunpack.c.h.b16 %v86
  %v629 = vunpack.c.l.b16 %v87
  %v630 = vunpack.c.h.b16 %v87
  %v631 = vunpack.c.l.b16 %v88
  %v632 = vunpack.c.h.b16 %v88
  %v633 = vunpack.c.l.b16 %v89
  %v634 = vunpack.c.h.b16 %v89
  %v635 = vunpack.c.l.b16 %v90
  %v636 = vunpack.c.h.b16 %v90
  %v637 = vunpack.c.l.b16 %v91
  %v638 = vunpack.c.h.b16 %v91
  %v639 = vunpack.c.l.b16 %v92
  %v640 = vunpack.c.h.b16 %v92
  %v641 = vunpack.c.l.b16 %v93
  %v642 = vunpack.c.h.b16 %v93
  %v643 = vunpack.c.l.b16 %v94
  %v644 = vunpack.c.h.b16 %v94
  %v645 = vunpack.c.l.b16 %v95
  %v646 = vunpack.c.h.b16 %v95
  %v647 = vunpack.c.l.b16 %v96
  %v648 = vunpack.c.h.b16 %v96
  %v649 = vunpack.c.l.b16 %v97
  %v650 = vunpack.c.h.b16 %v97
  %v651 = vunpack.c.l.b16 %v98
  %v652 = vunpack.c.h.b16 %v98
  %v653 = vunpack.c.l.b16 %v99
  %v654 = vunpack.c.h.b16 %v99
  %v655 = vunpack.c.l.b16 %v100
  %v656 = vunpack.c.h.b16 %v100
  %v657 = vunpack.c.l.b16 %v101
  %v658 = vunpack.c.h.b16 %v101
  %v659 = vunpack.c.l.b16 %v102
  %v660 = vunpack.c.h.b16 %v102
  %v661 = vunpack.c.l.b16 %v103
  %v662 = vunpack.c.h.b16 %v103
  %v663 = vunpack.c.l.b16 %v104
  %v664 = vunpack.c.h.b16 %v104
  %v665 = vunpack.c.l.b16 %v105
  %v666 = vunpack.c.h.b16 %v105
  %v667 = vunpack.c.l.b16 %v106
  %v668 = vunpack.c.h.b16 %v106
  %v669 = vunpack.c.l.b16 %v107
  %v670 = vunpack.c.h.b16 %v107
  %v671 = vunpack.c.l.b16 %v108
  %v672 = vunpack.c.h.b16 %v108
  %v673 = vunpack.c.l.b16 %v109
  %v674 = vunpack.c.h.b16 %v109
  %v675 = vunpack.c.l.b16 %v110
  %v676 = vunpack.c.h.b16 %v110
  %v677 = vunpack.c.l.b16 %v111
  %v678 = vunpack.c.h.b16 %v111
  %v679 = vunpack.c.l.b16 %v112
  %v680 = vunpack.c.h.b16 %v112
  %v681 = vunpack.c.l.b16 %v113
  %v682 = vunpack.c.h.b16 %v113
  %v683 = vunpack.c.l.b16 %v114
  %v684 = vunpack.c.h.b16 %v114
  %v685 = vunpack.c.l.b16 %v115
  %v686 = vunpack.c.h.b16 %v115
  %v687 = vunpack.c.l.b16 %v116
  %v688 = vunpack.c.h.b16 %v116
  %v689 = vunpack.c.l.b16 %v117
  %v690 = vunpack.c.h.b16 %v117
  %v691 = vunpack.c.l.b16 %v118
  %v692 = vunpack.c.h.b16 %v118
  %v693 = vunpack.c.l.b16 %v119
  %v694 = vunpack.c.h.b16 %v119
  %v695 = vunpack.c.l.b16 %v120
  %v696 = vunpack.c.h.b16 %v120
  %v697 = vunpack.c.l.b16 %v121
  %v698 = vunpack.c.h.b16 %v121
  %v699 = vunpack.c.l.b16 %v122
  %v700 = vunpack.c.h.b16 %v122
  %v701 = vunpack.c.l.b16 %v123
  %v702 = vunpack.c.h.b16 %v123
  %v703 = vunpack.c.l.b16 %v124
  %v704 = vunpack.c.h.b16 %v124
  %v705 = vunpack.c.l.b16 %v125
  %v706 = vunpack.c.h.b16 %v125
  %v707 = vunpack.c.l.b16 %v126
  %v708 = vunpack.c.h.b16 %v126
  %v709 = vunpack.c.l.b16 %v127
  %v710 = vunpack.c.h.b16 %v127
  %v711 = vunpack.c.l.b16 %v128
  %v712 = vunpack.c.h.b16 %v128
  %v713 = vunpack.c.l.b16 %v129
  %v714 = vunpack.c.h.b16 %v129
  %v715 = vunpack.c.l.b16 %v130
  %v716 = vunpack.c.h.b16 %v130
  %v717 = vunpack.c.l.b16 %v131
  %v718 = vunpack.c.h.b16 %v131
  %v719 = vunpack.c.l.b16 %v132
  %v720 = vunpack.c.h.b16 %v132
  %v721 = vunpack.c.l.b16 %v133
  %v722 = vunpack.c.h.b16 %v133
  %v723 = vunpack.c.l.b16 %v134
  %v724 = vunpack.c.h.b16 %v134
  %v725 = vunpack.c.l.b16 %v135
  %v726 = vunpack.c.h.b16 %v135
  %v727 = vunpack.c.l.b16 %v136
  %v728 = vunpack.c.h.b16 %v136
  %v729 = vunpack.c.l.b16 %v137
  %v730 = vunpack.c.h.b16 %v137
  %v731 = vunpack.c.l.b16 %v138
  %v732 = vunpack.c.h.b16 %v138
  %v733 = vunpack.c.l.b16 %v139
  %v734 = vunpack.c.h.b16 %v139
  %v735 = vunpack.c.l.b16 %v140
  %v736 = vunpack.c.h.b16 %v140
  %v737 = vunpack.c.l.b16 %v141
  %v738 = vunpack.c.h.b16 %v141
  %v739 = vunpack.c.l.b16 %v142
  %v740 = vunpack.c.h.b16 %v142
  %v741 = vunpack.c.l.b16 %v143
  %v742 = vunpack.c.h.b16 %v143
  %v743 = vunpack.c.l.b16 %v144
  %v744 = vunpack.c.h.b16 %v144
  %v745 = vunpack.c.l.b16 %v145
  %v746 = vunpack.c.h.b16 %v145
  %v747 = vunpack.c.l.b16 %v146
  %v748 = vunpack.c.h.b16 %v146
  %v749 = vunpack.c.l.b16 %v147
  %v750 = vunpack.c.h.b16 %v147
  %v751 = vunpack.c.l.b16 %v148
  %v752 = vunpack.c.h.b16 %v148
  %v753 = vunpack.c.l.b16 %v149
  %v754 = vunpack.c.h.b16 %v149
  %v755 = vunpack.c.l.b16 %v150
  %v756 = vunpack.c.h.b16 %v150
  %v757 = vunpack.c.l.b16 %v151
  %v758 = vunpack.c.h.b16 %v151
  %v759 = vunpack.c.l.b16 %v152
  %v760 = vunpack.c.h.b16 %v152
  %v761 = vunpack.c.l.b16 %v153
  %v762 = vunpack.c.h.b16 %v153
  %v763 = vunpack.c.l.b16 %v154
  %v764 = vunpack.c.h.b16 %v154
  %v765 = vunpack.c.l.b16 %v155
  %v766 = vunpack.c.h.b16 %v155
  %v767 = vunpack.c.l.b16 %v156
  %v768 = vunpack.c.h.b16 %v156
  %v769 = vunpack.c.l.b16 %v157
  %v770 = vunpack.c.h.b16 %v157
  %v771 = vunpack.c.l.b16 %v158
  %v772 = vunpack.c.h.b16 %v158
  %v773 = vunpack.c.l.b16 %v159
  %v774 = vunpack.c.h.b16 %v159
  %v775 = vunpack.c.l.b16 %v160
  %v776 = vunpack.c.h.b16 %v160
  %v777 = vunpack.c.l.b16 %v161
  %v778 = vunpack.c.h.b16 %v161
  %v779 = vunpack.c.l.b16 %v162
  %v780 = vunpack.c.h.b16 %v162
  %v781 = vunpack.c.l.b16 %v163
  %v782 = vunpack.c.h.b16 %v163
  %v783 = vunpack.c.l.b16 %v164
  %v784 = vunpack.c.h.b16 %v164
  %v785 = vunpack.c.l.b16 %v165
  %v786 = vunpack.c.h.b16 %v165
  %v787 = vunpack.c.l.b16 %v166
  %v788 = vunpack.c.h.b16 %v166
  %v789 = vunpack.c.l.b16 %v167
  %v790 = vunpack.c.h.b16 %v167
  %v791 = vunpack.c.l.b16 %v168
  %v792 = vunpack.c.h.b16 %v168
  %v793 = vunpack.c.l.b16 %v169
  %v794 = vunpack.c.h.b16 %v169
  %v795 = vunpack.c.l.b16 %v170
  %v796 = vunpack.c.h.b16 %v170
  %v797 = vunpack.c.l.b16 %v171
  %v798 = vunpack.c.h.b16 %v171
  %v799 = vunpack.c.l.b16 %v172
  %v800 = vunpack.c.h.b16 %v172
  %v801 = vunpack.c.l.b16 %v173
  %v802 = vunpack.c.h.b16 %v173
  %v803 = vunpack.c.l.b16 %v174
  %v804 = vunpack.c.h.b16 %v174
  %v805 = vunpack.c.l.b16 %v175
  %v806 = vunpack.c.h.b16 %v175
  %v807 = vunpack.c.l.b16 %v176
  %v808 = vunpack.c.h.b16 %v176
  %v809 = vunpack.c.l.b16 %v177
  %v810 = vunpack.c.h.b16 %v177
  %v811 = vunpack.c.l.b16 %v178
  %v812 = vunpack.c.h.b16 %v178
  %v813 = vunpack.c.l.b16 %v179
  %v814 = vunpack.c.h.b16 %v179
  %v815 = vunpack.c.l.b16 %v180
  %v816 = vunpack.c.h.b16 %v180
  %v817 = vunpack.c.l.b16 %v181
  %v818 = vunpack.c.h.b16 %v181
  %v819 = vunpack.c.l.b16 %v182
  %v820 = vunpack.c.h.b16 %v182
  %v821 = vunpack.c.l.b16 %v183
  %v822 = vunpack.c.h.b16 %v183
  %v823 = vunpack.c.l.b16 %v184
  %v824 = vunpack.c.h.b16 %v184
  %v825 = vunpack.c.l.b16 %v185
  %v826 = vunpack.c.h.b16 %v185
  %v827 = vunpack.c.l.b16 %v186
  %v828 = vunpack.c.h.b16 %v186
  %v829 = vunpack.c.l.b16 %v187
  %v830 = vunpack.c.h.b16 %v187
  %v831 = vunpack.c.l.b16 %v188
  %v832 = vunpack.c.h.b16 %v188
  %v833 = vunpack.c.l.b16 %v189
  %v834 = vunpack.c.h.b16 %v189
  %v835 = vunpack.c.l.b16 %v190
  %v836 = vunpack.c.h.b16 %v190
  %v837 = vunpack.c.l.b16 %v191
  %v838 = vunpack.c.h.b16 %v191
  %v839 = vunpack.c.l.b16 %v192
  %v840 = vunpack.c.h.b16 %v192
  %v841 = vunpack.c.l.b16 %v193
  %v842 = vunpack.c.h.b16 %v193
  %v843 = vunpack.c.l.b16 %v194
  %v844 = vunpack.c.h.b16 %v194
  %v845 = vunpack.c.l.b16 %v195
  %v846 = vunpack.c.h.b16 %v195
  %v847 = vunpack.c.l.b16 %v196
  %v848 = vunpack.c.h.b16 %v196
  %v849 = vunpack.c.l.b16 %v197
  %v850 = vunpack.c.h.b16 %v197
  %v851 = vunpack.c.l.b16 %v198
  %v852 = vunpack.c.h.b16 %v198
  %v853 = vunpack.c.l.b16 %v199
  %v854 = vunpack.c.h.b16 %v199
  %v855 = vunpack.c.l.b16 %v200
  %v856 = vunpack.c.h.b16 %v200
  %v857 = vunpack.c.l.b16 %v201
  %v858 = vunpack.c.h.b16 %v201
  %v859 = vunpack.c.l.b16 %v202
  %v860 = vunpack.c.h.b16 %v202
  %v861 = vunpack.c.l.b16 %v203
  %v862 = vunpack.c.h.b16 %v203
  %v863 = vunpack.c.l.b16 %v204
  %v864 = vunpack.c.h.b16 %v204
  %v865 = vunpack.c.l.b16 %v205
  %v866 = vunpack.c.h.b16 %v205
  %v867 = vunpack.c.l.b16 %v206
  %v868 = vunpack.c.h.b16 %v206
  %v869 = vunpack.c.l.b16 %v207
  %v870 = vunpack.c.h.b16 %v207
  %v871 = vunpack.c.l.b16 %v208
  %v872 = vunpack.c.h.b16 %v208
  %v873 = vunpack.c.l.b16 %v209
  %v874 = vunpack.c.h.b16 %v209
  %v875 = vunpack.c.l.b16 %v210
  %v876 = vunpack.c.h.b16 %v210
  %v877 = vunpack.c.l.b16 %v211
  %v878 = vunpack.c.h.b16 %v211
  %v879 = vunpack.c.l.b16 %v212
  %v880 = vunpack.c.h.b16 %v212
  %v881 = vunpack.c.l.b16 %v213
  %v882 = vunpack.c.h.b16 %v213
  %v883 = vunpack.c.l.b16 %v214
  %v884 = vunpack.c.h.b16 %v214
  %v885 = vunpack.c.l.b16 %v215
  %v886 = vunpack.c.h.b16 %v215
  %v887 = vunpack.c.l.b16 %v216
  %v888 = vunpack.c.h.b16 %v216
  %v889 = vunpack.c.l.b16 %v217
  %v890 = vunpack.c.h.b16 %v217
  %v891 = vunpack.c.l.b16 %v218
  %v892 = vunpack.c.h.b16 %v218
  %v893 = vunpack.c.l.b16 %v219
  %v894 = vunpack.c.h.b16 %v219
  %v895 = vunpack.c.l.b16 %v220
  %v896 = vunpack.c.h.b16 %v220
  %v897 = vunpack.c.l.b16 %v221
  %v898 = vunpack.c.h.b16 %v221
  %v899 = vunpack.c.l.b16 %v222
  %v900 = vunpack.c.h.b16 %v222
  %v901 = vunpack.c.l.b16 %v223
  %v902 = vunpack.c.h.b16 %v223
  %v903 = vunpack.c.l.b16 %v224
  %v904 = vunpack.c.h.b16 %v224
  %v905 = vunpack.c.l.b16 %v225
  %v906 = vunpack.c.h.b16 %v225
  %v907 = vunpack.c.l.b16 %v226
  %v908 = vunpack.c.h.b16 %v226
  %v909 = vunpack.c.l.b16 %v227
  %v910 = vunpack.c.h.b16 %v227
  %v911 = vunpack.c.l.b16 %v228
  %v912 = vunpack.c.h.b16 %v228
  %v913 = vunpack.c.l.b16 %v229
  %v914 = vunpack.c.h.b16 %v229
  %v915 = vunpack.c.l.b16 %v230
  %v916 = vunpack.c.h.b16 %v230
  %v917 = vunpack.c.l.b16 %v231
  %v918 = vunpack.c.h.b16 %v231
  %v919 = vunpack.c.l.b16 %v232
  %v920 = vunpack.c.h.b16 %v232
  %v921 = vunpack.c.l.b16 %v233
  %v922 = vunpack.c.h.b16 %v233
  %v923 = vunpack.c.l.b16 %v234
  %v924 = vunpack.c.h.b16 %v234
  %v925 = vunpack.c.l.b16 %v235
  %v926 = vunpack.c.h.b16 %v235
  %v927 = vunpack.c.l.b16 %v236
  %v928 = vunpack.c.h.b16 %v236
  %v929 = vunpack.c.l.b16 %v237
  %v930 = vunpack.c.h.b16 %v237
  %v931 = vunpack.c.l.b16 %v238
  %v932 = vunpack.c.h.b16 %v238
  %v933 = vunpack.c.l.b16 %v239
  %v934 = vunpack.c.h.b16 %v239
  %v935 = vunpack.c.l.b16 %v240
  %v936 = vunpack.c.h.b16 %v240
  %v937 = vunpack.c.l.b16 %v241
  %v938 = vunpack.c.h.b16 %v241
  %v939 = vunpack.c.l.b16 %v242
  %v940 = vunpack.c.h.b16 %v242
  %v941 = vunpack.c.l.b16 %v243
  %v942 = vunpack.c.h.b16 %v243
  %v943 = vunpack.c.l.b16 %v244
  %v944 = vunpack.c.h.b16 %v244
  %v945 = vunpack.c.l.b16 %v245
  %v946 = vunpack.c.h.b16 %v245
  %v947 = vunpack.c.l.b16 %v246
  %v948 = vunpack.c.h.b16 %v246
  %v949 = vunpack.c.l.b16 %v247
  %v950 = vunpack.c.h.b16 %v247
  %v951 = vunpack.c.l.b16 %v248
  %v952 = vunpack.c.h.b16 %v248
  %v953 = vunpack.c.l.b16 %v249
  %v954 = vunpack.c.h.b16 %v249
  %v955 = vunpack.c.l.b16 %v250
  %v956 = vunpack.c.h.b16 %v250
  %v957 = vunpack.c.l.b16 %v251
  %v958 = vunpack.c.h.b16 %v251
  %v959 = vunpack.c.l.b16 %v252
  %v960 = vunpack.c.h.b16 %v252
  %v961 = vunpack.c.l.b16 %v253
  %v962 = vunpack.c.h.b16 %v253
  %v963 = vunpack.c.l.b16 %v254
  %v964 = vunpack.c.h.b16 %v254
  %v965 = vunpack.c.l.b16 %v255
  %v966 = vunpack.c.h.b16 %v255
  %v967 = vunpack.c.l.b16 %v256
  %v968 = vunpack.c.h.b16 %v256
  %v969 = vunpack.c.l.b16 %v257
  %v970 = vunpack.c.h.b16 %v257
  %v971 = vunpack.c.l.b16 %v258
  %v972 = vunpack.c.h.b16 %v258
  %v973 = vunpack.c.l.b16 %v259
  %v974 = vunpack.c.h.b16 %v259
  %v975 = vunpack.c.l.b16 %v260
  %v976 = vunpack.c.h.b16 %v260
  %v977 = vunpack.c.l.b16 %v261
  %v978 = vunpack.c.h.b16 %v261
  %v979 = vunpack.c.l.b16 %v262
  %v980 = vunpack.c.h.b16 %v262
  %v981 = vunpack.c.l.b16 %v263
  %v982 = vunpack.c.h.b16 %v263
  %v983 = vunpack.c.l.b16 %v264
  %v984 = vunpack.c.h.b16 %v264
  %v985 = vunpack.c.l.b16 %v265
  %v986 = vunpack.c.h.b16 %v265
  %v987 = vunpack.c.l.b16 %v266
  %v988 = vunpack.c.h.b16 %v266
  %v989 = vunpack.c.l.b16 %v267
  %v990 = vunpack.c.h.b16 %v267
  %v991 = vunpack.c.l.b16 %v268
  %v992 = vunpack.c.h.b16 %v268
  %v993 = vunpack.c.l.b16 %v269
  %v994 = vunpack.c.h.b16 %v269
  %v995 = vunpack.c.l.b16 %v270
  %v996 = vunpack.c.h.b16 %v270
  %v997 = vunpack.c.l.b16 %v271
  %v998 = vunpack.c.h.b16 %v271
  %v999 = vunpack.c.l.b16 %v272
  %v1000 = vunpack.c.h.b16 %v272
  %v1001 = vunpack.c.l.b16 %v273
  %v1002 = vunpack.c.h.b16 %v273
  %v1003 = vunpack.c.l.b16 %v274
  %v1004 = vunpack.c.h.b16 %v274
  %v1005 = vunpack.c.l.b16 %v275
  %v1006 = vunpack.c.h.b16 %v275
  %v1007 = vunpack.c.l.b16 %v276
  %v1008 = vunpack.c.h.b16 %v276
  %v1009 = vunpack.c.l.b16 %v277
  %v1010 = vunpack.c.h.b16 %v277
  %v1011 = vunpack.c.l.b16 %v278
  %v1012 = vunpack.c.h.b16 %v278
  %v1013 = vunpack.c.l.b16 %v279
  %v1014 = vunpack.c.h.b16 %v279
  %v1015 = vunpack.c.l.b16 %v280
  %v1016 = vunpack.c.h.b16 %v280
  %v1017 = vunpack.c.l.b16 %v281
  %v1018 = vunpack.c.h.b16 %v281
  %v1019 = vunpack.c.l.b16 %v282
  %v1020 = vunpack.c.h.b16 %v282
  %v1021 = vunpack.c.l.b16 %v283
  %v1022 = vunpack.c.h.b16 %v283
  %v1023 = vunpack.c.l.b16 %v284
  %v1024 = vunpack.c.h.b16 %v284
  %v1025 = vunpack.c.l.b16 %v285
  %v1026 = vunpack.c.h.b16 %v285
  %v1027 = vunpack.c.l.b16 %v286
  %v1028 = vunpack.c.h.b16 %v286
  %v1029 = vunpack.c.l.b16 %v287
  %v1030 = vunpack.c.h.b16 %v287
  %v1031 = vunpack.c.l.b16 %v288
  %v1032 = vunpack.c.h.b16 %v288
  %v1033 = vunpack.c.l.b16 %v289
  %v1034 = vunpack.c.h.b16 %v289
  %v1035 = vunpack.c.l.b16 %v290
  %v1036 = vunpack.c.h.b16 %v290
  %v1037 = vunpack.c.l.b16 %v291
  %v1038 = vunpack.c.h.b16 %v291
  %v1039 = vunpack.c.l.b16 %v292
  %v1040 = vunpack.c.h.b16 %v292
  %v1041 = vunpack.c.l.b16 %v293
  %v1042 = vunpack.c.h.b16 %v293
  %v1043 = vunpack.c.l.b16 %v294
  %v1044 = vunpack.c.h.b16 %v294
  %v1045 = vunpack.c.l.b16 %v295
  %v1046 = vunpack.c.h.b16 %v295
  %v1047 = vunpack.c.l.b16 %v296
  %v1048 = vunpack.c.h.b16 %v296
  %v1049 = vpack.c.b16 %v575, %v569
  %v1050 = vpack.c.b16 %v576, %v570
  %v1051 = vpack.c.b16 %v577, %v571
  %v1052 = vpack.c.b16 %v578, %v572
  %v1053 = vpack.c.b16 %v579, %v573
  %v1054 = vpack.c.b16 %v580, %v574
  %v1055 = vpack.c.b16 %v587, %v581
  %v1056 = vpack.c.b16 %v588, %v582
  %v1057 = vpack.c.b16 %v589, %v583
  %v1058 = vpack.c.b16 %v590, %v584
  %v1059 = vpack.c.b16 %v591, %v585
  %v1060 = vpack.c.b16 %v592, %v586
  %v1061 = vpack.c.b16 %v599, %v593
  %v1062 = vpack.c.b16 %v600, %v594
  %v1063 = vpack.c.b16 %v601, %v595
  %v1064 = vpack.c.b16 %v602, %v596
  %v1065 = vpack.c.b16 %v603, %v597
  %v1066 = vpack.c.b16 %v604, %v598
  %v1067 = vpack.c.b16 %v611, %v605
  %v1068 = vpack.c.b16 %v612, %v606
  %v1069 = vpack.c.b16 %v613, %v607
  %v1070 = vpack.c.b16 %v614, %v608
  %v1071 = vpack.c.b16 %v615, %v609
  %v1072 = vpack.c.b16 %v616, %v610
  %v1073 = vpack.c.b16 %v623, %v617
  %v1074 = vpack.c.b16 %v624, %v618
  %v1075 = vpack.c.b16 %v625, %v619
  %v1076 = vpack.c.b16 %v626, %v620
  %v1077 = vpack.c.b16 %v627, %v621
  %v1078 = vpack.c.b16 %v628, %v622
  %v1079 = vpack.c.b16 %v635, %v629
  %v1080 = vpack.c.b16 %v636, %v630
  %v1081 = vpack.c.b16 %v637, %v631
  %v1082 = vpack.c.b16 %v638, %v632
  %v1083 = vpack.c.b16 %v639, %v633
  %v1084 = vpack.c.b16 %v640, %v634
  %v1085 = vpack.c.b16 %v647, %v641
  %v1086 = vpack.c.b16 %v648, %v642
  %v1087 = vpack.c.b16 %v649, %v643
  %v1088 = vpack.c.b16 %v650, %v644
  %v1089 = vpack.c.b16 %v651, %v645
  %v1090 = vpack.c.b16 %v652, %v646
  %v1091 = vpack.c.b16 %v659, %v653
  %v1092 = vpack.c.b16 %v660, %v654
  %v1093 = vpack.c.b16 %v661, %v655
  %v1094 = vpack.c.b16 %v662, %v656
  %v1095 = vpack.c.b16 %v663, %v657
  %v1096 = vpack.c.b16 %v664, %v658
  %v1097 = vpack.c.b16 %v671, %v665
  %v1098 = vpack.c.b16 %v672, %v666
  %v1099 = vpack.c.b16 %v673, %v667
  %v1100 = vpack.c.b16 %v674, %v668
  %v1101 = vpack.c.b16 %v675, %v669
  %v1102 = vpack.c.b16 %v676, %v670
  %v1103 = vpack.c.b16 %v683, %v677
  %v1104 = vpack.c.b16 %v684, %v678
  %v1105 = vpack.c.b16 %v685, %v679
  %v1106 = vpack.c.b16 %v686, %v680
  %v1107 = vpack.c.b16 %v687, %v681
  %v1108 = vpack.c.b16 %v688, %v682
  %v1109 = vpack.c.b16 %v695, %v689
  %v1110 = vpack.c.b16 %v696, %v690
  %v1111 = vpack.c.b16 %v697, %v691
  %v1112 = vpack.c.b16 %v698, %v692
  %v1113 = vpack.c.b16 %v699, %v693
  %v1114 = vpack.c.b16 %v700, %v694
  %v1115 = vpack.c.b16 %v707, %v701
  %v1116 = vpack.c.b16 %v708, %v702
  %v1117 = vpack.c.b16 %v709, %v703
  %v1118 = vpack.c.b16 %v710, %v704
  %v1119 = vpack.c.b16 %v711, %v705
  %v1120 = vpack.c.b16 %v712, %v706
  %v1121 = vpack.c.b16 %v719, %v713
  %v1122 = vpack.c.b16 %v720, %v714
  %v1123 = vpack.c.b16 %v721, %v715
  %v1124 = vpack.c.b16 %v722, %v716
  %v1125 = vpack.c.b16 %v723, %v717
  %v1126 = vpack.c.b16 %v724, %v718
  %v1127 = vpack.c.b16 %v731, %v725
  %v1128 = vpack.c.b16 %v732, %v726
  %v1129 = vpack.c.b16 %v733, %v727
  %v1130 = vpack.c.b16 %v734, %v728
  %v1131 = vpack.c.b16 %v735, %v729
  %v1132 = vpack.c.b16 %v736, %v730
  %v1133 = vpack.c.b16 %v743, %v737
  %v1134 = vpack.c.b16 %v744, %v738
  %v1135 = vpack.c.b16 %v745, %v739
  %v1136 = vpack.c.b16 %v746, %v740
  %v1137 = vpack.c.b16 %v747, %v741
  %v1138 = vpack.c.b16 %v748, %v742
  %v1139 = vpack.c.b16 %v755, %v749
  %v1140 = vpack.c.b16 %v756, %v750
  %v1141 = vpack.c.b16 %v757, %v751
  %v1142 = vpack.c.b16 %v758, %v752
  %v1143 = vpack.c.b16 %v759, %v753
  %v1144 = vpack.c.b16 %v760, %v754
  %v1145 = vpack.c.b16 %v767, %v761
  %v1146 = vpack.c.b16 %v768, %v762
  %v1147 = vpack.c.b16 %v769, %v763
  %v1148 = vpack.c.b16 %v770, %v764
  %v1149 = vpack.c.b16 %v771, %v765
  %v1150 = vpack.c.b16 %v772, %v766
  %v1151 = vpack.c.b16 %v779, %v773
  %v1152 = vpack.c.b16 %v780, %v774
  %v1153 = vpack.c.b16 %v781, %v775
  %v1154 = vpack.c.b16 %v782, %v776
  %v1155 = vpack.c.b16 %v783, %v777
  %v1156 = vpack.c.b16 %v784, %v778
  %v1157 = vpack.c.b16 %v791, %v785
  %v1158 = vpack.c.b16 %v792, %v786
  %v1159 = vpack.c.b16 %v793, %v787
  %v1160 = vpack.c.b16 %v794, %v788
  %v1161 = vpack.c.b16 %v795, %v789
  %v1162 = vpack.c.b16 %v796, %v790
  %v1163 = vpack.c.b16 %v803, %v797
  %v1164 = vpack.c.b16 %v804, %v798
  %v1165 = vpack.c.b16 %v805, %v799
  %v1166 = vpack.c.b16 %v806, %v800
  %v1167 = vpack.c.b16 %v807, %v801
  %v1168 = vpack.c.b16 %v808, %v802
  %v1169 = vpack.c.b16 %v815, %v809
  %v1170 = vpack.c.b16 %v816, %v810
  %v1171 = vpack.c.b16 %v817, %v811
  %v1172 = vpack.c.b16 %v818, %v812
  %v1173 = vpack.c.b16 %v819, %v813
  %v1174 = vpack.c.b16 %v820, %v814
  %v1175 = vpack.c.b16 %v827, %v821
  %v1176 = vpack.c.b16 %v828, %v822
  %v1177 = vpack.c.b16 %v829, %v823
  %v1178 = vpack.c.b16 %v830, %v824
  %v1179 = vpack.c.b16 %v831, %v825
  %v1180 = vpack.c.b16 %v832, %v826
  %v1181 = vpack.c.b16 %v839, %v833
  %v1182 = vpack.c.b16 %v840, %v834
  %v1183 = vpack.c.b16 %v841, %v835
  %v1184 = vpack.c.b16 %v842, %v836
  %v1185 = vpack.c.b16 %v843, %v837
  %v1186 = vpack.c.b16 %v844, %v838
  %v1187 = vpack.c.b16 %v851, %v845
  %v1188 = vpack.c.b16 %v852, %v846
  %v1189 = vpack.c.b16 %v853, %v847
  %v1190 = vpack.c.b16 %v854, %v848
  %v1191 = vpack.c.b16 %v855, %v849
  %v1192 = vpack.c.b16 %v856, %v850
  %v1193 = vpack.c.b16 %v863, %v857
  %v1194 = vpack.c.b16 %v864, %v858
  %v1195 = vpack.c.b16 %v865, %v859
  %v1196 = vpack.c.b16 %v866, %v860
  %v1197 = vpack.c.b16 %v867, %v861
  %v1198 = vpack.c.b16 %v868, %v862
  %v1199 = vpack.c.b16 %v875, %v869
  %v1200 = vpack.c.b16 %v876, %v870
  %v1201 = vpack.c.b16 %v877, %v871
  %v1202 = vpack.c.b16 %v878, %v872
  %v1203 = vpack.c.b16 %v879, %v873
  %v1204 = vpack.c.b16 %v880, %v874
  %v1205 = vpack.c.b16 %v887, %v881
  %v1206 = vpack.c.b16 %v888, %v882
  %v1207 = vpack.c.b16 %v889, %v883
  %v1208 = vpack.c.b16 %v890, %v884
  %v1209 = vpack.c.b16 %v891, %v885
  %v1210 = vpack.c.b16 %v892, %v886
  %v1211 = vpack.c.b16 %v899, %v893
  %v1212 = vpack.c.b16 %v900, %v894
  %v1213 = vpack.c.b16 %v901, %v895
  %v1214 = vpack.c.b16 %v902, %v896
  %v1215 = vpack.c.b16 %v903, %v897
  %v1216 = vpack.c.b16 %v904, %v898
  %v1217 = vpack.c.b16 %v911, %v905
  %v1218 = vpack.c.b16 %v912, %v906
  %v1219 = vpack.c.b16 %v913, %v907
  %v1220 = vpack.c.b16 %v914, %v908
  %v1221 = vpack.c.b16 %v915, %v909
  %v1222 = vpack.c.b16 %v916, %v910
  %v1223 = vpack.c.b16 %v923, %v917
  %v1224 = vpack.c.b16 %v924, %v918
  %v1225 = vpack.c.b16 %v925, %v919
  %v1226 = vpack.c.b16 %v926, %v920
  %v1227 = vpack.c.b16 %v927, %v921
  %v1228 = vpack.c.b16 %v928, %v922
  %v1229 = vpack.c.b16 %v935, %v929
  %v1230 = vpack.c.b16 %v936, %v930
  %v1231 = vpack.c.b16 %v937, %v931
  %v1232 = vpack.c.b16 %v938, %v932
  %v1233 = vpack.c.b16 %v939, %v933
  %v1234 = vpack.c.b16 %v940, %v934
  %v1235 = vpack.c.b16 %v947, %v941
  %v1236 = vpack.c.b16 %v948, %v942
  %v1237 = vpack.c.b16 %v949, %v943
  %v1238 = vpack.c.b16 %v950, %v944
  %v1239 = vpack.c.b16 %v951, %v945
  %v1240 = vpack.c.b16 %v952, %v946
  %v1241 = vpack.c.b16 %v959, %v953
  %v1242 = vpack.c.b16 %v960, %v954
  %v1243 = vpack.c.b16 %v961, %v955
  %v1244 = vpack.c.b16 %v962, %v956
  %v1245 = vpack.c.b16 %v963, %v957
  %v1246 = vpack.c.b16 %v964, %v958
  %v1247 = vpack.c.b16 %v971, %v965
  %v1248 = vpack.c.b16 %v972, %v966
  %v1249 = vpack.c.b16 %v973, %v967
  %v1250 = vpack.c.b16 %v974, %v968
  %v1251 = vpack.c.b16 %v975, %v969
  %v1252 = vpack.c.b16 %v976, %v970
  %v1253 = vpack.c.b16 %v983, %v977
  %v1254 = vpack.c.b16 %v984, %v978
  %v1255 = vpack.c.b16 %v985, %v979
  %v1256 = vpack.c.b16 %v986, %v980
  %v1257 = vpack.c.b16 %v987, %v981
  %v1258 = vpack.c.b16 %v988, %v982
  %v1259 = vpack.c.b16 %v995, %v989
  %v1260 = vpack.c.b16 %v996, %v990
  %v1261 = vpack.c.b16 %v997, %v991
  %v1262 = vpack.c.b16 %v998, %v992
  %v1263 = vpack.c.b16 %v999, %v993
  %v1264 = vpack.c.b16 %v1000, %v994
  %v1265 = vpack.c.b16 %v1007, %v1001
  %v1266 = vpack.c.b16 %v1008, %v1002
  %v1267 = vpack.c.b16 %v1009, %v1003
  %v1268 = vpack.c.b16 %v1010, %v1004
  %v1269 = vpack.c.b16 %v1011, %v1005
  %v1270 = vpack.c.b16 %v1012, %v1006
  %v1271 = vpack.c.b16 %v1019, %v1013
  %v1272 = vpack.c.b16 %v1020, %v1014
  %v1273 = vpack.c.b16 %v1021, %v1015
  %v1274 = vpack.c.b16 %v1022, %v1016
  %v1275 = vpack.c.b16 %v1023, %v1017
  %v1276 = vpack.c.b16 %v1024, %v1018
  %v1277 = vpack.c.b16 %v1031, %v1025
  %v1278 = vpack.c.b16 %v1032, %v1026
  %v1279 = vpack.c.b16 %v1033, %v1027
  %v1280 = vpack.c.b16 %v1034, %v1028
  %v1281 = vpack.c.b16 %v1035, %v1029
  %v1282 = vpack.c.b16 %v1036, %v1030
  %v1283 = vpack.c.b16 %v1043, %v1037
  %v1284 = vpack.c.b16 %v1044, %v1038
  %v1285 = vpack.c.b16 %v1045, %v1039
  %v1286 = vpack.c.b16 %v1046, %v1040
  %v1287 = vpack.c.b16 %v1047, %v1041
  %v1288 = vpack.c.b16 %v1048, %v1042
  %1529 = vmatprep.subr.bf16.mxu0 %v1092
  %1530 = vmatpush1.bf16.msra.mxu0 %v1091
  %1531 = vmatprep.subr.bf16.mxu0 %v1086
  %1532 = vmatpush1.bf16.msra.mxu0 %v1085
  %1533 = vmatprep.subr.bf16.mxu0 %v1080
  %1534 = vmatpush1.bf16.msra.mxu0 %v1079
  %1535 = vmatprep.subr.bf16.mxu0 %v1074
  %1536 = vmatpush1.bf16.msra.mxu0 %v1073
  %1537 = vmatprep.subr.bf16.mxu0 %v1068
  %1538 = vmatpush1.bf16.msra.mxu0 %v1067
  %1539 = vmatprep.subr.bf16.mxu0 %v1062
  %1540 = vmatpush1.bf16.msra.mxu0 %v1061
  %1541 = vmatprep.subr.bf16.mxu0 %v1056
  %1542 = vmatpush1.bf16.msra.mxu0 %v1055
  %1543 = vmatprep.subr.bf16.mxu0 %v1050
  %1544 = vmatpush1.bf16.msra.mxu0 %v1049
  %1545 = vmatprep.subr.bf16.mxu0 %v1140
  %1546 = vmatpush2.bf16.msra.mxu0 %v1139
  %1547 = vmatprep.subr.bf16.mxu0 %v1134
  %1548 = vmatpush2.bf16.msra.mxu0 %v1133
  %1549 = vmatprep.subr.bf16.mxu0 %v1128
  %1550 = vmatpush2.bf16.msra.mxu0 %v1127
  %1551 = vmatprep.subr.bf16.mxu0 %v1122
  %1552 = vmatpush2.bf16.msra.mxu0 %v1121
  %1553 = vmatprep.subr.bf16.mxu0 %v1116
  %1554 = vmatpush2.bf16.msra.mxu0 %v1115
  %1555 = vmatprep.subr.bf16.mxu0 %v1110
  %1556 = vmatpush2.bf16.msra.mxu0 %v1109
  %1557 = vmatprep.subr.bf16.mxu0 %v1104
  %1558 = vmatpush2.bf16.msra.mxu0 %v1103
  %1559 = vmatprep.subr.bf16.mxu0 %v1098
  %1560 = vmatpush2.bf16.msra.mxu0 %v1097
  %1561 = vmatprep.mubr.bf16.mxu0 %v48
  %1562 = vmatmul.mubr.bf16.gmra.mxu0 %v47
  %v1563 = vpop.f32.mrf.mxu0
  %v1564 = vadd.f32 %v302, %v1563
  %v1565 = vpop.f32.mrf.mxu0
  %v1566 = vadd.f32 %v306, %v1565
  %v1567 = vpop.f32.mrf.mxu0
  %v1568 = vadd.f32 %v302, %v1567
  %v1569 = vpop.f32.mrf.mxu0
  %v1570 = vadd.f32 %v306, %v1569
  %1571 = vmatprep.mubr.bf16.mxu0 %v53
  %1572 = vmatmul.mubr.bf16.gmra.mxu0 %v52
  %v1573 = vpop.f32.mrf.mxu0
  %v1574 = vadd.f32 %v302, %v1573
  %v1575 = vpop.f32.mrf.mxu0
  %v1576 = vadd.f32 %v306, %v1575
  %v1577 = vpop.f32.mrf.mxu0
  %v1578 = vadd.f32 %v302, %v1577
  %v1579 = vpop.f32.mrf.mxu0
  %v1580 = vadd.f32 %v306, %v1579
  %1581 = vdwg.mxu0
  %1582 = vmatprep.subr.bf16.mxu0 %v1188
  %1583 = vmatpush1.bf16.msra.mxu0 %v1187
  %1584 = vmatprep.subr.bf16.mxu0 %v1182
  %1585 = vmatpush1.bf16.msra.mxu0 %v1181
  %1586 = vmatprep.subr.bf16.mxu0 %v1176
  %1587 = vmatpush1.bf16.msra.mxu0 %v1175
  %1588 = vmatprep.subr.bf16.mxu0 %v1170
  %1589 = vmatpush1.bf16.msra.mxu0 %v1169
  %1590 = vmatprep.subr.bf16.mxu0 %v1164
  %1591 = vmatpush1.bf16.msra.mxu0 %v1163
  %1592 = vmatprep.subr.bf16.mxu0 %v1158
  %1593 = vmatpush1.bf16.msra.mxu0 %v1157
  %1594 = vmatprep.subr.bf16.mxu0 %v1152
  %1595 = vmatpush1.bf16.msra.mxu0 %v1151
  %1596 = vmatprep.subr.bf16.mxu0 %v1146
  %1597 = vmatpush1.bf16.msra.mxu0 %v1145
  %1598 = vmatprep.subr.bf16.mxu0 %v1236
  %1599 = vmatpush2.bf16.msra.mxu0 %v1235
  %1600 = vmatprep.subr.bf16.mxu0 %v1230
  %1601 = vmatpush2.bf16.msra.mxu0 %v1229
  %1602 = vmatprep.subr.bf16.mxu0 %v1224
  %1603 = vmatpush2.bf16.msra.mxu0 %v1223
  %1604 = vmatprep.subr.bf16.mxu0 %v1218
  %1605 = vmatpush2.bf16.msra.mxu0 %v1217
  %1606 = vmatprep.subr.bf16.mxu0 %v1212
  %1607 = vmatpush2.bf16.msra.mxu0 %v1211
  %1608 = vmatprep.subr.bf16.mxu0 %v1206
  %1609 = vmatpush2.bf16.msra.mxu0 %v1205
  %1610 = vmatprep.subr.bf16.mxu0 %v1200
  %1611 = vmatpush2.bf16.msra.mxu0 %v1199
  %1612 = vmatprep.subr.bf16.mxu0 %v1194
  %1613 = vmatpush2.bf16.msra.mxu0 %v1193
  %1614 = vmatprep.mubr.bf16.mxu0 %v50
  %1615 = vmatmul.mubr.bf16.gmra.mxu0 %v49
  %v1616 = vpop.f32.mrf.mxu0
  %v1617 = vadd.f32 %v1564, %v1616
  %v1618 = vpop.f32.mrf.mxu0
  %v1619 = vadd.f32 %v1566, %v1618
  %v1620 = vpop.f32.mrf.mxu0
  %v1621 = vadd.f32 %v1568, %v1620
  %v1622 = vpop.f32.mrf.mxu0
  %v1623 = vadd.f32 %v1570, %v1622
  %1624 = vmatprep.mubr.bf16.mxu0 %v55
  %1625 = vmatmul.mubr.bf16.gmra.mxu0 %v54
  %v1626 = vpop.f32.mrf.mxu0
  %v1627 = vadd.f32 %v1574, %v1626
  %v1628 = vpop.f32.mrf.mxu0
  %v1629 = vadd.f32 %v1576, %v1628
  %v1630 = vpop.f32.mrf.mxu0
  %v1631 = vadd.f32 %v1578, %v1630
  %v1632 = vpop.f32.mrf.mxu0
  %v1633 = vadd.f32 %v1580, %v1632
  %1634 = vdwg.mxu0
  %1635 = vmatprep.subr.bf16.mxu0 %v1284
  %1636 = vmatpush1.bf16.msra.mxu0 %v1283
  %1637 = vmatprep.subr.bf16.mxu0 %v1278
  %1638 = vmatpush1.bf16.msra.mxu0 %v1277
  %1639 = vmatprep.subr.bf16.mxu0 %v1272
  %1640 = vmatpush1.bf16.msra.mxu0 %v1271
  %1641 = vmatprep.subr.bf16.mxu0 %v1266
  %1642 = vmatpush1.bf16.msra.mxu0 %v1265
  %1643 = vmatprep.subr.bf16.mxu0 %v1260
  %1644 = vmatpush1.bf16.msra.mxu0 %v1259
  %1645 = vmatprep.subr.bf16.mxu0 %v1254
  %1646 = vmatpush1.bf16.msra.mxu0 %v1253
  %1647 = vmatprep.subr.bf16.mxu0 %v1248
  %1648 = vmatpush1.bf16.msra.mxu0 %v1247
  %1649 = vmatprep.subr.bf16.mxu0 %v1242
  %1650 = vmatpush1.bf16.msra.mxu0 %v1241
  %1651 = vmatprep.subr.bf16.mxu0 0
  %1652 = vmatpush2.bf16.msra.mxu0 0
  %1653 = vmatprep.subr.bf16.mxu0 0
  %1654 = vmatpush2.bf16.msra.mxu0 0
  %1655 = vmatprep.subr.bf16.mxu0 0
  %1656 = vmatpush2.bf16.msra.mxu0 0
  %1657 = vmatprep.subr.bf16.mxu0 0
  %1658 = vmatpush2.bf16.msra.mxu0 0
  %1659 = vmatprep.subr.bf16.mxu0 0
  %1660 = vmatpush2.bf16.msra.mxu0 0
  %1661 = vmatprep.subr.bf16.mxu0 0
  %1662 = vmatpush2.bf16.msra.mxu0 0
  %1663 = vmatprep.subr.bf16.mxu0 0
  %1664 = vmatpush2.bf16.msra.mxu0 0
  %1665 = vmatprep.subr.bf16.mxu0 0
  %1666 = vmatpush2.bf16.msra.mxu0 0
  %1667 = vmatprep.mubr.bf16.mxu0 0
  %1668 = vmatmul.mubr.bf16.gmra.mxu0 %v51
  %v1669 = vpop.f32.mrf.mxu0
  %v1670 = vadd.f32 %v1617, %v1669
  %v1671 = vpop.f32.mrf.mxu0
  %v1672 = vadd.f32 %v1619, %v1671
  %v1673 = vpop.f32.mrf.mxu0
  %v1674 = vadd.f32 %v1621, %v1673
  %v1675 = vpop.f32.mrf.mxu0
  %v1676 = vadd.f32 %v1623, %v1675
  %1677 = vmatprep.mubr.bf16.mxu0 0
  %1678 = vmatmul.mubr.bf16.gmra.mxu0 %v56
  %v1679 = vpop.f32.mrf.mxu0
  %v1680 = vadd.f32 %v1627, %v1679
  %v1681 = vpop.f32.mrf.mxu0
  %v1682 = vadd.f32 %v1629, %v1681
  %v1683 = vpop.f32.mrf.mxu0
  %v1684 = vadd.f32 %v1631, %v1683
  %v1685 = vpop.f32.mrf.mxu0
  %v1686 = vadd.f32 %v1633, %v1685
  %1687 = vdwg.mxu0
  %1688 = vmatprep.subr.bf16.mxu0 %v1094
  %1689 = vmatpush1.bf16.msra.mxu0 %v1093
  %1690 = vmatprep.subr.bf16.mxu0 %v1088
  %1691 = vmatpush1.bf16.msra.mxu0 %v1087
  %1692 = vmatprep.subr.bf16.mxu0 %v1082
  %1693 = vmatpush1.bf16.msra.mxu0 %v1081
  %1694 = vmatprep.subr.bf16.mxu0 %v1076
  %1695 = vmatpush1.bf16.msra.mxu0 %v1075
  %1696 = vmatprep.subr.bf16.mxu0 %v1070
  %1697 = vmatpush1.bf16.msra.mxu0 %v1069
  %1698 = vmatprep.subr.bf16.mxu0 %v1064
  %1699 = vmatpush1.bf16.msra.mxu0 %v1063
  %1700 = vmatprep.subr.bf16.mxu0 %v1058
  %1701 = vmatpush1.bf16.msra.mxu0 %v1057
  %1702 = vmatprep.subr.bf16.mxu0 %v1052
  %1703 = vmatpush1.bf16.msra.mxu0 %v1051
  %1704 = vmatprep.subr.bf16.mxu0 %v1142
  %1705 = vmatpush2.bf16.msra.mxu0 %v1141
  %1706 = vmatprep.subr.bf16.mxu0 %v1136
  %1707 = vmatpush2.bf16.msra.mxu0 %v1135
  %1708 = vmatprep.subr.bf16.mxu0 %v1130
  %1709 = vmatpush2.bf16.msra.mxu0 %v1129
  %1710 = vmatprep.subr.bf16.mxu0 %v1124
  %1711 = vmatpush2.bf16.msra.mxu0 %v1123
  %1712 = vmatprep.subr.bf16.mxu0 %v1118
  %1713 = vmatpush2.bf16.msra.mxu0 %v1117
  %1714 = vmatprep.subr.bf16.mxu0 %v1112
  %1715 = vmatpush2.bf16.msra.mxu0 %v1111
  %1716 = vmatprep.subr.bf16.mxu0 %v1106
  %1717 = vmatpush2.bf16.msra.mxu0 %v1105
  %1718 = vmatprep.subr.bf16.mxu0 %v1100
  %1719 = vmatpush2.bf16.msra.mxu0 %v1099
  %1720 = vmatprep.mubr.bf16.mxu0 %v48
  %1721 = vmatmul.mubr.bf16.gmra.mxu0 %v47
  %v1722 = vpop.f32.mrf.mxu0
  %v1723 = vadd.f32 %v310, %v1722
  %v1724 = vpop.f32.mrf.mxu0
  %v1725 = vadd.f32 %v314, %v1724
  %v1726 = vpop.f32.mrf.mxu0
  %v1727 = vadd.f32 %v310, %v1726
  %v1728 = vpop.f32.mrf.mxu0
  %v1729 = vadd.f32 %v314, %v1728
  %1730 = vmatprep.mubr.bf16.mxu0 %v53
  %1731 = vmatmul.mubr.bf16.gmra.mxu0 %v52
  %v1732 = vpop.f32.mrf.mxu0
  %v1733 = vadd.f32 %v310, %v1732
  %v1734 = vpop.f32.mrf.mxu0
  %v1735 = vadd.f32 %v314, %v1734
  %v1736 = vpop.f32.mrf.mxu0
  %v1737 = vadd.f32 %v310, %v1736
  %v1738 = vpop.f32.mrf.mxu0
  %v1739 = vadd.f32 %v314, %v1738
  %1740 = vdwg.mxu0
  %1741 = vmatprep.subr.bf16.mxu0 %v1190
  %1742 = vmatpush1.bf16.msra.mxu0 %v1189
  %1743 = vmatprep.subr.bf16.mxu0 %v1184
  %1744 = vmatpush1.bf16.msra.mxu0 %v1183
  %1745 = vmatprep.subr.bf16.mxu0 %v1178
  %1746 = vmatpush1.bf16.msra.mxu0 %v1177
  %1747 = vmatprep.subr.bf16.mxu0 %v1172
  %1748 = vmatpush1.bf16.msra.mxu0 %v1171
  %1749 = vmatprep.subr.bf16.mxu0 %v1166
  %1750 = vmatpush1.bf16.msra.mxu0 %v1165
  %1751 = vmatprep.subr.bf16.mxu0 %v1160
  %1752 = vmatpush1.bf16.msra.mxu0 %v1159
  %1753 = vmatprep.subr.bf16.mxu0 %v1154
  %1754 = vmatpush1.bf16.msra.mxu0 %v1153
  %1755 = vmatprep.subr.bf16.mxu0 %v1148
  %1756 = vmatpush1.bf16.msra.mxu0 %v1147
  %1757 = vmatprep.subr.bf16.mxu0 %v1238
  %1758 = vmatpush2.bf16.msra.mxu0 %v1237
  %1759 = vmatprep.subr.bf16.mxu0 %v1232
  %1760 = vmatpush2.bf16.msra.mxu0 %v1231
  %1761 = vmatprep.subr.bf16.mxu0 %v1226
  %1762 = vmatpush2.bf16.msra.mxu0 %v1225
  %1763 = vmatprep.subr.bf16.mxu0 %v1220
  %1764 = vmatpush2.bf16.msra.mxu0 %v1219
  %1765 = vmatprep.subr.bf16.mxu0 %v1214
  %1766 = vmatpush2.bf16.msra.mxu0 %v1213
  %1767 = vmatprep.subr.bf16.mxu0 %v1208
  %1768 = vmatpush2.bf16.msra.mxu0 %v1207
  %1769 = vmatprep.subr.bf16.mxu0 %v1202
  %1770 = vmatpush2.bf16.msra.mxu0 %v1201
  %1771 = vmatprep.subr.bf16.mxu0 %v1196
  %1772 = vmatpush2.bf16.msra.mxu0 %v1195
  %1773 = vmatprep.mubr.bf16.mxu0 %v50
  %1774 = vmatmul.mubr.bf16.gmra.mxu0 %v49
  %v1775 = vpop.f32.mrf.mxu0
  %v1776 = vadd.f32 %v1723, %v1775
  %v1777 = vpop.f32.mrf.mxu0
  %v1778 = vadd.f32 %v1725, %v1777
  %v1779 = vpop.f32.mrf.mxu0
  %v1780 = vadd.f32 %v1727, %v1779
  %v1781 = vpop.f32.mrf.mxu0
  %v1782 = vadd.f32 %v1729, %v1781
  %1783 = vmatprep.mubr.bf16.mxu0 %v55
  %1784 = vmatmul.mubr.bf16.gmra.mxu0 %v54
  %v1785 = vpop.f32.mrf.mxu0
  %v1786 = vadd.f32 %v1733, %v1785
  %v1787 = vpop.f32.mrf.mxu0
  %v1788 = vadd.f32 %v1735, %v1787
  %v1789 = vpop.f32.mrf.mxu0
  %v1790 = vadd.f32 %v1737, %v1789
  %v1791 = vpop.f32.mrf.mxu0
  %v1792 = vadd.f32 %v1739, %v1791
  %1793 = vdwg.mxu0
  %1794 = vmatprep.subr.bf16.mxu0 %v1286
  %1795 = vmatpush1.bf16.msra.mxu0 %v1285
  %1796 = vmatprep.subr.bf16.mxu0 %v1280
  %1797 = vmatpush1.bf16.msra.mxu0 %v1279
  %1798 = vmatprep.subr.bf16.mxu0 %v1274
  %1799 = vmatpush1.bf16.msra.mxu0 %v1273
  %1800 = vmatprep.subr.bf16.mxu0 %v1268
  %1801 = vmatpush1.bf16.msra.mxu0 %v1267
  %1802 = vmatprep.subr.bf16.mxu0 %v1262
  %1803 = vmatpush1.bf16.msra.mxu0 %v1261
  %1804 = vmatprep.subr.bf16.mxu0 %v1256
  %1805 = vmatpush1.bf16.msra.mxu0 %v1255
  %1806 = vmatprep.subr.bf16.mxu0 %v1250
  %1807 = vmatpush1.bf16.msra.mxu0 %v1249
  %1808 = vmatprep.subr.bf16.mxu0 %v1244
  %1809 = vmatpush1.bf16.msra.mxu0 %v1243
  %1810 = vmatprep.subr.bf16.mxu0 0
  %1811 = vmatpush2.bf16.msra.mxu0 0
  %1812 = vmatprep.subr.bf16.mxu0 0
  %1813 = vmatpush2.bf16.msra.mxu0 0
  %1814 = vmatprep.subr.bf16.mxu0 0
  %1815 = vmatpush2.bf16.msra.mxu0 0
  %1816 = vmatprep.subr.bf16.mxu0 0
  %1817 = vmatpush2.bf16.msra.mxu0 0
  %1818 = vmatprep.subr.bf16.mxu0 0
  %1819 = vmatpush2.bf16.msra.mxu0 0
  %1820 = vmatprep.subr.bf16.mxu0 0
  %1821 = vmatpush2.bf16.msra.mxu0 0
  %1822 = vmatprep.subr.bf16.mxu0 0
  %1823 = vmatpush2.bf16.msra.mxu0 0
  %1824 = vmatprep.subr.bf16.mxu0 0
  %1825 = vmatpush2.bf16.msra.mxu0 0
  %1826 = vmatprep.mubr.bf16.mxu0 0
  %1827 = vmatmul.mubr.bf16.gmra.mxu0 %v51
  %v1828 = vpop.f32.mrf.mxu0
  %v1829 = vadd.f32 %v1776, %v1828
  %v1830 = vpop.f32.mrf.mxu0
  %v1831 = vadd.f32 %v1778, %v1830
  %v1832 = vpop.f32.mrf.mxu0
  %v1833 = vadd.f32 %v1780, %v1832
  %v1834 = vpop.f32.mrf.mxu0
  %v1835 = vadd.f32 %v1782, %v1834
  %1836 = vmatprep.mubr.bf16.mxu0 0
  %1837 = vmatmul.mubr.bf16.gmra.mxu0 %v56
  %v1838 = vpop.f32.mrf.mxu0
  %v1839 = vadd.f32 %v1786, %v1838
  %v1840 = vpop.f32.mrf.mxu0
  %v1841 = vadd.f32 %v1788, %v1840
  %v1842 = vpop.f32.mrf.mxu0
  %v1843 = vadd.f32 %v1790, %v1842
  %v1844 = vpop.f32.mrf.mxu0
  %v1845 = vadd.f32 %v1792, %v1844
  %1846 = vdwg.mxu0
  %1847 = vmatprep.subr.bf16.mxu0 %v1096
  %1848 = vmatpush1.bf16.msra.mxu0 %v1095
  %1849 = vmatprep.subr.bf16.mxu0 %v1090
  %1850 = vmatpush1.bf16.msra.mxu0 %v1089
  %1851 = vmatprep.subr.bf16.mxu0 %v1084
  %1852 = vmatpush1.bf16.msra.mxu0 %v1083
  %1853 = vmatprep.subr.bf16.mxu0 %v1078
  %1854 = vmatpush1.bf16.msra.mxu0 %v1077
  %1855 = vmatprep.subr.bf16.mxu0 %v1072
  %1856 = vmatpush1.bf16.msra.mxu0 %v1071
  %1857 = vmatprep.subr.bf16.mxu0 %v1066
  %1858 = vmatpush1.bf16.msra.mxu0 %v1065
  %1859 = vmatprep.subr.bf16.mxu0 %v1060
  %1860 = vmatpush1.bf16.msra.mxu0 %v1059
  %1861 = vmatprep.subr.bf16.mxu0 %v1054
  %1862 = vmatpush1.bf16.msra.mxu0 %v1053
  %1863 = vmatprep.subr.bf16.mxu0 %v1144
  %1864 = vmatpush2.bf16.msra.mxu0 %v1143
  %1865 = vmatprep.subr.bf16.mxu0 %v1138
  %1866 = vmatpush2.bf16.msra.mxu0 %v1137
  %1867 = vmatprep.subr.bf16.mxu0 %v1132
  %1868 = vmatpush2.bf16.msra.mxu0 %v1131
  %1869 = vmatprep.subr.bf16.mxu0 %v1126
  %1870 = vmatpush2.bf16.msra.mxu0 %v1125
  %1871 = vmatprep.subr.bf16.mxu0 %v1120
  %1872 = vmatpush2.bf16.msra.mxu0 %v1119
  %1873 = vmatprep.subr.bf16.mxu0 %v1114
  %1874 = vmatpush2.bf16.msra.mxu0 %v1113
  %1875 = vmatprep.subr.bf16.mxu0 %v1108
  %1876 = vmatpush2.bf16.msra.mxu0 %v1107
  %1877 = vmatprep.subr.bf16.mxu0 %v1102
  %1878 = vmatpush2.bf16.msra.mxu0 %v1101
  %1879 = vmatprep.mubr.bf16.mxu0 %v48
  %1880 = vmatmul.mubr.bf16.gmra.mxu0 %v47
  %v1881 = vpop.f32.mrf.mxu0
  %v1882 = vadd.f32 %v318, %v1881
  %v1883 = vpop.f32.mrf.mxu0
  %v1884 = vadd.f32 %v322, %v1883
  %v1885 = vpop.f32.mrf.mxu0
  %v1886 = vadd.f32 %v318, %v1885
  %v1887 = vpop.f32.mrf.mxu0
  %v1888 = vadd.f32 %v322, %v1887
  %1889 = vmatprep.mubr.bf16.mxu0 %v53
  %1890 = vmatmul.mubr.bf16.gmra.mxu0 %v52
  %v1891 = vpop.f32.mrf.mxu0
  %v1892 = vadd.f32 %v318, %v1891
  %v1893 = vpop.f32.mrf.mxu0
  %v1894 = vadd.f32 %v322, %v1893
  %v1895 = vpop.f32.mrf.mxu0
  %v1896 = vadd.f32 %v318, %v1895
  %v1897 = vpop.f32.mrf.mxu0
  %v1898 = vadd.f32 %v322, %v1897
  %1899 = vdwg.mxu0
  %1900 = vmatprep.subr.bf16.mxu0 %v1192
  %1901 = vmatpush1.bf16.msra.mxu0 %v1191
  %1902 = vmatprep.subr.bf16.mxu0 %v1186
  %1903 = vmatpush1.bf16.msra.mxu0 %v1185
  %1904 = vmatprep.subr.bf16.mxu0 %v1180
  %1905 = vmatpush1.bf16.msra.mxu0 %v1179
  %1906 = vmatprep.subr.bf16.mxu0 %v1174
  %1907 = vmatpush1.bf16.msra.mxu0 %v1173
  %1908 = vmatprep.subr.bf16.mxu0 %v1168
  %1909 = vmatpush1.bf16.msra.mxu0 %v1167
  %1910 = vmatprep.subr.bf16.mxu0 %v1162
  %1911 = vmatpush1.bf16.msra.mxu0 %v1161
  %1912 = vmatprep.subr.bf16.mxu0 %v1156
  %1913 = vmatpush1.bf16.msra.mxu0 %v1155
  %1914 = vmatprep.subr.bf16.mxu0 %v1150
  %1915 = vmatpush1.bf16.msra.mxu0 %v1149
  %1916 = vmatprep.subr.bf16.mxu0 %v1240
  %1917 = vmatpush2.bf16.msra.mxu0 %v1239
  %1918 = vmatprep.subr.bf16.mxu0 %v1234
  %1919 = vmatpush2.bf16.msra.mxu0 %v1233
  %1920 = vmatprep.subr.bf16.mxu0 %v1228
  %1921 = vmatpush2.bf16.msra.mxu0 %v1227
  %1922 = vmatprep.subr.bf16.mxu0 %v1222
  %1923 = vmatpush2.bf16.msra.mxu0 %v1221
  %1924 = vmatprep.subr.bf16.mxu0 %v1216
  %1925 = vmatpush2.bf16.msra.mxu0 %v1215
  %1926 = vmatprep.subr.bf16.mxu0 %v1210
  %1927 = vmatpush2.bf16.msra.mxu0 %v1209
  %1928 = vmatprep.subr.bf16.mxu0 %v1204
  %1929 = vmatpush2.bf16.msra.mxu0 %v1203
  %1930 = vmatprep.subr.bf16.mxu0 %v1198
  %1931 = vmatpush2.bf16.msra.mxu0 %v1197
  %1932 = vmatprep.mubr.bf16.mxu0 %v50
  %1933 = vmatmul.mubr.bf16.gmra.mxu0 %v49
  %v1934 = vpop.f32.mrf.mxu0
  %v1935 = vadd.f32 %v1882, %v1934
  %v1936 = vpop.f32.mrf.mxu0
  %v1937 = vadd.f32 %v1884, %v1936
  %v1938 = vpop.f32.mrf.mxu0
  %v1939 = vadd.f32 %v1886, %v1938
  %v1940 = vpop.f32.mrf.mxu0
  %v1941 = vadd.f32 %v1888, %v1940
  %1942 = vmatprep.mubr.bf16.mxu0 %v55
  %1943 = vmatmul.mubr.bf16.gmra.mxu0 %v54
  %v1944 = vpop.f32.mrf.mxu0
  %v1945 = vadd.f32 %v1892, %v1944
  %v1946 = vpop.f32.mrf.mxu0
  %v1947 = vadd.f32 %v1894, %v1946
  %v1948 = vpop.f32.mrf.mxu0
  %v1949 = vadd.f32 %v1896, %v1948
  %v1950 = vpop.f32.mrf.mxu0
  %v1951 = vadd.f32 %v1898, %v1950
  %1952 = vdwg.mxu0
  %1953 = vmatprep.subr.bf16.mxu0 %v1288
  %1954 = vmatpush1.bf16.msra.mxu0 %v1287
  %1955 = vmatprep.subr.bf16.mxu0 %v1282
  %1956 = vmatpush1.bf16.msra.mxu0 %v1281
  %1957 = vmatprep.subr.bf16.mxu0 %v1276
  %1958 = vmatpush1.bf16.msra.mxu0 %v1275
  %1959 = vmatprep.subr.bf16.mxu0 %v1270
  %1960 = vmatpush1.bf16.msra.mxu0 %v1269
  %1961 = vmatprep.subr.bf16.mxu0 %v1264
  %1962 = vmatpush1.bf16.msra.mxu0 %v1263
  %1963 = vmatprep.subr.bf16.mxu0 %v1258
  %1964 = vmatpush1.bf16.msra.mxu0 %v1257
  %1965 = vmatprep.subr.bf16.mxu0 %v1252
  %1966 = vmatpush1.bf16.msra.mxu0 %v1251
  %1967 = vmatprep.subr.bf16.mxu0 %v1246
  %1968 = vmatpush1.bf16.msra.mxu0 %v1245
  %1969 = vmatprep.subr.bf16.mxu0 0
  %1970 = vmatpush2.bf16.msra.mxu0 0
  %1971 = vmatprep.subr.bf16.mxu0 0
  %1972 = vmatpush2.bf16.msra.mxu0 0
  %1973 = vmatprep.subr.bf16.mxu0 0
  %1974 = vmatpush2.bf16.msra.mxu0 0
  %1975 = vmatprep.subr.bf16.mxu0 0
  %1976 = vmatpush2.bf16.msra.mxu0 0
  %1977 = vmatprep.subr.bf16.mxu0 0
  %1978 = vmatpush2.bf16.msra.mxu0 0
  %1979 = vmatprep.subr.bf16.mxu0 0
  %1980 = vmatpush2.bf16.msra.mxu0 0
  %1981 = vmatprep.subr.bf16.mxu0 0
  %1982 = vmatpush2.bf16.msra.mxu0 0
  %1983 = vmatprep.subr.bf16.mxu0 0
  %1984 = vmatpush2.bf16.msra.mxu0 0
  %1985 = vmatprep.mubr.bf16.mxu0 0
  %1986 = vmatmul.mubr.bf16.gmra.mxu0 %v51
  %v1987 = vpop.f32.mrf.mxu0
  %v1988 = vadd.f32 %v1935, %v1987
  %v1989 = vpop.f32.mrf.mxu0
  %v1990 = vadd.f32 %v1937, %v1989
  %v1991 = vpop.f32.mrf.mxu0
  %v1992 = vadd.f32 %v1939, %v1991
  %v1993 = vpop.f32.mrf.mxu0
  %v1994 = vadd.f32 %v1941, %v1993
  %1995 = vmatprep.mubr.bf16.mxu0 0
  %1996 = vmatmul.mubr.bf16.gmra.mxu0 %v56
  %v1997 = vpop.f32.mrf.mxu0
  %v1998 = vadd.f32 %v1945, %v1997
  %v1999 = vpop.f32.mrf.mxu0
  %v2000 = vadd.f32 %v1947, %v1999
  %v2001 = vpop.f32.mrf.mxu0
  %v2002 = vadd.f32 %v1949, %v2001
  %v2003 = vpop.f32.mrf.mxu0
  %v2004 = vadd.f32 %v1951, %v2003
  %2005 = vdwg.mxu0
  %v2006 = vld [vmem:[%s2] sm:$0xff]
  %v2007 = vld [vmem:[%s2 + $0x8] sm:$0xf]
  %v2008 = vld [vmem:[%s2 + $0xc] sm:$0xff]
  %v2009 = vld [vmem:[%s2 + $0x14] sm:$0xf]
  %v2010 = vld [vmem:[%s2 + $0x18] sm:$0xff]
  %v2011 = vld [vmem:[%s2 + $0x20] sm:$0xf]
  %v2012 = vld [vmem:[%s2 + $0x24] sm:$0xff]
  %v2013 = vld [vmem:[%s2 + $0x2c] sm:$0xf]
  %v2014 = vld [vmem:[%s2 + $0x30] sm:$0xff]
  %v2015 = vld [vmem:[%s2 + $0x38] sm:$0xf]
  %v2016 = vld [vmem:[%s2 + $0x3c] sm:$0xff]
  %v2017 = vld [vmem:[%s2 + $0x44] sm:$0xf]
  %v2018 = vld [vmem:[%s2 + $0x48] sm:$0xff]
  %v2019 = vld [vmem:[%s2 + $0x50] sm:$0xf]
  %v2020 = vld [vmem:[%s2 + $0x54] sm:$0xff]
  %v2021 = vld [vmem:[%s2 + $0x5c] sm:$0xf]
  %v2022 = vld [vmem:[%s2 + $0x60] sm:$0xff]
  %v2023 = vld [vmem:[%s2 + $0x68] sm:$0xf]
  %v2024 = vld [vmem:[%s2 + $0x6c] sm:$0xff]
  %v2025 = vld [vmem:[%s2 + $0x74] sm:$0xf]
  %v2026 = vld [vmem:[%s2 + $0x78] sm:$0xff]
  %v2027 = vld [vmem:[%s2 + $0x80] sm:$0xf]
  %v2028 = vld [vmem:[%s2 + $0x84] sm:$0xff]
  %v2029 = vld [vmem:[%s2 + $0x8c] sm:$0xf]
  %v2030 = vld [vmem:[%s2 + $0x90] sm:$0xff]
  %v2031 = vld [vmem:[%s2 + $0x98] sm:$0xf]
  %v2032 = vld [vmem:[%s2 + $0x9c] sm:$0xff]
  %v2033 = vld [vmem:[%s2 + $0xa4] sm:$0xf]
  %v2034 = vld [vmem:[%s2 + $0xa8] sm:$0xff]
  %v2035 = vld [vmem:[%s2 + $0xb0] sm:$0xf]
  %v2036 = vld [vmem:[%s2 + $0xb4] sm:$0xff]
  %v2037 = vld [vmem:[%s2 + $0xbc] sm:$0xf]
  %v2038 = vld [vmem:[%s4] sm:$0x7]
  %v2039 = vld [vmem:[%s5] sm:$0xf]
  %v2040 = vld [vmem:[%s5 + $0x4] sm:$0xf]
  %v2041 = vld [vmem:[%s5 + $0x8] sm:$0xf]
  %v2042 = vld [vmem:[%s5 + $0xc] sm:$0xf]
  %v2043 = vld [vmem:[%s5 + $0x10] sm:$0xf]
  %v2044 = vld [vmem:[%s5 + $0x14] sm:$0xf]
  %v2045 = vld [vmem:[%s5 + $0x18] sm:$0xf]
  %v2046 = vld [vmem:[%s5 + $0x1c] sm:$0xf]
  %v2047 = vld [vmem:[%s5 + $0x20] sm:$0xf]
  %v2048 = vld [vmem:[%s5 + $0x24] sm:$0xf]
  %v2049 = vld [vmem:[%s5 + $0x28] sm:$0xf]
  %v2050 = vld [vmem:[%s5 + $0x2c] sm:$0xf]
  %v2051 = vld [vmem:[%s5 + $0x30] sm:$0xf]
  %v2052 = vld [vmem:[%s5 + $0x34] sm:$0xf]
  %v2053 = vld [vmem:[%s5 + $0x38] sm:$0xf]
  %v2054 = vld [vmem:[%s5 + $0x3c] sm:$0xf]
  %v2055 = vld [vmem:[%s6] sm:$0x1]
  %v2057 = vlaneseq
  %v2058 = vshrl.u32 %v2057, 7
  %v2059 = vsub.s32 0, %v2058
  %v2060 = vrot.slane %v2038, %v2059
  %v2061 = vlaneseq
  %v2062 = vshrl.u32 %v2061, 7
  %v2063 = vsub.s32 1, %v2062
  %v2064 = vrot.slane %v2038, %v2063
  %v2065 = vlaneseq
  %v2066 = vshrl.u32 %v2065, 7
  %v2067 = vsub.s32 2, %v2066
  %v2068 = vrot.slane %v2038, %v2067
  %v2104 = vunpack.c.l.b16 %v2006
  %v2105 = vunpack.c.h.b16 %v2006
  %v2106 = vunpack.c.l.b16 %v2007
  %v2107 = vunpack.c.l.b16 %v2008
  %v2108 = vunpack.c.h.b16 %v2008
  %v2109 = vunpack.c.l.b16 %v2009
  %v2110 = vunpack.c.l.b16 %v2010
  %v2111 = vunpack.c.h.b16 %v2010
  %v2112 = vunpack.c.l.b16 %v2011
  %v2113 = vunpack.c.l.b16 %v2012
  %v2114 = vunpack.c.h.b16 %v2012
  %v2115 = vunpack.c.l.b16 %v2013
  %v2116 = vunpack.c.l.b16 %v2014
  %v2117 = vunpack.c.h.b16 %v2014
  %v2118 = vunpack.c.l.b16 %v2015
  %v2119 = vunpack.c.l.b16 %v2016
  %v2120 = vunpack.c.h.b16 %v2016
  %v2121 = vunpack.c.l.b16 %v2017
  %v2122 = vunpack.c.l.b16 %v2018
  %v2123 = vunpack.c.h.b16 %v2018
  %v2124 = vunpack.c.l.b16 %v2019
  %v2125 = vunpack.c.l.b16 %v2020
  %v2126 = vunpack.c.h.b16 %v2020
  %v2127 = vunpack.c.l.b16 %v2021
  %v2128 = vunpack.c.l.b16 %v2022
  %v2129 = vunpack.c.h.b16 %v2022
  %v2130 = vunpack.c.l.b16 %v2023
  %v2131 = vunpack.c.l.b16 %v2024
  %v2132 = vunpack.c.h.b16 %v2024
  %v2133 = vunpack.c.l.b16 %v2025
  %v2134 = vunpack.c.l.b16 %v2026
  %v2135 = vunpack.c.h.b16 %v2026
  %v2136 = vunpack.c.l.b16 %v2027
  %v2137 = vunpack.c.l.b16 %v2028
  %v2138 = vunpack.c.h.b16 %v2028
  %v2139 = vunpack.c.l.b16 %v2029
  %v2140 = vunpack.c.l.b16 %v2030
  %v2141 = vunpack.c.h.b16 %v2030
  %v2142 = vunpack.c.l.b16 %v2031
  %v2143 = vunpack.c.l.b16 %v2032
  %v2144 = vunpack.c.h.b16 %v2032
  %v2145 = vunpack.c.l.b16 %v2033
  %v2146 = vunpack.c.l.b16 %v2034
  %v2147 = vunpack.c.h.b16 %v2034
  %v2148 = vunpack.c.l.b16 %v2035
  %v2149 = vunpack.c.l.b16 %v2036
  %v2150 = vunpack.c.h.b16 %v2036
  %v2151 = vunpack.c.l.b16 %v2037
  %v2152 = vpack.c.b16 %v2107, %v2104
  %v2153 = vpack.c.b16 %v2108, %v2105
  %v2154 = vpack.c.b16 %v2109, %v2106
  %v2155 = vpack.c.b16 %v2113, %v2110
  %v2156 = vpack.c.b16 %v2114, %v2111
  %v2157 = vpack.c.b16 %v2115, %v2112
  %v2158 = vpack.c.b16 %v2119, %v2116
  %v2159 = vpack.c.b16 %v2120, %v2117
  %v2160 = vpack.c.b16 %v2121, %v2118
  %v2161 = vpack.c.b16 %v2125, %v2122
  %v2162 = vpack.c.b16 %v2126, %v2123
  %v2163 = vpack.c.b16 %v2127, %v2124
  %v2164 = vpack.c.b16 %v2131, %v2128
  %v2165 = vpack.c.b16 %v2132, %v2129
  %v2166 = vpack.c.b16 %v2133, %v2130
  %v2167 = vpack.c.b16 %v2137, %v2134
  %v2168 = vpack.c.b16 %v2138, %v2135
  %v2169 = vpack.c.b16 %v2139, %v2136
  %v2170 = vpack.c.b16 %v2143, %v2140
  %v2171 = vpack.c.b16 %v2144, %v2141
  %v2172 = vpack.c.b16 %v2145, %v2142
  %v2173 = vpack.c.b16 %v2149, %v2146
  %v2174 = vpack.c.b16 %v2150, %v2147
  %v2175 = vpack.c.b16 %v2151, %v2148
  %2200 = vmatprep.subr.bf16.mxu0 %v2174
  %2201 = vmatpush1.bf16.msra.mxu0 %v2173
  %2202 = vmatprep.subr.bf16.mxu0 %v2171
  %2203 = vmatpush1.bf16.msra.mxu0 %v2170
  %2204 = vmatprep.subr.bf16.mxu0 %v2168
  %2205 = vmatpush1.bf16.msra.mxu0 %v2167
  %2206 = vmatprep.subr.bf16.mxu0 %v2165
  %2207 = vmatpush1.bf16.msra.mxu0 %v2164
  %2208 = vmatprep.subr.bf16.mxu0 %v2162
  %2209 = vmatpush1.bf16.msra.mxu0 %v2161
  %2210 = vmatprep.subr.bf16.mxu0 %v2159
  %2211 = vmatpush1.bf16.msra.mxu0 %v2158
  %2212 = vmatprep.subr.bf16.mxu0 %v2156
  %2213 = vmatpush1.bf16.msra.mxu0 %v2155
  %2214 = vmatprep.subr.bf16.mxu0 %v2153
  %2215 = vmatpush1.bf16.msra.mxu0 %v2152
  %2216 = vmatprep.subr.bf16.mxu0 0
  %2217 = vmatpush2.bf16.msra.mxu0 0
  %2218 = vmatprep.subr.bf16.mxu0 0
  %2219 = vmatpush2.bf16.msra.mxu0 0
  %2220 = vmatprep.subr.bf16.mxu0 0
  %2221 = vmatpush2.bf16.msra.mxu0 0
  %2222 = vmatprep.subr.bf16.mxu0 0
  %2223 = vmatpush2.bf16.msra.mxu0 0
  %2224 = vmatprep.subr.bf16.mxu0 0
  %2225 = vmatpush2.bf16.msra.mxu0 0
  %2226 = vmatprep.subr.bf16.mxu0 0
  %2227 = vmatpush2.bf16.msra.mxu0 0
  %2228 = vmatprep.subr.bf16.mxu0 0
  %2229 = vmatpush2.bf16.msra.mxu0 0
  %2230 = vmatprep.subr.bf16.mxu0 0
  %2231 = vmatpush2.bf16.msra.mxu0 0
  %2232 = vmatprep.mubr.bf16.mxu0 0
  %2233 = vmatmul.mubr.bf16.gmra.mxu0 0
  %v2234 = vpop.f32.mrf.mxu0
  %v2235 = vadd.f32 %v2060, %v2234
  %v2236 = vpop.f32.mrf.mxu0
  %v2237 = vadd.f32 %v2064, %v2236
  %v2238 = vpop.f32.mrf.mxu0
  %v2239 = vpop.f32.mrf.mxu0
  %2240 = vdwg.mxu0
  %2241 = vmatprep.subr.bf16.mxu0 0
  %2242 = vmatpush1.bf16.msra.mxu0 %v2175
  %2243 = vmatprep.subr.bf16.mxu0 0
  %2244 = vmatpush1.bf16.msra.mxu0 %v2172
  %2245 = vmatprep.subr.bf16.mxu0 0
  %2246 = vmatpush1.bf16.msra.mxu0 %v2169
  %2247 = vmatprep.subr.bf16.mxu0 0
  %2248 = vmatpush1.bf16.msra.mxu0 %v2166
  %2249 = vmatprep.subr.bf16.mxu0 0
  %2250 = vmatpush1.bf16.msra.mxu0 %v2163
  %2251 = vmatprep.subr.bf16.mxu0 0
  %2252 = vmatpush1.bf16.msra.mxu0 %v2160
  %2253 = vmatprep.subr.bf16.mxu0 0
  %2254 = vmatpush1.bf16.msra.mxu0 %v2157
  %2255 = vmatprep.subr.bf16.mxu0 0
  %2256 = vmatpush1.bf16.msra.mxu0 %v2154
  %2257 = vmatprep.subr.bf16.mxu0 0
  %2258 = vmatpush2.bf16.msra.mxu0 0
  %2259 = vmatprep.subr.bf16.mxu0 0
  %2260 = vmatpush2.bf16.msra.mxu0 0
  %2261 = vmatprep.subr.bf16.mxu0 0
  %2262 = vmatpush2.bf16.msra.mxu0 0
  %2263 = vmatprep.subr.bf16.mxu0 0
  %2264 = vmatpush2.bf16.msra.mxu0 0
  %2265 = vmatprep.subr.bf16.mxu0 0
  %2266 = vmatpush2.bf16.msra.mxu0 0
  %2267 = vmatprep.subr.bf16.mxu0 0
  %2268 = vmatpush2.bf16.msra.mxu0 0
  %2269 = vmatprep.subr.bf16.mxu0 0
  %2270 = vmatpush2.bf16.msra.mxu0 0
  %2271 = vmatprep.subr.bf16.mxu0 0
  %2272 = vmatpush2.bf16.msra.mxu0 0
  %2273 = vmatprep.mubr.bf16.mxu0 0
  %2274 = vmatmul.mubr.bf16.gmra.mxu0 0
  %v2275 = vpop.f32.mrf.mxu0
  %v2276 = vadd.f32 %v2068, %v2275
  %v2277 = vpop.f32.mrf.mxu0
  %v2278 = vpop.f32.mrf.mxu0
  %v2279 = vpop.f32.mrf.mxu0
  %2280 = vdwg.mxu0
  %v2281 = vadd.f32 %v1670, %v2235
  %v2282 = vxor.u32 %v2281, 2147483648
  %v2283 = vmul.f32 %v2282, 1.442695
  %v2284 = vpow.pop %v2283
  %v2285 = vadd.f32 %v2284, 1.0
  %v2286 = vrcp.pop %v2285
  %v2287 = vmul.f32 1.0, %v2286
  %v2288 = vadd.f32 %v1672, %v2237
  %v2289 = vxor.u32 %v2288, 2147483648
  %v2290 = vmul.f32 %v2289, 1.442695
  %v2291 = vpow.pop %v2290
  %v2292 = vadd.f32 %v2291, 1.0
  %v2293 = vrcp.pop %v2292
  %v2294 = vmul.f32 1.0, %v2293
  %v2295 = vmul.f32 %v2287, %v2276
  %v2296 = vadd.f32 %v1829, %v2295
  %v2297 = vtanh.pop %v2296
  %v2298 = vsub.f32 1.0, %v2294
  %v2299 = vmul.f32 %v2298, %v2297
  %v2300 = vmul.f32 %v2294, 0.0
  %v2301 = vadd.f32 %v2299, %v2300
  %v2302 = vpack.c.bf16 %v2301, %v2301
  %v2304 = vlaneseq
  %v2305 = vshrl.u32 %v2304, 7
  %v2306 = vsub.s32 0, %v2305
  %v2307 = vrot.slane %v2055, %v2306
  %v2325 = vunpack.c.l.b16 %v2039
  %v2326 = vunpack.c.l.b16 %v2040
  %v2327 = vunpack.c.l.b16 %v2041
  %v2328 = vunpack.c.l.b16 %v2042
  %v2329 = vunpack.c.l.b16 %v2043
  %v2330 = vunpack.c.l.b16 %v2044
  %v2331 = vunpack.c.l.b16 %v2045
  %v2332 = vunpack.c.l.b16 %v2046
  %v2333 = vunpack.c.l.b16 %v2047
  %v2334 = vunpack.c.l.b16 %v2048
  %v2335 = vunpack.c.l.b16 %v2049
  %v2336 = vunpack.c.l.b16 %v2050
  %v2337 = vunpack.c.l.b16 %v2051
  %v2338 = vunpack.c.l.b16 %v2052
  %v2339 = vunpack.c.l.b16 %v2053
  %v2340 = vunpack.c.l.b16 %v2054
  %v2341 = vpack.c.b16 %v2326, %v2325
  %v2342 = vpack.c.b16 %v2328, %v2327
  %v2343 = vpack.c.b16 %v2330, %v2329
  %v2344 = vpack.c.b16 %v2332, %v2331
  %v2345 = vpack.c.b16 %v2334, %v2333
  %v2346 = vpack.c.b16 %v2336, %v2335
  %v2347 = vpack.c.b16 %v2338, %v2337
  %v2348 = vpack.c.b16 %v2340, %v2339
  %2357 = vmatprep.subr.bf16.mxu0 0
  %2358 = vmatpush1.bf16.msra.mxu0 %v2348
  %2359 = vmatprep.subr.bf16.mxu0 0
  %2360 = vmatpush1.bf16.msra.mxu0 %v2347
  %2361 = vmatprep.subr.bf16.mxu0 0
  %2362 = vmatpush1.bf16.msra.mxu0 %v2346
  %2363 = vmatprep.subr.bf16.mxu0 0
  %2364 = vmatpush1.bf16.msra.mxu0 %v2345
  %2365 = vmatprep.subr.bf16.mxu0 0
  %2366 = vmatpush1.bf16.msra.mxu0 %v2344
  %2367 = vmatprep.subr.bf16.mxu0 0
  %2368 = vmatpush1.bf16.msra.mxu0 %v2343
  %2369 = vmatprep.subr.bf16.mxu0 0
  %2370 = vmatpush1.bf16.msra.mxu0 %v2342
  %2371 = vmatprep.subr.bf16.mxu0 0
  %2372 = vmatpush1.bf16.msra.mxu0 %v2341
  %2373 = vmatprep.subr.bf16.mxu0 0
  %2374 = vmatpush2.bf16.msra.mxu0 0
  %2375 = vmatprep.subr.bf16.mxu0 0
  %2376 = vmatpush2.bf16.msra.mxu0 0
  %2377 = vmatprep.subr.bf16.mxu0 0
  %2378 = vmatpush2.bf16.msra.mxu0 0
  %2379 = vmatprep.subr.bf16.mxu0 0
  %2380 = vmatpush2.bf16.msra.mxu0 0
  %2381 = vmatprep.subr.bf16.mxu0 0
  %2382 = vmatpush2.bf16.msra.mxu0 0
  %2383 = vmatprep.subr.bf16.mxu0 0
  %2384 = vmatpush2.bf16.msra.mxu0 0
  %2385 = vmatprep.subr.bf16.mxu0 0
  %2386 = vmatpush2.bf16.msra.mxu0 0
  %2387 = vmatprep.subr.bf16.mxu0 0
  %2388 = vmatpush2.bf16.msra.mxu0 0
  %2389 = vmatprep.mubr.bf16.mxu0 0
  %2390 = vmatmul.mubr.bf16.gmra.mxu0 %v2302
  %v2391 = vpop.f32.mrf.mxu0
  %v2392 = vadd.f32 %v2307, %v2391
  %v2393 = vpop.f32.mrf.mxu0
  %v2394 = vpop.f32.mrf.mxu0
  %v2395 = vpop.f32.mrf.mxu0
  %2396 = vdwg.mxu0
  %2397 = vst [vmem:[%s7] sm:$0xff] %v2392
  %2398 = vmatprep.subr.bf16.mxu0 %v2174
  %2399 = vmatpush1.bf16.msra.mxu0 %v2173
  %2400 = vmatprep.subr.bf16.mxu0 %v2171
  %2401 = vmatpush1.bf16.msra.mxu0 %v2170
  %2402 = vmatprep.subr.bf16.mxu0 %v2168
  %2403 = vmatpush1.bf16.msra.mxu0 %v2167
  %2404 = vmatprep.subr.bf16.mxu0 %v2165
  %2405 = vmatpush1.bf16.msra.mxu0 %v2164
  %2406 = vmatprep.subr.bf16.mxu0 %v2162
  %2407 = vmatpush1.bf16.msra.mxu0 %v2161
  %2408 = vmatprep.subr.bf16.mxu0 %v2159
  %2409 = vmatpush1.bf16.msra.mxu0 %v2158
  %2410 = vmatprep.subr.bf16.mxu0 %v2156
  %2411 = vmatpush1.bf16.msra.mxu0 %v2155
  %2412 = vmatprep.subr.bf16.mxu0 %v2153
  %2413 = vmatpush1.bf16.msra.mxu0 %v2152
  %2414 = vmatprep.subr.bf16.mxu0 0
  %2415 = vmatpush2.bf16.msra.mxu0 0
  %2416 = vmatprep.subr.bf16.mxu0 0
  %2417 = vmatpush2.bf16.msra.mxu0 0
  %2418 = vmatprep.subr.bf16.mxu0 0
  %2419 = vmatpush2.bf16.msra.mxu0 0
  %2420 = vmatprep.subr.bf16.mxu0 0
  %2421 = vmatpush2.bf16.msra.mxu0 0
  %2422 = vmatprep.subr.bf16.mxu0 0
  %2423 = vmatpush2.bf16.msra.mxu0 0
  %2424 = vmatprep.subr.bf16.mxu0 0
  %2425 = vmatpush2.bf16.msra.mxu0 0
  %2426 = vmatprep.subr.bf16.mxu0 0
  %2427 = vmatpush2.bf16.msra.mxu0 0
  %2428 = vmatprep.subr.bf16.mxu0 0
  %2429 = vmatpush2.bf16.msra.mxu0 0
  %2430 = vmatprep.mubr.bf16.mxu0 0
  %2431 = vmatmul.mubr.bf16.gmra.mxu0 %v2302
  %v2432 = vpop.f32.mrf.mxu0
  %v2433 = vadd.f32 %v2060, %v2432
  %v2434 = vpop.f32.mrf.mxu0
  %v2435 = vadd.f32 %v2064, %v2434
  %v2436 = vpop.f32.mrf.mxu0
  %v2437 = vpop.f32.mrf.mxu0
  %2438 = vdwg.mxu0
  %2439 = vmatprep.subr.bf16.mxu0 0
  %2440 = vmatpush1.bf16.msra.mxu0 %v2175
  %2441 = vmatprep.subr.bf16.mxu0 0
  %2442 = vmatpush1.bf16.msra.mxu0 %v2172
  %2443 = vmatprep.subr.bf16.mxu0 0
  %2444 = vmatpush1.bf16.msra.mxu0 %v2169
  %2445 = vmatprep.subr.bf16.mxu0 0
  %2446 = vmatpush1.bf16.msra.mxu0 %v2166
  %2447 = vmatprep.subr.bf16.mxu0 0
  %2448 = vmatpush1.bf16.msra.mxu0 %v2163
  %2449 = vmatprep.subr.bf16.mxu0 0
  %2450 = vmatpush1.bf16.msra.mxu0 %v2160
  %2451 = vmatprep.subr.bf16.mxu0 0
  %2452 = vmatpush1.bf16.msra.mxu0 %v2157
  %2453 = vmatprep.subr.bf16.mxu0 0
  %2454 = vmatpush1.bf16.msra.mxu0 %v2154
  %2455 = vmatprep.subr.bf16.mxu0 0
  %2456 = vmatpush2.bf16.msra.mxu0 0
  %2457 = vmatprep.subr.bf16.mxu0 0
  %2458 = vmatpush2.bf16.msra.mxu0 0
  %2459 = vmatprep.subr.bf16.mxu0 0
  %2460 = vmatpush2.bf16.msra.mxu0 0
  %2461 = vmatprep.subr.bf16.mxu0 0
  %2462 = vmatpush2.bf16.msra.mxu0 0
  %2463 = vmatprep.subr.bf16.mxu0 0
  %2464 = vmatpush2.bf16.msra.mxu0 0
  %2465 = vmatprep.subr.bf16.mxu0 0
  %2466 = vmatpush2.bf16.msra.mxu0 0
  %2467 = vmatprep.subr.bf16.mxu0 0
  %2468 = vmatpush2.bf16.msra.mxu0 0
  %2469 = vmatprep.subr.bf16.mxu0 0
  %2470 = vmatpush2.bf16.msra.mxu0 0
  %2471 = vmatprep.mubr.bf16.mxu0 0
  %2472 = vmatmul.mubr.bf16.gmra.mxu0 %v2302
  %v2473 = vpop.f32.mrf.mxu0
  %v2474 = vadd.f32 %v2068, %v2473
  %v2475 = vpop.f32.mrf.mxu0
  %v2476 = vpop.f32.mrf.mxu0
  %v2477 = vpop.f32.mrf.mxu0
  %2478 = vdwg.mxu0
  %v2479 = vadd.f32 %v1674, %v2433
  %v2480 = vxor.u32 %v2479, 2147483648
  %v2481 = vmul.f32 %v2480, 1.442695
  %v2482 = vpow.pop %v2481
  %v2483 = vadd.f32 %v2482, 1.0
  %v2484 = vrcp.pop %v2483
  %v2485 = vmul.f32 1.0, %v2484
  %v2486 = vadd.f32 %v1676, %v2435
  %v2487 = vxor.u32 %v2486, 2147483648
  %v2488 = vmul.f32 %v2487, 1.442695
  %v2489 = vpow.pop %v2488
  %v2490 = vadd.f32 %v2489, 1.0
  %v2491 = vrcp.pop %v2490
  %v2492 = vmul.f32 1.0, %v2491
  %v2493 = vmul.f32 %v2485, %v2474
  %v2494 = vadd.f32 %v1833, %v2493
  %v2495 = vtanh.pop %v2494
  %v2496 = vsub.f32 1.0, %v2492
  %v2497 = vmul.f32 %v2496, %v2495
  %v2498 = vmul.f32 %v2492, %v2301
  %v2499 = vadd.f32 %v2497, %v2498
  %v2500 = vpack.c.bf16 %v2499, %v2499
  %2501 = vmatprep.subr.bf16.mxu0 0
  %2502 = vmatpush1.bf16.msra.mxu0 %v2348
  %2503 = vmatprep.subr.bf16.mxu0 0
  %2504 = vmatpush1.bf16.msra.mxu0 %v2347
  %2505 = vmatprep.subr.bf16.mxu0 0
  %2506 = vmatpush1.bf16.msra.mxu0 %v2346
  %2507 = vmatprep.subr.bf16.mxu0 0
  %2508 = vmatpush1.bf16.msra.mxu0 %v2345
  %2509 = vmatprep.subr.bf16.mxu0 0
  %2510 = vmatpush1.bf16.msra.mxu0 %v2344
  %2511 = vmatprep.subr.bf16.mxu0 0
  %2512 = vmatpush1.bf16.msra.mxu0 %v2343
  %2513 = vmatprep.subr.bf16.mxu0 0
  %2514 = vmatpush1.bf16.msra.mxu0 %v2342
  %2515 = vmatprep.subr.bf16.mxu0 0
  %2516 = vmatpush1.bf16.msra.mxu0 %v2341
  %2517 = vmatprep.subr.bf16.mxu0 0
  %2518 = vmatpush2.bf16.msra.mxu0 0
  %2519 = vmatprep.subr.bf16.mxu0 0
  %2520 = vmatpush2.bf16.msra.mxu0 0
  %2521 = vmatprep.subr.bf16.mxu0 0
  %2522 = vmatpush2.bf16.msra.mxu0 0
  %2523 = vmatprep.subr.bf16.mxu0 0
  %2524 = vmatpush2.bf16.msra.mxu0 0
  %2525 = vmatprep.subr.bf16.mxu0 0
  %2526 = vmatpush2.bf16.msra.mxu0 0
  %2527 = vmatprep.subr.bf16.mxu0 0
  %2528 = vmatpush2.bf16.msra.mxu0 0
  %2529 = vmatprep.subr.bf16.mxu0 0
  %2530 = vmatpush2.bf16.msra.mxu0 0
  %2531 = vmatprep.subr.bf16.mxu0 0
  %2532 = vmatpush2.bf16.msra.mxu0 0
  %2533 = vmatprep.mubr.bf16.mxu0 0
  %2534 = vmatmul.mubr.bf16.gmra.mxu0 %v2500
  %v2535 = vpop.f32.mrf.mxu0
  %v2536 = vadd.f32 %v2307, %v2535
  %v2537 = vpop.f32.mrf.mxu0
  %v2538 = vpop.f32.mrf.mxu0
  %v2539 = vpop.f32.mrf.mxu0
  %2540 = vdwg.mxu0
  %s2541 = scalar_lea.vmem %s7, 8
  %2542 = vst [vmem:[%s2541] sm:$0xff] %v2536
  %2543 = vmatprep.subr.bf16.mxu0 %v2174
  %2544 = vmatpush1.bf16.msra.mxu0 %v2173
  %2545 = vmatprep.subr.bf16.mxu0 %v2171
  %2546 = vmatpush1.bf16.msra.mxu0 %v2170
  %2547 = vmatprep.subr.bf16.mxu0 %v2168
  %2548 = vmatpush1.bf16.msra.mxu0 %v2167
  %2549 = vmatprep.subr.bf16.mxu0 %v2165
  %2550 = vmatpush1.bf16.msra.mxu0 %v2164
  %2551 = vmatprep.subr.bf16.mxu0 %v2162
  %2552 = vmatpush1.bf16.msra.mxu0 %v2161
  %2553 = vmatprep.subr.bf16.mxu0 %v2159
  %2554 = vmatpush1.bf16.msra.mxu0 %v2158
  %2555 = vmatprep.subr.bf16.mxu0 %v2156
  %2556 = vmatpush1.bf16.msra.mxu0 %v2155
  %2557 = vmatprep.subr.bf16.mxu0 %v2153
  %2558 = vmatpush1.bf16.msra.mxu0 %v2152
  %2559 = vmatprep.subr.bf16.mxu0 0
  %2560 = vmatpush2.bf16.msra.mxu0 0
  %2561 = vmatprep.subr.bf16.mxu0 0
  %2562 = vmatpush2.bf16.msra.mxu0 0
  %2563 = vmatprep.subr.bf16.mxu0 0
  %2564 = vmatpush2.bf16.msra.mxu0 0
  %2565 = vmatprep.subr.bf16.mxu0 0
  %2566 = vmatpush2.bf16.msra.mxu0 0
  %2567 = vmatprep.subr.bf16.mxu0 0
  %2568 = vmatpush2.bf16.msra.mxu0 0
  %2569 = vmatprep.subr.bf16.mxu0 0
  %2570 = vmatpush2.bf16.msra.mxu0 0
  %2571 = vmatprep.subr.bf16.mxu0 0
  %2572 = vmatpush2.bf16.msra.mxu0 0
  %2573 = vmatprep.subr.bf16.mxu0 0
  %2574 = vmatpush2.bf16.msra.mxu0 0
  %2575 = vmatprep.mubr.bf16.mxu0 0
  %2576 = vmatmul.mubr.bf16.gmra.mxu0 %v2500
  %v2577 = vpop.f32.mrf.mxu0
  %v2578 = vadd.f32 %v2060, %v2577
  %v2579 = vpop.f32.mrf.mxu0
  %v2580 = vadd.f32 %v2064, %v2579
  %v2581 = vpop.f32.mrf.mxu0
  %v2582 = vpop.f32.mrf.mxu0
  %2583 = vdwg.mxu0
  %2584 = vmatprep.subr.bf16.mxu0 0
  %2585 = vmatpush1.bf16.msra.mxu0 %v2175
  %2586 = vmatprep.subr.bf16.mxu0 0
  %2587 = vmatpush1.bf16.msra.mxu0 %v2172
  %2588 = vmatprep.subr.bf16.mxu0 0
  %2589 = vmatpush1.bf16.msra.mxu0 %v2169
  %2590 = vmatprep.subr.bf16.mxu0 0
  %2591 = vmatpush1.bf16.msra.mxu0 %v2166
  %2592 = vmatprep.subr.bf16.mxu0 0
  %2593 = vmatpush1.bf16.msra.mxu0 %v2163
  %2594 = vmatprep.subr.bf16.mxu0 0
  %2595 = vmatpush1.bf16.msra.mxu0 %v2160
  %2596 = vmatprep.subr.bf16.mxu0 0
  %2597 = vmatpush1.bf16.msra.mxu0 %v2157
  %2598 = vmatprep.subr.bf16.mxu0 0
  %2599 = vmatpush1.bf16.msra.mxu0 %v2154
  %2600 = vmatprep.subr.bf16.mxu0 0
  %2601 = vmatpush2.bf16.msra.mxu0 0
  %2602 = vmatprep.subr.bf16.mxu0 0
  %2603 = vmatpush2.bf16.msra.mxu0 0
  %2604 = vmatprep.subr.bf16.mxu0 0
  %2605 = vmatpush2.bf16.msra.mxu0 0
  %2606 = vmatprep.subr.bf16.mxu0 0
  %2607 = vmatpush2.bf16.msra.mxu0 0
  %2608 = vmatprep.subr.bf16.mxu0 0
  %2609 = vmatpush2.bf16.msra.mxu0 0
  %2610 = vmatprep.subr.bf16.mxu0 0
  %2611 = vmatpush2.bf16.msra.mxu0 0
  %2612 = vmatprep.subr.bf16.mxu0 0
  %2613 = vmatpush2.bf16.msra.mxu0 0
  %2614 = vmatprep.subr.bf16.mxu0 0
  %2615 = vmatpush2.bf16.msra.mxu0 0
  %2616 = vmatprep.mubr.bf16.mxu0 0
  %2617 = vmatmul.mubr.bf16.gmra.mxu0 %v2500
  %v2618 = vpop.f32.mrf.mxu0
  %v2619 = vadd.f32 %v2068, %v2618
  %v2620 = vpop.f32.mrf.mxu0
  %v2621 = vpop.f32.mrf.mxu0
  %v2622 = vpop.f32.mrf.mxu0
  %2623 = vdwg.mxu0
  %v2624 = vadd.f32 %v1680, %v2578
  %v2625 = vxor.u32 %v2624, 2147483648
  %v2626 = vmul.f32 %v2625, 1.442695
  %v2627 = vpow.pop %v2626
  %v2628 = vadd.f32 %v2627, 1.0
  %v2629 = vrcp.pop %v2628
  %v2630 = vmul.f32 1.0, %v2629
  %v2631 = vadd.f32 %v1682, %v2580
  %v2632 = vxor.u32 %v2631, 2147483648
  %v2633 = vmul.f32 %v2632, 1.442695
  %v2634 = vpow.pop %v2633
  %v2635 = vadd.f32 %v2634, 1.0
  %v2636 = vrcp.pop %v2635
  %v2637 = vmul.f32 1.0, %v2636
  %v2638 = vmul.f32 %v2630, %v2619
  %v2639 = vadd.f32 %v1839, %v2638
  %v2640 = vtanh.pop %v2639
  %v2641 = vsub.f32 1.0, %v2637
  %v2642 = vmul.f32 %v2641, %v2640
  %v2643 = vmul.f32 %v2637, %v2499
  %v2644 = vadd.f32 %v2642, %v2643
  %v2645 = vpack.c.bf16 %v2644, %v2644
  %2646 = vmatprep.subr.bf16.mxu0 0
  %2647 = vmatpush1.bf16.msra.mxu0 %v2348
  %2648 = vmatprep.subr.bf16.mxu0 0
  %2649 = vmatpush1.bf16.msra.mxu0 %v2347
  %2650 = vmatprep.subr.bf16.mxu0 0
  %2651 = vmatpush1.bf16.msra.mxu0 %v2346
  %2652 = vmatprep.subr.bf16.mxu0 0
  %2653 = vmatpush1.bf16.msra.mxu0 %v2345
  %2654 = vmatprep.subr.bf16.mxu0 0
  %2655 = vmatpush1.bf16.msra.mxu0 %v2344
  %2656 = vmatprep.subr.bf16.mxu0 0
  %2657 = vmatpush1.bf16.msra.mxu0 %v2343
  %2658 = vmatprep.subr.bf16.mxu0 0
  %2659 = vmatpush1.bf16.msra.mxu0 %v2342
  %2660 = vmatprep.subr.bf16.mxu0 0
  %2661 = vmatpush1.bf16.msra.mxu0 %v2341
  %2662 = vmatprep.subr.bf16.mxu0 0
  %2663 = vmatpush2.bf16.msra.mxu0 0
  %2664 = vmatprep.subr.bf16.mxu0 0
  %2665 = vmatpush2.bf16.msra.mxu0 0
  %2666 = vmatprep.subr.bf16.mxu0 0
  %2667 = vmatpush2.bf16.msra.mxu0 0
  %2668 = vmatprep.subr.bf16.mxu0 0
  %2669 = vmatpush2.bf16.msra.mxu0 0
  %2670 = vmatprep.subr.bf16.mxu0 0
  %2671 = vmatpush2.bf16.msra.mxu0 0
  %2672 = vmatprep.subr.bf16.mxu0 0
  %2673 = vmatpush2.bf16.msra.mxu0 0
  %2674 = vmatprep.subr.bf16.mxu0 0
  %2675 = vmatpush2.bf16.msra.mxu0 0
  %2676 = vmatprep.subr.bf16.mxu0 0
  %2677 = vmatpush2.bf16.msra.mxu0 0
  %2678 = vmatprep.mubr.bf16.mxu0 0
  %2679 = vmatmul.mubr.bf16.gmra.mxu0 %v2645
  %v2680 = vpop.f32.mrf.mxu0
  %v2681 = vadd.f32 %v2307, %v2680
  %v2682 = vpop.f32.mrf.mxu0
  %v2683 = vpop.f32.mrf.mxu0
  %v2684 = vpop.f32.mrf.mxu0
  %2685 = vdwg.mxu0
  %s2686 = scalar_lea.vmem %s7, 16
  %2687 = vst [vmem:[%s2686] sm:$0xff] %v2681
  %2688 = vmatprep.subr.bf16.mxu0 %v2174
  %2689 = vmatpush1.bf16.msra.mxu0 %v2173
  %2690 = vmatprep.subr.bf16.mxu0 %v2171
  %2691 = vmatpush1.bf16.msra.mxu0 %v2170
  %2692 = vmatprep.subr.bf16.mxu0 %v2168
  %2693 = vmatpush1.bf16.msra.mxu0 %v2167
  %2694 = vmatprep.subr.bf16.mxu0 %v2165
  %2695 = vmatpush1.bf16.msra.mxu0 %v2164
  %2696 = vmatprep.subr.bf16.mxu0 %v2162
  %2697 = vmatpush1.bf16.msra.mxu0 %v2161
  %2698 = vmatprep.subr.bf16.mxu0 %v2159
  %2699 = vmatpush1.bf16.msra.mxu0 %v2158
  %2700 = vmatprep.subr.bf16.mxu0 %v2156
  %2701 = vmatpush1.bf16.msra.mxu0 %v2155
  %2702 = vmatprep.subr.bf16.mxu0 %v2153
  %2703 = vmatpush1.bf16.msra.mxu0 %v2152
  %2704 = vmatprep.subr.bf16.mxu0 0
  %2705 = vmatpush2.bf16.msra.mxu0 0
  %2706 = vmatprep.subr.bf16.mxu0 0
  %2707 = vmatpush2.bf16.msra.mxu0 0
  %2708 = vmatprep.subr.bf16.mxu0 0
  %2709 = vmatpush2.bf16.msra.mxu0 0
  %2710 = vmatprep.subr.bf16.mxu0 0
  %2711 = vmatpush2.bf16.msra.mxu0 0
  %2712 = vmatprep.subr.bf16.mxu0 0
  %2713 = vmatpush2.bf16.msra.mxu0 0
  %2714 = vmatprep.subr.bf16.mxu0 0
  %2715 = vmatpush2.bf16.msra.mxu0 0
  %2716 = vmatprep.subr.bf16.mxu0 0
  %2717 = vmatpush2.bf16.msra.mxu0 0
  %2718 = vmatprep.subr.bf16.mxu0 0
  %2719 = vmatpush2.bf16.msra.mxu0 0
  %2720 = vmatprep.mubr.bf16.mxu0 0
  %2721 = vmatmul.mubr.bf16.gmra.mxu0 %v2645
  %v2722 = vpop.f32.mrf.mxu0
  %v2723 = vadd.f32 %v2060, %v2722
  %v2724 = vpop.f32.mrf.mxu0
  %v2725 = vadd.f32 %v2064, %v2724
  %v2726 = vpop.f32.mrf.mxu0
  %v2727 = vpop.f32.mrf.mxu0
  %2728 = vdwg.mxu0
  %2729 = vmatprep.subr.bf16.mxu0 0
  %2730 = vmatpush1.bf16.msra.mxu0 %v2175
  %2731 = vmatprep.subr.bf16.mxu0 0
  %2732 = vmatpush1.bf16.msra.mxu0 %v2172
  %2733 = vmatprep.subr.bf16.mxu0 0
  %2734 = vmatpush1.bf16.msra.mxu0 %v2169
  %2735 = vmatprep.subr.bf16.mxu0 0
  %2736 = vmatpush1.bf16.msra.mxu0 %v2166
  %2737 = vmatprep.subr.bf16.mxu0 0
  %2738 = vmatpush1.bf16.msra.mxu0 %v2163
  %2739 = vmatprep.subr.bf16.mxu0 0
  %2740 = vmatpush1.bf16.msra.mxu0 %v2160
  %2741 = vmatprep.subr.bf16.mxu0 0
  %2742 = vmatpush1.bf16.msra.mxu0 %v2157
  %2743 = vmatprep.subr.bf16.mxu0 0
  %2744 = vmatpush1.bf16.msra.mxu0 %v2154
  %2745 = vmatprep.subr.bf16.mxu0 0
  %2746 = vmatpush2.bf16.msra.mxu0 0
  %2747 = vmatprep.subr.bf16.mxu0 0
  %2748 = vmatpush2.bf16.msra.mxu0 0
  %2749 = vmatprep.subr.bf16.mxu0 0
  %2750 = vmatpush2.bf16.msra.mxu0 0
  %2751 = vmatprep.subr.bf16.mxu0 0
  %2752 = vmatpush2.bf16.msra.mxu0 0
  %2753 = vmatprep.subr.bf16.mxu0 0
  %2754 = vmatpush2.bf16.msra.mxu0 0
  %2755 = vmatprep.subr.bf16.mxu0 0
  %2756 = vmatpush2.bf16.msra.mxu0 0
  %2757 = vmatprep.subr.bf16.mxu0 0
  %2758 = vmatpush2.bf16.msra.mxu0 0
  %2759 = vmatprep.subr.bf16.mxu0 0
  %2760 = vmatpush2.bf16.msra.mxu0 0
  %2761 = vmatprep.mubr.bf16.mxu0 0
  %2762 = vmatmul.mubr.bf16.gmra.mxu0 %v2645
  %v2763 = vpop.f32.mrf.mxu0
  %v2764 = vadd.f32 %v2068, %v2763
  %v2765 = vpop.f32.mrf.mxu0
  %v2766 = vpop.f32.mrf.mxu0
  %v2767 = vpop.f32.mrf.mxu0
  %2768 = vdwg.mxu0
  %v2769 = vadd.f32 %v1684, %v2723
  %v2770 = vxor.u32 %v2769, 2147483648
  %v2771 = vmul.f32 %v2770, 1.442695
  %v2772 = vpow.pop %v2771
  %v2773 = vadd.f32 %v2772, 1.0
  %v2774 = vrcp.pop %v2773
  %v2775 = vmul.f32 1.0, %v2774
  %v2776 = vadd.f32 %v1686, %v2725
  %v2777 = vxor.u32 %v2776, 2147483648
  %v2778 = vmul.f32 %v2777, 1.442695
  %v2779 = vpow.pop %v2778
  %v2780 = vadd.f32 %v2779, 1.0
  %v2781 = vrcp.pop %v2780
  %v2782 = vmul.f32 1.0, %v2781
  %v2783 = vmul.f32 %v2775, %v2764
  %v2784 = vadd.f32 %v1843, %v2783
  %v2785 = vtanh.pop %v2784
  %v2786 = vsub.f32 1.0, %v2782
  %v2787 = vmul.f32 %v2786, %v2785
  %v2788 = vmul.f32 %v2782, %v2644
  %v2789 = vadd.f32 %v2787, %v2788
  %v2790 = vpack.c.bf16 %v2789, %v2789
  %2791 = vmatprep.subr.bf16.mxu0 0
  %2792 = vmatpush1.bf16.msra.mxu0 %v2348
  %2793 = vmatprep.subr.bf16.mxu0 0
  %2794 = vmatpush1.bf16.msra.mxu0 %v2347
  %2795 = vmatprep.subr.bf16.mxu0 0
  %2796 = vmatpush1.bf16.msra.mxu0 %v2346
  %2797 = vmatprep.subr.bf16.mxu0 0
  %2798 = vmatpush1.bf16.msra.mxu0 %v2345
  %2799 = vmatprep.subr.bf16.mxu0 0
  %2800 = vmatpush1.bf16.msra.mxu0 %v2344
  %2801 = vmatprep.subr.bf16.mxu0 0
  %2802 = vmatpush1.bf16.msra.mxu0 %v2343
  %2803 = vmatprep.subr.bf16.mxu0 0
  %2804 = vmatpush1.bf16.msra.mxu0 %v2342
  %2805 = vmatprep.subr.bf16.mxu0 0
  %2806 = vmatpush1.bf16.msra.mxu0 %v2341
  %2807 = vmatprep.subr.bf16.mxu0 0
  %2808 = vmatpush2.bf16.msra.mxu0 0
  %2809 = vmatprep.subr.bf16.mxu0 0
  %2810 = vmatpush2.bf16.msra.mxu0 0
  %2811 = vmatprep.subr.bf16.mxu0 0
  %2812 = vmatpush2.bf16.msra.mxu0 0
  %2813 = vmatprep.subr.bf16.mxu0 0
  %2814 = vmatpush2.bf16.msra.mxu0 0
  %2815 = vmatprep.subr.bf16.mxu0 0
  %2816 = vmatpush2.bf16.msra.mxu0 0
  %2817 = vmatprep.subr.bf16.mxu0 0
  %2818 = vmatpush2.bf16.msra.mxu0 0
  %2819 = vmatprep.subr.bf16.mxu0 0
  %2820 = vmatpush2.bf16.msra.mxu0 0
  %2821 = vmatprep.subr.bf16.mxu0 0
  %2822 = vmatpush2.bf16.msra.mxu0 0
  %2823 = vmatprep.mubr.bf16.mxu0 0
  %2824 = vmatmul.mubr.bf16.gmra.mxu0 %v2790
  %v2825 = vpop.f32.mrf.mxu0
  %v2826 = vadd.f32 %v2307, %v2825
  %v2827 = vpop.f32.mrf.mxu0
  %v2828 = vpop.f32.mrf.mxu0
  %v2829 = vpop.f32.mrf.mxu0
  %2830 = vdwg.mxu0
  %s2831 = scalar_lea.vmem %s7, 24
  %2832 = vst [vmem:[%s2831] sm:$0xff] %v2826
  %s2833 = scalar_lea.vmem %s2, 192
  %v2834 = vld [vmem:[%s2833] sm:$0xff]
  %v2835 = vld [vmem:[%s2833 + $0x8] sm:$0xf]
  %v2836 = vld [vmem:[%s2833 + $0xc] sm:$0xff]
  %v2837 = vld [vmem:[%s2833 + $0x14] sm:$0xf]
  %v2838 = vld [vmem:[%s2833 + $0x18] sm:$0xff]
  %v2839 = vld [vmem:[%s2833 + $0x20] sm:$0xf]
  %v2840 = vld [vmem:[%s2833 + $0x24] sm:$0xff]
  %v2841 = vld [vmem:[%s2833 + $0x2c] sm:$0xf]
  %v2842 = vld [vmem:[%s2833 + $0x30] sm:$0xff]
  %v2843 = vld [vmem:[%s2833 + $0x38] sm:$0xf]
  %v2844 = vld [vmem:[%s2833 + $0x3c] sm:$0xff]
  %v2845 = vld [vmem:[%s2833 + $0x44] sm:$0xf]
  %v2846 = vld [vmem:[%s2833 + $0x48] sm:$0xff]
  %v2847 = vld [vmem:[%s2833 + $0x50] sm:$0xf]
  %v2848 = vld [vmem:[%s2833 + $0x54] sm:$0xff]
  %v2849 = vld [vmem:[%s2833 + $0x5c] sm:$0xf]
  %v2850 = vld [vmem:[%s2833 + $0x60] sm:$0xff]
  %v2851 = vld [vmem:[%s2833 + $0x68] sm:$0xf]
  %v2852 = vld [vmem:[%s2833 + $0x6c] sm:$0xff]
  %v2853 = vld [vmem:[%s2833 + $0x74] sm:$0xf]
  %v2854 = vld [vmem:[%s2833 + $0x78] sm:$0xff]
  %v2855 = vld [vmem:[%s2833 + $0x80] sm:$0xf]
  %v2856 = vld [vmem:[%s2833 + $0x84] sm:$0xff]
  %v2857 = vld [vmem:[%s2833 + $0x8c] sm:$0xf]
  %v2858 = vld [vmem:[%s2833 + $0x90] sm:$0xff]
  %v2859 = vld [vmem:[%s2833 + $0x98] sm:$0xf]
  %v2860 = vld [vmem:[%s2833 + $0x9c] sm:$0xff]
  %v2861 = vld [vmem:[%s2833 + $0xa4] sm:$0xf]
  %v2862 = vld [vmem:[%s2833 + $0xa8] sm:$0xff]
  %v2863 = vld [vmem:[%s2833 + $0xb0] sm:$0xf]
  %v2864 = vld [vmem:[%s2833 + $0xb4] sm:$0xff]
  %v2865 = vld [vmem:[%s2833 + $0xbc] sm:$0xf]
  %s2866 = scalar_lea.vmem %s4, 3
  %v2867 = vld [vmem:[%s2866] sm:$0x7]
  %v2868 = vld [vmem:[%s5 + $0x40] sm:$0xf]
  %v2869 = vld [vmem:[%s5 + $0x44] sm:$0xf]
  %v2870 = vld [vmem:[%s5 + $0x48] sm:$0xf]
  %v2871 = vld [vmem:[%s5 + $0x4c] sm:$0xf]
  %v2872 = vld [vmem:[%s5 + $0x50] sm:$0xf]
  %v2873 = vld [vmem:[%s5 + $0x54] sm:$0xf]
  %v2874 = vld [vmem:[%s5 + $0x58] sm:$0xf]
  %v2875 = vld [vmem:[%s5 + $0x5c] sm:$0xf]
  %v2876 = vld [vmem:[%s5 + $0x60] sm:$0xf]
  %v2877 = vld [vmem:[%s5 + $0x64] sm:$0xf]
  %v2878 = vld [vmem:[%s5 + $0x68] sm:$0xf]
  %v2879 = vld [vmem:[%s5 + $0x6c] sm:$0xf]
  %v2880 = vld [vmem:[%s5 + $0x70] sm:$0xf]
  %v2881 = vld [vmem:[%s5 + $0x74] sm:$0xf]
  %v2882 = vld [vmem:[%s5 + $0x78] sm:$0xf]
  %v2883 = vld [vmem:[%s5 + $0x7c] sm:$0xf]
  %v2885 = vlaneseq
  %v2886 = vshrl.u32 %v2885, 7
  %v2887 = vsub.s32 0, %v2886
  %v2888 = vrot.slane %v2867, %v2887
  %v2889 = vlaneseq
  %v2890 = vshrl.u32 %v2889, 7
  %v2891 = vsub.s32 1, %v2890
  %v2892 = vrot.slane %v2867, %v2891
  %v2893 = vlaneseq
  %v2894 = vshrl.u32 %v2893, 7
  %v2895 = vsub.s32 2, %v2894
  %v2896 = vrot.slane %v2867, %v2895
  %v2932 = vunpack.c.l.b16 %v2834
  %v2933 = vunpack.c.h.b16 %v2834
  %v2934 = vunpack.c.l.b16 %v2835
  %v2935 = vunpack.c.l.b16 %v2836
  %v2936 = vunpack.c.h.b16 %v2836
  %v2937 = vunpack.c.l.b16 %v2837
  %v2938 = vunpack.c.l.b16 %v2838
  %v2939 = vunpack.c.h.b16 %v2838
  %v2940 = vunpack.c.l.b16 %v2839
  %v2941 = vunpack.c.l.b16 %v2840
  %v2942 = vunpack.c.h.b16 %v2840
  %v2943 = vunpack.c.l.b16 %v2841
  %v2944 = vunpack.c.l.b16 %v2842
  %v2945 = vunpack.c.h.b16 %v2842
  %v2946 = vunpack.c.l.b16 %v2843
  %v2947 = vunpack.c.l.b16 %v2844
  %v2948 = vunpack.c.h.b16 %v2844
  %v2949 = vunpack.c.l.b16 %v2845
  %v2950 = vunpack.c.l.b16 %v2846
  %v2951 = vunpack.c.h.b16 %v2846
  %v2952 = vunpack.c.l.b16 %v2847
  %v2953 = vunpack.c.l.b16 %v2848
  %v2954 = vunpack.c.h.b16 %v2848
  %v2955 = vunpack.c.l.b16 %v2849
  %v2956 = vunpack.c.l.b16 %v2850
  %v2957 = vunpack.c.h.b16 %v2850
  %v2958 = vunpack.c.l.b16 %v2851
  %v2959 = vunpack.c.l.b16 %v2852
  %v2960 = vunpack.c.h.b16 %v2852
  %v2961 = vunpack.c.l.b16 %v2853
  %v2962 = vunpack.c.l.b16 %v2854
  %v2963 = vunpack.c.h.b16 %v2854
  %v2964 = vunpack.c.l.b16 %v2855
  %v2965 = vunpack.c.l.b16 %v2856
  %v2966 = vunpack.c.h.b16 %v2856
  %v2967 = vunpack.c.l.b16 %v2857
  %v2968 = vunpack.c.l.b16 %v2858
  %v2969 = vunpack.c.h.b16 %v2858
  %v2970 = vunpack.c.l.b16 %v2859
  %v2971 = vunpack.c.l.b16 %v2860
  %v2972 = vunpack.c.h.b16 %v2860
  %v2973 = vunpack.c.l.b16 %v2861
  %v2974 = vunpack.c.l.b16 %v2862
  %v2975 = vunpack.c.h.b16 %v2862
  %v2976 = vunpack.c.l.b16 %v2863
  %v2977 = vunpack.c.l.b16 %v2864
  %v2978 = vunpack.c.h.b16 %v2864
  %v2979 = vunpack.c.l.b16 %v2865
  %v2980 = vpack.c.b16 %v2935, %v2932
  %v2981 = vpack.c.b16 %v2936, %v2933
  %v2982 = vpack.c.b16 %v2937, %v2934
  %v2983 = vpack.c.b16 %v2941, %v2938
  %v2984 = vpack.c.b16 %v2942, %v2939
  %v2985 = vpack.c.b16 %v2943, %v2940
  %v2986 = vpack.c.b16 %v2947, %v2944
  %v2987 = vpack.c.b16 %v2948, %v2945
  %v2988 = vpack.c.b16 %v2949, %v2946
  %v2989 = vpack.c.b16 %v2953, %v2950
  %v2990 = vpack.c.b16 %v2954, %v2951
  %v2991 = vpack.c.b16 %v2955, %v2952
  %v2992 = vpack.c.b16 %v2959, %v2956
  %v2993 = vpack.c.b16 %v2960, %v2957
  %v2994 = vpack.c.b16 %v2961, %v2958
  %v2995 = vpack.c.b16 %v2965, %v2962
  %v2996 = vpack.c.b16 %v2966, %v2963
  %v2997 = vpack.c.b16 %v2967, %v2964
  %v2998 = vpack.c.b16 %v2971, %v2968
  %v2999 = vpack.c.b16 %v2972, %v2969
  %v3000 = vpack.c.b16 %v2973, %v2970
  %v3001 = vpack.c.b16 %v2977, %v2974
  %v3002 = vpack.c.b16 %v2978, %v2975
  %v3003 = vpack.c.b16 %v2979, %v2976
  %3028 = vmatprep.subr.bf16.mxu0 %v3002
  %3029 = vmatpush1.bf16.msra.mxu0 %v3001
  %3030 = vmatprep.subr.bf16.mxu0 %v2999
  %3031 = vmatpush1.bf16.msra.mxu0 %v2998
  %3032 = vmatprep.subr.bf16.mxu0 %v2996
  %3033 = vmatpush1.bf16.msra.mxu0 %v2995
  %3034 = vmatprep.subr.bf16.mxu0 %v2993
  %3035 = vmatpush1.bf16.msra.mxu0 %v2992
  %3036 = vmatprep.subr.bf16.mxu0 %v2990
  %3037 = vmatpush1.bf16.msra.mxu0 %v2989
  %3038 = vmatprep.subr.bf16.mxu0 %v2987
  %3039 = vmatpush1.bf16.msra.mxu0 %v2986
  %3040 = vmatprep.subr.bf16.mxu0 %v2984
  %3041 = vmatpush1.bf16.msra.mxu0 %v2983
  %3042 = vmatprep.subr.bf16.mxu0 %v2981
  %3043 = vmatpush1.bf16.msra.mxu0 %v2980
  %3044 = vmatprep.subr.bf16.mxu0 0
  %3045 = vmatpush2.bf16.msra.mxu0 0
  %3046 = vmatprep.subr.bf16.mxu0 0
  %3047 = vmatpush2.bf16.msra.mxu0 0
  %3048 = vmatprep.subr.bf16.mxu0 0
  %3049 = vmatpush2.bf16.msra.mxu0 0
  %3050 = vmatprep.subr.bf16.mxu0 0
  %3051 = vmatpush2.bf16.msra.mxu0 0
  %3052 = vmatprep.subr.bf16.mxu0 0
  %3053 = vmatpush2.bf16.msra.mxu0 0
  %3054 = vmatprep.subr.bf16.mxu0 0
  %3055 = vmatpush2.bf16.msra.mxu0 0
  %3056 = vmatprep.subr.bf16.mxu0 0
  %3057 = vmatpush2.bf16.msra.mxu0 0
  %3058 = vmatprep.subr.bf16.mxu0 0
  %3059 = vmatpush2.bf16.msra.mxu0 0
  %3060 = vmatprep.mubr.bf16.mxu0 0
  %3061 = vmatmul.mubr.bf16.gmra.mxu0 0
  %v3062 = vpop.f32.mrf.mxu0
  %v3063 = vadd.f32 %v2888, %v3062
  %v3064 = vpop.f32.mrf.mxu0
  %v3065 = vadd.f32 %v2892, %v3064
  %v3066 = vpop.f32.mrf.mxu0
  %v3067 = vpop.f32.mrf.mxu0
  %3068 = vdwg.mxu0
  %3069 = vmatprep.subr.bf16.mxu0 0
  %3070 = vmatpush1.bf16.msra.mxu0 %v3003
  %3071 = vmatprep.subr.bf16.mxu0 0
  %3072 = vmatpush1.bf16.msra.mxu0 %v3000
  %3073 = vmatprep.subr.bf16.mxu0 0
  %3074 = vmatpush1.bf16.msra.mxu0 %v2997
  %3075 = vmatprep.subr.bf16.mxu0 0
  %3076 = vmatpush1.bf16.msra.mxu0 %v2994
  %3077 = vmatprep.subr.bf16.mxu0 0
  %3078 = vmatpush1.bf16.msra.mxu0 %v2991
  %3079 = vmatprep.subr.bf16.mxu0 0
  %3080 = vmatpush1.bf16.msra.mxu0 %v2988
  %3081 = vmatprep.subr.bf16.mxu0 0
  %3082 = vmatpush1.bf16.msra.mxu0 %v2985
  %3083 = vmatprep.subr.bf16.mxu0 0
  %3084 = vmatpush1.bf16.msra.mxu0 %v2982
  %3085 = vmatprep.subr.bf16.mxu0 0
  %3086 = vmatpush2.bf16.msra.mxu0 0
  %3087 = vmatprep.subr.bf16.mxu0 0
  %3088 = vmatpush2.bf16.msra.mxu0 0
  %3089 = vmatprep.subr.bf16.mxu0 0
  %3090 = vmatpush2.bf16.msra.mxu0 0
  %3091 = vmatprep.subr.bf16.mxu0 0
  %3092 = vmatpush2.bf16.msra.mxu0 0
  %3093 = vmatprep.subr.bf16.mxu0 0
  %3094 = vmatpush2.bf16.msra.mxu0 0
  %3095 = vmatprep.subr.bf16.mxu0 0
  %3096 = vmatpush2.bf16.msra.mxu0 0
  %3097 = vmatprep.subr.bf16.mxu0 0
  %3098 = vmatpush2.bf16.msra.mxu0 0
  %3099 = vmatprep.subr.bf16.mxu0 0
  %3100 = vmatpush2.bf16.msra.mxu0 0
  %3101 = vmatprep.mubr.bf16.mxu0 0
  %3102 = vmatmul.mubr.bf16.gmra.mxu0 0
  %v3103 = vpop.f32.mrf.mxu0
  %v3104 = vadd.f32 %v2896, %v3103
  %v3105 = vpop.f32.mrf.mxu0
  %v3106 = vpop.f32.mrf.mxu0
  %v3107 = vpop.f32.mrf.mxu0
  %3108 = vdwg.mxu0
  %v3109 = vadd.f32 %v1845, %v3063
  %v3110 = vxor.u32 %v3109, 2147483648
  %v3111 = vmul.f32 %v3110, 1.442695
  %v3112 = vpow.pop %v3111
  %v3113 = vadd.f32 %v3112, 1.0
  %v3114 = vrcp.pop %v3113
  %v3115 = vmul.f32 1.0, %v3114
  %v3116 = vadd.f32 %v2002, %v3065
  %v3117 = vxor.u32 %v3116, 2147483648
  %v3118 = vmul.f32 %v3117, 1.442695
  %v3119 = vpow.pop %v3118
  %v3120 = vadd.f32 %v3119, 1.0
  %v3121 = vrcp.pop %v3120
  %v3122 = vmul.f32 1.0, %v3121
  %v3123 = vmul.f32 %v3115, %v3104
  %v3124 = vadd.f32 %v2004, %v3123
  %v3125 = vtanh.pop %v3124
  %v3126 = vsub.f32 1.0, %v3122
  %v3127 = vmul.f32 %v3126, %v3125
  %v3128 = vmul.f32 %v3122, 0.0
  %v3129 = vadd.f32 %v3127, %v3128
  %v3130 = vld [vmem:[%s2831] sm:$0xff]
  %v3131 = vpack.c.bf16 %v3129, %v3129
  %v3148 = vunpack.c.l.b16 %v2868
  %v3149 = vunpack.c.l.b16 %v2869
  %v3150 = vunpack.c.l.b16 %v2870
  %v3151 = vunpack.c.l.b16 %v2871
  %v3152 = vunpack.c.l.b16 %v2872
  %v3153 = vunpack.c.l.b16 %v2873
  %v3154 = vunpack.c.l.b16 %v2874
  %v3155 = vunpack.c.l.b16 %v2875
  %v3156 = vunpack.c.l.b16 %v2876
  %v3157 = vunpack.c.l.b16 %v2877
  %v3158 = vunpack.c.l.b16 %v2878
  %v3159 = vunpack.c.l.b16 %v2879
  %v3160 = vunpack.c.l.b16 %v2880
  %v3161 = vunpack.c.l.b16 %v2881
  %v3162 = vunpack.c.l.b16 %v2882
  %v3163 = vunpack.c.l.b16 %v2883
  %v3164 = vpack.c.b16 %v3149, %v3148
  %v3165 = vpack.c.b16 %v3151, %v3150
  %v3166 = vpack.c.b16 %v3153, %v3152
  %v3167 = vpack.c.b16 %v3155, %v3154
  %v3168 = vpack.c.b16 %v3157, %v3156
  %v3169 = vpack.c.b16 %v3159, %v3158
  %v3170 = vpack.c.b16 %v3161, %v3160
  %v3171 = vpack.c.b16 %v3163, %v3162
  %3180 = vmatprep.subr.bf16.mxu0 0
  %3181 = vmatpush1.bf16.msra.mxu0 %v3171
  %3182 = vmatprep.subr.bf16.mxu0 0
  %3183 = vmatpush1.bf16.msra.mxu0 %v3170
  %3184 = vmatprep.subr.bf16.mxu0 0
  %3185 = vmatpush1.bf16.msra.mxu0 %v3169
  %3186 = vmatprep.subr.bf16.mxu0 0
  %3187 = vmatpush1.bf16.msra.mxu0 %v3168
  %3188 = vmatprep.subr.bf16.mxu0 0
  %3189 = vmatpush1.bf16.msra.mxu0 %v3167
  %3190 = vmatprep.subr.bf16.mxu0 0
  %3191 = vmatpush1.bf16.msra.mxu0 %v3166
  %3192 = vmatprep.subr.bf16.mxu0 0
  %3193 = vmatpush1.bf16.msra.mxu0 %v3165
  %3194 = vmatprep.subr.bf16.mxu0 0
  %3195 = vmatpush1.bf16.msra.mxu0 %v3164
  %3196 = vmatprep.subr.bf16.mxu0 0
  %3197 = vmatpush2.bf16.msra.mxu0 0
  %3198 = vmatprep.subr.bf16.mxu0 0
  %3199 = vmatpush2.bf16.msra.mxu0 0
  %3200 = vmatprep.subr.bf16.mxu0 0
  %3201 = vmatpush2.bf16.msra.mxu0 0
  %3202 = vmatprep.subr.bf16.mxu0 0
  %3203 = vmatpush2.bf16.msra.mxu0 0
  %3204 = vmatprep.subr.bf16.mxu0 0
  %3205 = vmatpush2.bf16.msra.mxu0 0
  %3206 = vmatprep.subr.bf16.mxu0 0
  %3207 = vmatpush2.bf16.msra.mxu0 0
  %3208 = vmatprep.subr.bf16.mxu0 0
  %3209 = vmatpush2.bf16.msra.mxu0 0
  %3210 = vmatprep.subr.bf16.mxu0 0
  %3211 = vmatpush2.bf16.msra.mxu0 0
  %3212 = vmatprep.mubr.bf16.mxu0 0
  %3213 = vmatmul.mubr.bf16.gmra.mxu0 %v3131
  %v3214 = vpop.f32.mrf.mxu0
  %v3215 = vadd.f32 0.0, %v3214
  %v3216 = vpop.f32.mrf.mxu0
  %v3217 = vpop.f32.mrf.mxu0
  %v3218 = vpop.f32.mrf.mxu0
  %3219 = vdwg.mxu0
  %v3220 = vadd.f32 %v3130, %v3215
  %3221 = vst [vmem:[%s2831] sm:$0xff] %v3220
  %3222 = vmatprep.subr.bf16.mxu0 %v3002
  %3223 = vmatpush1.bf16.msra.mxu0 %v3001
  %3224 = vmatprep.subr.bf16.mxu0 %v2999
  %3225 = vmatpush1.bf16.msra.mxu0 %v2998
  %3226 = vmatprep.subr.bf16.mxu0 %v2996
  %3227 = vmatpush1.bf16.msra.mxu0 %v2995
  %3228 = vmatprep.subr.bf16.mxu0 %v2993
  %3229 = vmatpush1.bf16.msra.mxu0 %v2992
  %3230 = vmatprep.subr.bf16.mxu0 %v2990
  %3231 = vmatpush1.bf16.msra.mxu0 %v2989
  %3232 = vmatprep.subr.bf16.mxu0 %v2987
  %3233 = vmatpush1.bf16.msra.mxu0 %v2986
  %3234 = vmatprep.subr.bf16.mxu0 %v2984
  %3235 = vmatpush1.bf16.msra.mxu0 %v2983
  %3236 = vmatprep.subr.bf16.mxu0 %v2981
  %3237 = vmatpush1.bf16.msra.mxu0 %v2980
  %3238 = vmatprep.subr.bf16.mxu0 0
  %3239 = vmatpush2.bf16.msra.mxu0 0
  %3240 = vmatprep.subr.bf16.mxu0 0
  %3241 = vmatpush2.bf16.msra.mxu0 0
  %3242 = vmatprep.subr.bf16.mxu0 0
  %3243 = vmatpush2.bf16.msra.mxu0 0
  %3244 = vmatprep.subr.bf16.mxu0 0
  %3245 = vmatpush2.bf16.msra.mxu0 0
  %3246 = vmatprep.subr.bf16.mxu0 0
  %3247 = vmatpush2.bf16.msra.mxu0 0
  %3248 = vmatprep.subr.bf16.mxu0 0
  %3249 = vmatpush2.bf16.msra.mxu0 0
  %3250 = vmatprep.subr.bf16.mxu0 0
  %3251 = vmatpush2.bf16.msra.mxu0 0
  %3252 = vmatprep.subr.bf16.mxu0 0
  %3253 = vmatpush2.bf16.msra.mxu0 0
  %3254 = vmatprep.mubr.bf16.mxu0 0
  %3255 = vmatmul.mubr.bf16.gmra.mxu0 %v3131
  %v3256 = vpop.f32.mrf.mxu0
  %v3257 = vadd.f32 %v2888, %v3256
  %v3258 = vpop.f32.mrf.mxu0
  %v3259 = vadd.f32 %v2892, %v3258
  %v3260 = vpop.f32.mrf.mxu0
  %v3261 = vpop.f32.mrf.mxu0
  %3262 = vdwg.mxu0
  %3263 = vmatprep.subr.bf16.mxu0 0
  %3264 = vmatpush1.bf16.msra.mxu0 %v3003
  %3265 = vmatprep.subr.bf16.mxu0 0
  %3266 = vmatpush1.bf16.msra.mxu0 %v3000
  %3267 = vmatprep.subr.bf16.mxu0 0
  %3268 = vmatpush1.bf16.msra.mxu0 %v2997
  %3269 = vmatprep.subr.bf16.mxu0 0
  %3270 = vmatpush1.bf16.msra.mxu0 %v2994
  %3271 = vmatprep.subr.bf16.mxu0 0
  %3272 = vmatpush1.bf16.msra.mxu0 %v2991
  %3273 = vmatprep.subr.bf16.mxu0 0
  %3274 = vmatpush1.bf16.msra.mxu0 %v2988
  %3275 = vmatprep.subr.bf16.mxu0 0
  %3276 = vmatpush1.bf16.msra.mxu0 %v2985
  %3277 = vmatprep.subr.bf16.mxu0 0
  %3278 = vmatpush1.bf16.msra.mxu0 %v2982
  %3279 = vmatprep.subr.bf16.mxu0 0
  %3280 = vmatpush2.bf16.msra.mxu0 0
  %3281 = vmatprep.subr.bf16.mxu0 0
  %3282 = vmatpush2.bf16.msra.mxu0 0
  %3283 = vmatprep.subr.bf16.mxu0 0
  %3284 = vmatpush2.bf16.msra.mxu0 0
  %3285 = vmatprep.subr.bf16.mxu0 0
  %3286 = vmatpush2.bf16.msra.mxu0 0
  %3287 = vmatprep.subr.bf16.mxu0 0
  %3288 = vmatpush2.bf16.msra.mxu0 0
  %3289 = vmatprep.subr.bf16.mxu0 0
  %3290 = vmatpush2.bf16.msra.mxu0 0
  %3291 = vmatprep.subr.bf16.mxu0 0
  %3292 = vmatpush2.bf16.msra.mxu0 0
  %3293 = vmatprep.subr.bf16.mxu0 0
  %3294 = vmatpush2.bf16.msra.mxu0 0
  %3295 = vmatprep.mubr.bf16.mxu0 0
  %3296 = vmatmul.mubr.bf16.gmra.mxu0 %v3131
  %v3297 = vpop.f32.mrf.mxu0
  %v3298 = vadd.f32 %v2896, %v3297
  %v3299 = vpop.f32.mrf.mxu0
  %v3300 = vpop.f32.mrf.mxu0
  %v3301 = vpop.f32.mrf.mxu0
  %3302 = vdwg.mxu0
  %v3303 = vadd.f32 %v1841, %v3257
  %v3304 = vxor.u32 %v3303, 2147483648
  %v3305 = vmul.f32 %v3304, 1.442695
  %v3306 = vpow.pop %v3305
  %v3307 = vadd.f32 %v3306, 1.0
  %v3308 = vrcp.pop %v3307
  %v3309 = vmul.f32 1.0, %v3308
  %v3310 = vadd.f32 %v1998, %v3259
  %v3311 = vxor.u32 %v3310, 2147483648
  %v3312 = vmul.f32 %v3311, 1.442695
  %v3313 = vpow.pop %v3312
  %v3314 = vadd.f32 %v3313, 1.0
  %v3315 = vrcp.pop %v3314
  %v3316 = vmul.f32 1.0, %v3315
  %v3317 = vmul.f32 %v3309, %v3298
  %v3318 = vadd.f32 %v2000, %v3317
  %v3319 = vtanh.pop %v3318
  %v3320 = vsub.f32 1.0, %v3316
  %v3321 = vmul.f32 %v3320, %v3319
  %v3322 = vmul.f32 %v3316, %v3129
  %v3323 = vadd.f32 %v3321, %v3322
  %v3324 = vld [vmem:[%s2686] sm:$0xff]
  %v3325 = vpack.c.bf16 %v3323, %v3323
  %3326 = vmatprep.subr.bf16.mxu0 0
  %3327 = vmatpush1.bf16.msra.mxu0 %v3171
  %3328 = vmatprep.subr.bf16.mxu0 0
  %3329 = vmatpush1.bf16.msra.mxu0 %v3170
  %3330 = vmatprep.subr.bf16.mxu0 0
  %3331 = vmatpush1.bf16.msra.mxu0 %v3169
  %3332 = vmatprep.subr.bf16.mxu0 0
  %3333 = vmatpush1.bf16.msra.mxu0 %v3168
  %3334 = vmatprep.subr.bf16.mxu0 0
  %3335 = vmatpush1.bf16.msra.mxu0 %v3167
  %3336 = vmatprep.subr.bf16.mxu0 0
  %3337 = vmatpush1.bf16.msra.mxu0 %v3166
  %3338 = vmatprep.subr.bf16.mxu0 0
  %3339 = vmatpush1.bf16.msra.mxu0 %v3165
  %3340 = vmatprep.subr.bf16.mxu0 0
  %3341 = vmatpush1.bf16.msra.mxu0 %v3164
  %3342 = vmatprep.subr.bf16.mxu0 0
  %3343 = vmatpush2.bf16.msra.mxu0 0
  %3344 = vmatprep.subr.bf16.mxu0 0
  %3345 = vmatpush2.bf16.msra.mxu0 0
  %3346 = vmatprep.subr.bf16.mxu0 0
  %3347 = vmatpush2.bf16.msra.mxu0 0
  %3348 = vmatprep.subr.bf16.mxu0 0
  %3349 = vmatpush2.bf16.msra.mxu0 0
  %3350 = vmatprep.subr.bf16.mxu0 0
  %3351 = vmatpush2.bf16.msra.mxu0 0
  %3352 = vmatprep.subr.bf16.mxu0 0
  %3353 = vmatpush2.bf16.msra.mxu0 0
  %3354 = vmatprep.subr.bf16.mxu0 0
  %3355 = vmatpush2.bf16.msra.mxu0 0
  %3356 = vmatprep.subr.bf16.mxu0 0
  %3357 = vmatpush2.bf16.msra.mxu0 0
  %3358 = vmatprep.mubr.bf16.mxu0 0
  %3359 = vmatmul.mubr.bf16.gmra.mxu0 %v3325
  %v3360 = vpop.f32.mrf.mxu0
  %v3361 = vadd.f32 0.0, %v3360
  %v3362 = vpop.f32.mrf.mxu0
  %v3363 = vpop.f32.mrf.mxu0
  %v3364 = vpop.f32.mrf.mxu0
  %3365 = vdwg.mxu0
  %v3366 = vadd.f32 %v3324, %v3361
  %3367 = vst [vmem:[%s2686] sm:$0xff] %v3366
  %3368 = vmatprep.subr.bf16.mxu0 %v3002
  %3369 = vmatpush1.bf16.msra.mxu0 %v3001
  %3370 = vmatprep.subr.bf16.mxu0 %v2999
  %3371 = vmatpush1.bf16.msra.mxu0 %v2998
  %3372 = vmatprep.subr.bf16.mxu0 %v2996
  %3373 = vmatpush1.bf16.msra.mxu0 %v2995
  %3374 = vmatprep.subr.bf16.mxu0 %v2993
  %3375 = vmatpush1.bf16.msra.mxu0 %v2992
  %3376 = vmatprep.subr.bf16.mxu0 %v2990
  %3377 = vmatpush1.bf16.msra.mxu0 %v2989
  %3378 = vmatprep.subr.bf16.mxu0 %v2987
  %3379 = vmatpush1.bf16.msra.mxu0 %v2986
  %3380 = vmatprep.subr.bf16.mxu0 %v2984
  %3381 = vmatpush1.bf16.msra.mxu0 %v2983
  %3382 = vmatprep.subr.bf16.mxu0 %v2981
  %3383 = vmatpush1.bf16.msra.mxu0 %v2980
  %3384 = vmatprep.subr.bf16.mxu0 0
  %3385 = vmatpush2.bf16.msra.mxu0 0
  %3386 = vmatprep.subr.bf16.mxu0 0
  %3387 = vmatpush2.bf16.msra.mxu0 0
  %3388 = vmatprep.subr.bf16.mxu0 0
  %3389 = vmatpush2.bf16.msra.mxu0 0
  %3390 = vmatprep.subr.bf16.mxu0 0
  %3391 = vmatpush2.bf16.msra.mxu0 0
  %3392 = vmatprep.subr.bf16.mxu0 0
  %3393 = vmatpush2.bf16.msra.mxu0 0
  %3394 = vmatprep.subr.bf16.mxu0 0
  %3395 = vmatpush2.bf16.msra.mxu0 0
  %3396 = vmatprep.subr.bf16.mxu0 0
  %3397 = vmatpush2.bf16.msra.mxu0 0
  %3398 = vmatprep.subr.bf16.mxu0 0
  %3399 = vmatpush2.bf16.msra.mxu0 0
  %3400 = vmatprep.mubr.bf16.mxu0 0
  %3401 = vmatmul.mubr.bf16.gmra.mxu0 %v3325
  %v3402 = vpop.f32.mrf.mxu0
  %v3403 = vadd.f32 %v2888, %v3402
  %v3404 = vpop.f32.mrf.mxu0
  %v3405 = vadd.f32 %v2892, %v3404
  %v3406 = vpop.f32.mrf.mxu0
  %v3407 = vpop.f32.mrf.mxu0
  %3408 = vdwg.mxu0
  %3409 = vmatprep.subr.bf16.mxu0 0
  %3410 = vmatpush1.bf16.msra.mxu0 %v3003
  %3411 = vmatprep.subr.bf16.mxu0 0
  %3412 = vmatpush1.bf16.msra.mxu0 %v3000
  %3413 = vmatprep.subr.bf16.mxu0 0
  %3414 = vmatpush1.bf16.msra.mxu0 %v2997
  %3415 = vmatprep.subr.bf16.mxu0 0
  %3416 = vmatpush1.bf16.msra.mxu0 %v2994
  %3417 = vmatprep.subr.bf16.mxu0 0
  %3418 = vmatpush1.bf16.msra.mxu0 %v2991
  %3419 = vmatprep.subr.bf16.mxu0 0
  %3420 = vmatpush1.bf16.msra.mxu0 %v2988
  %3421 = vmatprep.subr.bf16.mxu0 0
  %3422 = vmatpush1.bf16.msra.mxu0 %v2985
  %3423 = vmatprep.subr.bf16.mxu0 0
  %3424 = vmatpush1.bf16.msra.mxu0 %v2982
  %3425 = vmatprep.subr.bf16.mxu0 0
  %3426 = vmatpush2.bf16.msra.mxu0 0
  %3427 = vmatprep.subr.bf16.mxu0 0
  %3428 = vmatpush2.bf16.msra.mxu0 0
  %3429 = vmatprep.subr.bf16.mxu0 0
  %3430 = vmatpush2.bf16.msra.mxu0 0
  %3431 = vmatprep.subr.bf16.mxu0 0
  %3432 = vmatpush2.bf16.msra.mxu0 0
  %3433 = vmatprep.subr.bf16.mxu0 0
  %3434 = vmatpush2.bf16.msra.mxu0 0
  %3435 = vmatprep.subr.bf16.mxu0 0
  %3436 = vmatpush2.bf16.msra.mxu0 0
  %3437 = vmatprep.subr.bf16.mxu0 0
  %3438 = vmatpush2.bf16.msra.mxu0 0
  %3439 = vmatprep.subr.bf16.mxu0 0
  %3440 = vmatpush2.bf16.msra.mxu0 0
  %3441 = vmatprep.mubr.bf16.mxu0 0
  %3442 = vmatmul.mubr.bf16.gmra.mxu0 %v3325
  %v3443 = vpop.f32.mrf.mxu0
  %v3444 = vadd.f32 %v2896, %v3443
  %v3445 = vpop.f32.mrf.mxu0
  %v3446 = vpop.f32.mrf.mxu0
  %v3447 = vpop.f32.mrf.mxu0
  %3448 = vdwg.mxu0
  %v3449 = vadd.f32 %v1835, %v3403
  %v3450 = vxor.u32 %v3449, 2147483648
  %v3451 = vmul.f32 %v3450, 1.442695
  %v3452 = vpow.pop %v3451
  %v3453 = vadd.f32 %v3452, 1.0
  %v3454 = vrcp.pop %v3453
  %v3455 = vmul.f32 1.0, %v3454
  %v3456 = vadd.f32 %v1992, %v3405
  %v3457 = vxor.u32 %v3456, 2147483648
  %v3458 = vmul.f32 %v3457, 1.442695
  %v3459 = vpow.pop %v3458
  %v3460 = vadd.f32 %v3459, 1.0
  %v3461 = vrcp.pop %v3460
  %v3462 = vmul.f32 1.0, %v3461
  %v3463 = vmul.f32 %v3455, %v3444
  %v3464 = vadd.f32 %v1994, %v3463
  %v3465 = vtanh.pop %v3464
  %v3466 = vsub.f32 1.0, %v3462
  %v3467 = vmul.f32 %v3466, %v3465
  %v3468 = vmul.f32 %v3462, %v3323
  %v3469 = vadd.f32 %v3467, %v3468
  %v3470 = vld [vmem:[%s2541] sm:$0xff]
  %v3471 = vpack.c.bf16 %v3469, %v3469
  %3472 = vmatprep.subr.bf16.mxu0 0
  %3473 = vmatpush1.bf16.msra.mxu0 %v3171
  %3474 = vmatprep.subr.bf16.mxu0 0
  %3475 = vmatpush1.bf16.msra.mxu0 %v3170
  %3476 = vmatprep.subr.bf16.mxu0 0
  %3477 = vmatpush1.bf16.msra.mxu0 %v3169
  %3478 = vmatprep.subr.bf16.mxu0 0
  %3479 = vmatpush1.bf16.msra.mxu0 %v3168
  %3480 = vmatprep.subr.bf16.mxu0 0
  %3481 = vmatpush1.bf16.msra.mxu0 %v3167
  %3482 = vmatprep.subr.bf16.mxu0 0
  %3483 = vmatpush1.bf16.msra.mxu0 %v3166
  %3484 = vmatprep.subr.bf16.mxu0 0
  %3485 = vmatpush1.bf16.msra.mxu0 %v3165
  %3486 = vmatprep.subr.bf16.mxu0 0
  %3487 = vmatpush1.bf16.msra.mxu0 %v3164
  %3488 = vmatprep.subr.bf16.mxu0 0
  %3489 = vmatpush2.bf16.msra.mxu0 0
  %3490 = vmatprep.subr.bf16.mxu0 0
  %3491 = vmatpush2.bf16.msra.mxu0 0
  %3492 = vmatprep.subr.bf16.mxu0 0
  %3493 = vmatpush2.bf16.msra.mxu0 0
  %3494 = vmatprep.subr.bf16.mxu0 0
  %3495 = vmatpush2.bf16.msra.mxu0 0
  %3496 = vmatprep.subr.bf16.mxu0 0
  %3497 = vmatpush2.bf16.msra.mxu0 0
  %3498 = vmatprep.subr.bf16.mxu0 0
  %3499 = vmatpush2.bf16.msra.mxu0 0
  %3500 = vmatprep.subr.bf16.mxu0 0
  %3501 = vmatpush2.bf16.msra.mxu0 0
  %3502 = vmatprep.subr.bf16.mxu0 0
  %3503 = vmatpush2.bf16.msra.mxu0 0
  %3504 = vmatprep.mubr.bf16.mxu0 0
  %3505 = vmatmul.mubr.bf16.gmra.mxu0 %v3471
  %v3506 = vpop.f32.mrf.mxu0
  %v3507 = vadd.f32 0.0, %v3506
  %v3508 = vpop.f32.mrf.mxu0
  %v3509 = vpop.f32.mrf.mxu0
  %v3510 = vpop.f32.mrf.mxu0
  %3511 = vdwg.mxu0
  %v3512 = vadd.f32 %v3470, %v3507
  %3513 = vst [vmem:[%s2541] sm:$0xff] %v3512
  %3514 = vmatprep.subr.bf16.mxu0 %v3002
  %3515 = vmatpush1.bf16.msra.mxu0 %v3001
  %3516 = vmatprep.subr.bf16.mxu0 %v2999
  %3517 = vmatpush1.bf16.msra.mxu0 %v2998
  %3518 = vmatprep.subr.bf16.mxu0 %v2996
  %3519 = vmatpush1.bf16.msra.mxu0 %v2995
  %3520 = vmatprep.subr.bf16.mxu0 %v2993
  %3521 = vmatpush1.bf16.msra.mxu0 %v2992
  %3522 = vmatprep.subr.bf16.mxu0 %v2990
  %3523 = vmatpush1.bf16.msra.mxu0 %v2989
  %3524 = vmatprep.subr.bf16.mxu0 %v2987
  %3525 = vmatpush1.bf16.msra.mxu0 %v2986
  %3526 = vmatprep.subr.bf16.mxu0 %v2984
  %3527 = vmatpush1.bf16.msra.mxu0 %v2983
  %3528 = vmatprep.subr.bf16.mxu0 %v2981
  %3529 = vmatpush1.bf16.msra.mxu0 %v2980
  %3530 = vmatprep.subr.bf16.mxu0 0
  %3531 = vmatpush2.bf16.msra.mxu0 0
  %3532 = vmatprep.subr.bf16.mxu0 0
  %3533 = vmatpush2.bf16.msra.mxu0 0
  %3534 = vmatprep.subr.bf16.mxu0 0
  %3535 = vmatpush2.bf16.msra.mxu0 0
  %3536 = vmatprep.subr.bf16.mxu0 0
  %3537 = vmatpush2.bf16.msra.mxu0 0
  %3538 = vmatprep.subr.bf16.mxu0 0
  %3539 = vmatpush2.bf16.msra.mxu0 0
  %3540 = vmatprep.subr.bf16.mxu0 0
  %3541 = vmatpush2.bf16.msra.mxu0 0
  %3542 = vmatprep.subr.bf16.mxu0 0
  %3543 = vmatpush2.bf16.msra.mxu0 0
  %3544 = vmatprep.subr.bf16.mxu0 0
  %3545 = vmatpush2.bf16.msra.mxu0 0
  %3546 = vmatprep.mubr.bf16.mxu0 0
  %3547 = vmatmul.mubr.bf16.gmra.mxu0 %v3471
  %v3548 = vpop.f32.mrf.mxu0
  %v3549 = vadd.f32 %v2888, %v3548
  %v3550 = vpop.f32.mrf.mxu0
  %v3551 = vadd.f32 %v2892, %v3550
  %v3552 = vpop.f32.mrf.mxu0
  %v3553 = vpop.f32.mrf.mxu0
  %3554 = vdwg.mxu0
  %3555 = vmatprep.subr.bf16.mxu0 0
  %3556 = vmatpush1.bf16.msra.mxu0 %v3003
  %3557 = vmatprep.subr.bf16.mxu0 0
  %3558 = vmatpush1.bf16.msra.mxu0 %v3000
  %3559 = vmatprep.subr.bf16.mxu0 0
  %3560 = vmatpush1.bf16.msra.mxu0 %v2997
  %3561 = vmatprep.subr.bf16.mxu0 0
  %3562 = vmatpush1.bf16.msra.mxu0 %v2994
  %3563 = vmatprep.subr.bf16.mxu0 0
  %3564 = vmatpush1.bf16.msra.mxu0 %v2991
  %3565 = vmatprep.subr.bf16.mxu0 0
  %3566 = vmatpush1.bf16.msra.mxu0 %v2988
  %3567 = vmatprep.subr.bf16.mxu0 0
  %3568 = vmatpush1.bf16.msra.mxu0 %v2985
  %3569 = vmatprep.subr.bf16.mxu0 0
  %3570 = vmatpush1.bf16.msra.mxu0 %v2982
  %3571 = vmatprep.subr.bf16.mxu0 0
  %3572 = vmatpush2.bf16.msra.mxu0 0
  %3573 = vmatprep.subr.bf16.mxu0 0
  %3574 = vmatpush2.bf16.msra.mxu0 0
  %3575 = vmatprep.subr.bf16.mxu0 0
  %3576 = vmatpush2.bf16.msra.mxu0 0
  %3577 = vmatprep.subr.bf16.mxu0 0
  %3578 = vmatpush2.bf16.msra.mxu0 0
  %3579 = vmatprep.subr.bf16.mxu0 0
  %3580 = vmatpush2.bf16.msra.mxu0 0
  %3581 = vmatprep.subr.bf16.mxu0 0
  %3582 = vmatpush2.bf16.msra.mxu0 0
  %3583 = vmatprep.subr.bf16.mxu0 0
  %3584 = vmatpush2.bf16.msra.mxu0 0
  %3585 = vmatprep.subr.bf16.mxu0 0
  %3586 = vmatpush2.bf16.msra.mxu0 0
  %3587 = vmatprep.mubr.bf16.mxu0 0
  %3588 = vmatmul.mubr.bf16.gmra.mxu0 %v3471
  %v3589 = vpop.f32.mrf.mxu0
  %v3590 = vadd.f32 %v2896, %v3589
  %v3591 = vpop.f32.mrf.mxu0
  %v3592 = vpop.f32.mrf.mxu0
  %v3593 = vpop.f32.mrf.mxu0
  %3594 = vdwg.mxu0
  %v3595 = vadd.f32 %v1831, %v3549
  %v3596 = vxor.u32 %v3595, 2147483648
  %v3597 = vmul.f32 %v3596, 1.442695
  %v3598 = vpow.pop %v3597
  %v3599 = vadd.f32 %v3598, 1.0
  %v3600 = vrcp.pop %v3599
  %v3601 = vmul.f32 1.0, %v3600
  %v3602 = vadd.f32 %v1988, %v3551
  %v3603 = vxor.u32 %v3602, 2147483648
  %v3604 = vmul.f32 %v3603, 1.442695
  %v3605 = vpow.pop %v3604
  %v3606 = vadd.f32 %v3605, 1.0
  %v3607 = vrcp.pop %v3606
  %v3608 = vmul.f32 1.0, %v3607
  %v3609 = vmul.f32 %v3601, %v3590
  %v3610 = vadd.f32 %v1990, %v3609
  %v3611 = vtanh.pop %v3610
  %v3612 = vsub.f32 1.0, %v3608
  %v3613 = vmul.f32 %v3612, %v3611
  %v3614 = vmul.f32 %v3608, %v3469
  %v3615 = vadd.f32 %v3613, %v3614
  %v3616 = vld [vmem:[%s7] sm:$0xff]
  %v3617 = vpack.c.bf16 %v3615, %v3615
  %3618 = vmatprep.subr.bf16.mxu0 0
  %3619 = vmatpush1.bf16.msra.mxu0 %v3171
  %3620 = vmatprep.subr.bf16.mxu0 0
  %3621 = vmatpush1.bf16.msra.mxu0 %v3170
  %3622 = vmatprep.subr.bf16.mxu0 0
  %3623 = vmatpush1.bf16.msra.mxu0 %v3169
  %3624 = vmatprep.subr.bf16.mxu0 0
  %3625 = vmatpush1.bf16.msra.mxu0 %v3168
  %3626 = vmatprep.subr.bf16.mxu0 0
  %3627 = vmatpush1.bf16.msra.mxu0 %v3167
  %3628 = vmatprep.subr.bf16.mxu0 0
  %3629 = vmatpush1.bf16.msra.mxu0 %v3166
  %3630 = vmatprep.subr.bf16.mxu0 0
  %3631 = vmatpush1.bf16.msra.mxu0 %v3165
  %3632 = vmatprep.subr.bf16.mxu0 0
  %3633 = vmatpush1.bf16.msra.mxu0 %v3164
  %3634 = vmatprep.subr.bf16.mxu0 0
  %3635 = vmatpush2.bf16.msra.mxu0 0
  %3636 = vmatprep.subr.bf16.mxu0 0
  %3637 = vmatpush2.bf16.msra.mxu0 0
  %3638 = vmatprep.subr.bf16.mxu0 0
  %3639 = vmatpush2.bf16.msra.mxu0 0
  %3640 = vmatprep.subr.bf16.mxu0 0
  %3641 = vmatpush2.bf16.msra.mxu0 0
  %3642 = vmatprep.subr.bf16.mxu0 0
  %3643 = vmatpush2.bf16.msra.mxu0 0
  %3644 = vmatprep.subr.bf16.mxu0 0
  %3645 = vmatpush2.bf16.msra.mxu0 0
  %3646 = vmatprep.subr.bf16.mxu0 0
  %3647 = vmatpush2.bf16.msra.mxu0 0
  %3648 = vmatprep.subr.bf16.mxu0 0
  %3649 = vmatpush2.bf16.msra.mxu0 0
  %3650 = vmatprep.mubr.bf16.mxu0 0
  %3651 = vmatmul.mubr.bf16.gmra.mxu0 %v3617
  %v3652 = vpop.f32.mrf.mxu0
  %v3653 = vadd.f32 0.0, %v3652
  %v3654 = vpop.f32.mrf.mxu0
  %v3655 = vpop.f32.mrf.mxu0
  %v3656 = vpop.f32.mrf.mxu0
  %3657 = vdwg.mxu0
  %v3658 = vadd.f32 %v3616, %v3653
  %3659 = vst [vmem:[%s7] sm:$0xff] %v3658
  // Predicated region
  $region30: #{forward.4} parent=0 // pred_check
    _
  $region31: #{forward.4} parent=0 // pred_check_branch
    %3661 = sbr.rel (0) target = $region33
  $region32: #{forward.4} parent=0 // pred_region
    _
  $region33: #{forward.4} parent=0 // pred_fallthru
    _
  // Predicated region
  $region34: #{forward.4} parent=0 // pred_check
    _
  $region35: #{forward.4} parent=0 // pred_check_branch
    %3663 = sbr.rel (0) target = $region37
  $region36: #{forward.4} parent=0 // pred_region
    _
  $region37: #{forward.4} parent=0 // pred_fallthru
    _

</llo_original>
